<compile_context>
chip_gen: v6e
topology: v6e:2x2x1
jax: 0.10.0
libtpu: 0.0.40
codegen_flags: <defaults>
</compile_context>

<pallas_src>
import functools

import jax
import jax.numpy as jnp
from jax.experimental import pallas as pl
from jax.experimental.pallas import tpu as pltpu

NUM_HEADS = 4
LN_EPS = 1e-5  # nn.LayerNorm default

WEIGHT_ORDER = [
    "proj_w", "proj_b", "ln1_g", "ln1_b", "qkv_w", "qkv_b", "attn_w", "attn_b",
    "ln2_g", "ln2_b", "mlp_w1", "mlp_b1", "mlp_w2", "mlp_b2",
]


def _layer_norm(h, gamma, beta):
    mu = jnp.mean(h, axis=-1, keepdims=True)
    var = jnp.mean((h - mu) ** 2, axis=-1, keepdims=True)
    return (h - mu) * jax.lax.rsqrt(var + LN_EPS) * gamma + beta


def clip_cross_attn_kernel(
    xt_ref,                              # (BT, S, D)   token rows (f32)
    clip_ref,                            # (BT, 1, D)   CLIP embedding row (f32)
    proj_w_ref, proj_b_ref,              # (D, D) bf16, (1, D) f32
    ln1_g_ref, ln1_b_ref,                # (1, D) f32
    qkv_w_ref, qkv_b_ref,                # (D, 3D) bf16 (q cols pre-scaled), (1, 3D) f32
    attn_w_ref, attn_b_ref,              # (H, dh, D) bf16, (1, D) f32
    ln2_g_ref, ln2_b_ref,                # (1, D) f32
    mlp_w1_ref, mlp_b1_ref,              # (D, 4D) bf16, (1, 4D) f32
    mlp_w2_ref, mlp_b2_ref,              # (4D, D) bf16, (1, D) f32
    pw_w_ref, pw_b_ref,                  # (BT, 1, 2D) f32 per-batch task slice
    rho_ref,                             # out: (BT, S, D)
    logits_ref,                          # out: (BT, S, 2D)  [:, :, :D]=logit0, [:, :, D:]=logit1
    *, n_mlp_chunks: int,
):
    BT, S, D = xt_ref.shape
    dh = D // NUM_HEADS
    cdt = proj_w_ref.dtype               # MXU operand dtype (bf16)

    x_tok = xt_ref[...].astype(jnp.float32)          # (BT, S, D)
    clip_emb = clip_ref[...].astype(jnp.float32)     # (BT, 1, D)

    # x = self.proj(x) * Q   (Q = clip_emb repeated along seq -> broadcast)
    xf = (jnp.dot(x_tok.reshape(BT * S, D).astype(cdt), proj_w_ref[...],
                  preferred_element_type=jnp.float32) + proj_b_ref[...])
    x = xf.reshape(BT, S, D) * clip_emb               # residual stream (BT, S, D) f32

    # ---- ViT Block, attention branch: x = x + Attn(LN1(x)) ----
    h = _layer_norm(x, ln1_g_ref[...], ln1_b_ref[...])
    qkv = (jnp.dot(h.reshape(BT * S, D).astype(cdt), qkv_w_ref[...],
                   preferred_element_type=jnp.float32) + qkv_b_ref[...])
    qkv = qkv.reshape(BT, S, 3 * D)

    attn_out = jnp.zeros((BT * S, D), jnp.float32)
    for hh in range(NUM_HEADS):                       # static unroll over heads
        # 1/sqrt(dh) already folded into the q columns of qkv_w/qkv_b.
        q = qkv[:, :, hh * dh:(hh + 1) * dh].astype(cdt)
        k = qkv[:, :, D + hh * dh:D + (hh + 1) * dh].astype(cdt)
        v = qkv[:, :, 2 * D + hh * dh:2 * D + (hh + 1) * dh].astype(cdt)
        s = jnp.einsum("bqd,bkd->bqk", q, k,
                       preferred_element_type=jnp.float32)          # (BT, S, S)
        s = s - jnp.max(s, axis=-1, keepdims=True)
        p = jnp.exp(s)
        # EUP approximate reciprocal instead of a VALU divide.
        p = p * pl.reciprocal(jnp.sum(p, axis=-1, keepdims=True), approx=True)
        o = jnp.einsum("bqk,bkd->bqd", p.astype(cdt), v,
                       preferred_element_type=jnp.float32)          # (BT, S, dh)
        # Fold the output projection into the head loop (no VMEM scratch round trip).
        attn_out = attn_out + jnp.dot(
            o.reshape(BT * S, dh).astype(cdt), attn_w_ref[hh],
            preferred_element_type=jnp.float32)
    xf = x.reshape(BT * S, D) + attn_out + attn_b_ref[...]          # (BT*S, D)

    # ---- ViT Block, MLP branch: x = x + MLP(LN2(x)), chunked over 4D hidden ----
    h2 = _layer_norm(xf, ln2_g_ref[...], ln2_b_ref[...]).astype(cdt)
    hid = mlp_w1_ref.shape[1]
    chunk = hid // n_mlp_chunks
    x2 = xf + mlp_b2_ref[...]
    for c in range(n_mlp_chunks):                     # static unroll (chunk lane-aligned)
        lo, hi = c * chunk, (c + 1) * chunk
        m = (jnp.dot(h2, mlp_w1_ref[:, lo:hi],
                     preferred_element_type=jnp.float32) + mlp_b1_ref[:, lo:hi])
        # TODO(synk): PyTorch nn.GELU default is exact erf GELU; tanh approx used here.
        m = jax.nn.gelu(m, approximate=True)
        x2 = x2 + jnp.dot(m.astype(cdt), mlp_w2_ref[lo:hi, :],
                          preferred_element_type=jnp.float32)
    x3 = x2.reshape(BT, S, D)

    # ---- PiecewiseRect (task-conditioned affine -> 2 binary logits per feature)
    #      + BinaryGumbelSoftmax (deterministic eval): rho = sigmoid(l1 - l0) ----
    pw_w = pw_w_ref[...]                              # (BT, 1, 2D) f32
    pw_b = pw_b_ref[...]
    # Single full-width lane-dense store for the logits slab (final (b,s,t,f) order).
    lg = jnp.concatenate([x3, x3], axis=-1) * pw_w + pw_b
    logits_ref[...] = lg.astype(logits_ref.dtype)
    dw = pw_w[:, :, D:] - pw_w[:, :, :D]
    db = pw_b[:, :, D:] - pw_b[:, :, :D]
    rho_ref[...] = jax.nn.sigmoid(x3 * dw + db).astype(rho_ref.dtype)


def init_params(key, D, T, use_conditioning):
    keys = jax.random.split(key, 12)
    s = 0.05
    Tp = T if use_conditioning else 1
    return {
        "proj_w": jax.random.normal(keys[0], (D, D), jnp.float32) * s,
        "proj_b": jax.random.normal(keys[1], (1, D), jnp.float32) * s,
        "ln1_g": jnp.ones((1, D), jnp.float32),
        "ln1_b": jnp.zeros((1, D), jnp.float32),
        "qkv_w": jax.random.normal(keys[2], (D, 3 * D), jnp.float32) * s,
        "qkv_b": jax.random.normal(keys[3], (1, 3 * D), jnp.float32) * s,
        "attn_w": jax.random.normal(keys[4], (D, D), jnp.float32) * s,
        "attn_b": jax.random.normal(keys[5], (1, D), jnp.float32) * s,
        "ln2_g": jnp.ones((1, D), jnp.float32),
        "ln2_b": jnp.zeros((1, D), jnp.float32),
        "mlp_w1": jax.random.normal(keys[6], (D, 4 * D), jnp.float32) * s,
        "mlp_b1": jax.random.normal(keys[7], (1, 4 * D), jnp.float32) * s,
        "mlp_w2": jax.random.normal(keys[8], (4 * D, D), jnp.float32) * s,
        "mlp_b2": jax.random.normal(keys[9], (1, D), jnp.float32) * s,
        # piecewise-rect: per-task scale/shift for the two binary logits: (Tp, 2, D)
        "pw_w": jax.random.normal(keys[10], (Tp, 2, D), jnp.float32) * s + 1.0,
        "pw_b": jax.random.normal(keys[11], (Tp, 2, D), jnp.float32) * s,
    }


def _pick_mlp_chunks(hid, target_cols=2048):
    """Number of lane-aligned column chunks for the MLP hidden dim."""
    n = max(1, hid // target_cols)
    while n > 1 and (hid % n != 0 or (hid // n) % 128 != 0):
        n -= 1
    return n


def clip_cross_attention_v4(x, y, tasks_id, params, use_conditioning,
                            compute_dtype=jnp.bfloat16, out_dtype=jnp.float32,
                            block_batch=None, min_grid_steps=2,
                            mlp_chunk_cols=2048):
    """Forward pass. Returns (rho (B,S,D), logits (B,S,2,D))."""
    del y  # `y` is an argument of the PyTorch forward but is never used there.
    B, S1, D = x.shape
    S = S1 - 1
    dh = D // NUM_HEADS
    cdt = compute_dtype

    # ---- kernel-ready weights: bf16 MXU operands, pre-folded q scale, head-split attn proj ----
    scale = dh ** -0.5
    qscale = jnp.concatenate([jnp.full((D,), scale, jnp.float32),
                              jnp.ones((2 * D,), jnp.float32)])
    kw = {
        "proj_w": params["proj_w"].astype(cdt),
        "proj_b": params["proj_b"].astype(jnp.float32),
        "ln1_g": params["ln1_g"].astype(jnp.float32),
        "ln1_b": params["ln1_b"].astype(jnp.float32),
        "qkv_w": (params["qkv_w"] * qscale).astype(cdt),
        "qkv_b": (params["qkv_b"] * qscale).astype(jnp.float32),
        "attn_w": params["attn_w"].reshape(NUM_HEADS, dh, D).astype(cdt),
        "attn_b": params["attn_b"].astype(jnp.float32),
        "ln2_g": params["ln2_g"].astype(jnp.float32),
        "ln2_b": params["ln2_b"].astype(jnp.float32),
        "mlp_w1": params["mlp_w1"].astype(cdt),
        "mlp_b1": params["mlp_b1"].astype(jnp.float32),
        "mlp_w2": params["mlp_w2"].astype(cdt),
        "mlp_b2": params["mlp_b2"].astype(jnp.float32),
    }

    # Split tokens / CLIP row outside the kernel: the (S+1)-row block would force
    # sublane-masked in-kernel slices (S+1 is not a multiple of 8).
    x_tok = x[:, :S, :]                               # (B, S, D)
    clip_emb = x[:, S:, :]                            # (B, 1, D)

    # Task-conditioned PiecewiseRect parameters, gathered per batch element and
    # flattened lane-dense as (B, 1, 2D): [:D] -> logit-0 affine, [D:] -> logit-1.
    # TODO(synk): with BT > 1 batch rows per block the tasks inside a block differ,
    # so the gather stays in the wrapper instead of scalar-prefetch index_maps.
    tid = tasks_id.astype(jnp.int32)
    if not use_conditioning:
        tid = jnp.zeros_like(tid)
    pw_w_sel = params["pw_w"][tid].reshape(B, 1, 2 * D).astype(jnp.float32)
    pw_b_sel = params["pw_b"][tid].reshape(B, 1, 2 * D).astype(jnp.float32)

    # ---- chip-aware VMEM budget ----
    try:
        vmem_cap = int(pltpu.get_tpu_info().vmem_capacity_bytes)
    except Exception:
        vmem_cap = 64 * 1024 * 1024           # conservative default (v7x per-TC VMEM)
    # Leave headroom for compiler-internal scratch; this gives ~48 MiB on v7x and
    # ~112 MiB on v5e/v6e instead of a one-size-fits-all 64 MiB cap.
    vmem_limit = max(32 * 1024 * 1024, vmem_cap - 16 * 1024 * 1024)

    weight_bytes = sum(int(a.size) * a.dtype.itemsize for a in kw.values())
    n_chunks = _pick_mlp_chunks(4 * D, mlp_chunk_cols)
    mlp_chunk = (4 * D) // n_chunks
    out_bytes = jnp.dtype(out_dtype).itemsize
    in_bytes = x.dtype.itemsize

    def vmem_estimate(bt, weight_bufs):
        f32 = 4
        io = 2 * bt * (S * D * in_bytes + D * in_bytes + 2 * (2 * D) * f32
                       + S * D * out_bytes + S * 2 * D * out_bytes)   # double-buffered I/O
        # Live f32 intermediates: residual x, qkv, scores+probs, attn acc / h2 / l0-l1,
        # MLP chunk activation, logits slab.
        live = f32 * bt * S * (D + 3 * D + 2 * S + 3 * D + mlp_chunk + 2 * D)
        return int(1.2 * (io + live)) + weight_bufs * weight_bytes

    # ---- block-batch selection: biggest BT that fits, keeping >= min_grid_steps
    # grid steps so v7x can shard the "parallel" batch axis over both TensorCores ----
    if block_batch is None:
        max_bt = B if B < min_grid_steps else max(1, B // min_grid_steps)
        BT = 1
        for cand in range(max_bt, 0, -1):
            if B % cand == 0 and vmem_estimate(cand, 1) <= vmem_limit:
                BT = cand
                break
    else:
        BT = block_batch
        assert B % BT == 0, "block_batch must divide the batch size"

    def const_spec(arr, single_buffer):
        nd = arr.ndim
        if single_buffer:
            # Constant index map => fetched once; single-buffer to halve weight VMEM.
            return pl.BlockSpec(arr.shape, lambda i, _nd=nd: (0,) * _nd,
                                pipeline_mode=pl.Buffered(1))
        return pl.BlockSpec(arr.shape, lambda i, _nd=nd: (0,) * _nd)

    def _run(single_buffer_weights):
        in_specs = [
            pl.BlockSpec((BT, S, D), lambda i: (i, 0, 0)),        # token rows
            pl.BlockSpec((BT, 1, D), lambda i: (i, 0, 0)),        # CLIP row
        ]
        in_specs += [const_spec(kw[n], single_buffer_weights) for n in WEIGHT_ORDER]
        in_specs += [
            pl.BlockSpec((BT, 1, 2 * D), lambda i: (i, 0, 0)),    # pw_w_sel
            pl.BlockSpec((BT, 1, 2 * D), lambda i: (i, 0, 0)),    # pw_b_sel
        ]
        out_specs = [
            pl.BlockSpec((BT, S, D), lambda i: (i, 0, 0)),        # rho
            pl.BlockSpec((BT, S, 2 * D), lambda i: (i, 0, 0)),    # logits slab
        ]
        grid_spec = pltpu.PrefetchScalarGridSpec(
            num_scalar_prefetch=0,
            grid=(B // BT,),
            in_specs=in_specs,
            out_specs=out_specs,
        )
        return pl.pallas_call(
            functools.partial(clip_cross_attn_kernel, n_mlp_chunks=n_chunks),
            out_shape=(
                jax.ShapeDtypeStruct((B, S, D), out_dtype),
                jax.ShapeDtypeStruct((B, S, 2 * D), out_dtype),
            ),
            grid_spec=grid_spec,
            compiler_params=pltpu.CompilerParams(
                dimension_semantics=("parallel",),   # batch groups independent (v7x: 2 TCs)
                vmem_limit_bytes=int(vmem_limit),
            ),
        )(x_tok, clip_emb, *[kw[n] for n in WEIGHT_ORDER], pw_w_sel, pw_b_sel)

    try:
        rho, logits_flat = _run(single_buffer_weights=True)
    except Exception:
        # pipeline_mode=pl.Buffered(1) unsupported on this jax version -> fall back to
        # default double-buffered constant-weight blocks (correctness unaffected).
        rho, logits_flat = _run(single_buffer_weights=False)

    # Kernel emits logits in final (b, s, t, f) memory order packed along lanes as
    # t*D+f; this reshape is a free contiguous bitcast (no transpose op).
    logits = logits_flat.reshape(B, S, 2, D)
    return rho, logits


def reference_forward(x, tasks_id, params, use_conditioning):
    """Pure-JAX f32 reference mirroring the kernel math (for verification)."""
    B, S1, D = x.shape
    S = S1 - 1
    clip_emb = x[:, -1:, :]
    xs = x[:, :-1, :]
    h = (xs @ params["proj_w"] + params["proj_b"]) * clip_emb

    def ln(z, g, b):
        mu = z.mean(-1, keepdims=True)
        var = ((z - mu) ** 2).mean(-1, keepdims=True)
        return (z - mu) / jnp.sqrt(var + LN_EPS) * g + b

    z = ln(h, params["ln1_g"], params["ln1_b"])
    qkv = z @ params["qkv_w"] + params["qkv_b"]
    q, k, v = qkv[..., :D], qkv[..., D:2 * D], qkv[..., 2 * D:]
    dh = D // NUM_HEADS

    def split_heads(t):
        return t.reshape(B, S, NUM_HEADS, dh).transpose(0, 2, 1, 3)

    qh, kh, vh = split_heads(q), split_heads(k), split_heads(v)
    scores = jnp.einsum("bhqd,bhkd->bhqk", qh, kh) * dh ** -0.5
    p = jax.nn.softmax(scores, axis=-1)
    o = jnp.einsum("bhqk,bhkd->bhqd", p, vh).transpose(0, 2, 1, 3).reshape(B, S, D)
    o = o @ params["attn_w"] + params["attn_b"]
    h = h + o
    z2 = ln(h, params["ln2_g"], params["ln2_b"])
    m = jax.nn.gelu(z2 @ params["mlp_w1"] + params["mlp_b1"], approximate=True)
    m = m @ params["mlp_w2"] + params["mlp_b2"]
    h = h + m

    tid = tasks_id if use_conditioning else jnp.zeros_like(tasks_id)
    w = params["pw_w"][tid]        # (B, 2, D)
    b = params["pw_b"][tid]        # (B, 2, D)
    logits = h[:, :, None, :] * w[:, None, :, :] + b[:, None, :, :]   # (B, S, 2, D)
    rho = jax.nn.sigmoid(logits[:, :, 1, :] - logits[:, :, 0, :])
    return rho, logits


if __name__ == "__main__":
    B, S, D, T = 8, 8, 64, 3
    use_conditioning = True

    key = jax.random.PRNGKey(0)
    kx, ky, kt, kp = jax.random.split(key, 4)
    x = jax.random.normal(kx, (B, S + 1, D), jnp.float32)
    y = jax.random.normal(ky, (B, S + 1, D), jnp.float32)  # unused by forward (torch signature parity)
    tasks_id = jax.random.randint(kt, (B,), 0, T, jnp.int32)
    params = init_params(kp, D, T, use_conditioning)

    # mlp_chunk_cols=128 exercises the chunked-MLP path (2 chunks of 128 at 4D=256).
    rho, logits = clip_cross_attention_v4(x, y, tasks_id, params, use_conditioning,
                                          mlp_chunk_cols=128)
    jax.block_until_ready((rho, logits))

    rho_ref, logits_ref = reference_forward(x, tasks_id, params, use_conditioning)
    assert rho.shape == (B, S, D) and logits.shape == (B, S, 2, D)
    # Tolerance accounts for bf16 MXU operands + EUP approx reciprocal in the kernel
    # vs the pure-f32 reference.
    assert bool(jnp.allclose(rho, rho_ref, atol=5e-2, rtol=5e-2)), "rho mismatch"
    assert bool(jnp.allclose(logits, logits_ref, atol=5e-2, rtol=5e-2)), "logits mismatch"

    print("KERNEL_OK")
</pallas_src>

<mosaic_0001>
module attributes {stable_mosaic.version = 11 : i64} {
  func.func @clip_cross_attn_kernel(%arg0: i32, %arg1: memref<4x8x64xf32, #tpu.memory_space<vmem>>, %arg2: memref<4x1x64xf32, #tpu.memory_space<vmem>>, %arg3: memref<64x64xbf16, #tpu.memory_space<vmem>>, %arg4: memref<1x64xf32, #tpu.memory_space<vmem>>, %arg5: memref<1x64xf32, #tpu.memory_space<vmem>>, %arg6: memref<1x64xf32, #tpu.memory_space<vmem>>, %arg7: memref<64x192xbf16, #tpu.memory_space<vmem>>, %arg8: memref<1x192xf32, #tpu.memory_space<vmem>>, %arg9: memref<4x16x64xbf16, #tpu.memory_space<vmem>>, %arg10: memref<1x64xf32, #tpu.memory_space<vmem>>, %arg11: memref<1x64xf32, #tpu.memory_space<vmem>>, %arg12: memref<1x64xf32, #tpu.memory_space<vmem>>, %arg13: memref<64x256xbf16, #tpu.memory_space<vmem>>, %arg14: memref<1x256xf32, #tpu.memory_space<vmem>>, %arg15: memref<256x64xbf16, #tpu.memory_space<vmem>>, %arg16: memref<1x64xf32, #tpu.memory_space<vmem>>, %arg17: memref<4x1x128xf32, #tpu.memory_space<vmem>>, %arg18: memref<4x1x128xf32, #tpu.memory_space<vmem>>, %arg19: memref<4x8x64xf32, #tpu.memory_space<vmem>>, %arg20: memref<4x8x128xf32, #tpu.memory_space<vmem>>) attributes {dimension_semantics = [#tpu.dimension_semantics<parallel>], iteration_bounds = array<i64: 2>, scalar_prefetch = 0 : i64, scratch_operands = 0 : i64, tpu.core_type = #tpu.core_type<tc>, window_params = [{transform_indices = @transform_0, window_bounds = array<i64: 4, 8, 64>}, {transform_indices = @transform_1, window_bounds = array<i64: 4, 1, 64>}, {pipeline_mode = #tpu.pipeline_mode<synchronous>, transform_indices = @transform_2, window_bounds = array<i64: 64, 64>}, {pipeline_mode = #tpu.pipeline_mode<synchronous>, transform_indices = @transform_3, window_bounds = array<i64: 1, 64>}, {pipeline_mode = #tpu.pipeline_mode<synchronous>, transform_indices = @transform_4, window_bounds = array<i64: 1, 64>}, {pipeline_mode = #tpu.pipeline_mode<synchronous>, transform_indices = @transform_5, window_bounds = array<i64: 1, 64>}, {pipeline_mode = #tpu.pipeline_mode<synchronous>, transform_indices = @transform_6, window_bounds = array<i64: 64, 192>}, {pipeline_mode = #tpu.pipeline_mode<synchronous>, transform_indices = @transform_7, window_bounds = array<i64: 1, 192>}, {pipeline_mode = #tpu.pipeline_mode<synchronous>, transform_indices = @transform_8, window_bounds = array<i64: 4, 16, 64>}, {pipeline_mode = #tpu.pipeline_mode<synchronous>, transform_indices = @transform_9, window_bounds = array<i64: 1, 64>}, {pipeline_mode = #tpu.pipeline_mode<synchronous>, transform_indices = @transform_10, window_bounds = array<i64: 1, 64>}, {pipeline_mode = #tpu.pipeline_mode<synchronous>, transform_indices = @transform_11, window_bounds = array<i64: 1, 64>}, {pipeline_mode = #tpu.pipeline_mode<synchronous>, transform_indices = @transform_12, window_bounds = array<i64: 64, 256>}, {pipeline_mode = #tpu.pipeline_mode<synchronous>, transform_indices = @transform_13, window_bounds = array<i64: 1, 256>}, {pipeline_mode = #tpu.pipeline_mode<synchronous>, transform_indices = @transform_14, window_bounds = array<i64: 256, 64>}, {pipeline_mode = #tpu.pipeline_mode<synchronous>, transform_indices = @transform_15, window_bounds = array<i64: 1, 64>}, {transform_indices = @transform_16, window_bounds = array<i64: 4, 1, 128>}, {transform_indices = @transform_17, window_bounds = array<i64: 4, 1, 128>}, {transform_indices = @transform_18, window_bounds = array<i64: 4, 8, 64>}, {transform_indices = @transform_19, window_bounds = array<i64: 4, 8, 128>}]} {
    %c0 = arith.constant 0 : index
    %c0_0 = arith.constant 0 : index
    %c0_1 = arith.constant 0 : index
    %0 = vector.load %arg1[%c0, %c0_0, %c0_1] : memref<4x8x64xf32, #tpu.memory_space<vmem>>, vector<4x8x64xf32>
    %c0_2 = arith.constant 0 : index
    %c0_3 = arith.constant 0 : index
    %c0_4 = arith.constant 0 : index
    %1 = vector.load %arg2[%c0_2, %c0_3, %c0_4] : memref<4x1x64xf32, #tpu.memory_space<vmem>>, vector<4x1x64xf32>
    %2 = vector.shape_cast %0 : vector<4x8x64xf32> to vector<32x64xf32>
    %3 = arith.truncf %2 : vector<32x64xf32> to vector<32x64xbf16>
    %c0_5 = arith.constant 0 : index
    %c0_6 = arith.constant 0 : index
    %4 = vector.load %arg3[%c0_5, %c0_6] : memref<64x64xbf16, #tpu.memory_space<vmem>>, vector<64x64xbf16>
    %cst = arith.constant dense<0.000000e+00> : vector<32x64xf32>
    %5 = tpu.matmul %3, %4, %cst {dimension_numbers = #tpu.dot_dimension_numbers<[1], [0], [0], [1], [0, 0, 1, 1], [], []>} : vector<32x64xbf16>, vector<64x64xbf16>, vector<32x64xf32> -> vector<32x64xf32>
    %c0_7 = arith.constant 0 : index
    %c0_8 = arith.constant 0 : index
    %6 = vector.load %arg4[%c0_7, %c0_8] : memref<1x64xf32, #tpu.memory_space<vmem>>, vector<1x64xf32>
    %7 = vector.broadcast %6 : vector<1x64xf32> to vector<32x64xf32>
    %8 = arith.addf %5, %7 : vector<32x64xf32>
    %9 = vector.shape_cast %8 : vector<32x64xf32> to vector<4x8x64xf32>
    %10 = vector.broadcast %1 : vector<4x1x64xf32> to vector<4x8x64xf32>
    %11 = arith.mulf %9, %10 : vector<4x8x64xf32>
    %c0_9 = arith.constant 0 : index
    %c0_10 = arith.constant 0 : index
    %12 = vector.load %arg5[%c0_9, %c0_10] : memref<1x64xf32, #tpu.memory_space<vmem>>, vector<1x64xf32>
    %c0_11 = arith.constant 0 : index
    %c0_12 = arith.constant 0 : index
    %13 = vector.load %arg6[%c0_11, %c0_12] : memref<1x64xf32, #tpu.memory_space<vmem>>, vector<1x64xf32>
    %cst_13 = arith.constant dense<0.000000e+00> : vector<4x8xf32>
    %14 = vector.multi_reduction <add>, %11, %cst_13 [2] : vector<4x8x64xf32> to vector<4x8xf32>
    %15 = vector.shape_cast %14 : vector<4x8xf32> to vector<4x8x1xf32>
    %cst_14 = arith.constant 6.400000e+01 : f32
    %16 = vector.broadcast %cst_14 : f32 to vector<4x8x1xf32>
    %17 = arith.divf %15, %16 : vector<4x8x1xf32>
    %18 = vector.broadcast %17 : vector<4x8x1xf32> to vector<4x8x64xf32>
    %19 = arith.subf %11, %18 : vector<4x8x64xf32>
    %20 = arith.mulf %19, %19 : vector<4x8x64xf32>
    %cst_15 = arith.constant dense<0.000000e+00> : vector<4x8xf32>
    %21 = vector.multi_reduction <add>, %20, %cst_15 [2] : vector<4x8x64xf32> to vector<4x8xf32>
    %22 = vector.shape_cast %21 : vector<4x8xf32> to vector<4x8x1xf32>
    %cst_16 = arith.constant 6.400000e+01 : f32
    %23 = vector.broadcast %cst_16 : f32 to vector<4x8x1xf32>
    %24 = arith.divf %22, %23 : vector<4x8x1xf32>
    %25 = vector.broadcast %17 : vector<4x8x1xf32> to vector<4x8x64xf32>
    %26 = arith.subf %11, %25 : vector<4x8x64xf32>
    %cst_17 = arith.constant 9.99999974E-6 : f32
    %27 = vector.broadcast %cst_17 : f32 to vector<4x8x1xf32>
    %28 = arith.addf %24, %27 : vector<4x8x1xf32>
    %29 = math.rsqrt %28 : vector<4x8x1xf32>
    %30 = vector.broadcast %29 : vector<4x8x1xf32> to vector<4x8x64xf32>
    %31 = arith.mulf %26, %30 : vector<4x8x64xf32>
    %32 = vector.shape_cast %12 : vector<1x64xf32> to vector<1x1x64xf32>
    %33 = vector.broadcast %32 : vector<1x1x64xf32> to vector<4x8x64xf32>
    %34 = arith.mulf %31, %33 : vector<4x8x64xf32>
    %35 = vector.shape_cast %13 : vector<1x64xf32> to vector<1x1x64xf32>
    %36 = vector.broadcast %35 : vector<1x1x64xf32> to vector<4x8x64xf32>
    %37 = arith.addf %34, %36 : vector<4x8x64xf32>
    %38 = vector.shape_cast %37 : vector<4x8x64xf32> to vector<32x64xf32>
    %39 = arith.truncf %38 : vector<32x64xf32> to vector<32x64xbf16>
    %c0_18 = arith.constant 0 : index
    %c0_19 = arith.constant 0 : index
    %40 = vector.load %arg7[%c0_18, %c0_19] : memref<64x192xbf16, #tpu.memory_space<vmem>>, vector<64x192xbf16>
    %cst_20 = arith.constant dense<0.000000e+00> : vector<32x192xf32>
    %41 = tpu.matmul %39, %40, %cst_20 {dimension_numbers = #tpu.dot_dimension_numbers<[1], [0], [0], [1], [0, 0, 1, 1], [], []>} : vector<32x64xbf16>, vector<64x192xbf16>, vector<32x192xf32> -> vector<32x192xf32>
    %c0_21 = arith.constant 0 : index
    %c0_22 = arith.constant 0 : index
    %42 = vector.load %arg8[%c0_21, %c0_22] : memref<1x192xf32, #tpu.memory_space<vmem>>, vector<1x192xf32>
    %43 = vector.broadcast %42 : vector<1x192xf32> to vector<32x192xf32>
    %44 = arith.addf %41, %43 : vector<32x192xf32>
    %45 = vector.shape_cast %44 : vector<32x192xf32> to vector<4x8x192xf32>
    %cst_23 = arith.constant 0.000000e+00 : f32
    %46 = vector.broadcast %cst_23 : f32 to vector<32x64xf32>
    %47 = vector.extract_strided_slice %45 {offsets = [0, 0, 0], sizes = [4, 8, 16], strides = [1, 1, 1]} : vector<4x8x192xf32> to vector<4x8x16xf32>
    %48 = arith.truncf %47 : vector<4x8x16xf32> to vector<4x8x16xbf16>
    %49 = vector.extract_strided_slice %45 {offsets = [0, 0, 64], sizes = [4, 8, 16], strides = [1, 1, 1]} : vector<4x8x192xf32> to vector<4x8x16xf32>
    %50 = arith.truncf %49 : vector<4x8x16xf32> to vector<4x8x16xbf16>
    %51 = vector.extract_strided_slice %45 {offsets = [0, 0, 128], sizes = [4, 8, 16], strides = [1, 1, 1]} : vector<4x8x192xf32> to vector<4x8x16xf32>
    %52 = arith.truncf %51 : vector<4x8x16xf32> to vector<4x8x16xbf16>
    "tpu.trace_start"() <{level = 10 : i32, message = "bqd,bkd->bqk"}> : () -> ()
    %cst_24 = arith.constant dense<0.000000e+00> : vector<4x8x8xf32>
    %53 = tpu.matmul %48, %50, %cst_24 {dimension_numbers = #tpu.dot_dimension_numbers<[2], [2], [1], [1], [0, 0, 0, 1, 1, 1], [0], [0]>} : vector<4x8x16xbf16>, vector<4x8x16xbf16>, vector<4x8x8xf32> -> vector<4x8x8xf32>
    "tpu.trace_stop"() : () -> ()
    %cst_25 = arith.constant dense<0xFF800000> : vector<4x8xf32>
    %54 = vector.multi_reduction <maximumf>, %53, %cst_25 [2] : vector<4x8x8xf32> to vector<4x8xf32>
    %55 = vector.shape_cast %54 : vector<4x8xf32> to vector<4x8x1xf32>
    %56 = vector.broadcast %55 : vector<4x8x1xf32> to vector<4x8x8xf32>
    %57 = arith.subf %53, %56 : vector<4x8x8xf32>
    %58 = math.exp %57 : vector<4x8x8xf32>
    %cst_26 = arith.constant dense<0.000000e+00> : vector<4x8xf32>
    %59 = vector.multi_reduction <add>, %58, %cst_26 [2] : vector<4x8x8xf32> to vector<4x8xf32>
    %60 = vector.shape_cast %59 : vector<4x8xf32> to vector<4x8x1xf32>
    %61 = tpu.reciprocal %60 {approx = true} : vector<4x8x1xf32> -> vector<4x8x1xf32>
    %62 = vector.broadcast %61 : vector<4x8x1xf32> to vector<4x8x8xf32>
    %63 = arith.mulf %58, %62 : vector<4x8x8xf32>
    %64 = arith.truncf %63 : vector<4x8x8xf32> to vector<4x8x8xbf16>
    "tpu.trace_start"() <{level = 10 : i32, message = "bqk,bkd->bqd"}> : () -> ()
    %cst_27 = arith.constant dense<0.000000e+00> : vector<4x8x16xf32>
    %65 = tpu.matmul %64, %52, %cst_27 {dimension_numbers = #tpu.dot_dimension_numbers<[2], [1], [1], [2], [0, 0, 0, 1, 1, 2], [0], [0]>} : vector<4x8x8xbf16>, vector<4x8x16xbf16>, vector<4x8x16xf32> -> vector<4x8x16xf32>
    "tpu.trace_stop"() : () -> ()
    %66 = vector.shape_cast %65 : vector<4x8x16xf32> to vector<32x16xf32>
    %67 = arith.truncf %66 : vector<32x16xf32> to vector<32x16xbf16>
    %c0_28 = arith.constant 0 : index
    %c0_29 = arith.constant 0 : index
    %c0_30 = arith.constant 0 : index
    %68 = vector.load %arg9[%c0_28, %c0_29, %c0_30] : memref<4x16x64xbf16, #tpu.memory_space<vmem>>, vector<1x16x64xbf16>
    %69 = vector.shape_cast %68 : vector<1x16x64xbf16> to vector<16x64xbf16>
    %cst_31 = arith.constant dense<0.000000e+00> : vector<32x64xf32>
    %70 = tpu.matmul %67, %69, %cst_31 {dimension_numbers = #tpu.dot_dimension_numbers<[1], [0], [0], [1], [0, 0, 1, 1], [], []>} : vector<32x16xbf16>, vector<16x64xbf16>, vector<32x64xf32> -> vector<32x64xf32>
    %71 = arith.addf %46, %70 : vector<32x64xf32>
    %72 = vector.extract_strided_slice %45 {offsets = [0, 0, 16], sizes = [4, 8, 16], strides = [1, 1, 1]} : vector<4x8x192xf32> to vector<4x8x16xf32>
    %73 = arith.truncf %72 : vector<4x8x16xf32> to vector<4x8x16xbf16>
    %74 = vector.extract_strided_slice %45 {offsets = [0, 0, 80], sizes = [4, 8, 16], strides = [1, 1, 1]} : vector<4x8x192xf32> to vector<4x8x16xf32>
    %75 = arith.truncf %74 : vector<4x8x16xf32> to vector<4x8x16xbf16>
    %76 = vector.extract_strided_slice %45 {offsets = [0, 0, 144], sizes = [4, 8, 16], strides = [1, 1, 1]} : vector<4x8x192xf32> to vector<4x8x16xf32>
    %77 = arith.truncf %76 : vector<4x8x16xf32> to vector<4x8x16xbf16>
    "tpu.trace_start"() <{level = 10 : i32, message = "bqd,bkd->bqk"}> : () -> ()
    %cst_32 = arith.constant dense<0.000000e+00> : vector<4x8x8xf32>
    %78 = tpu.matmul %73, %75, %cst_32 {dimension_numbers = #tpu.dot_dimension_numbers<[2], [2], [1], [1], [0, 0, 0, 1, 1, 1], [0], [0]>} : vector<4x8x16xbf16>, vector<4x8x16xbf16>, vector<4x8x8xf32> -> vector<4x8x8xf32>
    "tpu.trace_stop"() : () -> ()
    %cst_33 = arith.constant dense<0xFF800000> : vector<4x8xf32>
    %79 = vector.multi_reduction <maximumf>, %78, %cst_33 [2] : vector<4x8x8xf32> to vector<4x8xf32>
    %80 = vector.shape_cast %79 : vector<4x8xf32> to vector<4x8x1xf32>
    %81 = vector.broadcast %80 : vector<4x8x1xf32> to vector<4x8x8xf32>
    %82 = arith.subf %78, %81 : vector<4x8x8xf32>
    %83 = math.exp %82 : vector<4x8x8xf32>
    %cst_34 = arith.constant dense<0.000000e+00> : vector<4x8xf32>
    %84 = vector.multi_reduction <add>, %83, %cst_34 [2] : vector<4x8x8xf32> to vector<4x8xf32>
    %85 = vector.shape_cast %84 : vector<4x8xf32> to vector<4x8x1xf32>
    %86 = tpu.reciprocal %85 {approx = true} : vector<4x8x1xf32> -> vector<4x8x1xf32>
    %87 = vector.broadcast %86 : vector<4x8x1xf32> to vector<4x8x8xf32>
    %88 = arith.mulf %83, %87 : vector<4x8x8xf32>
    %89 = arith.truncf %88 : vector<4x8x8xf32> to vector<4x8x8xbf16>
    "tpu.trace_start"() <{level = 10 : i32, message = "bqk,bkd->bqd"}> : () -> ()
    %cst_35 = arith.constant dense<0.000000e+00> : vector<4x8x16xf32>
    %90 = tpu.matmul %89, %77, %cst_35 {dimension_numbers = #tpu.dot_dimension_numbers<[2], [1], [1], [2], [0, 0, 0, 1, 1, 2], [0], [0]>} : vector<4x8x8xbf16>, vector<4x8x16xbf16>, vector<4x8x16xf32> -> vector<4x8x16xf32>
    "tpu.trace_stop"() : () -> ()
    %91 = vector.shape_cast %90 : vector<4x8x16xf32> to vector<32x16xf32>
    %92 = arith.truncf %91 : vector<32x16xf32> to vector<32x16xbf16>
    %c1 = arith.constant 1 : index
    %c0_36 = arith.constant 0 : index
    %c0_37 = arith.constant 0 : index
    %93 = vector.load %arg9[%c1, %c0_36, %c0_37] : memref<4x16x64xbf16, #tpu.memory_space<vmem>>, vector<1x16x64xbf16>
    %94 = vector.shape_cast %93 : vector<1x16x64xbf16> to vector<16x64xbf16>
    %cst_38 = arith.constant dense<0.000000e+00> : vector<32x64xf32>
    %95 = tpu.matmul %92, %94, %cst_38 {dimension_numbers = #tpu.dot_dimension_numbers<[1], [0], [0], [1], [0, 0, 1, 1], [], []>} : vector<32x16xbf16>, vector<16x64xbf16>, vector<32x64xf32> -> vector<32x64xf32>
    %96 = arith.addf %71, %95 : vector<32x64xf32>
    %97 = vector.extract_strided_slice %45 {offsets = [0, 0, 32], sizes = [4, 8, 16], strides = [1, 1, 1]} : vector<4x8x192xf32> to vector<4x8x16xf32>
    %98 = arith.truncf %97 : vector<4x8x16xf32> to vector<4x8x16xbf16>
    %99 = vector.extract_strided_slice %45 {offsets = [0, 0, 96], sizes = [4, 8, 16], strides = [1, 1, 1]} : vector<4x8x192xf32> to vector<4x8x16xf32>
    %100 = arith.truncf %99 : vector<4x8x16xf32> to vector<4x8x16xbf16>
    %101 = vector.extract_strided_slice %45 {offsets = [0, 0, 160], sizes = [4, 8, 16], strides = [1, 1, 1]} : vector<4x8x192xf32> to vector<4x8x16xf32>
    %102 = arith.truncf %101 : vector<4x8x16xf32> to vector<4x8x16xbf16>
    "tpu.trace_start"() <{level = 10 : i32, message = "bqd,bkd->bqk"}> : () -> ()
    %cst_39 = arith.constant dense<0.000000e+00> : vector<4x8x8xf32>
    %103 = tpu.matmul %98, %100, %cst_39 {dimension_numbers = #tpu.dot_dimension_numbers<[2], [2], [1], [1], [0, 0, 0, 1, 1, 1], [0], [0]>} : vector<4x8x16xbf16>, vector<4x8x16xbf16>, vector<4x8x8xf32> -> vector<4x8x8xf32>
    "tpu.trace_stop"() : () -> ()
    %cst_40 = arith.constant dense<0xFF800000> : vector<4x8xf32>
    %104 = vector.multi_reduction <maximumf>, %103, %cst_40 [2] : vector<4x8x8xf32> to vector<4x8xf32>
    %105 = vector.shape_cast %104 : vector<4x8xf32> to vector<4x8x1xf32>
    %106 = vector.broadcast %105 : vector<4x8x1xf32> to vector<4x8x8xf32>
    %107 = arith.subf %103, %106 : vector<4x8x8xf32>
    %108 = math.exp %107 : vector<4x8x8xf32>
    %cst_41 = arith.constant dense<0.000000e+00> : vector<4x8xf32>
    %109 = vector.multi_reduction <add>, %108, %cst_41 [2] : vector<4x8x8xf32> to vector<4x8xf32>
    %110 = vector.shape_cast %109 : vector<4x8xf32> to vector<4x8x1xf32>
    %111 = tpu.reciprocal %110 {approx = true} : vector<4x8x1xf32> -> vector<4x8x1xf32>
    %112 = vector.broadcast %111 : vector<4x8x1xf32> to vector<4x8x8xf32>
    %113 = arith.mulf %108, %112 : vector<4x8x8xf32>
    %114 = arith.truncf %113 : vector<4x8x8xf32> to vector<4x8x8xbf16>
    "tpu.trace_start"() <{level = 10 : i32, message = "bqk,bkd->bqd"}> : () -> ()
    %cst_42 = arith.constant dense<0.000000e+00> : vector<4x8x16xf32>
    %115 = tpu.matmul %114, %102, %cst_42 {dimension_numbers = #tpu.dot_dimension_numbers<[2], [1], [1], [2], [0, 0, 0, 1, 1, 2], [0], [0]>} : vector<4x8x8xbf16>, vector<4x8x16xbf16>, vector<4x8x16xf32> -> vector<4x8x16xf32>
    "tpu.trace_stop"() : () -> ()
    %116 = vector.shape_cast %115 : vector<4x8x16xf32> to vector<32x16xf32>
    %117 = arith.truncf %116 : vector<32x16xf32> to vector<32x16xbf16>
    %c2 = arith.constant 2 : index
    %c0_43 = arith.constant 0 : index
    %c0_44 = arith.constant 0 : index
    %118 = vector.load %arg9[%c2, %c0_43, %c0_44] : memref<4x16x64xbf16, #tpu.memory_space<vmem>>, vector<1x16x64xbf16>
    %119 = vector.shape_cast %118 : vector<1x16x64xbf16> to vector<16x64xbf16>
    %cst_45 = arith.constant dense<0.000000e+00> : vector<32x64xf32>
    %120 = tpu.matmul %117, %119, %cst_45 {dimension_numbers = #tpu.dot_dimension_numbers<[1], [0], [0], [1], [0, 0, 1, 1], [], []>} : vector<32x16xbf16>, vector<16x64xbf16>, vector<32x64xf32> -> vector<32x64xf32>
    %121 = arith.addf %96, %120 : vector<32x64xf32>
    %122 = vector.extract_strided_slice %45 {offsets = [0, 0, 48], sizes = [4, 8, 16], strides = [1, 1, 1]} : vector<4x8x192xf32> to vector<4x8x16xf32>
    %123 = arith.truncf %122 : vector<4x8x16xf32> to vector<4x8x16xbf16>
    %124 = vector.extract_strided_slice %45 {offsets = [0, 0, 112], sizes = [4, 8, 16], strides = [1, 1, 1]} : vector<4x8x192xf32> to vector<4x8x16xf32>
    %125 = arith.truncf %124 : vector<4x8x16xf32> to vector<4x8x16xbf16>
    %126 = vector.extract_strided_slice %45 {offsets = [0, 0, 176], sizes = [4, 8, 16], strides = [1, 1, 1]} : vector<4x8x192xf32> to vector<4x8x16xf32>
    %127 = arith.truncf %126 : vector<4x8x16xf32> to vector<4x8x16xbf16>
    "tpu.trace_start"() <{level = 10 : i32, message = "bqd,bkd->bqk"}> : () -> ()
    %cst_46 = arith.constant dense<0.000000e+00> : vector<4x8x8xf32>
    %128 = tpu.matmul %123, %125, %cst_46 {dimension_numbers = #tpu.dot_dimension_numbers<[2], [2], [1], [1], [0, 0, 0, 1, 1, 1], [0], [0]>} : vector<4x8x16xbf16>, vector<4x8x16xbf16>, vector<4x8x8xf32> -> vector<4x8x8xf32>
    "tpu.trace_stop"() : () -> ()
    %cst_47 = arith.constant dense<0xFF800000> : vector<4x8xf32>
    %129 = vector.multi_reduction <maximumf>, %128, %cst_47 [2] : vector<4x8x8xf32> to vector<4x8xf32>
    %130 = vector.shape_cast %129 : vector<4x8xf32> to vector<4x8x1xf32>
    %131 = vector.broadcast %130 : vector<4x8x1xf32> to vector<4x8x8xf32>
    %132 = arith.subf %128, %131 : vector<4x8x8xf32>
    %133 = math.exp %132 : vector<4x8x8xf32>
    %cst_48 = arith.constant dense<0.000000e+00> : vector<4x8xf32>
    %134 = vector.multi_reduction <add>, %133, %cst_48 [2] : vector<4x8x8xf32> to vector<4x8xf32>
    %135 = vector.shape_cast %134 : vector<4x8xf32> to vector<4x8x1xf32>
    %136 = tpu.reciprocal %135 {approx = true} : vector<4x8x1xf32> -> vector<4x8x1xf32>
    %137 = vector.broadcast %136 : vector<4x8x1xf32> to vector<4x8x8xf32>
    %138 = arith.mulf %133, %137 : vector<4x8x8xf32>
    %139 = arith.truncf %138 : vector<4x8x8xf32> to vector<4x8x8xbf16>
    "tpu.trace_start"() <{level = 10 : i32, message = "bqk,bkd->bqd"}> : () -> ()
    %cst_49 = arith.constant dense<0.000000e+00> : vector<4x8x16xf32>
    %140 = tpu.matmul %139, %127, %cst_49 {dimension_numbers = #tpu.dot_dimension_numbers<[2], [1], [1], [2], [0, 0, 0, 1, 1, 2], [0], [0]>} : vector<4x8x8xbf16>, vector<4x8x16xbf16>, vector<4x8x16xf32> -> vector<4x8x16xf32>
    "tpu.trace_stop"() : () -> ()
    %141 = vector.shape_cast %140 : vector<4x8x16xf32> to vector<32x16xf32>
    %142 = arith.truncf %141 : vector<32x16xf32> to vector<32x16xbf16>
    %c3 = arith.constant 3 : index
    %c0_50 = arith.constant 0 : index
    %c0_51 = arith.constant 0 : index
    %143 = vector.load %arg9[%c3, %c0_50, %c0_51] : memref<4x16x64xbf16, #tpu.memory_space<vmem>>, vector<1x16x64xbf16>
    %144 = vector.shape_cast %143 : vector<1x16x64xbf16> to vector<16x64xbf16>
    %cst_52 = arith.constant dense<0.000000e+00> : vector<32x64xf32>
    %145 = tpu.matmul %142, %144, %cst_52 {dimension_numbers = #tpu.dot_dimension_numbers<[1], [0], [0], [1], [0, 0, 1, 1], [], []>} : vector<32x16xbf16>, vector<16x64xbf16>, vector<32x64xf32> -> vector<32x64xf32>
    %146 = arith.addf %121, %145 : vector<32x64xf32>
    %147 = vector.shape_cast %11 : vector<4x8x64xf32> to vector<32x64xf32>
    %148 = arith.addf %147, %146 : vector<32x64xf32>
    %c0_53 = arith.constant 0 : index
    %c0_54 = arith.constant 0 : index
    %149 = vector.load %arg10[%c0_53, %c0_54] : memref<1x64xf32, #tpu.memory_space<vmem>>, vector<1x64xf32>
    %150 = vector.broadcast %149 : vector<1x64xf32> to vector<32x64xf32>
    %151 = arith.addf %148, %150 : vector<32x64xf32>
    %c0_55 = arith.constant 0 : index
    %c0_56 = arith.constant 0 : index
    %152 = vector.load %arg11[%c0_55, %c0_56] : memref<1x64xf32, #tpu.memory_space<vmem>>, vector<1x64xf32>
    %c0_57 = arith.constant 0 : index
    %c0_58 = arith.constant 0 : index
    %153 = vector.load %arg12[%c0_57, %c0_58] : memref<1x64xf32, #tpu.memory_space<vmem>>, vector<1x64xf32>
    %cst_59 = arith.constant dense<0.000000e+00> : vector<32xf32>
    %154 = vector.multi_reduction <add>, %151, %cst_59 [1] : vector<32x64xf32> to vector<32xf32>
    %155 = vector.shape_cast %154 : vector<32xf32> to vector<32x1xf32>
    %cst_60 = arith.constant 6.400000e+01 : f32
    %156 = vector.broadcast %cst_60 : f32 to vector<32x1xf32>
    %157 = arith.divf %155, %156 : vector<32x1xf32>
    %158 = vector.broadcast %157 : vector<32x1xf32> to vector<32x64xf32>
    %159 = arith.subf %151, %158 : vector<32x64xf32>
    %160 = arith.mulf %159, %159 : vector<32x64xf32>
    %cst_61 = arith.constant dense<0.000000e+00> : vector<32xf32>
    %161 = vector.multi_reduction <add>, %160, %cst_61 [1] : vector<32x64xf32> to vector<32xf32>
    %162 = vector.shape_cast %161 : vector<32xf32> to vector<32x1xf32>
    %cst_62 = arith.constant 6.400000e+01 : f32
    %163 = vector.broadcast %cst_62 : f32 to vector<32x1xf32>
    %164 = arith.divf %162, %163 : vector<32x1xf32>
    %165 = vector.broadcast %157 : vector<32x1xf32> to vector<32x64xf32>
    %166 = arith.subf %151, %165 : vector<32x64xf32>
    %cst_63 = arith.constant 9.99999974E-6 : f32
    %167 = vector.broadcast %cst_63 : f32 to vector<32x1xf32>
    %168 = arith.addf %164, %167 : vector<32x1xf32>
    %169 = math.rsqrt %168 : vector<32x1xf32>
    %170 = vector.broadcast %169 : vector<32x1xf32> to vector<32x64xf32>
    %171 = arith.mulf %166, %170 : vector<32x64xf32>
    %172 = vector.broadcast %152 : vector<1x64xf32> to vector<32x64xf32>
    %173 = arith.mulf %171, %172 : vector<32x64xf32>
    %174 = vector.broadcast %153 : vector<1x64xf32> to vector<32x64xf32>
    %175 = arith.addf %173, %174 : vector<32x64xf32>
    %176 = arith.truncf %175 : vector<32x64xf32> to vector<32x64xbf16>
    %c0_64 = arith.constant 0 : index
    %c0_65 = arith.constant 0 : index
    %177 = vector.load %arg16[%c0_64, %c0_65] : memref<1x64xf32, #tpu.memory_space<vmem>>, vector<1x64xf32>
    %178 = vector.broadcast %177 : vector<1x64xf32> to vector<32x64xf32>
    %179 = arith.addf %151, %178 : vector<32x64xf32>
    %c0_66 = arith.constant 0 : index
    %c0_67 = arith.constant 0 : index
    %180 = vector.load %arg13[%c0_66, %c0_67] : memref<64x256xbf16, #tpu.memory_space<vmem>>, vector<64x128xbf16>
    %cst_68 = arith.constant dense<0.000000e+00> : vector<32x128xf32>
    %181 = tpu.matmul %176, %180, %cst_68 {dimension_numbers = #tpu.dot_dimension_numbers<[1], [0], [0], [1], [0, 0, 1, 1], [], []>} : vector<32x64xbf16>, vector<64x128xbf16>, vector<32x128xf32> -> vector<32x128xf32>
    %c0_69 = arith.constant 0 : index
    %c0_70 = arith.constant 0 : index
    %182 = vector.load %arg14[%c0_69, %c0_70] : memref<1x256xf32, #tpu.memory_space<vmem>>, vector<1x128xf32>
    %183 = vector.broadcast %182 : vector<1x128xf32> to vector<32x128xf32>
    %184 = arith.addf %181, %183 : vector<32x128xf32>
    %185 = arith.mulf %184, %184 : vector<32x128xf32>
    %186 = arith.mulf %184, %185 : vector<32x128xf32>
    %cst_71 = arith.constant 4.471500e-02 : f32
    %187 = vector.broadcast %cst_71 : f32 to vector<32x128xf32>
    %188 = arith.mulf %187, %186 : vector<32x128xf32>
    %189 = arith.addf %184, %188 : vector<32x128xf32>
    %cst_72 = arith.constant 0.797884583 : f32
    %190 = vector.broadcast %cst_72 : f32 to vector<32x128xf32>
    %191 = arith.mulf %190, %189 : vector<32x128xf32>
    %192 = math.tanh %191 : vector<32x128xf32>
    %cst_73 = arith.constant 1.000000e+00 : f32
    %193 = vector.broadcast %cst_73 : f32 to vector<32x128xf32>
    %194 = arith.addf %193, %192 : vector<32x128xf32>
    %cst_74 = arith.constant 5.000000e-01 : f32
    %195 = vector.broadcast %cst_74 : f32 to vector<32x128xf32>
    %196 = arith.mulf %195, %194 : vector<32x128xf32>
    %197 = arith.mulf %184, %196 : vector<32x128xf32>
    %198 = arith.truncf %197 : vector<32x128xf32> to vector<32x128xbf16>
    %c0_75 = arith.constant 0 : index
    %c0_76 = arith.constant 0 : index
    %199 = vector.load %arg15[%c0_75, %c0_76] : memref<256x64xbf16, #tpu.memory_space<vmem>>, vector<128x64xbf16>
    %cst_77 = arith.constant dense<0.000000e+00> : vector<32x64xf32>
    %200 = tpu.matmul %198, %199, %cst_77 {dimension_numbers = #tpu.dot_dimension_numbers<[1], [0], [0], [1], [0, 0, 1, 1], [], []>} : vector<32x128xbf16>, vector<128x64xbf16>, vector<32x64xf32> -> vector<32x64xf32>
    %201 = arith.addf %179, %200 : vector<32x64xf32>
    %c0_78 = arith.constant 0 : index
    %c128 = arith.constant 128 : index
    %202 = vector.load %arg13[%c0_78, %c128] : memref<64x256xbf16, #tpu.memory_space<vmem>>, vector<64x128xbf16>
    %cst_79 = arith.constant dense<0.000000e+00> : vector<32x128xf32>
    %203 = tpu.matmul %176, %202, %cst_79 {dimension_numbers = #tpu.dot_dimension_numbers<[1], [0], [0], [1], [0, 0, 1, 1], [], []>} : vector<32x64xbf16>, vector<64x128xbf16>, vector<32x128xf32> -> vector<32x128xf32>
    %c0_80 = arith.constant 0 : index
    %c128_81 = arith.constant 128 : index
    %204 = vector.load %arg14[%c0_80, %c128_81] : memref<1x256xf32, #tpu.memory_space<vmem>>, vector<1x128xf32>
    %205 = vector.broadcast %204 : vector<1x128xf32> to vector<32x128xf32>
    %206 = arith.addf %203, %205 : vector<32x128xf32>
    %207 = arith.mulf %206, %206 : vector<32x128xf32>
    %208 = arith.mulf %206, %207 : vector<32x128xf32>
    %cst_82 = arith.constant 4.471500e-02 : f32
    %209 = vector.broadcast %cst_82 : f32 to vector<32x128xf32>
    %210 = arith.mulf %209, %208 : vector<32x128xf32>
    %211 = arith.addf %206, %210 : vector<32x128xf32>
    %cst_83 = arith.constant 0.797884583 : f32
    %212 = vector.broadcast %cst_83 : f32 to vector<32x128xf32>
    %213 = arith.mulf %212, %211 : vector<32x128xf32>
    %214 = math.tanh %213 : vector<32x128xf32>
    %cst_84 = arith.constant 1.000000e+00 : f32
    %215 = vector.broadcast %cst_84 : f32 to vector<32x128xf32>
    %216 = arith.addf %215, %214 : vector<32x128xf32>
    %cst_85 = arith.constant 5.000000e-01 : f32
    %217 = vector.broadcast %cst_85 : f32 to vector<32x128xf32>
    %218 = arith.mulf %217, %216 : vector<32x128xf32>
    %219 = arith.mulf %206, %218 : vector<32x128xf32>
    %220 = arith.truncf %219 : vector<32x128xf32> to vector<32x128xbf16>
    %c128_86 = arith.constant 128 : index
    %c0_87 = arith.constant 0 : index
    %221 = vector.load %arg15[%c128_86, %c0_87] : memref<256x64xbf16, #tpu.memory_space<vmem>>, vector<128x64xbf16>
    %cst_88 = arith.constant dense<0.000000e+00> : vector<32x64xf32>
    %222 = tpu.matmul %220, %221, %cst_88 {dimension_numbers = #tpu.dot_dimension_numbers<[1], [0], [0], [1], [0, 0, 1, 1], [], []>} : vector<32x128xbf16>, vector<128x64xbf16>, vector<32x64xf32> -> vector<32x64xf32>
    %223 = arith.addf %201, %222 : vector<32x64xf32>
    %224 = vector.shape_cast %223 : vector<32x64xf32> to vector<4x8x64xf32>
    %c0_89 = arith.constant 0 : index
    %c0_90 = arith.constant 0 : index
    %c0_91 = arith.constant 0 : index
    %225 = vector.load %arg17[%c0_89, %c0_90, %c0_91] : memref<4x1x128xf32, #tpu.memory_space<vmem>>, vector<4x1x128xf32>
    %c0_92 = arith.constant 0 : index
    %c0_93 = arith.constant 0 : index
    %c0_94 = arith.constant 0 : index
    %226 = vector.load %arg18[%c0_92, %c0_93, %c0_94] : memref<4x1x128xf32, #tpu.memory_space<vmem>>, vector<4x1x128xf32>
    %227 = tpu.concatenate %224, %224 in 2 : vector<4x8x64xf32>, vector<4x8x64xf32> -> vector<4x8x128xf32>
    %228 = vector.broadcast %225 : vector<4x1x128xf32> to vector<4x8x128xf32>
    %229 = arith.mulf %227, %228 : vector<4x8x128xf32>
    %230 = vector.broadcast %226 : vector<4x1x128xf32> to vector<4x8x128xf32>
    %231 = arith.addf %229, %230 : vector<4x8x128xf32>
    %c0_95 = arith.constant 0 : index
    %c0_96 = arith.constant 0 : index
    %c0_97 = arith.constant 0 : index
    %232 = vector.load %arg20[%c0_95, %c0_96, %c0_97] : memref<4x8x128xf32, #tpu.memory_space<vmem>>, vector<4x8x128xf32>
    tpu.vector_store %arg20[%c0_95, %c0_96, %c0_97], %231 {strides = array<i32>} : memref<4x8x128xf32, #tpu.memory_space<vmem>>, vector<4x8x128xf32>,
    %233 = vector.extract_strided_slice %225 {offsets = [0, 0, 64], sizes = [4, 1, 64], strides = [1, 1, 1]} : vector<4x1x128xf32> to vector<4x1x64xf32>
    %234 = vector.extract_strided_slice %225 {offsets = [0, 0, 0], sizes = [4, 1, 64], strides = [1, 1, 1]} : vector<4x1x128xf32> to vector<4x1x64xf32>
    %235 = arith.subf %233, %234 : vector<4x1x64xf32>
    %236 = vector.extract_strided_slice %226 {offsets = [0, 0, 64], sizes = [4, 1, 64], strides = [1, 1, 1]} : vector<4x1x128xf32> to vector<4x1x64xf32>
    %237 = vector.extract_strided_slice %226 {offsets = [0, 0, 0], sizes = [4, 1, 64], strides = [1, 1, 1]} : vector<4x1x128xf32> to vector<4x1x64xf32>
    %238 = arith.subf %236, %237 : vector<4x1x64xf32>
    %239 = vector.broadcast %235 : vector<4x1x64xf32> to vector<4x8x64xf32>
    %240 = arith.mulf %224, %239 : vector<4x8x64xf32>
    %241 = vector.broadcast %238 : vector<4x1x64xf32> to vector<4x8x64xf32>
    %242 = arith.addf %240, %241 : vector<4x8x64xf32>
    %243 = arith.negf %242 : vector<4x8x64xf32>
    %244 = math.exp %243 : vector<4x8x64xf32>
    %cst_98 = arith.constant 1.000000e+00 : f32
    %245 = vector.broadcast %cst_98 : f32 to vector<4x8x64xf32>
    %246 = arith.addf %245, %244 : vector<4x8x64xf32>
    %247 = arith.divf %245, %246 : vector<4x8x64xf32>
    %c0_99 = arith.constant 0 : index
    %c0_100 = arith.constant 0 : index
    %c0_101 = arith.constant 0 : index
    %248 = vector.load %arg19[%c0_99, %c0_100, %c0_101] : memref<4x8x64xf32, #tpu.memory_space<vmem>>, vector<4x8x64xf32>
    tpu.vector_store %arg19[%c0_99, %c0_100, %c0_101], %247 {strides = array<i32>} : memref<4x8x64xf32, #tpu.memory_space<vmem>>, vector<4x8x64xf32>,
    return
  }
  func.func @transform_0(%arg0: i32) -> (i32, i32, i32) {
    %c0_i32 = arith.constant 0 : i32
    %c0_i32_0 = arith.constant 0 : i32
    %c0_i32_1 = arith.constant 0 : i32
    return %arg0, %c0_i32, %c0_i32_0 : i32, i32, i32
  }
  func.func @transform_1(%arg0: i32) -> (i32, i32, i32) {
    %c0_i32 = arith.constant 0 : i32
    %c0_i32_0 = arith.constant 0 : i32
    %c0_i32_1 = arith.constant 0 : i32
    return %arg0, %c0_i32, %c0_i32_0 : i32, i32, i32
  }
  func.func @transform_2(%arg0: i32) -> (i32, i32) {
    %c0_i32 = arith.constant 0 : i32
    %c0_i32_0 = arith.constant 0 : i32
    %c0_i32_1 = arith.constant 0 : i32
    return %c0_i32, %c0_i32_0 : i32, i32
  }
  func.func @transform_3(%arg0: i32) -> (i32, i32) {
    %c0_i32 = arith.constant 0 : i32
    %c0_i32_0 = arith.constant 0 : i32
    %c0_i32_1 = arith.constant 0 : i32
    return %c0_i32, %c0_i32_0 : i32, i32
  }
  func.func @transform_4(%arg0: i32) -> (i32, i32) {
    %c0_i32 = arith.constant 0 : i32
    %c0_i32_0 = arith.constant 0 : i32
    %c0_i32_1 = arith.constant 0 : i32
    return %c0_i32, %c0_i32_0 : i32, i32
  }
  func.func @transform_5(%arg0: i32) -> (i32, i32) {
    %c0_i32 = arith.constant 0 : i32
    %c0_i32_0 = arith.constant 0 : i32
    %c0_i32_1 = arith.constant 0 : i32
    return %c0_i32, %c0_i32_0 : i32, i32
  }
  func.func @transform_6(%arg0: i32) -> (i32, i32) {
    %c0_i32 = arith.constant 0 : i32
    %c0_i32_0 = arith.constant 0 : i32
    %c0_i32_1 = arith.constant 0 : i32
    return %c0_i32, %c0_i32_0 : i32, i32
  }
  func.func @transform_7(%arg0: i32) -> (i32, i32) {
    %c0_i32 = arith.constant 0 : i32
    %c0_i32_0 = arith.constant 0 : i32
    %c0_i32_1 = arith.constant 0 : i32
    return %c0_i32, %c0_i32_0 : i32, i32
  }
  func.func @transform_8(%arg0: i32) -> (i32, i32, i32) {
    %c0_i32 = arith.constant 0 : i32
    %c0_i32_0 = arith.constant 0 : i32
    %c0_i32_1 = arith.constant 0 : i32
    %c0_i32_2 = arith.constant 0 : i32
    return %c0_i32, %c0_i32_0, %c0_i32_1 : i32, i32, i32
  }
  func.func @transform_9(%arg0: i32) -> (i32, i32) {
    %c0_i32 = arith.constant 0 : i32
    %c0_i32_0 = arith.constant 0 : i32
    %c0_i32_1 = arith.constant 0 : i32
    return %c0_i32, %c0_i32_0 : i32, i32
  }
  func.func @transform_10(%arg0: i32) -> (i32, i32) {
    %c0_i32 = arith.constant 0 : i32
    %c0_i32_0 = arith.constant 0 : i32
    %c0_i32_1 = arith.constant 0 : i32
    return %c0_i32, %c0_i32_0 : i32, i32
  }
  func.func @transform_11(%arg0: i32) -> (i32, i32) {
    %c0_i32 = arith.constant 0 : i32
    %c0_i32_0 = arith.constant 0 : i32
    %c0_i32_1 = arith.constant 0 : i32
    return %c0_i32, %c0_i32_0 : i32, i32
  }
  func.func @transform_12(%arg0: i32) -> (i32, i32) {
    %c0_i32 = arith.constant 0 : i32
    %c0_i32_0 = arith.constant 0 : i32
    %c0_i32_1 = arith.constant 0 : i32
    return %c0_i32, %c0_i32_0 : i32, i32
  }
  func.func @transform_13(%arg0: i32) -> (i32, i32) {
    %c0_i32 = arith.constant 0 : i32
    %c0_i32_0 = arith.constant 0 : i32
    %c0_i32_1 = arith.constant 0 : i32
    return %c0_i32, %c0_i32_0 : i32, i32
  }
  func.func @transform_14(%arg0: i32) -> (i32, i32) {
    %c0_i32 = arith.constant 0 : i32
    %c0_i32_0 = arith.constant 0 : i32
    %c0_i32_1 = arith.constant 0 : i32
    return %c0_i32, %c0_i32_0 : i32, i32
  }
  func.func @transform_15(%arg0: i32) -> (i32, i32) {
    %c0_i32 = arith.constant 0 : i32
    %c0_i32_0 = arith.constant 0 : i32
    %c0_i32_1 = arith.constant 0 : i32
    return %c0_i32, %c0_i32_0 : i32, i32
  }
  func.func @transform_16(%arg0: i32) -> (i32, i32, i32) {
    %c0_i32 = arith.constant 0 : i32
    %c0_i32_0 = arith.constant 0 : i32
    %c0_i32_1 = arith.constant 0 : i32
    return %arg0, %c0_i32, %c0_i32_0 : i32, i32, i32
  }
  func.func @transform_17(%arg0: i32) -> (i32, i32, i32) {
    %c0_i32 = arith.constant 0 : i32
    %c0_i32_0 = arith.constant 0 : i32
    %c0_i32_1 = arith.constant 0 : i32
    return %arg0, %c0_i32, %c0_i32_0 : i32, i32, i32
  }
  func.func @transform_18(%arg0: i32) -> (i32, i32, i32) {
    %c0_i32 = arith.constant 0 : i32
    %c0_i32_0 = arith.constant 0 : i32
    %c0_i32_1 = arith.constant 0 : i32
    return %arg0, %c0_i32, %c0_i32_0 : i32, i32, i32
  }
  func.func @transform_19(%arg0: i32) -> (i32, i32, i32) {
    %c0_i32 = arith.constant 0 : i32
    %c0_i32_0 = arith.constant 0 : i32
    %c0_i32_1 = arith.constant 0 : i32
    return %arg0, %c0_i32, %c0_i32_0 : i32, i32, i32
  }
}

module attributes {stable_mosaic.version = 11 : i64} {
  func.func @clip_cross_attn_kernel(%arg0: i32, %arg1: memref<4x8x64xf32, #tpu.memory_space<vmem>>, %arg2: memref<4x1x64xf32, #tpu.memory_space<vmem>>, %arg3: memref<64x64xbf16, #tpu.memory_space<vmem>>, %arg4: memref<1x64xf32, #tpu.memory_space<vmem>>, %arg5: memref<1x64xf32, #tpu.memory_space<vmem>>, %arg6: memref<1x64xf32, #tpu.memory_space<vmem>>, %arg7: memref<64x192xbf16, #tpu.memory_space<vmem>>, %arg8: memref<1x192xf32, #tpu.memory_space<vmem>>, %arg9: memref<4x16x64xbf16, #tpu.memory_space<vmem>>, %arg10: memref<1x64xf32, #tpu.memory_space<vmem>>, %arg11: memref<1x64xf32, #tpu.memory_space<vmem>>, %arg12: memref<1x64xf32, #tpu.memory_space<vmem>>, %arg13: memref<64x256xbf16, #tpu.memory_space<vmem>>, %arg14: memref<1x256xf32, #tpu.memory_space<vmem>>, %arg15: memref<256x64xbf16, #tpu.memory_space<vmem>>, %arg16: memref<1x64xf32, #tpu.memory_space<vmem>>, %arg17: memref<4x1x128xf32, #tpu.memory_space<vmem>>, %arg18: memref<4x1x128xf32, #tpu.memory_space<vmem>>, %arg19: memref<4x8x64xf32, #tpu.memory_space<vmem>>, %arg20: memref<4x8x128xf32, #tpu.memory_space<vmem>>) attributes {dimension_semantics = [#tpu.dimension_semantics<parallel>], iteration_bounds = array<i64: 2>, scalar_prefetch = 0 : i64, scratch_operands = 0 : i64, tpu.core_type = #tpu.core_type<tc>, window_params = [{transform_indices = @transform_0, window_bounds = array<i64: 4, 8, 64>}, {transform_indices = @transform_1, window_bounds = array<i64: 4, 1, 64>}, {pipeline_mode = #tpu.pipeline_mode<synchronous>, transform_indices = @transform_2, window_bounds = array<i64: 64, 64>}, {pipeline_mode = #tpu.pipeline_mode<synchronous>, transform_indices = @transform_3, window_bounds = array<i64: 1, 64>}, {pipeline_mode = #tpu.pipeline_mode<synchronous>, transform_indices = @transform_4, window_bounds = array<i64: 1, 64>}, {pipeline_mode = #tpu.pipeline_mode<synchronous>, transform_indices = @transform_5, window_bounds = array<i64: 1, 64>}, {pipeline_mode = #tpu.pipeline_mode<synchronous>, transform_indices = @transform_6, window_bounds = array<i64: 64, 192>}, {pipeline_mode = #tpu.pipeline_mode<synchronous>, transform_indices = @transform_7, window_bounds = array<i64: 1, 192>}, {pipeline_mode = #tpu.pipeline_mode<synchronous>, transform_indices = @transform_8, window_bounds = array<i64: 4, 16, 64>}, {pipeline_mode = #tpu.pipeline_mode<synchronous>, transform_indices = @transform_9, window_bounds = array<i64: 1, 64>}, {pipeline_mode = #tpu.pipeline_mode<synchronous>, transform_indices = @transform_10, window_bounds = array<i64: 1, 64>}, {pipeline_mode = #tpu.pipeline_mode<synchronous>, transform_indices = @transform_11, window_bounds = array<i64: 1, 64>}, {pipeline_mode = #tpu.pipeline_mode<synchronous>, transform_indices = @transform_12, window_bounds = array<i64: 64, 256>}, {pipeline_mode = #tpu.pipeline_mode<synchronous>, transform_indices = @transform_13, window_bounds = array<i64: 1, 256>}, {pipeline_mode = #tpu.pipeline_mode<synchronous>, transform_indices = @transform_14, window_bounds = array<i64: 256, 64>}, {pipeline_mode = #tpu.pipeline_mode<synchronous>, transform_indices = @transform_15, window_bounds = array<i64: 1, 64>}, {transform_indices = @transform_16, window_bounds = array<i64: 4, 1, 128>}, {transform_indices = @transform_17, window_bounds = array<i64: 4, 1, 128>}, {transform_indices = @transform_18, window_bounds = array<i64: 4, 8, 64>}, {transform_indices = @transform_19, window_bounds = array<i64: 4, 8, 128>}]} {
    %c0 = arith.constant 0 : index
    %c0_0 = arith.constant 0 : index
    %c0_1 = arith.constant 0 : index
    %0 = vector.load %arg1[%c0, %c0_0, %c0_1] : memref<4x8x64xf32, #tpu.memory_space<vmem>>, vector<4x8x64xf32>
    %c0_2 = arith.constant 0 : index
    %c0_3 = arith.constant 0 : index
    %c0_4 = arith.constant 0 : index
    %1 = vector.load %arg2[%c0_2, %c0_3, %c0_4] : memref<4x1x64xf32, #tpu.memory_space<vmem>>, vector<4x1x64xf32>
    %2 = vector.shape_cast %0 : vector<4x8x64xf32> to vector<32x64xf32>
    %3 = arith.truncf %2 : vector<32x64xf32> to vector<32x64xbf16>
    %c0_5 = arith.constant 0 : index
    %c0_6 = arith.constant 0 : index
    %4 = vector.load %arg3[%c0_5, %c0_6] : memref<64x64xbf16, #tpu.memory_space<vmem>>, vector<64x64xbf16>
    %cst = arith.constant dense<0.000000e+00> : vector<32x64xf32>
    %5 = tpu.matmul %3, %4, %cst {dimension_numbers = #tpu.dot_dimension_numbers<[1], [0], [0], [1], [0, 0, 1, 1], [], []>} : vector<32x64xbf16>, vector<64x64xbf16>, vector<32x64xf32> -> vector<32x64xf32>
    %c0_7 = arith.constant 0 : index
    %c0_8 = arith.constant 0 : index
    %6 = vector.load %arg4[%c0_7, %c0_8] : memref<1x64xf32, #tpu.memory_space<vmem>>, vector<1x64xf32>
    %7 = vector.broadcast %6 : vector<1x64xf32> to vector<32x64xf32>
    %8 = arith.addf %5, %7 : vector<32x64xf32>
    %9 = vector.shape_cast %8 : vector<32x64xf32> to vector<4x8x64xf32>
    %10 = vector.broadcast %1 : vector<4x1x64xf32> to vector<4x8x64xf32>
    %11 = arith.mulf %9, %10 : vector<4x8x64xf32>
    %c0_9 = arith.constant 0 : index
    %c0_10 = arith.constant 0 : index
    %12 = vector.load %arg5[%c0_9, %c0_10] : memref<1x64xf32, #tpu.memory_space<vmem>>, vector<1x64xf32>
    %c0_11 = arith.constant 0 : index
    %c0_12 = arith.constant 0 : index
    %13 = vector.load %arg6[%c0_11, %c0_12] : memref<1x64xf32, #tpu.memory_space<vmem>>, vector<1x64xf32>
    %cst_13 = arith.constant dense<0.000000e+00> : vector<4x8xf32>
    %14 = vector.multi_reduction <add>, %11, %cst_13 [2] : vector<4x8x64xf32> to vector<4x8xf32>
    %15 = vector.shape_cast %14 : vector<4x8xf32> to vector<4x8x1xf32>
    %cst_14 = arith.constant 6.400000e+01 : f32
    %16 = vector.broadcast %cst_14 : f32 to vector<4x8x1xf32>
    %17 = arith.divf %15, %16 : vector<4x8x1xf32>
    %18 = vector.broadcast %17 : vector<4x8x1xf32> to vector<4x8x64xf32>
    %19 = arith.subf %11, %18 : vector<4x8x64xf32>
    %20 = arith.mulf %19, %19 : vector<4x8x64xf32>
    %cst_15 = arith.constant dense<0.000000e+00> : vector<4x8xf32>
    %21 = vector.multi_reduction <add>, %20, %cst_15 [2] : vector<4x8x64xf32> to vector<4x8xf32>
    %22 = vector.shape_cast %21 : vector<4x8xf32> to vector<4x8x1xf32>
    %cst_16 = arith.constant 6.400000e+01 : f32
    %23 = vector.broadcast %cst_16 : f32 to vector<4x8x1xf32>
    %24 = arith.divf %22, %23 : vector<4x8x1xf32>
    %25 = vector.broadcast %17 : vector<4x8x1xf32> to vector<4x8x64xf32>
    %26 = arith.subf %11, %25 : vector<4x8x64xf32>
    %cst_17 = arith.constant 9.99999974E-6 : f32
    %27 = vector.broadcast %cst_17 : f32 to vector<4x8x1xf32>
    %28 = arith.addf %24, %27 : vector<4x8x1xf32>
    %29 = math.rsqrt %28 : vector<4x8x1xf32>
    %30 = vector.broadcast %29 : vector<4x8x1xf32> to vector<4x8x64xf32>
    %31 = arith.mulf %26, %30 : vector<4x8x64xf32>
    %32 = vector.shape_cast %12 : vector<1x64xf32> to vector<1x1x64xf32>
    %33 = vector.broadcast %32 : vector<1x1x64xf32> to vector<4x8x64xf32>
    %34 = arith.mulf %31, %33 : vector<4x8x64xf32>
    %35 = vector.shape_cast %13 : vector<1x64xf32> to vector<1x1x64xf32>
    %36 = vector.broadcast %35 : vector<1x1x64xf32> to vector<4x8x64xf32>
    %37 = arith.addf %34, %36 : vector<4x8x64xf32>
    %38 = vector.shape_cast %37 : vector<4x8x64xf32> to vector<32x64xf32>
    %39 = arith.truncf %38 : vector<32x64xf32> to vector<32x64xbf16>
    %c0_18 = arith.constant 0 : index
    %c0_19 = arith.constant 0 : index
    %40 = vector.load %arg7[%c0_18, %c0_19] : memref<64x192xbf16, #tpu.memory_space<vmem>>, vector<64x192xbf16>
    %cst_20 = arith.constant dense<0.000000e+00> : vector<32x192xf32>
    %41 = tpu.matmul %39, %40, %cst_20 {dimension_numbers = #tpu.dot_dimension_numbers<[1], [0], [0], [1], [0, 0, 1, 1], [], []>} : vector<32x64xbf16>, vector<64x192xbf16>, vector<32x192xf32> -> vector<32x192xf32>
    %c0_21 = arith.constant 0 : index
    %c0_22 = arith.constant 0 : index
    %42 = vector.load %arg8[%c0_21, %c0_22] : memref<1x192xf32, #tpu.memory_space<vmem>>, vector<1x192xf32>
    %43 = vector.broadcast %42 : vector<1x192xf32> to vector<32x192xf32>
    %44 = arith.addf %41, %43 : vector<32x192xf32>
    %45 = vector.shape_cast %44 : vector<32x192xf32> to vector<4x8x192xf32>
    %cst_23 = arith.constant 0.000000e+00 : f32
    %46 = vector.broadcast %cst_23 : f32 to vector<32x64xf32>
    %47 = vector.extract_strided_slice %45 {offsets = [0, 0, 0], sizes = [4, 8, 16], strides = [1, 1, 1]} : vector<4x8x192xf32> to vector<4x8x16xf32>
    %48 = arith.truncf %47 : vector<4x8x16xf32> to vector<4x8x16xbf16>
    %49 = vector.extract_strided_slice %45 {offsets = [0, 0, 64], sizes = [4, 8, 16], strides = [1, 1, 1]} : vector<4x8x192xf32> to vector<4x8x16xf32>
    %50 = arith.truncf %49 : vector<4x8x16xf32> to vector<4x8x16xbf16>
    %51 = vector.extract_strided_slice %45 {offsets = [0, 0, 128], sizes = [4, 8, 16], strides = [1, 1, 1]} : vector<4x8x192xf32> to vector<4x8x16xf32>
    %52 = arith.truncf %51 : vector<4x8x16xf32> to vector<4x8x16xbf16>
    "tpu.trace_start"() <{level = 10 : i32, message = "bqd,bkd->bqk"}> : () -> ()
    %cst_24 = arith.constant dense<0.000000e+00> : vector<4x8x8xf32>
    %53 = tpu.matmul %48, %50, %cst_24 {dimension_numbers = #tpu.dot_dimension_numbers<[2], [2], [1], [1], [0, 0, 0, 1, 1, 1], [0], [0]>} : vector<4x8x16xbf16>, vector<4x8x16xbf16>, vector<4x8x8xf32> -> vector<4x8x8xf32>
    "tpu.trace_stop"() : () -> ()
    %cst_25 = arith.constant dense<0xFF800000> : vector<4x8xf32>
    %54 = vector.multi_reduction <maximumf>, %53, %cst_25 [2] : vector<4x8x8xf32> to vector<4x8xf32>
    %55 = vector.shape_cast %54 : vector<4x8xf32> to vector<4x8x1xf32>
    %56 = vector.broadcast %55 : vector<4x8x1xf32> to vector<4x8x8xf32>
    %57 = arith.subf %53, %56 : vector<4x8x8xf32>
    %58 = math.exp %57 : vector<4x8x8xf32>
    %cst_26 = arith.constant dense<0.000000e+00> : vector<4x8xf32>
    %59 = vector.multi_reduction <add>, %58, %cst_26 [2] : vector<4x8x8xf32> to vector<4x8xf32>
    %60 = vector.shape_cast %59 : vector<4x8xf32> to vector<4x8x1xf32>
    %61 = tpu.reciprocal %60 {approx = true} : vector<4x8x1xf32> -> vector<4x8x1xf32>
    %62 = vector.broadcast %61 : vector<4x8x1xf32> to vector<4x8x8xf32>
    %63 = arith.mulf %58, %62 : vector<4x8x8xf32>
    %64 = arith.truncf %63 : vector<4x8x8xf32> to vector<4x8x8xbf16>
    "tpu.trace_start"() <{level = 10 : i32, message = "bqk,bkd->bqd"}> : () -> ()
    %cst_27 = arith.constant dense<0.000000e+00> : vector<4x8x16xf32>
    %65 = tpu.matmul %64, %52, %cst_27 {dimension_numbers = #tpu.dot_dimension_numbers<[2], [1], [1], [2], [0, 0, 0, 1, 1, 2], [0], [0]>} : vector<4x8x8xbf16>, vector<4x8x16xbf16>, vector<4x8x16xf32> -> vector<4x8x16xf32>
    "tpu.trace_stop"() : () -> ()
    %66 = vector.shape_cast %65 : vector<4x8x16xf32> to vector<32x16xf32>
    %67 = arith.truncf %66 : vector<32x16xf32> to vector<32x16xbf16>
    %c0_28 = arith.constant 0 : index
    %c0_29 = arith.constant 0 : index
    %c0_30 = arith.constant 0 : index
    %68 = vector.load %arg9[%c0_28, %c0_29, %c0_30] : memref<4x16x64xbf16, #tpu.memory_space<vmem>>, vector<1x16x64xbf16>
    %69 = vector.shape_cast %68 : vector<1x16x64xbf16> to vector<16x64xbf16>
    %cst_31 = arith.constant dense<0.000000e+00> : vector<32x64xf32>
    %70 = tpu.matmul %67, %69, %cst_31 {dimension_numbers = #tpu.dot_dimension_numbers<[1], [0], [0], [1], [0, 0, 1, 1], [], []>} : vector<32x16xbf16>, vector<16x64xbf16>, vector<32x64xf32> -> vector<32x64xf32>
    %71 = arith.addf %46, %70 : vector<32x64xf32>
    %72 = vector.extract_strided_slice %45 {offsets = [0, 0, 16], sizes = [4, 8, 16], strides = [1, 1, 1]} : vector<4x8x192xf32> to vector<4x8x16xf32>
    %73 = arith.truncf %72 : vector<4x8x16xf32> to vector<4x8x16xbf16>
    %74 = vector.extract_strided_slice %45 {offsets = [0, 0, 80], sizes = [4, 8, 16], strides = [1, 1, 1]} : vector<4x8x192xf32> to vector<4x8x16xf32>
    %75 = arith.truncf %74 : vector<4x8x16xf32> to vector<4x8x16xbf16>
    %76 = vector.extract_strided_slice %45 {offsets = [0, 0, 144], sizes = [4, 8, 16], strides = [1, 1, 1]} : vector<4x8x192xf32> to vector<4x8x16xf32>
    %77 = arith.truncf %76 : vector<4x8x16xf32> to vector<4x8x16xbf16>
    "tpu.trace_start"() <{level = 10 : i32, message = "bqd,bkd->bqk"}> : () -> ()
    %cst_32 = arith.constant dense<0.000000e+00> : vector<4x8x8xf32>
    %78 = tpu.matmul %73, %75, %cst_32 {dimension_numbers = #tpu.dot_dimension_numbers<[2], [2], [1], [1], [0, 0, 0, 1, 1, 1], [0], [0]>} : vector<4x8x16xbf16>, vector<4x8x16xbf16>, vector<4x8x8xf32> -> vector<4x8x8xf32>
    "tpu.trace_stop"() : () -> ()
    %cst_33 = arith.constant dense<0xFF800000> : vector<4x8xf32>
    %79 = vector.multi_reduction <maximumf>, %78, %cst_33 [2] : vector<4x8x8xf32> to vector<4x8xf32>
    %80 = vector.shape_cast %79 : vector<4x8xf32> to vector<4x8x1xf32>
    %81 = vector.broadcast %80 : vector<4x8x1xf32> to vector<4x8x8xf32>
    %82 = arith.subf %78, %81 : vector<4x8x8xf32>
    %83 = math.exp %82 : vector<4x8x8xf32>
    %cst_34 = arith.constant dense<0.000000e+00> : vector<4x8xf32>
    %84 = vector.multi_reduction <add>, %83, %cst_34 [2] : vector<4x8x8xf32> to vector<4x8xf32>
    %85 = vector.shape_cast %84 : vector<4x8xf32> to vector<4x8x1xf32>
    %86 = tpu.reciprocal %85 {approx = true} : vector<4x8x1xf32> -> vector<4x8x1xf32>
    %87 = vector.broadcast %86 : vector<4x8x1xf32> to vector<4x8x8xf32>
    %88 = arith.mulf %83, %87 : vector<4x8x8xf32>
    %89 = arith.truncf %88 : vector<4x8x8xf32> to vector<4x8x8xbf16>
    "tpu.trace_start"() <{level = 10 : i32, message = "bqk,bkd->bqd"}> : () -> ()
    %cst_35 = arith.constant dense<0.000000e+00> : vector<4x8x16xf32>
    %90 = tpu.matmul %89, %77, %cst_35 {dimension_numbers = #tpu.dot_dimension_numbers<[2], [1], [1], [2], [0, 0, 0, 1, 1, 2], [0], [0]>} : vector<4x8x8xbf16>, vector<4x8x16xbf16>, vector<4x8x16xf32> -> vector<4x8x16xf32>
    "tpu.trace_stop"() : () -> ()
    %91 = vector.shape_cast %90 : vector<4x8x16xf32> to vector<32x16xf32>
    %92 = arith.truncf %91 : vector<32x16xf32> to vector<32x16xbf16>
    %c1 = arith.constant 1 : index
    %c0_36 = arith.constant 0 : index
    %c0_37 = arith.constant 0 : index
    %93 = vector.load %arg9[%c1, %c0_36, %c0_37] : memref<4x16x64xbf16, #tpu.memory_space<vmem>>, vector<1x16x64xbf16>
    %94 = vector.shape_cast %93 : vector<1x16x64xbf16> to vector<16x64xbf16>
    %cst_38 = arith.constant dense<0.000000e+00> : vector<32x64xf32>
    %95 = tpu.matmul %92, %94, %cst_38 {dimension_numbers = #tpu.dot_dimension_numbers<[1], [0], [0], [1], [0, 0, 1, 1], [], []>} : vector<32x16xbf16>, vector<16x64xbf16>, vector<32x64xf32> -> vector<32x64xf32>
    %96 = arith.addf %71, %95 : vector<32x64xf32>
    %97 = vector.extract_strided_slice %45 {offsets = [0, 0, 32], sizes = [4, 8, 16], strides = [1, 1, 1]} : vector<4x8x192xf32> to vector<4x8x16xf32>
    %98 = arith.truncf %97 : vector<4x8x16xf32> to vector<4x8x16xbf16>
    %99 = vector.extract_strided_slice %45 {offsets = [0, 0, 96], sizes = [4, 8, 16], strides = [1, 1, 1]} : vector<4x8x192xf32> to vector<4x8x16xf32>
    %100 = arith.truncf %99 : vector<4x8x16xf32> to vector<4x8x16xbf16>
    %101 = vector.extract_strided_slice %45 {offsets = [0, 0, 160], sizes = [4, 8, 16], strides = [1, 1, 1]} : vector<4x8x192xf32> to vector<4x8x16xf32>
    %102 = arith.truncf %101 : vector<4x8x16xf32> to vector<4x8x16xbf16>
    "tpu.trace_start"() <{level = 10 : i32, message = "bqd,bkd->bqk"}> : () -> ()
    %cst_39 = arith.constant dense<0.000000e+00> : vector<4x8x8xf32>
    %103 = tpu.matmul %98, %100, %cst_39 {dimension_numbers = #tpu.dot_dimension_numbers<[2], [2], [1], [1], [0, 0, 0, 1, 1, 1], [0], [0]>} : vector<4x8x16xbf16>, vector<4x8x16xbf16>, vector<4x8x8xf32> -> vector<4x8x8xf32>
    "tpu.trace_stop"() : () -> ()
    %cst_40 = arith.constant dense<0xFF800000> : vector<4x8xf32>
    %104 = vector.multi_reduction <maximumf>, %103, %cst_40 [2] : vector<4x8x8xf32> to vector<4x8xf32>
    %105 = vector.shape_cast %104 : vector<4x8xf32> to vector<4x8x1xf32>
    %106 = vector.broadcast %105 : vector<4x8x1xf32> to vector<4x8x8xf32>
    %107 = arith.subf %103, %106 : vector<4x8x8xf32>
    %108 = math.exp %107 : vector<4x8x8xf32>
    %cst_41 = arith.constant dense<0.000000e+00> : vector<4x8xf32>
    %109 = vector.multi_reduction <add>, %108, %cst_41 [2] : vector<4x8x8xf32> to vector<4x8xf32>
    %110 = vector.shape_cast %109 : vector<4x8xf32> to vector<4x8x1xf32>
    %111 = tpu.reciprocal %110 {approx = true} : vector<4x8x1xf32> -> vector<4x8x1xf32>
    %112 = vector.broadcast %111 : vector<4x8x1xf32> to vector<4x8x8xf32>
    %113 = arith.mulf %108, %112 : vector<4x8x8xf32>
    %114 = arith.truncf %113 : vector<4x8x8xf32> to vector<4x8x8xbf16>
    "tpu.trace_start"() <{level = 10 : i32, message = "bqk,bkd->bqd"}> : () -> ()
    %cst_42 = arith.constant dense<0.000000e+00> : vector<4x8x16xf32>
    %115 = tpu.matmul %114, %102, %cst_42 {dimension_numbers = #tpu.dot_dimension_numbers<[2], [1], [1], [2], [0, 0, 0, 1, 1, 2], [0], [0]>} : vector<4x8x8xbf16>, vector<4x8x16xbf16>, vector<4x8x16xf32> -> vector<4x8x16xf32>
    "tpu.trace_stop"() : () -> ()
    %116 = vector.shape_cast %115 : vector<4x8x16xf32> to vector<32x16xf32>
    %117 = arith.truncf %116 : vector<32x16xf32> to vector<32x16xbf16>
    %c2 = arith.constant 2 : index
    %c0_43 = arith.constant 0 : index
    %c0_44 = arith.constant 0 : index
    %118 = vector.load %arg9[%c2, %c0_43, %c0_44] : memref<4x16x64xbf16, #tpu.memory_space<vmem>>, vector<1x16x64xbf16>
    %119 = vector.shape_cast %118 : vector<1x16x64xbf16> to vector<16x64xbf16>
    %cst_45 = arith.constant dense<0.000000e+00> : vector<32x64xf32>
    %120 = tpu.matmul %117, %119, %cst_45 {dimension_numbers = #tpu.dot_dimension_numbers<[1], [0], [0], [1], [0, 0, 1, 1], [], []>} : vector<32x16xbf16>, vector<16x64xbf16>, vector<32x64xf32> -> vector<32x64xf32>
    %121 = arith.addf %96, %120 : vector<32x64xf32>
    %122 = vector.extract_strided_slice %45 {offsets = [0, 0, 48], sizes = [4, 8, 16], strides = [1, 1, 1]} : vector<4x8x192xf32> to vector<4x8x16xf32>
    %123 = arith.truncf %122 : vector<4x8x16xf32> to vector<4x8x16xbf16>
    %124 = vector.extract_strided_slice %45 {offsets = [0, 0, 112], sizes = [4, 8, 16], strides = [1, 1, 1]} : vector<4x8x192xf32> to vector<4x8x16xf32>
    %125 = arith.truncf %124 : vector<4x8x16xf32> to vector<4x8x16xbf16>
    %126 = vector.extract_strided_slice %45 {offsets = [0, 0, 176], sizes = [4, 8, 16], strides = [1, 1, 1]} : vector<4x8x192xf32> to vector<4x8x16xf32>
    %127 = arith.truncf %126 : vector<4x8x16xf32> to vector<4x8x16xbf16>
    "tpu.trace_start"() <{level = 10 : i32, message = "bqd,bkd->bqk"}> : () -> ()
    %cst_46 = arith.constant dense<0.000000e+00> : vector<4x8x8xf32>
    %128 = tpu.matmul %123, %125, %cst_46 {dimension_numbers = #tpu.dot_dimension_numbers<[2], [2], [1], [1], [0, 0, 0, 1, 1, 1], [0], [0]>} : vector<4x8x16xbf16>, vector<4x8x16xbf16>, vector<4x8x8xf32> -> vector<4x8x8xf32>
    "tpu.trace_stop"() : () -> ()
    %cst_47 = arith.constant dense<0xFF800000> : vector<4x8xf32>
    %129 = vector.multi_reduction <maximumf>, %128, %cst_47 [2] : vector<4x8x8xf32> to vector<4x8xf32>
    %130 = vector.shape_cast %129 : vector<4x8xf32> to vector<4x8x1xf32>
    %131 = vector.broadcast %130 : vector<4x8x1xf32> to vector<4x8x8xf32>
    %132 = arith.subf %128, %131 : vector<4x8x8xf32>
    %133 = math.exp %132 : vector<4x8x8xf32>
    %cst_48 = arith.constant dense<0.000000e+00> : vector<4x8xf32>
    %134 = vector.multi_reduction <add>, %133, %cst_48 [2] : vector<4x8x8xf32> to vector<4x8xf32>
    %135 = vector.shape_cast %134 : vector<4x8xf32> to vector<4x8x1xf32>
    %136 = tpu.reciprocal %135 {approx = true} : vector<4x8x1xf32> -> vector<4x8x1xf32>
    %137 = vector.broadcast %136 : vector<4x8x1xf32> to vector<4x8x8xf32>
    %138 = arith.mulf %133, %137 : vector<4x8x8xf32>
    %139 = arith.truncf %138 : vector<4x8x8xf32> to vector<4x8x8xbf16>
    "tpu.trace_start"() <{level = 10 : i32, message = "bqk,bkd->bqd"}> : () -> ()
    %cst_49 = arith.constant dense<0.000000e+00> : vector<4x8x16xf32>
    %140 = tpu.matmul %139, %127, %cst_49 {dimension_numbers = #tpu.dot_dimension_numbers<[2], [1], [1], [2], [0, 0, 0, 1, 1, 2], [0], [0]>} : vector<4x8x8xbf16>, vector<4x8x16xbf16>, vector<4x8x16xf32> -> vector<4x8x16xf32>
    "tpu.trace_stop"() : () -> ()
    %141 = vector.shape_cast %140 : vector<4x8x16xf32> to vector<32x16xf32>
    %142 = arith.truncf %141 : vector<32x16xf32> to vector<32x16xbf16>
    %c3 = arith.constant 3 : index
    %c0_50 = arith.constant 0 : index
    %c0_51 = arith.constant 0 : index
    %143 = vector.load %arg9[%c3, %c0_50, %c0_51] : memref<4x16x64xbf16, #tpu.memory_space<vmem>>, vector<1x16x64xbf16>
    %144 = vector.shape_cast %143 : vector<1x16x64xbf16> to vector<16x64xbf16>
    %cst_52 = arith.constant dense<0.000000e+00> : vector<32x64xf32>
    %145 = tpu.matmul %142, %144, %cst_52 {dimension_numbers = #tpu.dot_dimension_numbers<[1], [0], [0], [1], [0, 0, 1, 1], [], []>} : vector<32x16xbf16>, vector<16x64xbf16>, vector<32x64xf32> -> vector<32x64xf32>
    %146 = arith.addf %121, %145 : vector<32x64xf32>
    %147 = vector.shape_cast %11 : vector<4x8x64xf32> to vector<32x64xf32>
    %148 = arith.addf %147, %146 : vector<32x64xf32>
    %c0_53 = arith.constant 0 : index
    %c0_54 = arith.constant 0 : index
    %149 = vector.load %arg10[%c0_53, %c0_54] : memref<1x64xf32, #tpu.memory_space<vmem>>, vector<1x64xf32>
    %150 = vector.broadcast %149 : vector<1x64xf32> to vector<32x64xf32>
    %151 = arith.addf %148, %150 : vector<32x64xf32>
    %c0_55 = arith.constant 0 : index
    %c0_56 = arith.constant 0 : index
    %152 = vector.load %arg11[%c0_55, %c0_56] : memref<1x64xf32, #tpu.memory_space<vmem>>, vector<1x64xf32>
    %c0_57 = arith.constant 0 : index
    %c0_58 = arith.constant 0 : index
    %153 = vector.load %arg12[%c0_57, %c0_58] : memref<1x64xf32, #tpu.memory_space<vmem>>, vector<1x64xf32>
    %cst_59 = arith.constant dense<0.000000e+00> : vector<32xf32>
    %154 = vector.multi_reduction <add>, %151, %cst_59 [1] : vector<32x64xf32> to vector<32xf32>
    %155 = vector.shape_cast %154 : vector<32xf32> to vector<32x1xf32>
    %cst_60 = arith.constant 6.400000e+01 : f32
    %156 = vector.broadcast %cst_60 : f32 to vector<32x1xf32>
    %157 = arith.divf %155, %156 : vector<32x1xf32>
    %158 = vector.broadcast %157 : vector<32x1xf32> to vector<32x64xf32>
    %159 = arith.subf %151, %158 : vector<32x64xf32>
    %160 = arith.mulf %159, %159 : vector<32x64xf32>
    %cst_61 = arith.constant dense<0.000000e+00> : vector<32xf32>
    %161 = vector.multi_reduction <add>, %160, %cst_61 [1] : vector<32x64xf32> to vector<32xf32>
    %162 = vector.shape_cast %161 : vector<32xf32> to vector<32x1xf32>
    %cst_62 = arith.constant 6.400000e+01 : f32
    %163 = vector.broadcast %cst_62 : f32 to vector<32x1xf32>
    %164 = arith.divf %162, %163 : vector<32x1xf32>
    %165 = vector.broadcast %157 : vector<32x1xf32> to vector<32x64xf32>
    %166 = arith.subf %151, %165 : vector<32x64xf32>
    %cst_63 = arith.constant 9.99999974E-6 : f32
    %167 = vector.broadcast %cst_63 : f32 to vector<32x1xf32>
    %168 = arith.addf %164, %167 : vector<32x1xf32>
    %169 = math.rsqrt %168 : vector<32x1xf32>
    %170 = vector.broadcast %169 : vector<32x1xf32> to vector<32x64xf32>
    %171 = arith.mulf %166, %170 : vector<32x64xf32>
    %172 = vector.broadcast %152 : vector<1x64xf32> to vector<32x64xf32>
    %173 = arith.mulf %171, %172 : vector<32x64xf32>
    %174 = vector.broadcast %153 : vector<1x64xf32> to vector<32x64xf32>
    %175 = arith.addf %173, %174 : vector<32x64xf32>
    %176 = arith.truncf %175 : vector<32x64xf32> to vector<32x64xbf16>
    %c0_64 = arith.constant 0 : index
    %c0_65 = arith.constant 0 : index
    %177 = vector.load %arg16[%c0_64, %c0_65] : memref<1x64xf32, #tpu.memory_space<vmem>>, vector<1x64xf32>
    %178 = vector.broadcast %177 : vector<1x64xf32> to vector<32x64xf32>
    %179 = arith.addf %151, %178 : vector<32x64xf32>
    %c0_66 = arith.constant 0 : index
    %c0_67 = arith.constant 0 : index
    %180 = vector.load %arg13[%c0_66, %c0_67] : memref<64x256xbf16, #tpu.memory_space<vmem>>, vector<64x128xbf16>
    %cst_68 = arith.constant dense<0.000000e+00> : vector<32x128xf32>
    %181 = tpu.matmul %176, %180, %cst_68 {dimension_numbers = #tpu.dot_dimension_numbers<[1], [0], [0], [1], [0, 0, 1, 1], [], []>} : vector<32x64xbf16>, vector<64x128xbf16>, vector<32x128xf32> -> vector<32x128xf32>
    %c0_69 = arith.constant 0 : index
    %c0_70 = arith.constant 0 : index
    %182 = vector.load %arg14[%c0_69, %c0_70] : memref<1x256xf32, #tpu.memory_space<vmem>>, vector<1x128xf32>
    %183 = vector.broadcast %182 : vector<1x128xf32> to vector<32x128xf32>
    %184 = arith.addf %181, %183 : vector<32x128xf32>
    %185 = arith.mulf %184, %184 : vector<32x128xf32>
    %186 = arith.mulf %184, %185 : vector<32x128xf32>
    %cst_71 = arith.constant 4.471500e-02 : f32
    %187 = vector.broadcast %cst_71 : f32 to vector<32x128xf32>
    %188 = arith.mulf %187, %186 : vector<32x128xf32>
    %189 = arith.addf %184, %188 : vector<32x128xf32>
    %cst_72 = arith.constant 0.797884583 : f32
    %190 = vector.broadcast %cst_72 : f32 to vector<32x128xf32>
    %191 = arith.mulf %190, %189 : vector<32x128xf32>
    %192 = math.tanh %191 : vector<32x128xf32>
    %cst_73 = arith.constant 1.000000e+00 : f32
    %193 = vector.broadcast %cst_73 : f32 to vector<32x128xf32>
    %194 = arith.addf %193, %192 : vector<32x128xf32>
    %cst_74 = arith.constant 5.000000e-01 : f32
    %195 = vector.broadcast %cst_74 : f32 to vector<32x128xf32>
    %196 = arith.mulf %195, %194 : vector<32x128xf32>
    %197 = arith.mulf %184, %196 : vector<32x128xf32>
    %198 = arith.truncf %197 : vector<32x128xf32> to vector<32x128xbf16>
    %c0_75 = arith.constant 0 : index
    %c0_76 = arith.constant 0 : index
    %199 = vector.load %arg15[%c0_75, %c0_76] : memref<256x64xbf16, #tpu.memory_space<vmem>>, vector<128x64xbf16>
    %cst_77 = arith.constant dense<0.000000e+00> : vector<32x64xf32>
    %200 = tpu.matmul %198, %199, %cst_77 {dimension_numbers = #tpu.dot_dimension_numbers<[1], [0], [0], [1], [0, 0, 1, 1], [], []>} : vector<32x128xbf16>, vector<128x64xbf16>, vector<32x64xf32> -> vector<32x64xf32>
    %201 = arith.addf %179, %200 : vector<32x64xf32>
    %c0_78 = arith.constant 0 : index
    %c128 = arith.constant 128 : index
    %202 = vector.load %arg13[%c0_78, %c128] : memref<64x256xbf16, #tpu.memory_space<vmem>>, vector<64x128xbf16>
    %cst_79 = arith.constant dense<0.000000e+00> : vector<32x128xf32>
    %203 = tpu.matmul %176, %202, %cst_79 {dimension_numbers = #tpu.dot_dimension_numbers<[1], [0], [0], [1], [0, 0, 1, 1], [], []>} : vector<32x64xbf16>, vector<64x128xbf16>, vector<32x128xf32> -> vector<32x128xf32>
    %c0_80 = arith.constant 0 : index
    %c128_81 = arith.constant 128 : index
    %204 = vector.load %arg14[%c0_80, %c128_81] : memref<1x256xf32, #tpu.memory_space<vmem>>, vector<1x128xf32>
    %205 = vector.broadcast %204 : vector<1x128xf32> to vector<32x128xf32>
    %206 = arith.addf %203, %205 : vector<32x128xf32>
    %207 = arith.mulf %206, %206 : vector<32x128xf32>
    %208 = arith.mulf %206, %207 : vector<32x128xf32>
    %cst_82 = arith.constant 4.471500e-02 : f32
    %209 = vector.broadcast %cst_82 : f32 to vector<32x128xf32>
    %210 = arith.mulf %209, %208 : vector<32x128xf32>
    %211 = arith.addf %206, %210 : vector<32x128xf32>
    %cst_83 = arith.constant 0.797884583 : f32
    %212 = vector.broadcast %cst_83 : f32 to vector<32x128xf32>
    %213 = arith.mulf %212, %211 : vector<32x128xf32>
    %214 = math.tanh %213 : vector<32x128xf32>
    %cst_84 = arith.constant 1.000000e+00 : f32
    %215 = vector.broadcast %cst_84 : f32 to vector<32x128xf32>
    %216 = arith.addf %215, %214 : vector<32x128xf32>
    %cst_85 = arith.constant 5.000000e-01 : f32
    %217 = vector.broadcast %cst_85 : f32 to vector<32x128xf32>
    %218 = arith.mulf %217, %216 : vector<32x128xf32>
    %219 = arith.mulf %206, %218 : vector<32x128xf32>
    %220 = arith.truncf %219 : vector<32x128xf32> to vector<32x128xbf16>
    %c128_86 = arith.constant 128 : index
    %c0_87 = arith.constant 0 : index
    %221 = vector.load %arg15[%c128_86, %c0_87] : memref<256x64xbf16, #tpu.memory_space<vmem>>, vector<128x64xbf16>
    %cst_88 = arith.constant dense<0.000000e+00> : vector<32x64xf32>
    %222 = tpu.matmul %220, %221, %cst_88 {dimension_numbers = #tpu.dot_dimension_numbers<[1], [0], [0], [1], [0, 0, 1, 1], [], []>} : vector<32x128xbf16>, vector<128x64xbf16>, vector<32x64xf32> -> vector<32x64xf32>
    %223 = arith.addf %201, %222 : vector<32x64xf32>
    %224 = vector.shape_cast %223 : vector<32x64xf32> to vector<4x8x64xf32>
    %c0_89 = arith.constant 0 : index
    %c0_90 = arith.constant 0 : index
    %c0_91 = arith.constant 0 : index
    %225 = vector.load %arg17[%c0_89, %c0_90, %c0_91] : memref<4x1x128xf32, #tpu.memory_space<vmem>>, vector<4x1x128xf32>
    %c0_92 = arith.constant 0 : index
    %c0_93 = arith.constant 0 : index
    %c0_94 = arith.constant 0 : index
    %226 = vector.load %arg18[%c0_92, %c0_93, %c0_94] : memref<4x1x128xf32, #tpu.memory_space<vmem>>, vector<4x1x128xf32>
    %227 = tpu.concatenate %224, %224 in 2 : vector<4x8x64xf32>, vector<4x8x64xf32> -> vector<4x8x128xf32>
    %228 = vector.broadcast %225 : vector<4x1x128xf32> to vector<4x8x128xf32>
    %229 = arith.mulf %227, %228 : vector<4x8x128xf32>
    %230 = vector.broadcast %226 : vector<4x1x128xf32> to vector<4x8x128xf32>
    %231 = arith.addf %229, %230 : vector<4x8x128xf32>
    %c0_95 = arith.constant 0 : index
    %c0_96 = arith.constant 0 : index
    %c0_97 = arith.constant 0 : index
    %232 = vector.load %arg20[%c0_95, %c0_96, %c0_97] : memref<4x8x128xf32, #tpu.memory_space<vmem>>, vector<4x8x128xf32>
    tpu.vector_store %arg20[%c0_95, %c0_96, %c0_97], %231 {strides = array<i32>} : memref<4x8x128xf32, #tpu.memory_space<vmem>>, vector<4x8x128xf32>,
    %233 = vector.extract_strided_slice %225 {offsets = [0, 0, 64], sizes = [4, 1, 64], strides = [1, 1, 1]} : vector<4x1x128xf32> to vector<4x1x64xf32>
    %234 = vector.extract_strided_slice %225 {offsets = [0, 0, 0], sizes = [4, 1, 64], strides = [1, 1, 1]} : vector<4x1x128xf32> to vector<4x1x64xf32>
    %235 = arith.subf %233, %234 : vector<4x1x64xf32>
    %236 = vector.extract_strided_slice %226 {offsets = [0, 0, 64], sizes = [4, 1, 64], strides = [1, 1, 1]} : vector<4x1x128xf32> to vector<4x1x64xf32>
    %237 = vector.extract_strided_slice %226 {offsets = [0, 0, 0], sizes = [4, 1, 64], strides = [1, 1, 1]} : vector<4x1x128xf32> to vector<4x1x64xf32>
    %238 = arith.subf %236, %237 : vector<4x1x64xf32>
    %239 = vector.broadcast %235 : vector<4x1x64xf32> to vector<4x8x64xf32>
    %240 = arith.mulf %224, %239 : vector<4x8x64xf32>
    %241 = vector.broadcast %238 : vector<4x1x64xf32> to vector<4x8x64xf32>
    %242 = arith.addf %240, %241 : vector<4x8x64xf32>
    %243 = arith.negf %242 : vector<4x8x64xf32>
    %244 = math.exp %243 : vector<4x8x64xf32>
    %cst_98 = arith.constant 1.000000e+00 : f32
    %245 = vector.broadcast %cst_98 : f32 to vector<4x8x64xf32>
    %246 = arith.addf %245, %244 : vector<4x8x64xf32>
    %247 = arith.divf %245, %246 : vector<4x8x64xf32>
    %c0_99 = arith.constant 0 : index
    %c0_100 = arith.constant 0 : index
    %c0_101 = arith.constant 0 : index
    %248 = vector.load %arg19[%c0_99, %c0_100, %c0_101] : memref<4x8x64xf32, #tpu.memory_space<vmem>>, vector<4x8x64xf32>
    tpu.vector_store %arg19[%c0_99, %c0_100, %c0_101], %247 {strides = array<i32>} : memref<4x8x64xf32, #tpu.memory_space<vmem>>, vector<4x8x64xf32>,
    return
  }
  func.func @transform_0(%arg0: i32) -> (i32, i32, i32) {
    %c0_i32 = arith.constant 0 : i32
    %c0_i32_0 = arith.constant 0 : i32
    %c0_i32_1 = arith.constant 0 : i32
    return %arg0, %c0_i32, %c0_i32_0 : i32, i32, i32
  }
  func.func @transform_1(%arg0: i32) -> (i32, i32, i32) {
    %c0_i32 = arith.constant 0 : i32
    %c0_i32_0 = arith.constant 0 : i32
    %c0_i32_1 = arith.constant 0 : i32
    return %arg0, %c0_i32, %c0_i32_0 : i32, i32, i32
  }
  func.func @transform_2(%arg0: i32) -> (i32, i32) {
    %c0_i32 = arith.constant 0 : i32
    %c0_i32_0 = arith.constant 0 : i32
    %c0_i32_1 = arith.constant 0 : i32
    return %c0_i32, %c0_i32_0 : i32, i32
  }
  func.func @transform_3(%arg0: i32) -> (i32, i32) {
    %c0_i32 = arith.constant 0 : i32
    %c0_i32_0 = arith.constant 0 : i32
    %c0_i32_1 = arith.constant 0 : i32
    return %c0_i32, %c0_i32_0 : i32, i32
  }
  func.func @transform_4(%arg0: i32) -> (i32, i32) {
    %c0_i32 = arith.constant 0 : i32
    %c0_i32_0 = arith.constant 0 : i32
    %c0_i32_1 = arith.constant 0 : i32
    return %c0_i32, %c0_i32_0 : i32, i32
  }
  func.func @transform_5(%arg0: i32) -> (i32, i32) {
    %c0_i32 = arith.constant 0 : i32
    %c0_i32_0 = arith.constant 0 : i32
    %c0_i32_1 = arith.constant 0 : i32
    return %c0_i32, %c0_i32_0 : i32, i32
  }
  func.func @transform_6(%arg0: i32) -> (i32, i32) {
    %c0_i32 = arith.constant 0 : i32
    %c0_i32_0 = arith.constant 0 : i32
    %c0_i32_1 = arith.constant 0 : i32
    return %c0_i32, %c0_i32_0 : i32, i32
  }
  func.func @transform_7(%arg0: i32) -> (i32, i32) {
    %c0_i32 = arith.constant 0 : i32
    %c0_i32_0 = arith.constant 0 : i32
    %c0_i32_1 = arith.constant 0 : i32
    return %c0_i32, %c0_i32_0 : i32, i32
  }
  func.func @transform_8(%arg0: i32) -> (i32, i32, i32) {
    %c0_i32 = arith.constant 0 : i32
    %c0_i32_0 = arith.constant 0 : i32
    %c0_i32_1 = arith.constant 0 : i32
    %c0_i32_2 = arith.constant 0 : i32
    return %c0_i32, %c0_i32_0, %c0_i32_1 : i32, i32, i32
  }
  func.func @transform_9(%arg0: i32) -> (i32, i32) {
    %c0_i32 = arith.constant 0 : i32
    %c0_i32_0 = arith.constant 0 : i32
    %c0_i32_1 = arith.constant 0 : i32
    return %c0_i32, %c0_i32_0 : i32, i32
  }
  func.func @transform_10(%arg0: i32) -> (i32, i32) {
    %c0_i32 = arith.constant 0 : i32
    %c0_i32_0 = arith.constant 0 : i32
    %c0_i32_1 = arith.constant 0 : i32
    return %c0_i32, %c0_i32_0 : i32, i32
  }
  func.func @transform_11(%arg0: i32) -> (i32, i32) {
    %c0_i32 = arith.constant 0 : i32
    %c0_i32_0 = arith.constant 0 : i32
    %c0_i32_1 = arith.constant 0 : i32
    return %c0_i32, %c0_i32_0 : i32, i32
  }
  func.func @transform_12(%arg0: i32) -> (i32, i32) {
    %c0_i32 = arith.constant 0 : i32
    %c0_i32_0 = arith.constant 0 : i32
    %c0_i32_1 = arith.constant 0 : i32
    return %c0_i32, %c0_i32_0 : i32, i32
  }
  func.func @transform_13(%arg0: i32) -> (i32, i32) {
    %c0_i32 = arith.constant 0 : i32
    %c0_i32_0 = arith.constant 0 : i32
    %c0_i32_1 = arith.constant 0 : i32
    return %c0_i32, %c0_i32_0 : i32, i32
  }
  func.func @transform_14(%arg0: i32) -> (i32, i32) {
    %c0_i32 = arith.constant 0 : i32
    %c0_i32_0 = arith.constant 0 : i32
    %c0_i32_1 = arith.constant 0 : i32
    return %c0_i32, %c0_i32_0 : i32, i32
  }
  func.func @transform_15(%arg0: i32) -> (i32, i32) {
    %c0_i32 = arith.constant 0 : i32
    %c0_i32_0 = arith.constant 0 : i32
    %c0_i32_1 = arith.constant 0 : i32
    return %c0_i32, %c0_i32_0 : i32, i32
  }
  func.func @transform_16(%arg0: i32) -> (i32, i32, i32) {
    %c0_i32 = arith.constant 0 : i32
    %c0_i32_0 = arith.constant 0 : i32
    %c0_i32_1 = arith.constant 0 : i32
    return %arg0, %c0_i32, %c0_i32_0 : i32, i32, i32
  }
  func.func @transform_17(%arg0: i32) -> (i32, i32, i32) {
    %c0_i32 = arith.constant 0 : i32
    %c0_i32_0 = arith.constant 0 : i32
    %c0_i32_1 = arith.constant 0 : i32
    return %arg0, %c0_i32, %c0_i32_0 : i32, i32, i32
  }
  func.func @transform_18(%arg0: i32) -> (i32, i32, i32) {
    %c0_i32 = arith.constant 0 : i32
    %c0_i32_0 = arith.constant 0 : i32
    %c0_i32_1 = arith.constant 0 : i32
    return %arg0, %c0_i32, %c0_i32_0 : i32, i32, i32
  }
  func.func @transform_19(%arg0: i32) -> (i32, i32, i32) {
    %c0_i32 = arith.constant 0 : i32
    %c0_i32_0 = arith.constant 0 : i32
    %c0_i32_1 = arith.constant 0 : i32
    return %arg0, %c0_i32, %c0_i32_0 : i32, i32, i32
  }
}

</mosaic_0001>

<llo_original>
// kernel: tpu_custom_call.1
$region0: #{tpu_custom_call.1}
  #allocation0 [shape = 'u32[]', space=smem, size = 0x4, offset = 0x4, fixed_abs, tag = 'smem constant byte address 0x4 - core index']
  #allocation1 [shape = 'u32[144,128]{1,0:T(1,128)}', space=vmem, size = 0x12000, scoped, tag = 'internal scratch']
  %s0 = inlined_call_operand.vmem [shape: f32[8,8,64], index: 0, kind: input, shape index: {}]
  %s1 = inlined_call_operand.hbm [shape: f32[8,1,64], index: 1, kind: input, shape index: {}]
  %s2 = inlined_call_operand.hbm [shape: bf16[64,64], index: 2, kind: input, shape index: {}]
  %s3 = inlined_call_operand.hbm [shape: f32[1,64], index: 3, kind: input, shape index: {}]
  %s4 = inlined_call_operand.hbm [shape: f32[1,64], index: 4, kind: input, shape index: {}]
  %s5 = inlined_call_operand.hbm [shape: f32[1,64], index: 5, kind: input, shape index: {}]
  %s6 = inlined_call_operand.vmem [shape: bf16[64,192], index: 6, kind: input, shape index: {}]
  %s7 = inlined_call_operand.vmem [shape: f32[1,192], index: 7, kind: input, shape index: {}]
  %s8 = inlined_call_operand.hbm [shape: bf16[4,16,64], index: 8, kind: input, shape index: {}]
  %s9 = inlined_call_operand.hbm [shape: f32[1,64], index: 9, kind: input, shape index: {}]
  %s10 = inlined_call_operand.hbm [shape: f32[1,64], index: 10, kind: input, shape index: {}]
  %s11 = inlined_call_operand.hbm [shape: f32[1,64], index: 11, kind: input, shape index: {}]
  %s12 = inlined_call_operand.vmem [shape: bf16[64,256], index: 12, kind: input, shape index: {}]
  %s13 = inlined_call_operand.vmem [shape: f32[1,256], index: 13, kind: input, shape index: {}]
  %s14 = inlined_call_operand.vmem [shape: bf16[256,64], index: 14, kind: input, shape index: {}]
  %s15 = inlined_call_operand.vmem [shape: f32[1,64], index: 15, kind: input, shape index: {}]
  %s16 = inlined_call_operand.vmem [shape: f32[8,1,128], index: 16, kind: input, shape index: {}]
  %s17 = inlined_call_operand.vmem [shape: f32[8,1,128], index: 17, kind: input, shape index: {}]
  %s18 = inlined_call_operand.hbm [shape: f32[8,8,64], index: 18, kind: output, shape index: {0}]
  %s19 = inlined_call_operand.hbm [shape: f32[8,8,128], index: 19, kind: output, shape index: {1}]
  %20 = xla_tuple %s18, %s19
  %s21 = sld [smem:[#allocation0]]
  $region149: #{tpu_custom_call.1} parent=0
    _
  %s23 = ssub.s32 1, %s21
  %s24 = scalar_select 0, %s23, %s21
  $region1: #{tpu_custom_call.1} parent=0
    #allocation2 [shape = 'u8[4096]{0}', space=vmem, size = 0x1000, scoped, tag = 'input window, operand 1']
    #allocation3 [shape = 's32[2]{0}', space=sflag, size = 0x8, scoped, tag = 'scoped memory for tpu_custom_call.1']
    #allocation4 [shape = 's32[2]{0}', space=sflag, size = 0x8, scoped, tag = 'scoped memory for tpu_custom_call.1']
    #allocation5 [shape = 'u8[16384]{0}', space=vmem, size = 0x4000, scoped, tag = 'input window, operand 2, single buffered']
    #allocation6 [shape = 's32[1]{0}', space=sflag, size = 0x4, scoped, tag = 'scoped memory for tpu_custom_call.1']
    #allocation7 [shape = 'u8[512]{0}', space=vmem, size = 0x400, scoped, tag = 'input window, operand 3, single buffered']
    #allocation8 [shape = 'u8[512]{0}', space=vmem, size = 0x400, scoped, tag = 'input window, operand 4, single buffered']
    #allocation9 [shape = 's32[1]{0}', space=sflag, size = 0x4, scoped, tag = 'scoped memory for tpu_custom_call.1']
    #allocation10 [shape = 'u8[512]{0}', space=vmem, size = 0x400, scoped, tag = 'input window, operand 5, single buffered']
    #allocation11 [shape = 'u8[16384]{0}', space=vmem, size = 0x4000, scoped, tag = 'input window, operand 8, single buffered']
    #allocation12 [shape = 's32[1]{0}', space=sflag, size = 0x4, scoped, tag = 'scoped memory for tpu_custom_call.1']
    #allocation13 [shape = 'u8[512]{0}', space=vmem, size = 0x400, scoped, tag = 'input window, operand 9, single buffered']
    #allocation14 [shape = 'u8[512]{0}', space=vmem, size = 0x400, scoped, tag = 'input window, operand 10, single buffered']
    #allocation15 [shape = 's32[1]{0}', space=sflag, size = 0x4, scoped, tag = 'scoped memory for tpu_custom_call.1']
    #allocation16 [shape = 'u8[512]{0}', space=vmem, size = 0x400, scoped, tag = 'input window, operand 11, single buffered']
    #allocation17 [shape = 'u8[32768]{0}', space=vmem, size = 0x8000, scoped, tag = 'output window, operand 0']
    #allocation18 [shape = 'u8[32768]{0}', space=vmem, size = 0x8000, scoped, tag = 'output window, operand 1']
    #allocation19 [shape = 's32[2]{0}', space=sflag, size = 0x8, scoped, tag = 'scoped memory for tpu_custom_call.1']
    %25 = vsyncpa [#allocation3], 0
    %s26 = scalar_lea.sflag [#allocation3], 1
    %27 = vsyncpa %s26, 0
    %28 = vsyncpa [#allocation6], 0
    %29 = vsyncpa [#allocation9], 0
    %30 = vsyncpa [#allocation12], 0
    %31 = vsyncpa [#allocation15], 0
    %32 = vsyncpa [#allocation4], 0
    %s33 = scalar_lea.sflag [#allocation4], 1
    %34 = vsyncpa %s33, 0
    %35 = vsyncpa [#allocation19], 0
    %s36 = scalar_lea.sflag [#allocation19], 1
    %37 = vsyncpa %s36, 0
    loop: start=0, step=1, limit=4
    $region2: #{tpu_custom_call.1} parent=1 // loop_pre_header
      _
    $region3: #{tpu_custom_call.1} parent=1 // loop_header
      %s39 = sphi 0, %s43
      %p40 = scmp.ge.s32.totalorder %s39, 4
      %s49 = sphi 0, %s51
      %s52 = sphi 0, %s49
      %s53 = sphi 0, %s52
      %s69 = sphi 0, %s53
      %s75 = sphi 0, %s77
      %s78 = sphi 0, %s75
      %s79 = sphi 0, %s78
      %s95 = sphi 0, %s79
      %s99 = sphi 0, %s99
      %s101 = sphi 0, %s99
      %s102 = sphi 0, %s101
      %s116 = sphi 0, %s102
      %s120 = sphi 0, %s120
      %s122 = sphi 0, %s120
      %s123 = sphi 0, %s122
      %s137 = sphi 0, %s123
      %s141 = sphi 0, %s141
      %s143 = sphi 0, %s141
      %s144 = sphi 0, %s143
      %s158 = sphi 0, %s144
      %s162 = sphi 0, %s162
      %s164 = sphi 0, %s162
      %s165 = sphi 0, %s164
      %s179 = sphi 0, %s165
      %s183 = sphi 0, %s183
      %s185 = sphi 0, %s183
      %s186 = sphi 0, %s185
      %s200 = sphi 0, %s186
      %s204 = sphi 0, %s204
      %s206 = sphi 0, %s204
      %s207 = sphi 0, %s206
      %s221 = sphi 0, %s207
      %s225 = sphi 0, %s225
      %s227 = sphi 0, %s225
      %s228 = sphi 0, %s227
      %s242 = sphi 0, %s228
      %s246 = sphi 0, %s246
      %s248 = sphi 0, %s246
      %s249 = sphi 0, %s248
      %s263 = sphi 0, %s249
      %s267 = sphi 0, %s267
      %s269 = sphi 0, %s267
      %s270 = sphi 0, %s269
      %s284 = sphi 0, %s270
      %s288 = sphi 0, %s288
      %s290 = sphi 0, %s288
      %s291 = sphi 0, %s290
      %s305 = sphi 0, %s291
      %s309 = sphi 0, %s309
      %s311 = sphi 0, %s309
      %s312 = sphi 0, %s311
      %s326 = sphi 0, %s312
      %s330 = sphi 0, %s330
      %s332 = sphi 0, %s330
      %s333 = sphi 0, %s332
      %s347 = sphi 0, %s333
      %s351 = sphi 0, %s351
      %s353 = sphi 0, %s351
      %s354 = sphi 0, %s353
      %s368 = sphi 0, %s354
      %s372 = sphi 0, %s372
      %s374 = sphi 0, %s372
      %s375 = sphi 0, %s374
      %s389 = sphi 0, %s375
      %s395 = sphi 0, %s397
      %s398 = sphi 0, %s395
      %s399 = sphi 0, %s398
      %s415 = sphi 0, %s399
      %s421 = sphi 0, %s423
      %s424 = sphi 0, %s421
      %s425 = sphi 0, %s424
      %s441 = sphi 0, %s425
      %s447 = sphi 0, %s449
      %s450 = sphi 0, %s447
      %s451 = sphi 0, %s450
      %s467 = sphi 0, %s451
      %s473 = sphi 0, %s475
      %s476 = sphi 0, %s473
      %s477 = sphi 0, %s476
      %s493 = sphi 0, %s477
    $region4: #{tpu_custom_call.1} parent=1 // loop_header_branch
      %42 = sbr.rel (%p40) target = $region8
    $region5: #{tpu_custom_call.1} parent=1 // loop_body
      %s44 = ssub.s32 %s39, 1
      %s45 = ssub.s32 %s39, 2
      %s46 = sadd.s32 %s39, 1
      %s47 = ssub.s32 %s39, %s46
      %p48 = scmp.eq.s32.totalorder %s47, 0
      %s50 = sadd.s32 %s49, 1
      %s51 = scalar_select %p48, %s49, %s50
      %p54 = pneg %p48
      %p55 = scmp.eq.s32.totalorder %s39, 1
      %p56 = por %p54, %p55
      %p57 = scmp.ne.s32.totalorder %s49, %s52
      %p58 = scmp.eq.s32.totalorder %s39, 0
      %p59 = por %p57, %p58
      %p60 = scmp.ne.s32.totalorder %s49, %s52
      %p61 = scmp.eq.s32.totalorder %s44, 1
      %p62 = por %p60, %p61
      %p63 = scmp.ne.s32.totalorder %s52, %s53
      %p64 = scmp.eq.s32.totalorder %s44, 0
      %p65 = por %p63, %p64
      %p66 = scmp.ne.s32.totalorder %s52, %s53
      %p67 = scmp.eq.s32.totalorder %s45, 1
      %p68 = por %p66, %p67
      %p70 = scmp.ne.s32.totalorder %s53, %s69
      %p71 = scmp.eq.s32.totalorder %s45, 0
      %p72 = por %p70, %p71
      %s73 = ssub.s32 %s39, %s46
      %p74 = scmp.eq.s32.totalorder %s73, 0
      %s76 = sadd.s32 %s75, 1
      %s77 = scalar_select %p74, %s75, %s76
      %p80 = pneg %p74
      %p81 = scmp.eq.s32.totalorder %s39, 1
      %p82 = por %p80, %p81
      %p83 = scmp.ne.s32.totalorder %s75, %s78
      %p84 = scmp.eq.s32.totalorder %s39, 0
      %p85 = por %p83, %p84
      %p86 = scmp.ne.s32.totalorder %s75, %s78
      %p87 = scmp.eq.s32.totalorder %s44, 1
      %p88 = por %p86, %p87
      %p89 = scmp.ne.s32.totalorder %s78, %s79
      %p90 = scmp.eq.s32.totalorder %s44, 0
      %p91 = por %p89, %p90
      %p92 = scmp.ne.s32.totalorder %s78, %s79
      %p93 = scmp.eq.s32.totalorder %s45, 1
      %p94 = por %p92, %p93
      %p96 = scmp.ne.s32.totalorder %s79, %s95
      %p97 = scmp.eq.s32.totalorder %s45, 0
      %p98 = por %p96, %p97
      %s100 = sadd.s32 %s99, 1
      %p103 = scmp.eq.s32.totalorder %s39, 1
      %p104 = scmp.ne.s32.totalorder %s99, %s101
      %p105 = scmp.eq.s32.totalorder %s39, 0
      %p106 = por %p104, %p105
      %p107 = scmp.ne.s32.totalorder %s99, %s101
      %p108 = scmp.eq.s32.totalorder %s44, 1
      %p109 = por %p107, %p108
      %p110 = scmp.ne.s32.totalorder %s101, %s102
      %p111 = scmp.eq.s32.totalorder %s44, 0
      %p112 = por %p110, %p111
      %p113 = scmp.ne.s32.totalorder %s101, %s102
      %p114 = scmp.eq.s32.totalorder %s45, 1
      %p115 = por %p113, %p114
      %p117 = scmp.ne.s32.totalorder %s102, %s116
      %p118 = scmp.eq.s32.totalorder %s45, 0
      %p119 = por %p117, %p118
      %s121 = sadd.s32 %s120, 1
      %p124 = scmp.eq.s32.totalorder %s39, 1
      %p125 = scmp.ne.s32.totalorder %s120, %s122
      %p126 = scmp.eq.s32.totalorder %s39, 0
      %p127 = por %p125, %p126
      %p128 = scmp.ne.s32.totalorder %s120, %s122
      %p129 = scmp.eq.s32.totalorder %s44, 1
      %p130 = por %p128, %p129
      %p131 = scmp.ne.s32.totalorder %s122, %s123
      %p132 = scmp.eq.s32.totalorder %s44, 0
      %p133 = por %p131, %p132
      %p134 = scmp.ne.s32.totalorder %s122, %s123
      %p135 = scmp.eq.s32.totalorder %s45, 1
      %p136 = por %p134, %p135
      %p138 = scmp.ne.s32.totalorder %s123, %s137
      %p139 = scmp.eq.s32.totalorder %s45, 0
      %p140 = por %p138, %p139
      %s142 = sadd.s32 %s141, 1
      %p145 = scmp.eq.s32.totalorder %s39, 1
      %p146 = scmp.ne.s32.totalorder %s141, %s143
      %p147 = scmp.eq.s32.totalorder %s39, 0
      %p148 = por %p146, %p147
      %p149 = scmp.ne.s32.totalorder %s141, %s143
      %p150 = scmp.eq.s32.totalorder %s44, 1
      %p151 = por %p149, %p150
      %p152 = scmp.ne.s32.totalorder %s143, %s144
      %p153 = scmp.eq.s32.totalorder %s44, 0
      %p154 = por %p152, %p153
      %p155 = scmp.ne.s32.totalorder %s143, %s144
      %p156 = scmp.eq.s32.totalorder %s45, 1
      %p157 = por %p155, %p156
      %p159 = scmp.ne.s32.totalorder %s144, %s158
      %p160 = scmp.eq.s32.totalorder %s45, 0
      %p161 = por %p159, %p160
      %s163 = sadd.s32 %s162, 1
      %p166 = scmp.eq.s32.totalorder %s39, 1
      %p167 = scmp.ne.s32.totalorder %s162, %s164
      %p168 = scmp.eq.s32.totalorder %s39, 0
      %p169 = por %p167, %p168
      %p170 = scmp.ne.s32.totalorder %s162, %s164
      %p171 = scmp.eq.s32.totalorder %s44, 1
      %p172 = por %p170, %p171
      %p173 = scmp.ne.s32.totalorder %s164, %s165
      %p174 = scmp.eq.s32.totalorder %s44, 0
      %p175 = por %p173, %p174
      %p176 = scmp.ne.s32.totalorder %s164, %s165
      %p177 = scmp.eq.s32.totalorder %s45, 1
      %p178 = por %p176, %p177
      %p180 = scmp.ne.s32.totalorder %s165, %s179
      %p181 = scmp.eq.s32.totalorder %s45, 0
      %p182 = por %p180, %p181
      %s184 = sadd.s32 %s183, 1
      %p187 = scmp.eq.s32.totalorder %s39, 1
      %p188 = scmp.ne.s32.totalorder %s183, %s185
      %p189 = scmp.eq.s32.totalorder %s39, 0
      %p190 = por %p188, %p189
      %p191 = scmp.ne.s32.totalorder %s183, %s185
      %p192 = scmp.eq.s32.totalorder %s44, 1
      %p193 = por %p191, %p192
      %p194 = scmp.ne.s32.totalorder %s185, %s186
      %p195 = scmp.eq.s32.totalorder %s44, 0
      %p196 = por %p194, %p195
      %p197 = scmp.ne.s32.totalorder %s185, %s186
      %p198 = scmp.eq.s32.totalorder %s45, 1
      %p199 = por %p197, %p198
      %p201 = scmp.ne.s32.totalorder %s186, %s200
      %p202 = scmp.eq.s32.totalorder %s45, 0
      %p203 = por %p201, %p202
      %s205 = sadd.s32 %s204, 1
      %p208 = scmp.eq.s32.totalorder %s39, 1
      %p209 = scmp.ne.s32.totalorder %s204, %s206
      %p210 = scmp.eq.s32.totalorder %s39, 0
      %p211 = por %p209, %p210
      %p212 = scmp.ne.s32.totalorder %s204, %s206
      %p213 = scmp.eq.s32.totalorder %s44, 1
      %p214 = por %p212, %p213
      %p215 = scmp.ne.s32.totalorder %s206, %s207
      %p216 = scmp.eq.s32.totalorder %s44, 0
      %p217 = por %p215, %p216
      %p218 = scmp.ne.s32.totalorder %s206, %s207
      %p219 = scmp.eq.s32.totalorder %s45, 1
      %p220 = por %p218, %p219
      %p222 = scmp.ne.s32.totalorder %s207, %s221
      %p223 = scmp.eq.s32.totalorder %s45, 0
      %p224 = por %p222, %p223
      %s226 = sadd.s32 %s225, 1
      %p229 = scmp.eq.s32.totalorder %s39, 1
      %p230 = scmp.ne.s32.totalorder %s225, %s227
      %p231 = scmp.eq.s32.totalorder %s39, 0
      %p232 = por %p230, %p231
      %p233 = scmp.ne.s32.totalorder %s225, %s227
      %p234 = scmp.eq.s32.totalorder %s44, 1
      %p235 = por %p233, %p234
      %p236 = scmp.ne.s32.totalorder %s227, %s228
      %p237 = scmp.eq.s32.totalorder %s44, 0
      %p238 = por %p236, %p237
      %p239 = scmp.ne.s32.totalorder %s227, %s228
      %p240 = scmp.eq.s32.totalorder %s45, 1
      %p241 = por %p239, %p240
      %p243 = scmp.ne.s32.totalorder %s228, %s242
      %p244 = scmp.eq.s32.totalorder %s45, 0
      %p245 = por %p243, %p244
      %s247 = sadd.s32 %s246, 1
      %p250 = scmp.eq.s32.totalorder %s39, 1
      %p251 = scmp.ne.s32.totalorder %s246, %s248
      %p252 = scmp.eq.s32.totalorder %s39, 0
      %p253 = por %p251, %p252
      %p254 = scmp.ne.s32.totalorder %s246, %s248
      %p255 = scmp.eq.s32.totalorder %s44, 1
      %p256 = por %p254, %p255
      %p257 = scmp.ne.s32.totalorder %s248, %s249
      %p258 = scmp.eq.s32.totalorder %s44, 0
      %p259 = por %p257, %p258
      %p260 = scmp.ne.s32.totalorder %s248, %s249
      %p261 = scmp.eq.s32.totalorder %s45, 1
      %p262 = por %p260, %p261
      %p264 = scmp.ne.s32.totalorder %s249, %s263
      %p265 = scmp.eq.s32.totalorder %s45, 0
      %p266 = por %p264, %p265
      %s268 = sadd.s32 %s267, 1
      %p271 = scmp.eq.s32.totalorder %s39, 1
      %p272 = scmp.ne.s32.totalorder %s267, %s269
      %p273 = scmp.eq.s32.totalorder %s39, 0
      %p274 = por %p272, %p273
      %p275 = scmp.ne.s32.totalorder %s267, %s269
      %p276 = scmp.eq.s32.totalorder %s44, 1
      %p277 = por %p275, %p276
      %p278 = scmp.ne.s32.totalorder %s269, %s270
      %p279 = scmp.eq.s32.totalorder %s44, 0
      %p280 = por %p278, %p279
      %p281 = scmp.ne.s32.totalorder %s269, %s270
      %p282 = scmp.eq.s32.totalorder %s45, 1
      %p283 = por %p281, %p282
      %p285 = scmp.ne.s32.totalorder %s270, %s284
      %p286 = scmp.eq.s32.totalorder %s45, 0
      %p287 = por %p285, %p286
      %s289 = sadd.s32 %s288, 1
      %p292 = scmp.eq.s32.totalorder %s39, 1
      %p293 = scmp.ne.s32.totalorder %s288, %s290
      %p294 = scmp.eq.s32.totalorder %s39, 0
      %p295 = por %p293, %p294
      %p296 = scmp.ne.s32.totalorder %s288, %s290
      %p297 = scmp.eq.s32.totalorder %s44, 1
      %p298 = por %p296, %p297
      %p299 = scmp.ne.s32.totalorder %s290, %s291
      %p300 = scmp.eq.s32.totalorder %s44, 0
      %p301 = por %p299, %p300
      %p302 = scmp.ne.s32.totalorder %s290, %s291
      %p303 = scmp.eq.s32.totalorder %s45, 1
      %p304 = por %p302, %p303
      %p306 = scmp.ne.s32.totalorder %s291, %s305
      %p307 = scmp.eq.s32.totalorder %s45, 0
      %p308 = por %p306, %p307
      %s310 = sadd.s32 %s309, 1
      %p313 = scmp.eq.s32.totalorder %s39, 1
      %p314 = scmp.ne.s32.totalorder %s309, %s311
      %p315 = scmp.eq.s32.totalorder %s39, 0
      %p316 = por %p314, %p315
      %p317 = scmp.ne.s32.totalorder %s309, %s311
      %p318 = scmp.eq.s32.totalorder %s44, 1
      %p319 = por %p317, %p318
      %p320 = scmp.ne.s32.totalorder %s311, %s312
      %p321 = scmp.eq.s32.totalorder %s44, 0
      %p322 = por %p320, %p321
      %p323 = scmp.ne.s32.totalorder %s311, %s312
      %p324 = scmp.eq.s32.totalorder %s45, 1
      %p325 = por %p323, %p324
      %p327 = scmp.ne.s32.totalorder %s312, %s326
      %p328 = scmp.eq.s32.totalorder %s45, 0
      %p329 = por %p327, %p328
      %s331 = sadd.s32 %s330, 1
      %p334 = scmp.eq.s32.totalorder %s39, 1
      %p335 = scmp.ne.s32.totalorder %s330, %s332
      %p336 = scmp.eq.s32.totalorder %s39, 0
      %p337 = por %p335, %p336
      %p338 = scmp.ne.s32.totalorder %s330, %s332
      %p339 = scmp.eq.s32.totalorder %s44, 1
      %p340 = por %p338, %p339
      %p341 = scmp.ne.s32.totalorder %s332, %s333
      %p342 = scmp.eq.s32.totalorder %s44, 0
      %p343 = por %p341, %p342
      %p344 = scmp.ne.s32.totalorder %s332, %s333
      %p345 = scmp.eq.s32.totalorder %s45, 1
      %p346 = por %p344, %p345
      %p348 = scmp.ne.s32.totalorder %s333, %s347
      %p349 = scmp.eq.s32.totalorder %s45, 0
      %p350 = por %p348, %p349
      %s352 = sadd.s32 %s351, 1
      %p355 = scmp.eq.s32.totalorder %s39, 1
      %p356 = scmp.ne.s32.totalorder %s351, %s353
      %p357 = scmp.eq.s32.totalorder %s39, 0
      %p358 = por %p356, %p357
      %p359 = scmp.ne.s32.totalorder %s351, %s353
      %p360 = scmp.eq.s32.totalorder %s44, 1
      %p361 = por %p359, %p360
      %p362 = scmp.ne.s32.totalorder %s353, %s354
      %p363 = scmp.eq.s32.totalorder %s44, 0
      %p364 = por %p362, %p363
      %p365 = scmp.ne.s32.totalorder %s353, %s354
      %p366 = scmp.eq.s32.totalorder %s45, 1
      %p367 = por %p365, %p366
      %p369 = scmp.ne.s32.totalorder %s354, %s368
      %p370 = scmp.eq.s32.totalorder %s45, 0
      %p371 = por %p369, %p370
      %s373 = sadd.s32 %s372, 1
      %p376 = scmp.eq.s32.totalorder %s39, 1
      %p377 = scmp.ne.s32.totalorder %s372, %s374
      %p378 = scmp.eq.s32.totalorder %s39, 0
      %p379 = por %p377, %p378
      %p380 = scmp.ne.s32.totalorder %s372, %s374
      %p381 = scmp.eq.s32.totalorder %s44, 1
      %p382 = por %p380, %p381
      %p383 = scmp.ne.s32.totalorder %s374, %s375
      %p384 = scmp.eq.s32.totalorder %s44, 0
      %p385 = por %p383, %p384
      %p386 = scmp.ne.s32.totalorder %s374, %s375
      %p387 = scmp.eq.s32.totalorder %s45, 1
      %p388 = por %p386, %p387
      %p390 = scmp.ne.s32.totalorder %s375, %s389
      %p391 = scmp.eq.s32.totalorder %s45, 0
      %p392 = por %p390, %p391
      %s393 = ssub.s32 %s39, %s46
      %p394 = scmp.eq.s32.totalorder %s393, 0
      %s396 = sadd.s32 %s395, 1
      %s397 = scalar_select %p394, %s395, %s396
      %p400 = pneg %p394
      %p401 = scmp.eq.s32.totalorder %s39, 1
      %p402 = por %p400, %p401
      %p403 = scmp.ne.s32.totalorder %s395, %s398
      %p404 = scmp.eq.s32.totalorder %s39, 0
      %p405 = por %p403, %p404
      %p406 = scmp.ne.s32.totalorder %s395, %s398
      %p407 = scmp.eq.s32.totalorder %s44, 1
      %p408 = por %p406, %p407
      %p409 = scmp.ne.s32.totalorder %s398, %s399
      %p410 = scmp.eq.s32.totalorder %s44, 0
      %p411 = por %p409, %p410
      %p412 = scmp.ne.s32.totalorder %s398, %s399
      %p413 = scmp.eq.s32.totalorder %s45, 1
      %p414 = por %p412, %p413
      %p416 = scmp.ne.s32.totalorder %s399, %s415
      %p417 = scmp.eq.s32.totalorder %s45, 0
      %p418 = por %p416, %p417
      %s419 = ssub.s32 %s39, %s46
      %p420 = scmp.eq.s32.totalorder %s419, 0
      %s422 = sadd.s32 %s421, 1
      %s423 = scalar_select %p420, %s421, %s422
      %p426 = pneg %p420
      %p427 = scmp.eq.s32.totalorder %s39, 1
      %p428 = por %p426, %p427
      %p429 = scmp.ne.s32.totalorder %s421, %s424
      %p430 = scmp.eq.s32.totalorder %s39, 0
      %p431 = por %p429, %p430
      %p432 = scmp.ne.s32.totalorder %s421, %s424
      %p433 = scmp.eq.s32.totalorder %s44, 1
      %p434 = por %p432, %p433
      %p435 = scmp.ne.s32.totalorder %s424, %s425
      %p436 = scmp.eq.s32.totalorder %s44, 0
      %p437 = por %p435, %p436
      %p438 = scmp.ne.s32.totalorder %s424, %s425
      %p439 = scmp.eq.s32.totalorder %s45, 1
      %p440 = por %p438, %p439
      %p442 = scmp.ne.s32.totalorder %s425, %s441
      %p443 = scmp.eq.s32.totalorder %s45, 0
      %p444 = por %p442, %p443
      %s445 = ssub.s32 %s39, %s46
      %p446 = scmp.eq.s32.totalorder %s445, 0
      %s448 = sadd.s32 %s447, 1
      %s449 = scalar_select %p446, %s447, %s448
      %p452 = pneg %p446
      %p453 = scmp.eq.s32.totalorder %s39, 1
      %p454 = por %p452, %p453
      %p455 = scmp.ne.s32.totalorder %s447, %s450
      %p456 = scmp.eq.s32.totalorder %s39, 0
      %p457 = por %p455, %p456
      %p458 = scmp.ne.s32.totalorder %s447, %s450
      %p459 = scmp.eq.s32.totalorder %s44, 1
      %p460 = por %p458, %p459
      %p461 = scmp.ne.s32.totalorder %s450, %s451
      %p462 = scmp.eq.s32.totalorder %s44, 0
      %p463 = por %p461, %p462
      %p464 = scmp.ne.s32.totalorder %s450, %s451
      %p465 = scmp.eq.s32.totalorder %s45, 1
      %p466 = por %p464, %p465
      %p468 = scmp.ne.s32.totalorder %s451, %s467
      %p469 = scmp.eq.s32.totalorder %s45, 0
      %p470 = por %p468, %p469
      %s471 = ssub.s32 %s39, %s46
      %p472 = scmp.eq.s32.totalorder %s471, 0
      %s474 = sadd.s32 %s473, 1
      %s475 = scalar_select %p472, %s473, %s474
      %p478 = pneg %p472
      %p479 = scmp.eq.s32.totalorder %s39, 1
      %p480 = por %p478, %p479
      %p481 = scmp.ne.s32.totalorder %s473, %s476
      %p482 = scmp.eq.s32.totalorder %s39, 0
      %p483 = por %p481, %p482
      %p484 = scmp.ne.s32.totalorder %s473, %s476
      %p485 = scmp.eq.s32.totalorder %s44, 1
      %p486 = por %p484, %p485
      %p487 = scmp.ne.s32.totalorder %s476, %s477
      %p488 = scmp.eq.s32.totalorder %s44, 0
      %p489 = por %p487, %p488
      %p490 = scmp.ne.s32.totalorder %s476, %s477
      %p491 = scmp.eq.s32.totalorder %s45, 1
      %p492 = por %p490, %p491
      %p494 = scmp.ne.s32.totalorder %s477, %s493
      %p495 = scmp.eq.s32.totalorder %s45, 0
      %p496 = por %p494, %p495
      %p497 = scmp.le.s32.totalorder 1, %s39
      %p498 = scmp.lt.s32.totalorder %s39, 3
      %p499 = pnand %p497, %p498
      %p500 = pneg %p499
      // Predicated region
      $region9: #{tpu_custom_call.1} parent=5 // pred_check
        _
      $region10: #{tpu_custom_call.1} parent=5 // pred_check_branch
        %502 = sbr.rel (%p499) target = $region12
      $region11: #{tpu_custom_call.1} parent=5 // pred_region
        %s503 = ssub.s32 %s39, 1
        // Predicated region
        $region13: #{tpu_custom_call.1} parent=11 // pred_check
          %p504 = pneg %p112
        $region14: #{tpu_custom_call.1} parent=11 // pred_check_branch
          %506 = sbr.rel (%p504) target = $region16
        $region15: #{tpu_custom_call.1} parent=11 // pred_region
          %s508 = ssub.s32 512, 512
          %509 = vsyncadd [#allocation6], %s508
          %s510 = sshll.u32 [#allocation5], 4
          %s511 = int_to_ptr.vmem [resolvable:$true] %s510
          %516 = dma.hbm_to_vmem [thread:$0]  %s2, 512, %s511, [#allocation6], 64, 64, 4
        $region16: #{tpu_custom_call.1} parent=11 // pred_fallthru
          _
        // Predicated region
        $region17: #{tpu_custom_call.1} parent=11 // pred_check
          %p517 = pneg %p133
        $region18: #{tpu_custom_call.1} parent=11 // pred_check_branch
          %519 = sbr.rel (%p517) target = $region20
        $region19: #{tpu_custom_call.1} parent=11 // pred_region
          %s521 = ssub.s32 16, 16
          %522 = vsyncadd [#allocation6], %s521
          %s524 = sshll.u32 [#allocation7], 4
          %s525 = int_to_ptr.vmem [resolvable:$true] %s524
          %527 = dma.hbm_to_vmem [thread:$0]  %s3, 16, %s525, [#allocation6]
        $region20: #{tpu_custom_call.1} parent=11 // pred_fallthru
          _
        // Predicated region
        $region21: #{tpu_custom_call.1} parent=11 // pred_check
          %p528 = pneg %p154
        $region22: #{tpu_custom_call.1} parent=11 // pred_check_branch
          %530 = sbr.rel (%p528) target = $region24
        $region23: #{tpu_custom_call.1} parent=11 // pred_region
          %s532 = ssub.s32 16, 16
          %533 = vsyncadd [#allocation9], %s532
          %s535 = sshll.u32 [#allocation8], 4
          %s536 = int_to_ptr.vmem [resolvable:$true] %s535
          %538 = dma.hbm_to_vmem [thread:$0]  %s4, 16, %s536, [#allocation9]
        $region24: #{tpu_custom_call.1} parent=11 // pred_fallthru
          _
        // Predicated region
        $region25: #{tpu_custom_call.1} parent=11 // pred_check
          %p539 = pneg %p175
        $region26: #{tpu_custom_call.1} parent=11 // pred_check_branch
          %541 = sbr.rel (%p539) target = $region28
        $region27: #{tpu_custom_call.1} parent=11 // pred_region
          %s543 = ssub.s32 16, 16
          %544 = vsyncadd [#allocation9], %s543
          %s546 = sshll.u32 [#allocation10], 4
          %s547 = int_to_ptr.vmem [resolvable:$true] %s546
          %549 = dma.hbm_to_vmem [thread:$0]  %s5, 16, %s547, [#allocation9]
        $region28: #{tpu_custom_call.1} parent=11 // pred_fallthru
          _
        // Predicated region
        $region29: #{tpu_custom_call.1} parent=11 // pred_check
          %p550 = pneg %p196
        $region30: #{tpu_custom_call.1} parent=11 // pred_check_branch
          %552 = sbr.rel (%p550) target = $region32
        $region31: #{tpu_custom_call.1} parent=11 // pred_region
          _
        $region32: #{tpu_custom_call.1} parent=11 // pred_fallthru
          _
        // Predicated region
        $region33: #{tpu_custom_call.1} parent=11 // pred_check
          %p553 = pneg %p217
        $region34: #{tpu_custom_call.1} parent=11 // pred_check_branch
          %555 = sbr.rel (%p553) target = $region36
        $region35: #{tpu_custom_call.1} parent=11 // pred_region
          _
        $region36: #{tpu_custom_call.1} parent=11 // pred_fallthru
          _
        // Predicated region
        $region37: #{tpu_custom_call.1} parent=11 // pred_check
          %p556 = pneg %p238
        $region38: #{tpu_custom_call.1} parent=11 // pred_check_branch
          %558 = sbr.rel (%p556) target = $region40
        $region39: #{tpu_custom_call.1} parent=11 // pred_region
          %s560 = ssub.s32 512, 512
          %561 = vsyncadd [#allocation12], %s560
          %s562 = sshll.u32 [#allocation11], 4
          %s563 = int_to_ptr.vmem [resolvable:$true] %s562
          %568 = dma.hbm_to_vmem [thread:$0]  %s8, 512, %s563, [#allocation12], 64, 64, 4
        $region40: #{tpu_custom_call.1} parent=11 // pred_fallthru
          _
        // Predicated region
        $region41: #{tpu_custom_call.1} parent=11 // pred_check
          %p569 = pneg %p259
        $region42: #{tpu_custom_call.1} parent=11 // pred_check_branch
          %571 = sbr.rel (%p569) target = $region44
        $region43: #{tpu_custom_call.1} parent=11 // pred_region
          %s573 = ssub.s32 16, 16
          %574 = vsyncadd [#allocation12], %s573
          %s576 = sshll.u32 [#allocation13], 4
          %s577 = int_to_ptr.vmem [resolvable:$true] %s576
          %579 = dma.hbm_to_vmem [thread:$0]  %s9, 16, %s577, [#allocation12]
        $region44: #{tpu_custom_call.1} parent=11 // pred_fallthru
          _
        // Predicated region
        $region45: #{tpu_custom_call.1} parent=11 // pred_check
          %p580 = pneg %p280
        $region46: #{tpu_custom_call.1} parent=11 // pred_check_branch
          %582 = sbr.rel (%p580) target = $region48
        $region47: #{tpu_custom_call.1} parent=11 // pred_region
          %s584 = ssub.s32 16, 16
          %585 = vsyncadd [#allocation15], %s584
          %s587 = sshll.u32 [#allocation14], 4
          %s588 = int_to_ptr.vmem [resolvable:$true] %s587
          %590 = dma.hbm_to_vmem [thread:$0]  %s10, 16, %s588, [#allocation15]
        $region48: #{tpu_custom_call.1} parent=11 // pred_fallthru
          _
        // Predicated region
        $region49: #{tpu_custom_call.1} parent=11 // pred_check
          %p591 = pneg %p301
        $region50: #{tpu_custom_call.1} parent=11 // pred_check_branch
          %593 = sbr.rel (%p591) target = $region52
        $region51: #{tpu_custom_call.1} parent=11 // pred_region
          %s595 = ssub.s32 16, 16
          %596 = vsyncadd [#allocation15], %s595
          %s598 = sshll.u32 [#allocation16], 4
          %s599 = int_to_ptr.vmem [resolvable:$true] %s598
          %601 = dma.hbm_to_vmem [thread:$0]  %s11, 16, %s599, [#allocation15]
        $region52: #{tpu_custom_call.1} parent=11 // pred_fallthru
          _
        // Predicated region
        $region53: #{tpu_custom_call.1} parent=11 // pred_check
          %p602 = pneg %p322
        $region54: #{tpu_custom_call.1} parent=11 // pred_check_branch
          %604 = sbr.rel (%p602) target = $region56
        $region55: #{tpu_custom_call.1} parent=11 // pred_region
          _
        $region56: #{tpu_custom_call.1} parent=11 // pred_fallthru
          _
        // Predicated region
        $region57: #{tpu_custom_call.1} parent=11 // pred_check
          %p605 = pneg %p343
        $region58: #{tpu_custom_call.1} parent=11 // pred_check_branch
          %607 = sbr.rel (%p605) target = $region60
        $region59: #{tpu_custom_call.1} parent=11 // pred_region
          _
        $region60: #{tpu_custom_call.1} parent=11 // pred_fallthru
          _
        // Predicated region
        $region61: #{tpu_custom_call.1} parent=11 // pred_check
          %p608 = pneg %p364
        $region62: #{tpu_custom_call.1} parent=11 // pred_check_branch
          %610 = sbr.rel (%p608) target = $region64
        $region63: #{tpu_custom_call.1} parent=11 // pred_region
          _
        $region64: #{tpu_custom_call.1} parent=11 // pred_fallthru
          _
        // Predicated region
        $region65: #{tpu_custom_call.1} parent=11 // pred_check
          %p611 = pneg %p385
        $region66: #{tpu_custom_call.1} parent=11 // pred_check_branch
          %613 = sbr.rel (%p611) target = $region68
        $region67: #{tpu_custom_call.1} parent=11 // pred_region
          _
        $region68: #{tpu_custom_call.1} parent=11 // pred_fallthru
          _
      $region12: #{tpu_custom_call.1} parent=5 // pred_fallthru
        _
      %p614 = scmp.lt.s32.totalorder %s39, 2
      // Predicated region
      $region69: #{tpu_custom_call.1} parent=5 // pred_check
        %p615 = pneg %p614
      $region70: #{tpu_custom_call.1} parent=5 // pred_check_branch
        %617 = sbr.rel (%p615) target = $region72
      $region71: #{tpu_custom_call.1} parent=5 // pred_region
        // Predicated region
        $region73: #{tpu_custom_call.1} parent=71 // pred_check
          %p618 = pneg %p59
        $region74: #{tpu_custom_call.1} parent=71 // pred_check_branch
          %620 = sbr.rel (%p618) target = $region76
        $region75: #{tpu_custom_call.1} parent=71 // pred_region
          %s621 = smul.u32 4, %s39
          %p622 = scmp.lt.s32.totalorder %s621, 7
          %s623 = scalar_select %p622, %s621, 7
          %s624 = smul.addr %s623, 8
          %s625 = scalar_lea.vmem %s0, %s624
          %s626 = smul.u32 4, %s39
        $region76: #{tpu_custom_call.1} parent=71 // pred_fallthru
          _
        // Predicated region
        $region77: #{tpu_custom_call.1} parent=71 // pred_check
          %p627 = pneg %p85
        $region78: #{tpu_custom_call.1} parent=71 // pred_check_branch
          %629 = sbr.rel (%p627) target = $region80
        $region79: #{tpu_custom_call.1} parent=71 // pred_region
          %s630 = sand.u32 %s75, 1
          %s631 = scalar_lea.sflag [#allocation3], %s630
          %s632 = sand.u32 %s75, 1
          %s633 = smul.addr %s632, 4
          %s634 = scalar_lea.vmem [#allocation2], %s633
          %s635 = smul.u32 4, %s39
          %s637 = ssub.s32 64, 64
          %638 = vsyncadd %s631, %s637
          %s639 = smul.addr %s635, 16
          %s640 = scalar_lea.hbm %s1, %s639
          %s641 = sshll.u32 %s634, 4
          %s642 = int_to_ptr.vmem [resolvable:$true] %s641
          %647 = dma.hbm_to_vmem [thread:$0]  %s640, 64, %s642, %s631, 16, 16, 1
        $region80: #{tpu_custom_call.1} parent=71 // pred_fallthru
          _
        // Predicated region
        $region81: #{tpu_custom_call.1} parent=71 // pred_check
          %p648 = pneg %p405
        $region82: #{tpu_custom_call.1} parent=71 // pred_check_branch
          %650 = sbr.rel (%p648) target = $region84
        $region83: #{tpu_custom_call.1} parent=71 // pred_region
          %s651 = smul.u32 4, %s39
          %p652 = scmp.lt.s32.totalorder %s651, 7
          %s653 = scalar_select %p652, %s651, 7
          %s654 = scalar_lea.vmem %s16, %s653
          %s655 = smul.u32 4, %s39
        $region84: #{tpu_custom_call.1} parent=71 // pred_fallthru
          _
        // Predicated region
        $region85: #{tpu_custom_call.1} parent=71 // pred_check
          %p656 = pneg %p431
        $region86: #{tpu_custom_call.1} parent=71 // pred_check_branch
          %658 = sbr.rel (%p656) target = $region88
        $region87: #{tpu_custom_call.1} parent=71 // pred_region
          %s659 = smul.u32 4, %s39
          %p660 = scmp.lt.s32.totalorder %s659, 7
          %s661 = scalar_select %p660, %s659, 7
          %s662 = scalar_lea.vmem %s17, %s661
          %s663 = smul.u32 4, %s39
        $region88: #{tpu_custom_call.1} parent=71 // pred_fallthru
          _
      $region72: #{tpu_custom_call.1} parent=5 // pred_fallthru
        _
      %p664 = scmp.le.s32.totalorder 1, %s39
      %p665 = scmp.lt.s32.totalorder %s39, 3
      %p666 = pnand %p664, %p665
      %p667 = pneg %p666
      // Predicated region
      $region89: #{tpu_custom_call.1} parent=5 // pred_check
        _
      $region90: #{tpu_custom_call.1} parent=5 // pred_check_branch
        %669 = sbr.rel (%p666) target = $region92
      $region91: #{tpu_custom_call.1} parent=5 // pred_region
        %s670 = ssub.s32 %s39, 1
        %s671 = sand.u32 %s78, 1
        %s672 = scalar_lea.sflag [#allocation3], %s671
        %s673 = sand.u32 %s78, 1
        %s674 = smul.addr %s673, 4
        %s675 = scalar_lea.vmem [#allocation2], %s674
        // Predicated region
        $region93: #{tpu_custom_call.1} parent=91 // pred_check
          %p676 = pneg %p91
        $region94: #{tpu_custom_call.1} parent=91 // pred_check_branch
          %678 = sbr.rel (%p676) target = $region96
        $region95: #{tpu_custom_call.1} parent=91 // pred_region
          %679 = dma.done %s672, 64
        $region96: #{tpu_custom_call.1} parent=91 // pred_fallthru
          _
        // Predicated region
        $region97: #{tpu_custom_call.1} parent=91 // pred_check
          %p680 = pneg %p112
        $region98: #{tpu_custom_call.1} parent=91 // pred_check_branch
          %682 = sbr.rel (%p680) target = $region100
        $region99: #{tpu_custom_call.1} parent=91 // pred_region
          %683 = dma.done [#allocation6], 512
        $region100: #{tpu_custom_call.1} parent=91 // pred_fallthru
          _
        // Predicated region
        $region101: #{tpu_custom_call.1} parent=91 // pred_check
          %p684 = pneg %p133
        $region102: #{tpu_custom_call.1} parent=91 // pred_check_branch
          %686 = sbr.rel (%p684) target = $region104
        $region103: #{tpu_custom_call.1} parent=91 // pred_region
          %687 = dma.done [#allocation6], 16
        $region104: #{tpu_custom_call.1} parent=91 // pred_fallthru
          _
        // Predicated region
        $region105: #{tpu_custom_call.1} parent=91 // pred_check
          %p688 = pneg %p154
        $region106: #{tpu_custom_call.1} parent=91 // pred_check_branch
          %690 = sbr.rel (%p688) target = $region108
        $region107: #{tpu_custom_call.1} parent=91 // pred_region
          %691 = dma.done [#allocation9], 16
        $region108: #{tpu_custom_call.1} parent=91 // pred_fallthru
          _
        // Predicated region
        $region109: #{tpu_custom_call.1} parent=91 // pred_check
          %p692 = pneg %p175
        $region110: #{tpu_custom_call.1} parent=91 // pred_check_branch
          %694 = sbr.rel (%p692) target = $region112
        $region111: #{tpu_custom_call.1} parent=91 // pred_region
          %695 = dma.done [#allocation9], 16
        $region112: #{tpu_custom_call.1} parent=91 // pred_fallthru
          _
        // Predicated region
        $region113: #{tpu_custom_call.1} parent=91 // pred_check
          %p696 = pneg %p238
        $region114: #{tpu_custom_call.1} parent=91 // pred_check_branch
          %698 = sbr.rel (%p696) target = $region116
        $region115: #{tpu_custom_call.1} parent=91 // pred_region
          %699 = dma.done [#allocation12], 512
        $region116: #{tpu_custom_call.1} parent=91 // pred_fallthru
          _
        // Predicated region
        $region117: #{tpu_custom_call.1} parent=91 // pred_check
          %p700 = pneg %p259
        $region118: #{tpu_custom_call.1} parent=91 // pred_check_branch
          %702 = sbr.rel (%p700) target = $region120
        $region119: #{tpu_custom_call.1} parent=91 // pred_region
          %703 = dma.done [#allocation12], 16
        $region120: #{tpu_custom_call.1} parent=91 // pred_fallthru
          _
        // Predicated region
        $region121: #{tpu_custom_call.1} parent=91 // pred_check
          %p704 = pneg %p280
        $region122: #{tpu_custom_call.1} parent=91 // pred_check_branch
          %706 = sbr.rel (%p704) target = $region124
        $region123: #{tpu_custom_call.1} parent=91 // pred_region
          %707 = dma.done [#allocation15], 16
        $region124: #{tpu_custom_call.1} parent=91 // pred_fallthru
          _
        // Predicated region
        $region125: #{tpu_custom_call.1} parent=91 // pred_check
          %p708 = pneg %p301
        $region126: #{tpu_custom_call.1} parent=91 // pred_check_branch
          %710 = sbr.rel (%p708) target = $region128
        $region127: #{tpu_custom_call.1} parent=91 // pred_region
          %711 = dma.done [#allocation15], 16
        $region128: #{tpu_custom_call.1} parent=91 // pred_fallthru
          _
        %s712 = smul.u32 4, %s44
        %p713 = scmp.lt.s32.totalorder %s712, 7
        %s714 = scalar_select %p713, %s712, 7
        %s715 = smul.addr %s714, 8
        %s716 = scalar_lea.vmem %s0, %s715
        %p717 = pneg %p65
        %p718 = pneg %p62
        %s719 = sand.u32 %s78, 1
        %s720 = scalar_lea.sflag [#allocation3], %s719
        %s721 = sand.u32 %s78, 1
        %s722 = smul.addr %s721, 4
        %s723 = scalar_lea.vmem [#allocation2], %s722
        %p724 = pneg %p91
        %p725 = pneg %p88
        %p726 = pneg %p112
        %p727 = pneg %p109
        %p728 = pneg %p133
        %p729 = pneg %p130
        %p730 = pneg %p154
        %p731 = pneg %p151
        %p732 = pneg %p175
        %p733 = pneg %p172
        %p734 = pneg %p196
        %p735 = pneg %p193
        %p736 = pneg %p217
        %p737 = pneg %p214
        %p738 = pneg %p238
        %p739 = pneg %p235
        %p740 = pneg %p259
        %p741 = pneg %p256
        %p742 = pneg %p280
        %p743 = pneg %p277
        %p744 = pneg %p301
        %p745 = pneg %p298
        %p746 = pneg %p322
        %p747 = pneg %p319
        %p748 = pneg %p343
        %p749 = pneg %p340
        %p750 = pneg %p364
        %p751 = pneg %p361
        %p752 = pneg %p385
        %p753 = pneg %p382
        %s754 = smul.u32 4, %s44
        %p755 = scmp.lt.s32.totalorder %s754, 7
        %s756 = scalar_select %p755, %s754, 7
        %s757 = scalar_lea.vmem %s16, %s756
        %p758 = pneg %p411
        %p759 = pneg %p408
        %s760 = smul.u32 4, %s44
        %p761 = scmp.lt.s32.totalorder %s760, 7
        %s762 = scalar_select %p761, %s760, 7
        %s763 = scalar_lea.vmem %s17, %s762
        %p764 = pneg %p437
        %p765 = pneg %p434
        %p766 = pneg %p463
        %p767 = pneg %p460
        %s768 = sand.u32 %s450, 1
        %s769 = scalar_lea.sflag [#allocation4], %s768
        %s770 = sand.u32 %s450, 1
        %s771 = smul.addr %s770, 32
        %s772 = scalar_lea.vmem [#allocation17], %s771
        %p773 = pneg %p489
        %p774 = pneg %p486
        %s775 = sand.u32 %s476, 1
        %s776 = scalar_lea.sflag [#allocation19], %s775
        %s777 = sand.u32 %s476, 1
        %s778 = smul.addr %s777, 32
        %s779 = scalar_lea.vmem [#allocation18], %s778
        %s780 = smul.u32 4, %s44
        %p781 = scmp.lt.s32.totalorder %s780, 7
        %s782 = scalar_select %p781, %s780, 7
        %s783 = smul.addr %s782, 8
        %s784 = scalar_lea.vmem %s0, %s783
        %s785 = smul.u32 4, %s44
        %s786 = smul.u32 4, %s44
        %s787 = smul.u32 4, %s44
        %p788 = scmp.lt.s32.totalorder %s787, 7
        %s789 = scalar_select %p788, %s787, 7
        %s790 = scalar_lea.vmem %s16, %s789
        %s791 = smul.u32 4, %s44
        %s792 = smul.u32 4, %s44
        %p793 = scmp.lt.s32.totalorder %s792, 7
        %s794 = scalar_select %p793, %s792, 7
        %s795 = scalar_lea.vmem %s17, %s794
        %s796 = smul.u32 4, %s44
        %s797 = smul.u32 4, %s44
        %s798 = smul.u32 4, %s44
        %v800 = vld [vmem:[%s784] sm:$0xff]
        %v801 = vld [vmem:[%s784 + $0x8] sm:$0xff]
        %v802 = vld [vmem:[%s784 + $0x10] sm:$0xff]
        %v803 = vld [vmem:[%s784 + $0x18] sm:$0xff]
        %v804 = vld [vmem:[%s675] sm:$0x1]
        %v805 = vld [vmem:[%s675 + $0x1] sm:$0x1]
        %v806 = vld [vmem:[%s675 + $0x2] sm:$0x1]
        %v807 = vld [vmem:[%s675 + $0x3] sm:$0x1]
        %v808 = vpack.c.bf16 %v801, %v800
        %v809 = vpack.c.bf16 %v803, %v802
        %v810 = vld [vmem:[#allocation5] sm:$0xf]
        %v811 = vld [vmem:[#allocation5 + $0x4] sm:$0xf]
        %v812 = vld [vmem:[#allocation5 + $0x8] sm:$0xf]
        %v813 = vld [vmem:[#allocation5 + $0xc] sm:$0xf]
        %v814 = vld [vmem:[#allocation5 + $0x10] sm:$0xf]
        %v815 = vld [vmem:[#allocation5 + $0x14] sm:$0xf]
        %v816 = vld [vmem:[#allocation5 + $0x18] sm:$0xf]
        %v817 = vld [vmem:[#allocation5 + $0x1c] sm:$0xf]
        %v818 = vld [vmem:[#allocation7] sm:$0x1]
        %v820 = vlaneseq
        %v821 = vshrl.u32 %v820, 7
        %v822 = vsub.s32 0, %v821
        %v823 = vrot.slane %v818, %v822
        %v833 = vunpack.c.l.b16 %v810
        %v834 = vunpack.c.l.b16 %v811
        %v835 = vunpack.c.l.b16 %v812
        %v836 = vunpack.c.l.b16 %v813
        %v837 = vunpack.c.l.b16 %v814
        %v838 = vunpack.c.l.b16 %v815
        %v839 = vunpack.c.l.b16 %v816
        %v840 = vunpack.c.l.b16 %v817
        %v841 = vpack.c.b16 %v834, %v833
        %v842 = vpack.c.b16 %v836, %v835
        %v843 = vpack.c.b16 %v838, %v837
        %v844 = vpack.c.b16 %v840, %v839
        %vm849 = vcmask 523264
        %v851 = vsel %vm849, %v808, 0
        %v854 = vsel %vm849, %v809, 0
        %856 = vmatprep.subr.bf16.mxu0 0
        %857 = vmatpush1.bf16.msra.mxu0 0
        %858 = vmatprep.subr.bf16.mxu0 0
        %859 = vmatpush1.bf16.msra.mxu0 0
        %860 = vmatprep.subr.bf16.mxu0 0
        %861 = vmatpush1.bf16.msra.mxu0 0
        %862 = vmatprep.subr.bf16.mxu0 0
        %863 = vmatpush1.bf16.msra.mxu0 0
        %864 = vmatprep.subr.bf16.mxu0 0
        %865 = vmatpush1.bf16.msra.mxu0 %v844
        %866 = vmatprep.subr.bf16.mxu0 0
        %867 = vmatpush1.bf16.msra.mxu0 %v843
        %868 = vmatprep.subr.bf16.mxu0 0
        %869 = vmatpush1.bf16.msra.mxu0 %v842
        %870 = vmatprep.subr.bf16.mxu0 0
        %871 = vmatpush1.bf16.msra.mxu0 %v841
        %872 = vmatprep.subr.bf16.mxu0 0
        %873 = vmatpush2.bf16.msra.mxu0 0
        %874 = vmatprep.subr.bf16.mxu0 0
        %875 = vmatpush2.bf16.msra.mxu0 0
        %876 = vmatprep.subr.bf16.mxu0 0
        %877 = vmatpush2.bf16.msra.mxu0 0
        %878 = vmatprep.subr.bf16.mxu0 0
        %879 = vmatpush2.bf16.msra.mxu0 0
        %880 = vmatprep.subr.bf16.mxu0 0
        %881 = vmatpush2.bf16.msra.mxu0 0
        %882 = vmatprep.subr.bf16.mxu0 0
        %883 = vmatpush2.bf16.msra.mxu0 0
        %884 = vmatprep.subr.bf16.mxu0 0
        %885 = vmatpush2.bf16.msra.mxu0 0
        %886 = vmatprep.subr.bf16.mxu0 0
        %887 = vmatpush2.bf16.msra.mxu0 0
        %888 = vmatprep.mubr.bf16.mxu0 0
        %889 = vmatmul.mubr.bf16.gmra.mxu0 %v851
        %v890 = vpop.f32.mrf.mxu0
        %v891 = vadd.f32 %v823, %v890
        %v892 = vpop.f32.mrf.mxu0
        %v893 = vpop.f32.mrf.mxu0
        %v894 = vadd.f32 %v823, %v893
        %v895 = vpop.f32.mrf.mxu0
        %896 = vmatprep.mubr.bf16.mxu0 0
        %897 = vmatmul.mubr.bf16.gmra.mxu0 %v854
        %v898 = vpop.f32.mrf.mxu0
        %v899 = vadd.f32 %v823, %v898
        %v900 = vpop.f32.mrf.mxu0
        %v901 = vpop.f32.mrf.mxu0
        %v902 = vadd.f32 %v823, %v901
        %v903 = vpop.f32.mrf.mxu0
        %904 = vdwg.mxu0
        %v909 = vlaneseq
        %v910 = vshrl.u32 %v909, 7
        %v911 = vsub.s32 0, %v910
        %v912 = vrot.slane %v804, %v911
        %v913 = vlaneseq
        %v914 = vshrl.u32 %v913, 7
        %v915 = vsub.s32 0, %v914
        %v916 = vrot.slane %v805, %v915
        %v917 = vlaneseq
        %v918 = vshrl.u32 %v917, 7
        %v919 = vsub.s32 0, %v918
        %v920 = vrot.slane %v806, %v919
        %v921 = vlaneseq
        %v922 = vshrl.u32 %v921, 7
        %v923 = vsub.s32 0, %v922
        %v924 = vrot.slane %v807, %v923
        %v929 = vmul.f32 %v891, %v912
        %v930 = vmul.f32 %v894, %v916
        %v931 = vmul.f32 %v899, %v920
        %v932 = vmul.f32 %v902, %v924
        %v933 = vld [vmem:[#allocation8] sm:$0x1]
        %v934 = vld [vmem:[#allocation10] sm:$0x1]
        %v935 = vsel %vm849, %v929, 0.0
        %936 = vadd.xlane.f32.xlu0 %v935
        %v937 = vpop.xlane.xlu0 %936
        %v938 = vsel %vm849, %v930, 0.0
        %939 = vadd.xlane.f32.xlu0 %v938
        %v940 = vpop.xlane.xlu0 %939
        %v941 = vsel %vm849, %v931, 0.0
        %942 = vadd.xlane.f32.xlu0 %v941
        %v943 = vpop.xlane.xlu0 %942
        %v944 = vsel %vm849, %v932, 0.0
        %945 = vadd.xlane.f32.xlu0 %v944
        %v946 = vpop.xlane.xlu0 %945
        %v947 = vrcp.pop 64.0
        %v948 = vmul.f32 %v937, %v947
        %v949 = vmul.f32 %v940, %v947
        %v950 = vmul.f32 %v943, %v947
        %v951 = vmul.f32 %v946, %v947
        %v952 = vsub.f32 %v929, %v948
        %v953 = vsub.f32 %v930, %v949
        %v954 = vsub.f32 %v931, %v950
        %v955 = vsub.f32 %v932, %v951
        %v956 = vmul.f32 %v952, %v952
        %v957 = vmul.f32 %v953, %v953
        %v958 = vmul.f32 %v954, %v954
        %v959 = vmul.f32 %v955, %v955
        %v960 = vsel %vm849, %v956, 0.0
        %961 = vadd.xlane.f32.xlu0 %v960
        %v962 = vpop.xlane.xlu0 %961
        %v963 = vsel %vm849, %v957, 0.0
        %964 = vadd.xlane.f32.xlu0 %v963
        %v965 = vpop.xlane.xlu0 %964
        %v966 = vsel %vm849, %v958, 0.0
        %967 = vadd.xlane.f32.xlu0 %v966
        %v968 = vpop.xlane.xlu0 %967
        %v969 = vsel %vm849, %v959, 0.0
        %970 = vadd.xlane.f32.xlu0 %v969
        %v971 = vpop.xlane.xlu0 %970
        %v972 = vmul.f32 %v962, %v947
        %v973 = vmul.f32 %v965, %v947
        %v974 = vmul.f32 %v968, %v947
        %v975 = vmul.f32 %v971, %v947
        %v976 = vadd.f32 %v972, 1e-05
        %v977 = vadd.f32 %v973, 1e-05
        %v978 = vadd.f32 %v974, 1e-05
        %v979 = vadd.f32 %v975, 1e-05
        %v980 = vrsqrt.pop %v976
        %v981 = vrsqrt.pop %v977
        %v982 = vrsqrt.pop %v978
        %v983 = vrsqrt.pop %v979
        %v984 = vmul.f32 %v952, %v980
        %v985 = vmul.f32 %v953, %v981
        %v986 = vmul.f32 %v954, %v982
        %v987 = vmul.f32 %v955, %v983
        %v989 = vlaneseq
        %v990 = vshrl.u32 %v989, 7
        %v991 = vsub.s32 0, %v990
        %v992 = vrot.slane %v933, %v991
        %v994 = vmul.f32 %v984, %v992
        %v995 = vmul.f32 %v985, %v992
        %v996 = vmul.f32 %v986, %v992
        %v997 = vmul.f32 %v987, %v992
        %v999 = vlaneseq
        %v1000 = vshrl.u32 %v999, 7
        %v1001 = vsub.s32 0, %v1000
        %v1002 = vrot.slane %v934, %v1001
        %v1004 = vadd.f32 %v994, %v1002
        %v1005 = vadd.f32 %v995, %v1002
        %v1006 = vadd.f32 %v996, %v1002
        %v1007 = vadd.f32 %v997, %v1002
        %v1008 = vpack.c.bf16 %v1005, %v1004
        %v1009 = vpack.c.bf16 %v1007, %v1006
        %v1010 = vld [vmem:[%s6] sm:$0xff]
        %v1011 = vld [vmem:[%s6 + $0x8] sm:$0xff]
        %v1012 = vld [vmem:[%s6 + $0x10] sm:$0xff]
        %v1013 = vld [vmem:[%s6 + $0x18] sm:$0xff]
        %v1014 = vld [vmem:[%s6 + $0x20] sm:$0xff]
        %v1015 = vld [vmem:[%s6 + $0x28] sm:$0xff]
        %v1016 = vld [vmem:[%s6 + $0x30] sm:$0xff]
        %v1017 = vld [vmem:[%s6 + $0x38] sm:$0xff]
        %v1018 = vld [vmem:[%s7] sm:$0x3]
        %v1020 = vlaneseq
        %v1021 = vshrl.u32 %v1020, 7
        %v1022 = vsub.s32 0, %v1021
        %v1023 = vrot.slane %v1018, %v1022
        %v1024 = vlaneseq
        %v1025 = vshrl.u32 %v1024, 7
        %v1026 = vsub.s32 1, %v1025
        %v1027 = vrot.slane %v1018, %v1026
        %v1038 = vunpack.c.l.b16 %v1010
        %v1039 = vunpack.c.h.b16 %v1010
        %v1040 = vunpack.c.l.b16 %v1011
        %v1041 = vunpack.c.h.b16 %v1011
        %v1042 = vunpack.c.l.b16 %v1012
        %v1043 = vunpack.c.h.b16 %v1012
        %v1044 = vunpack.c.l.b16 %v1013
        %v1045 = vunpack.c.h.b16 %v1013
        %v1046 = vunpack.c.l.b16 %v1014
        %v1047 = vunpack.c.h.b16 %v1014
        %v1048 = vunpack.c.l.b16 %v1015
        %v1049 = vunpack.c.h.b16 %v1015
        %v1050 = vunpack.c.l.b16 %v1016
        %v1051 = vunpack.c.h.b16 %v1016
        %v1052 = vunpack.c.l.b16 %v1017
        %v1053 = vunpack.c.h.b16 %v1017
        %v1054 = vpack.c.b16 %v1040, %v1038
        %v1055 = vpack.c.b16 %v1041, %v1039
        %v1056 = vpack.c.b16 %v1044, %v1042
        %v1057 = vpack.c.b16 %v1045, %v1043
        %v1058 = vpack.c.b16 %v1048, %v1046
        %v1059 = vpack.c.b16 %v1049, %v1047
        %v1060 = vpack.c.b16 %v1052, %v1050
        %v1061 = vpack.c.b16 %v1053, %v1051
        %v1071 = vsel %vm849, %v1008, 0
        %v1074 = vsel %vm849, %v1009, 0
        %1076 = vmatprep.subr.bf16.mxu0 0
        %1077 = vmatpush1.bf16.msra.mxu0 0
        %1078 = vmatprep.subr.bf16.mxu0 0
        %1079 = vmatpush1.bf16.msra.mxu0 0
        %1080 = vmatprep.subr.bf16.mxu0 0
        %1081 = vmatpush1.bf16.msra.mxu0 0
        %1082 = vmatprep.subr.bf16.mxu0 0
        %1083 = vmatpush1.bf16.msra.mxu0 0
        %1084 = vmatprep.subr.bf16.mxu0 %v1061
        %1085 = vmatpush1.bf16.msra.mxu0 %v1060
        %1086 = vmatprep.subr.bf16.mxu0 %v1059
        %1087 = vmatpush1.bf16.msra.mxu0 %v1058
        %1088 = vmatprep.subr.bf16.mxu0 %v1057
        %1089 = vmatpush1.bf16.msra.mxu0 %v1056
        %1090 = vmatprep.subr.bf16.mxu0 %v1055
        %1091 = vmatpush1.bf16.msra.mxu0 %v1054
        %1092 = vmatprep.subr.bf16.mxu0 0
        %1093 = vmatpush2.bf16.msra.mxu0 0
        %1094 = vmatprep.subr.bf16.mxu0 0
        %1095 = vmatpush2.bf16.msra.mxu0 0
        %1096 = vmatprep.subr.bf16.mxu0 0
        %1097 = vmatpush2.bf16.msra.mxu0 0
        %1098 = vmatprep.subr.bf16.mxu0 0
        %1099 = vmatpush2.bf16.msra.mxu0 0
        %1100 = vmatprep.subr.bf16.mxu0 0
        %1101 = vmatpush2.bf16.msra.mxu0 0
        %1102 = vmatprep.subr.bf16.mxu0 0
        %1103 = vmatpush2.bf16.msra.mxu0 0
        %1104 = vmatprep.subr.bf16.mxu0 0
        %1105 = vmatpush2.bf16.msra.mxu0 0
        %1106 = vmatprep.subr.bf16.mxu0 0
        %1107 = vmatpush2.bf16.msra.mxu0 0
        %1108 = vmatprep.mubr.bf16.mxu0 0
        %1109 = vmatmul.mubr.bf16.gmra.mxu0 %v1071
        %v1110 = vpop.f32.mrf.mxu0
        %v1111 = vadd.f32 %v1023, %v1110
        %v1112 = vpop.f32.mrf.mxu0
        %v1113 = vadd.f32 %v1027, %v1112
        %v1114 = vpop.f32.mrf.mxu0
        %v1115 = vadd.f32 %v1023, %v1114
        %v1116 = vpop.f32.mrf.mxu0
        %v1117 = vadd.f32 %v1027, %v1116
        %1118 = vmatprep.mubr.bf16.mxu0 0
        %1119 = vmatmul.mubr.bf16.gmra.mxu0 %v1074
        %v1120 = vpop.f32.mrf.mxu0
        %v1121 = vadd.f32 %v1023, %v1120
        %v1122 = vpop.f32.mrf.mxu0
        %v1123 = vadd.f32 %v1027, %v1122
        %v1124 = vpop.f32.mrf.mxu0
        %v1125 = vadd.f32 %v1023, %v1124
        %v1126 = vpop.f32.mrf.mxu0
        %v1127 = vadd.f32 %v1027, %v1126
        %1128 = vdwg.mxu0
        %v1129 = vpack.c.bf16 %v1111, %v1111
        %v1130 = vpack.c.bf16 %v1115, %v1115
        %v1131 = vpack.c.bf16 %v1121, %v1121
        %v1132 = vpack.c.bf16 %v1125, %v1125
        %v1133 = vpack.c.bf16 %v1113, %v1113
        %v1134 = vpack.c.bf16 %v1117, %v1117
        %v1135 = vpack.c.bf16 %v1123, %v1123
        %v1136 = vpack.c.bf16 %v1127, %v1127
        %1138 = vrot.lane.b32.xlu0 %v1129, 64
        %v1139 = vpop.permute.xlu0 %1138
        %vm1140 = vcmask 130048
        %v1142 = vsel %vm1140, %v1129, 0
        %v1145 = vsel %vm1140, %v1139, 0
        %1147 = vmatprep.subr.bf16.mxu0 0
        %1148 = vmatpush1.bf16.xpose.msra.mxu0 0
        %1149 = vmatprep.subr.bf16.mxu0 0
        %1150 = vmatpush1.bf16.xpose.msra.mxu0 0
        %1151 = vmatprep.subr.bf16.mxu0 0
        %1152 = vmatpush1.bf16.xpose.msra.mxu0 0
        %1153 = vmatprep.subr.bf16.mxu0 0
        %1154 = vmatpush1.bf16.xpose.msra.mxu0 0
        %1155 = vmatprep.subr.bf16.mxu0 0
        %1156 = vmatpush1.bf16.xpose.msra.mxu0 0
        %1157 = vmatprep.subr.bf16.mxu0 0
        %1158 = vmatpush1.bf16.xpose.msra.mxu0 0
        %1159 = vmatprep.subr.bf16.mxu0 0
        %1160 = vmatpush1.bf16.xpose.msra.mxu0 0
        %1161 = vmatprep.subr.bf16.mxu0 0
        %1162 = vmatpush1.bf16.xpose.msra.mxu0 %v1145
        %1163 = vmatprep.subr.bf16.mxu0 0
        %1164 = vmatpush2.bf16.xpose.msra.mxu0 0
        %1165 = vmatprep.subr.bf16.mxu0 0
        %1166 = vmatpush2.bf16.xpose.msra.mxu0 0
        %1167 = vmatprep.subr.bf16.mxu0 0
        %1168 = vmatpush2.bf16.xpose.msra.mxu0 0
        %1169 = vmatprep.subr.bf16.mxu0 0
        %1170 = vmatpush2.bf16.xpose.msra.mxu0 0
        %1171 = vmatprep.subr.bf16.mxu0 0
        %1172 = vmatpush2.bf16.xpose.msra.mxu0 0
        %1173 = vmatprep.subr.bf16.mxu0 0
        %1174 = vmatpush2.bf16.xpose.msra.mxu0 0
        %1175 = vmatprep.subr.bf16.mxu0 0
        %1176 = vmatpush2.bf16.xpose.msra.mxu0 0
        %1177 = vmatprep.subr.bf16.mxu0 0
        %1178 = vmatpush2.bf16.xpose.msra.mxu0 0
        %1179 = vmatprep.mubr.bf16.mxu0 0
        %1180 = vmatmul.mubr.bf16.gmra.mxu0 %v1142
        %v1181 = vpop.f32.mrf.mxu0
        %v1182 = vadd.f32 0.0, %v1181
        %v1183 = vpop.f32.mrf.mxu0
        %v1184 = vpop.f32.mrf.mxu0
        %v1185 = vpop.f32.mrf.mxu0
        %1186 = vdwg.mxu0
        %1188 = vrot.lane.b32.xlu0 %v1130, 64
        %v1189 = vpop.permute.xlu0 %1188
        %v1191 = vsel %vm1140, %v1130, 0
        %v1194 = vsel %vm1140, %v1189, 0
        %1196 = vmatprep.subr.bf16.mxu0 0
        %1197 = vmatpush1.bf16.xpose.msra.mxu0 0
        %1198 = vmatprep.subr.bf16.mxu0 0
        %1199 = vmatpush1.bf16.xpose.msra.mxu0 0
        %1200 = vmatprep.subr.bf16.mxu0 0
        %1201 = vmatpush1.bf16.xpose.msra.mxu0 0
        %1202 = vmatprep.subr.bf16.mxu0 0
        %1203 = vmatpush1.bf16.xpose.msra.mxu0 0
        %1204 = vmatprep.subr.bf16.mxu0 0
        %1205 = vmatpush1.bf16.xpose.msra.mxu0 0
        %1206 = vmatprep.subr.bf16.mxu0 0
        %1207 = vmatpush1.bf16.xpose.msra.mxu0 0
        %1208 = vmatprep.subr.bf16.mxu0 0
        %1209 = vmatpush1.bf16.xpose.msra.mxu0 0
        %1210 = vmatprep.subr.bf16.mxu0 0
        %1211 = vmatpush1.bf16.xpose.msra.mxu0 %v1194
        %1212 = vmatprep.subr.bf16.mxu0 0
        %1213 = vmatpush2.bf16.xpose.msra.mxu0 0
        %1214 = vmatprep.subr.bf16.mxu0 0
        %1215 = vmatpush2.bf16.xpose.msra.mxu0 0
        %1216 = vmatprep.subr.bf16.mxu0 0
        %1217 = vmatpush2.bf16.xpose.msra.mxu0 0
        %1218 = vmatprep.subr.bf16.mxu0 0
        %1219 = vmatpush2.bf16.xpose.msra.mxu0 0
        %1220 = vmatprep.subr.bf16.mxu0 0
        %1221 = vmatpush2.bf16.xpose.msra.mxu0 0
        %1222 = vmatprep.subr.bf16.mxu0 0
        %1223 = vmatpush2.bf16.xpose.msra.mxu0 0
        %1224 = vmatprep.subr.bf16.mxu0 0
        %1225 = vmatpush2.bf16.xpose.msra.mxu0 0
        %1226 = vmatprep.subr.bf16.mxu0 0
        %1227 = vmatpush2.bf16.xpose.msra.mxu0 0
        %1228 = vmatprep.mubr.bf16.mxu0 0
        %1229 = vmatmul.mubr.bf16.gmra.mxu0 %v1191
        %v1230 = vpop.f32.mrf.mxu0
        %v1231 = vadd.f32 0.0, %v1230
        %v1232 = vpop.f32.mrf.mxu0
        %v1233 = vpop.f32.mrf.mxu0
        %v1234 = vpop.f32.mrf.mxu0
        %1235 = vdwg.mxu0
        %1237 = vrot.lane.b32.xlu0 %v1131, 64
        %v1238 = vpop.permute.xlu0 %1237
        %v1240 = vsel %vm1140, %v1131, 0
        %v1243 = vsel %vm1140, %v1238, 0
        %1245 = vmatprep.subr.bf16.mxu0 0
        %1246 = vmatpush1.bf16.xpose.msra.mxu0 0
        %1247 = vmatprep.subr.bf16.mxu0 0
        %1248 = vmatpush1.bf16.xpose.msra.mxu0 0
        %1249 = vmatprep.subr.bf16.mxu0 0
        %1250 = vmatpush1.bf16.xpose.msra.mxu0 0
        %1251 = vmatprep.subr.bf16.mxu0 0
        %1252 = vmatpush1.bf16.xpose.msra.mxu0 0
        %1253 = vmatprep.subr.bf16.mxu0 0
        %1254 = vmatpush1.bf16.xpose.msra.mxu0 0
        %1255 = vmatprep.subr.bf16.mxu0 0
        %1256 = vmatpush1.bf16.xpose.msra.mxu0 0
        %1257 = vmatprep.subr.bf16.mxu0 0
        %1258 = vmatpush1.bf16.xpose.msra.mxu0 0
        %1259 = vmatprep.subr.bf16.mxu0 0
        %1260 = vmatpush1.bf16.xpose.msra.mxu0 %v1243
        %1261 = vmatprep.subr.bf16.mxu0 0
        %1262 = vmatpush2.bf16.xpose.msra.mxu0 0
        %1263 = vmatprep.subr.bf16.mxu0 0
        %1264 = vmatpush2.bf16.xpose.msra.mxu0 0
        %1265 = vmatprep.subr.bf16.mxu0 0
        %1266 = vmatpush2.bf16.xpose.msra.mxu0 0
        %1267 = vmatprep.subr.bf16.mxu0 0
        %1268 = vmatpush2.bf16.xpose.msra.mxu0 0
        %1269 = vmatprep.subr.bf16.mxu0 0
        %1270 = vmatpush2.bf16.xpose.msra.mxu0 0
        %1271 = vmatprep.subr.bf16.mxu0 0
        %1272 = vmatpush2.bf16.xpose.msra.mxu0 0
        %1273 = vmatprep.subr.bf16.mxu0 0
        %1274 = vmatpush2.bf16.xpose.msra.mxu0 0
        %1275 = vmatprep.subr.bf16.mxu0 0
        %1276 = vmatpush2.bf16.xpose.msra.mxu0 0
        %1277 = vmatprep.mubr.bf16.mxu0 0
        %1278 = vmatmul.mubr.bf16.gmra.mxu0 %v1240
        %v1279 = vpop.f32.mrf.mxu0
        %v1280 = vadd.f32 0.0, %v1279
        %v1281 = vpop.f32.mrf.mxu0
        %v1282 = vpop.f32.mrf.mxu0
        %v1283 = vpop.f32.mrf.mxu0
        %1284 = vdwg.mxu0
        %1286 = vrot.lane.b32.xlu0 %v1132, 64
        %v1287 = vpop.permute.xlu0 %1286
        %v1289 = vsel %vm1140, %v1132, 0
        %v1292 = vsel %vm1140, %v1287, 0
        %1294 = vmatprep.subr.bf16.mxu0 0
        %1295 = vmatpush1.bf16.xpose.msra.mxu0 0
        %1296 = vmatprep.subr.bf16.mxu0 0
        %1297 = vmatpush1.bf16.xpose.msra.mxu0 0
        %1298 = vmatprep.subr.bf16.mxu0 0
        %1299 = vmatpush1.bf16.xpose.msra.mxu0 0
        %1300 = vmatprep.subr.bf16.mxu0 0
        %1301 = vmatpush1.bf16.xpose.msra.mxu0 0
        %1302 = vmatprep.subr.bf16.mxu0 0
        %1303 = vmatpush1.bf16.xpose.msra.mxu0 0
        %1304 = vmatprep.subr.bf16.mxu0 0
        %1305 = vmatpush1.bf16.xpose.msra.mxu0 0
        %1306 = vmatprep.subr.bf16.mxu0 0
        %1307 = vmatpush1.bf16.xpose.msra.mxu0 0
        %1308 = vmatprep.subr.bf16.mxu0 0
        %1309 = vmatpush1.bf16.xpose.msra.mxu0 %v1292
        %1310 = vmatprep.subr.bf16.mxu0 0
        %1311 = vmatpush2.bf16.xpose.msra.mxu0 0
        %1312 = vmatprep.subr.bf16.mxu0 0
        %1313 = vmatpush2.bf16.xpose.msra.mxu0 0
        %1314 = vmatprep.subr.bf16.mxu0 0
        %1315 = vmatpush2.bf16.xpose.msra.mxu0 0
        %1316 = vmatprep.subr.bf16.mxu0 0
        %1317 = vmatpush2.bf16.xpose.msra.mxu0 0
        %1318 = vmatprep.subr.bf16.mxu0 0
        %1319 = vmatpush2.bf16.xpose.msra.mxu0 0
        %1320 = vmatprep.subr.bf16.mxu0 0
        %1321 = vmatpush2.bf16.xpose.msra.mxu0 0
        %1322 = vmatprep.subr.bf16.mxu0 0
        %1323 = vmatpush2.bf16.xpose.msra.mxu0 0
        %1324 = vmatprep.subr.bf16.mxu0 0
        %1325 = vmatpush2.bf16.xpose.msra.mxu0 0
        %1326 = vmatprep.mubr.bf16.mxu0 0
        %1327 = vmatmul.mubr.bf16.gmra.mxu0 %v1289
        %v1328 = vpop.f32.mrf.mxu0
        %v1329 = vadd.f32 0.0, %v1328
        %v1330 = vpop.f32.mrf.mxu0
        %v1331 = vpop.f32.mrf.mxu0
        %v1332 = vpop.f32.mrf.mxu0
        %1333 = vdwg.mxu0
        %vm1334 = vcmask 64512
        %v1335 = vsel %vm1334, %v1182, -inf
        %1336 = vmax.xlane.f32.xlu0 %v1335
        %v1337 = vpop.xlane.xlu0 %1336
        %v1338 = vsel %vm1334, %v1231, -inf
        %1339 = vmax.xlane.f32.xlu0 %v1338
        %v1340 = vpop.xlane.xlu0 %1339
        %v1341 = vsel %vm1334, %v1280, -inf
        %1342 = vmax.xlane.f32.xlu0 %v1341
        %v1343 = vpop.xlane.xlu0 %1342
        %v1344 = vsel %vm1334, %v1329, -inf
        %1345 = vmax.xlane.f32.xlu0 %v1344
        %v1346 = vpop.xlane.xlu0 %1345
        %v1347 = vsub.f32 %v1182, %v1337
        %v1348 = vsub.f32 %v1231, %v1340
        %v1349 = vsub.f32 %v1280, %v1343
        %v1350 = vsub.f32 %v1329, %v1346
        %v1351 = vmul.f32 %v1347, 1.442695
        %v1352 = vpow.pop %v1351
        %v1353 = vmul.f32 %v1348, 1.442695
        %v1354 = vpow.pop %v1353
        %v1355 = vmul.f32 %v1349, 1.442695
        %v1356 = vpow.pop %v1355
        %v1357 = vmul.f32 %v1350, 1.442695
        %v1358 = vpow.pop %v1357
        %v1359 = vsel %vm1334, %v1352, 0.0
        %1360 = vadd.xlane.f32.xlu0 %v1359
        %v1361 = vpop.xlane.xlu0 %1360
        %v1362 = vsel %vm1334, %v1354, 0.0
        %1363 = vadd.xlane.f32.xlu0 %v1362
        %v1364 = vpop.xlane.xlu0 %1363
        %v1365 = vsel %vm1334, %v1356, 0.0
        %1366 = vadd.xlane.f32.xlu0 %v1365
        %v1367 = vpop.xlane.xlu0 %1366
        %v1368 = vsel %vm1334, %v1358, 0.0
        %1369 = vadd.xlane.f32.xlu0 %v1368
        %v1370 = vpop.xlane.xlu0 %1369
        %v1371 = vrcp.pop %v1361
        %v1372 = vrcp.pop %v1364
        %v1373 = vrcp.pop %v1367
        %v1374 = vrcp.pop %v1370
        %v1375 = vmul.f32 %v1352, %v1371
        %v1376 = vmul.f32 %v1354, %v1372
        %v1377 = vmul.f32 %v1356, %v1373
        %v1378 = vmul.f32 %v1358, %v1374
        %v1379 = vpack.c.bf16 %v1375, %v1375
        %v1380 = vpack.c.bf16 %v1376, %v1376
        %v1381 = vpack.c.bf16 %v1377, %v1377
        %v1382 = vpack.c.bf16 %v1378, %v1378
        %v1384 = vsel %vm1334, %v1379, 0
        %vm1386 = vcmask 1043456
        %v1388 = vsel %vm1386, %v1133, 0
        %1390 = vmatprep.subr.bf16.mxu0 0
        %1391 = vmatpush1.bf16.msra.mxu0 0
        %1392 = vmatprep.subr.bf16.mxu0 0
        %1393 = vmatpush1.bf16.msra.mxu0 0
        %1394 = vmatprep.subr.bf16.mxu0 0
        %1395 = vmatpush1.bf16.msra.mxu0 0
        %1396 = vmatprep.subr.bf16.mxu0 0
        %1397 = vmatpush1.bf16.msra.mxu0 0
        %1398 = vmatprep.subr.bf16.mxu0 0
        %1399 = vmatpush1.bf16.msra.mxu0 0
        %1400 = vmatprep.subr.bf16.mxu0 0
        %1401 = vmatpush1.bf16.msra.mxu0 0
        %1402 = vmatprep.subr.bf16.mxu0 0
        %1403 = vmatpush1.bf16.msra.mxu0 0
        %1404 = vmatprep.subr.bf16.mxu0 0
        %1405 = vmatpush1.bf16.msra.mxu0 %v1388
        %1406 = vmatprep.subr.bf16.mxu0 0
        %1407 = vmatpush2.bf16.msra.mxu0 0
        %1408 = vmatprep.subr.bf16.mxu0 0
        %1409 = vmatpush2.bf16.msra.mxu0 0
        %1410 = vmatprep.subr.bf16.mxu0 0
        %1411 = vmatpush2.bf16.msra.mxu0 0
        %1412 = vmatprep.subr.bf16.mxu0 0
        %1413 = vmatpush2.bf16.msra.mxu0 0
        %1414 = vmatprep.subr.bf16.mxu0 0
        %1415 = vmatpush2.bf16.msra.mxu0 0
        %1416 = vmatprep.subr.bf16.mxu0 0
        %1417 = vmatpush2.bf16.msra.mxu0 0
        %1418 = vmatprep.subr.bf16.mxu0 0
        %1419 = vmatpush2.bf16.msra.mxu0 0
        %1420 = vmatprep.subr.bf16.mxu0 0
        %1421 = vmatpush2.bf16.msra.mxu0 0
        %1422 = vmatprep.mubr.bf16.mxu0 0
        %1423 = vmatmul.mubr.bf16.gmra.mxu0 %v1384
        %v1424 = vpop.f32.mrf.mxu0
        %v1425 = vadd.f32 0.0, %v1424
        %v1426 = vpop.f32.mrf.mxu0
        %v1427 = vpop.f32.mrf.mxu0
        %v1428 = vpop.f32.mrf.mxu0
        %1429 = vdwg.mxu0
        %v1431 = vsel %vm1334, %v1380, 0
        %v1434 = vsel %vm1386, %v1134, 0
        %1436 = vmatprep.subr.bf16.mxu0 0
        %1437 = vmatpush1.bf16.msra.mxu0 0
        %1438 = vmatprep.subr.bf16.mxu0 0
        %1439 = vmatpush1.bf16.msra.mxu0 0
        %1440 = vmatprep.subr.bf16.mxu0 0
        %1441 = vmatpush1.bf16.msra.mxu0 0
        %1442 = vmatprep.subr.bf16.mxu0 0
        %1443 = vmatpush1.bf16.msra.mxu0 0
        %1444 = vmatprep.subr.bf16.mxu0 0
        %1445 = vmatpush1.bf16.msra.mxu0 0
        %1446 = vmatprep.subr.bf16.mxu0 0
        %1447 = vmatpush1.bf16.msra.mxu0 0
        %1448 = vmatprep.subr.bf16.mxu0 0
        %1449 = vmatpush1.bf16.msra.mxu0 0
        %1450 = vmatprep.subr.bf16.mxu0 0
        %1451 = vmatpush1.bf16.msra.mxu0 %v1434
        %1452 = vmatprep.subr.bf16.mxu0 0
        %1453 = vmatpush2.bf16.msra.mxu0 0
        %1454 = vmatprep.subr.bf16.mxu0 0
        %1455 = vmatpush2.bf16.msra.mxu0 0
        %1456 = vmatprep.subr.bf16.mxu0 0
        %1457 = vmatpush2.bf16.msra.mxu0 0
        %1458 = vmatprep.subr.bf16.mxu0 0
        %1459 = vmatpush2.bf16.msra.mxu0 0
        %1460 = vmatprep.subr.bf16.mxu0 0
        %1461 = vmatpush2.bf16.msra.mxu0 0
        %1462 = vmatprep.subr.bf16.mxu0 0
        %1463 = vmatpush2.bf16.msra.mxu0 0
        %1464 = vmatprep.subr.bf16.mxu0 0
        %1465 = vmatpush2.bf16.msra.mxu0 0
        %1466 = vmatprep.subr.bf16.mxu0 0
        %1467 = vmatpush2.bf16.msra.mxu0 0
        %1468 = vmatprep.mubr.bf16.mxu0 0
        %1469 = vmatmul.mubr.bf16.gmra.mxu0 %v1431
        %v1470 = vpop.f32.mrf.mxu0
        %v1471 = vadd.f32 0.0, %v1470
        %v1472 = vpop.f32.mrf.mxu0
        %v1473 = vpop.f32.mrf.mxu0
        %v1474 = vpop.f32.mrf.mxu0
        %1475 = vdwg.mxu0
        %v1477 = vsel %vm1334, %v1381, 0
        %v1480 = vsel %vm1386, %v1135, 0
        %1482 = vmatprep.subr.bf16.mxu0 0
        %1483 = vmatpush1.bf16.msra.mxu0 0
        %1484 = vmatprep.subr.bf16.mxu0 0
        %1485 = vmatpush1.bf16.msra.mxu0 0
        %1486 = vmatprep.subr.bf16.mxu0 0
        %1487 = vmatpush1.bf16.msra.mxu0 0
        %1488 = vmatprep.subr.bf16.mxu0 0
        %1489 = vmatpush1.bf16.msra.mxu0 0
        %1490 = vmatprep.subr.bf16.mxu0 0
        %1491 = vmatpush1.bf16.msra.mxu0 0
        %1492 = vmatprep.subr.bf16.mxu0 0
        %1493 = vmatpush1.bf16.msra.mxu0 0
        %1494 = vmatprep.subr.bf16.mxu0 0
        %1495 = vmatpush1.bf16.msra.mxu0 0
        %1496 = vmatprep.subr.bf16.mxu0 0
        %1497 = vmatpush1.bf16.msra.mxu0 %v1480
        %1498 = vmatprep.subr.bf16.mxu0 0
        %1499 = vmatpush2.bf16.msra.mxu0 0
        %1500 = vmatprep.subr.bf16.mxu0 0
        %1501 = vmatpush2.bf16.msra.mxu0 0
        %1502 = vmatprep.subr.bf16.mxu0 0
        %1503 = vmatpush2.bf16.msra.mxu0 0
        %1504 = vmatprep.subr.bf16.mxu0 0
        %1505 = vmatpush2.bf16.msra.mxu0 0
        %1506 = vmatprep.subr.bf16.mxu0 0
        %1507 = vmatpush2.bf16.msra.mxu0 0
        %1508 = vmatprep.subr.bf16.mxu0 0
        %1509 = vmatpush2.bf16.msra.mxu0 0
        %1510 = vmatprep.subr.bf16.mxu0 0
        %1511 = vmatpush2.bf16.msra.mxu0 0
        %1512 = vmatprep.subr.bf16.mxu0 0
        %1513 = vmatpush2.bf16.msra.mxu0 0
        %1514 = vmatprep.mubr.bf16.mxu0 0
        %1515 = vmatmul.mubr.bf16.gmra.mxu0 %v1477
        %v1516 = vpop.f32.mrf.mxu0
        %v1517 = vadd.f32 0.0, %v1516
        %v1518 = vpop.f32.mrf.mxu0
        %v1519 = vpop.f32.mrf.mxu0
        %v1520 = vpop.f32.mrf.mxu0
        %1521 = vdwg.mxu0
        %v1523 = vsel %vm1334, %v1382, 0
        %v1526 = vsel %vm1386, %v1136, 0
        %1528 = vmatprep.subr.bf16.mxu0 0
        %1529 = vmatpush1.bf16.msra.mxu0 0
        %1530 = vmatprep.subr.bf16.mxu0 0
        %1531 = vmatpush1.bf16.msra.mxu0 0
        %1532 = vmatprep.subr.bf16.mxu0 0
        %1533 = vmatpush1.bf16.msra.mxu0 0
        %1534 = vmatprep.subr.bf16.mxu0 0
        %1535 = vmatpush1.bf16.msra.mxu0 0
        %1536 = vmatprep.subr.bf16.mxu0 0
        %1537 = vmatpush1.bf16.msra.mxu0 0
        %1538 = vmatprep.subr.bf16.mxu0 0
        %1539 = vmatpush1.bf16.msra.mxu0 0
        %1540 = vmatprep.subr.bf16.mxu0 0
        %1541 = vmatpush1.bf16.msra.mxu0 0
        %1542 = vmatprep.subr.bf16.mxu0 0
        %1543 = vmatpush1.bf16.msra.mxu0 %v1526
        %1544 = vmatprep.subr.bf16.mxu0 0
        %1545 = vmatpush2.bf16.msra.mxu0 0
        %1546 = vmatprep.subr.bf16.mxu0 0
        %1547 = vmatpush2.bf16.msra.mxu0 0
        %1548 = vmatprep.subr.bf16.mxu0 0
        %1549 = vmatpush2.bf16.msra.mxu0 0
        %1550 = vmatprep.subr.bf16.mxu0 0
        %1551 = vmatpush2.bf16.msra.mxu0 0
        %1552 = vmatprep.subr.bf16.mxu0 0
        %1553 = vmatpush2.bf16.msra.mxu0 0
        %1554 = vmatprep.subr.bf16.mxu0 0
        %1555 = vmatpush2.bf16.msra.mxu0 0
        %1556 = vmatprep.subr.bf16.mxu0 0
        %1557 = vmatpush2.bf16.msra.mxu0 0
        %1558 = vmatprep.subr.bf16.mxu0 0
        %1559 = vmatpush2.bf16.msra.mxu0 0
        %1560 = vmatprep.mubr.bf16.mxu0 0
        %1561 = vmatmul.mubr.bf16.gmra.mxu0 %v1523
        %v1562 = vpop.f32.mrf.mxu0
        %v1563 = vadd.f32 0.0, %v1562
        %v1564 = vpop.f32.mrf.mxu0
        %v1565 = vpop.f32.mrf.mxu0
        %v1566 = vpop.f32.mrf.mxu0
        %1567 = vdwg.mxu0
        %v1568 = vpack.c.bf16 %v1471, %v1425
        %v1569 = vpack.c.bf16 %v1563, %v1517
        %v1570 = vld [vmem:[#allocation11] sm:$0xf]
        %v1571 = vld [vmem:[#allocation11 + $0x4] sm:$0xf]
        %1572 = vrot.lane.b32.xlu0 %v1129, 112
        %v1573 = vpop.permute.xlu0 %1572
        %1574 = vrot.lane.b32.xlu0 %v1129, 48
        %v1575 = vpop.permute.xlu0 %1574
        %v1577 = vsel %vm1140, %v1573, 0
        %v1580 = vsel %vm1140, %v1575, 0
        %1582 = vmatprep.subr.bf16.mxu0 0
        %1583 = vmatpush1.bf16.xpose.msra.mxu0 0
        %1584 = vmatprep.subr.bf16.mxu0 0
        %1585 = vmatpush1.bf16.xpose.msra.mxu0 0
        %1586 = vmatprep.subr.bf16.mxu0 0
        %1587 = vmatpush1.bf16.xpose.msra.mxu0 0
        %1588 = vmatprep.subr.bf16.mxu0 0
        %1589 = vmatpush1.bf16.xpose.msra.mxu0 0
        %1590 = vmatprep.subr.bf16.mxu0 0
        %1591 = vmatpush1.bf16.xpose.msra.mxu0 0
        %1592 = vmatprep.subr.bf16.mxu0 0
        %1593 = vmatpush1.bf16.xpose.msra.mxu0 0
        %1594 = vmatprep.subr.bf16.mxu0 0
        %1595 = vmatpush1.bf16.xpose.msra.mxu0 0
        %1596 = vmatprep.subr.bf16.mxu0 0
        %1597 = vmatpush1.bf16.xpose.msra.mxu0 %v1580
        %1598 = vmatprep.subr.bf16.mxu0 0
        %1599 = vmatpush2.bf16.xpose.msra.mxu0 0
        %1600 = vmatprep.subr.bf16.mxu0 0
        %1601 = vmatpush2.bf16.xpose.msra.mxu0 0
        %1602 = vmatprep.subr.bf16.mxu0 0
        %1603 = vmatpush2.bf16.xpose.msra.mxu0 0
        %1604 = vmatprep.subr.bf16.mxu0 0
        %1605 = vmatpush2.bf16.xpose.msra.mxu0 0
        %1606 = vmatprep.subr.bf16.mxu0 0
        %1607 = vmatpush2.bf16.xpose.msra.mxu0 0
        %1608 = vmatprep.subr.bf16.mxu0 0
        %1609 = vmatpush2.bf16.xpose.msra.mxu0 0
        %1610 = vmatprep.subr.bf16.mxu0 0
        %1611 = vmatpush2.bf16.xpose.msra.mxu0 0
        %1612 = vmatprep.subr.bf16.mxu0 0
        %1613 = vmatpush2.bf16.xpose.msra.mxu0 0
        %1614 = vmatprep.mubr.bf16.mxu0 0
        %1615 = vmatmul.mubr.bf16.gmra.mxu0 %v1577
        %v1616 = vpop.f32.mrf.mxu0
        %v1617 = vadd.f32 0.0, %v1616
        %v1618 = vpop.f32.mrf.mxu0
        %v1619 = vpop.f32.mrf.mxu0
        %v1620 = vpop.f32.mrf.mxu0
        %1621 = vdwg.mxu0
        %1622 = vrot.lane.b32.xlu0 %v1130, 112
        %v1623 = vpop.permute.xlu0 %1622
        %1624 = vrot.lane.b32.xlu0 %v1130, 48
        %v1625 = vpop.permute.xlu0 %1624
        %v1627 = vsel %vm1140, %v1623, 0
        %v1630 = vsel %vm1140, %v1625, 0
        %1632 = vmatprep.subr.bf16.mxu0 0
        %1633 = vmatpush1.bf16.xpose.msra.mxu0 0
        %1634 = vmatprep.subr.bf16.mxu0 0
        %1635 = vmatpush1.bf16.xpose.msra.mxu0 0
        %1636 = vmatprep.subr.bf16.mxu0 0
        %1637 = vmatpush1.bf16.xpose.msra.mxu0 0
        %1638 = vmatprep.subr.bf16.mxu0 0
        %1639 = vmatpush1.bf16.xpose.msra.mxu0 0
        %1640 = vmatprep.subr.bf16.mxu0 0
        %1641 = vmatpush1.bf16.xpose.msra.mxu0 0
        %1642 = vmatprep.subr.bf16.mxu0 0
        %1643 = vmatpush1.bf16.xpose.msra.mxu0 0
        %1644 = vmatprep.subr.bf16.mxu0 0
        %1645 = vmatpush1.bf16.xpose.msra.mxu0 0
        %1646 = vmatprep.subr.bf16.mxu0 0
        %1647 = vmatpush1.bf16.xpose.msra.mxu0 %v1630
        %1648 = vmatprep.subr.bf16.mxu0 0
        %1649 = vmatpush2.bf16.xpose.msra.mxu0 0
        %1650 = vmatprep.subr.bf16.mxu0 0
        %1651 = vmatpush2.bf16.xpose.msra.mxu0 0
        %1652 = vmatprep.subr.bf16.mxu0 0
        %1653 = vmatpush2.bf16.xpose.msra.mxu0 0
        %1654 = vmatprep.subr.bf16.mxu0 0
        %1655 = vmatpush2.bf16.xpose.msra.mxu0 0
        %1656 = vmatprep.subr.bf16.mxu0 0
        %1657 = vmatpush2.bf16.xpose.msra.mxu0 0
        %1658 = vmatprep.subr.bf16.mxu0 0
        %1659 = vmatpush2.bf16.xpose.msra.mxu0 0
        %1660 = vmatprep.subr.bf16.mxu0 0
        %1661 = vmatpush2.bf16.xpose.msra.mxu0 0
        %1662 = vmatprep.subr.bf16.mxu0 0
        %1663 = vmatpush2.bf16.xpose.msra.mxu0 0
        %1664 = vmatprep.mubr.bf16.mxu0 0
        %1665 = vmatmul.mubr.bf16.gmra.mxu0 %v1627
        %v1666 = vpop.f32.mrf.mxu0
        %v1667 = vadd.f32 0.0, %v1666
        %v1668 = vpop.f32.mrf.mxu0
        %v1669 = vpop.f32.mrf.mxu0
        %v1670 = vpop.f32.mrf.mxu0
        %1671 = vdwg.mxu0
        %1672 = vrot.lane.b32.xlu0 %v1131, 112
        %v1673 = vpop.permute.xlu0 %1672
        %1674 = vrot.lane.b32.xlu0 %v1131, 48
        %v1675 = vpop.permute.xlu0 %1674
        %v1677 = vsel %vm1140, %v1673, 0
        %v1680 = vsel %vm1140, %v1675, 0
        %1682 = vmatprep.subr.bf16.mxu0 0
        %1683 = vmatpush1.bf16.xpose.msra.mxu0 0
        %1684 = vmatprep.subr.bf16.mxu0 0
        %1685 = vmatpush1.bf16.xpose.msra.mxu0 0
        %1686 = vmatprep.subr.bf16.mxu0 0
        %1687 = vmatpush1.bf16.xpose.msra.mxu0 0
        %1688 = vmatprep.subr.bf16.mxu0 0
        %1689 = vmatpush1.bf16.xpose.msra.mxu0 0
        %1690 = vmatprep.subr.bf16.mxu0 0
        %1691 = vmatpush1.bf16.xpose.msra.mxu0 0
        %1692 = vmatprep.subr.bf16.mxu0 0
        %1693 = vmatpush1.bf16.xpose.msra.mxu0 0
        %1694 = vmatprep.subr.bf16.mxu0 0
        %1695 = vmatpush1.bf16.xpose.msra.mxu0 0
        %1696 = vmatprep.subr.bf16.mxu0 0
        %1697 = vmatpush1.bf16.xpose.msra.mxu0 %v1680
        %1698 = vmatprep.subr.bf16.mxu0 0
        %1699 = vmatpush2.bf16.xpose.msra.mxu0 0
        %1700 = vmatprep.subr.bf16.mxu0 0
        %1701 = vmatpush2.bf16.xpose.msra.mxu0 0
        %1702 = vmatprep.subr.bf16.mxu0 0
        %1703 = vmatpush2.bf16.xpose.msra.mxu0 0
        %1704 = vmatprep.subr.bf16.mxu0 0
        %1705 = vmatpush2.bf16.xpose.msra.mxu0 0
        %1706 = vmatprep.subr.bf16.mxu0 0
        %1707 = vmatpush2.bf16.xpose.msra.mxu0 0
        %1708 = vmatprep.subr.bf16.mxu0 0
        %1709 = vmatpush2.bf16.xpose.msra.mxu0 0
        %1710 = vmatprep.subr.bf16.mxu0 0
        %1711 = vmatpush2.bf16.xpose.msra.mxu0 0
        %1712 = vmatprep.subr.bf16.mxu0 0
        %1713 = vmatpush2.bf16.xpose.msra.mxu0 0
        %1714 = vmatprep.mubr.bf16.mxu0 0
        %1715 = vmatmul.mubr.bf16.gmra.mxu0 %v1677
        %v1716 = vpop.f32.mrf.mxu0
        %v1717 = vadd.f32 0.0, %v1716
        %v1718 = vpop.f32.mrf.mxu0
        %v1719 = vpop.f32.mrf.mxu0
        %v1720 = vpop.f32.mrf.mxu0
        %1721 = vdwg.mxu0
        %1722 = vrot.lane.b32.xlu0 %v1132, 112
        %v1723 = vpop.permute.xlu0 %1722
        %1724 = vrot.lane.b32.xlu0 %v1132, 48
        %v1725 = vpop.permute.xlu0 %1724
        %v1727 = vsel %vm1140, %v1723, 0
        %v1730 = vsel %vm1140, %v1725, 0
        %1732 = vmatprep.subr.bf16.mxu0 0
        %1733 = vmatpush1.bf16.xpose.msra.mxu0 0
        %1734 = vmatprep.subr.bf16.mxu0 0
        %1735 = vmatpush1.bf16.xpose.msra.mxu0 0
        %1736 = vmatprep.subr.bf16.mxu0 0
        %1737 = vmatpush1.bf16.xpose.msra.mxu0 0
        %1738 = vmatprep.subr.bf16.mxu0 0
        %1739 = vmatpush1.bf16.xpose.msra.mxu0 0
        %1740 = vmatprep.subr.bf16.mxu0 0
        %1741 = vmatpush1.bf16.xpose.msra.mxu0 0
        %1742 = vmatprep.subr.bf16.mxu0 0
        %1743 = vmatpush1.bf16.xpose.msra.mxu0 0
        %1744 = vmatprep.subr.bf16.mxu0 0
        %1745 = vmatpush1.bf16.xpose.msra.mxu0 0
        %1746 = vmatprep.subr.bf16.mxu0 0
        %1747 = vmatpush1.bf16.xpose.msra.mxu0 %v1730
        %1748 = vmatprep.subr.bf16.mxu0 0
        %1749 = vmatpush2.bf16.xpose.msra.mxu0 0
        %1750 = vmatprep.subr.bf16.mxu0 0
        %1751 = vmatpush2.bf16.xpose.msra.mxu0 0
        %1752 = vmatprep.subr.bf16.mxu0 0
        %1753 = vmatpush2.bf16.xpose.msra.mxu0 0
        %1754 = vmatprep.subr.bf16.mxu0 0
        %1755 = vmatpush2.bf16.xpose.msra.mxu0 0
        %1756 = vmatprep.subr.bf16.mxu0 0
        %1757 = vmatpush2.bf16.xpose.msra.mxu0 0
        %1758 = vmatprep.subr.bf16.mxu0 0
        %1759 = vmatpush2.bf16.xpose.msra.mxu0 0
        %1760 = vmatprep.subr.bf16.mxu0 0
        %1761 = vmatpush2.bf16.xpose.msra.mxu0 0
        %1762 = vmatprep.subr.bf16.mxu0 0
        %1763 = vmatpush2.bf16.xpose.msra.mxu0 0
        %1764 = vmatprep.mubr.bf16.mxu0 0
        %1765 = vmatmul.mubr.bf16.gmra.mxu0 %v1727
        %v1766 = vpop.f32.mrf.mxu0
        %v1767 = vadd.f32 0.0, %v1766
        %v1768 = vpop.f32.mrf.mxu0
        %v1769 = vpop.f32.mrf.mxu0
        %v1770 = vpop.f32.mrf.mxu0
        %1771 = vdwg.mxu0
        %v1772 = vsel %vm1334, %v1617, -inf
        %1773 = vmax.xlane.f32.xlu0 %v1772
        %v1774 = vpop.xlane.xlu0 %1773
        %v1775 = vsel %vm1334, %v1667, -inf
        %1776 = vmax.xlane.f32.xlu0 %v1775
        %v1777 = vpop.xlane.xlu0 %1776
        %v1778 = vsel %vm1334, %v1717, -inf
        %1779 = vmax.xlane.f32.xlu0 %v1778
        %v1780 = vpop.xlane.xlu0 %1779
        %v1781 = vsel %vm1334, %v1767, -inf
        %1782 = vmax.xlane.f32.xlu0 %v1781
        %v1783 = vpop.xlane.xlu0 %1782
        %v1784 = vsub.f32 %v1617, %v1774
        %v1785 = vsub.f32 %v1667, %v1777
        %v1786 = vsub.f32 %v1717, %v1780
        %v1787 = vsub.f32 %v1767, %v1783
        %v1788 = vmul.f32 %v1784, 1.442695
        %v1789 = vpow.pop %v1788
        %v1790 = vmul.f32 %v1785, 1.442695
        %v1791 = vpow.pop %v1790
        %v1792 = vmul.f32 %v1786, 1.442695
        %v1793 = vpow.pop %v1792
        %v1794 = vmul.f32 %v1787, 1.442695
        %v1795 = vpow.pop %v1794
        %v1796 = vsel %vm1334, %v1789, 0.0
        %1797 = vadd.xlane.f32.xlu0 %v1796
        %v1798 = vpop.xlane.xlu0 %1797
        %v1799 = vsel %vm1334, %v1791, 0.0
        %1800 = vadd.xlane.f32.xlu0 %v1799
        %v1801 = vpop.xlane.xlu0 %1800
        %v1802 = vsel %vm1334, %v1793, 0.0
        %1803 = vadd.xlane.f32.xlu0 %v1802
        %v1804 = vpop.xlane.xlu0 %1803
        %v1805 = vsel %vm1334, %v1795, 0.0
        %1806 = vadd.xlane.f32.xlu0 %v1805
        %v1807 = vpop.xlane.xlu0 %1806
        %v1808 = vrcp.pop %v1798
        %v1809 = vrcp.pop %v1801
        %v1810 = vrcp.pop %v1804
        %v1811 = vrcp.pop %v1807
        %v1812 = vmul.f32 %v1789, %v1808
        %v1813 = vmul.f32 %v1791, %v1809
        %v1814 = vmul.f32 %v1793, %v1810
        %v1815 = vmul.f32 %v1795, %v1811
        %v1816 = vpack.c.bf16 %v1812, %v1812
        %v1817 = vpack.c.bf16 %v1813, %v1813
        %v1818 = vpack.c.bf16 %v1814, %v1814
        %v1819 = vpack.c.bf16 %v1815, %v1815
        %1821 = vrot.lane.b32.xlu0 %v1133, 112
        %v1822 = vpop.permute.xlu0 %1821
        %v1824 = vsel %vm1334, %v1816, 0
        %v1827 = vsel %vm1386, %v1822, 0
        %1829 = vmatprep.subr.bf16.mxu0 0
        %1830 = vmatpush1.bf16.msra.mxu0 0
        %1831 = vmatprep.subr.bf16.mxu0 0
        %1832 = vmatpush1.bf16.msra.mxu0 0
        %1833 = vmatprep.subr.bf16.mxu0 0
        %1834 = vmatpush1.bf16.msra.mxu0 0
        %1835 = vmatprep.subr.bf16.mxu0 0
        %1836 = vmatpush1.bf16.msra.mxu0 0
        %1837 = vmatprep.subr.bf16.mxu0 0
        %1838 = vmatpush1.bf16.msra.mxu0 0
        %1839 = vmatprep.subr.bf16.mxu0 0
        %1840 = vmatpush1.bf16.msra.mxu0 0
        %1841 = vmatprep.subr.bf16.mxu0 0
        %1842 = vmatpush1.bf16.msra.mxu0 0
        %1843 = vmatprep.subr.bf16.mxu0 0
        %1844 = vmatpush1.bf16.msra.mxu0 %v1827
        %1845 = vmatprep.subr.bf16.mxu0 0
        %1846 = vmatpush2.bf16.msra.mxu0 0
        %1847 = vmatprep.subr.bf16.mxu0 0
        %1848 = vmatpush2.bf16.msra.mxu0 0
        %1849 = vmatprep.subr.bf16.mxu0 0
        %1850 = vmatpush2.bf16.msra.mxu0 0
        %1851 = vmatprep.subr.bf16.mxu0 0
        %1852 = vmatpush2.bf16.msra.mxu0 0
        %1853 = vmatprep.subr.bf16.mxu0 0
        %1854 = vmatpush2.bf16.msra.mxu0 0
        %1855 = vmatprep.subr.bf16.mxu0 0
        %1856 = vmatpush2.bf16.msra.mxu0 0
        %1857 = vmatprep.subr.bf16.mxu0 0
        %1858 = vmatpush2.bf16.msra.mxu0 0
        %1859 = vmatprep.subr.bf16.mxu0 0
        %1860 = vmatpush2.bf16.msra.mxu0 0
        %1861 = vmatprep.mubr.bf16.mxu0 0
        %1862 = vmatmul.mubr.bf16.gmra.mxu0 %v1824
        %v1863 = vpop.f32.mrf.mxu0
        %v1864 = vadd.f32 0.0, %v1863
        %v1865 = vpop.f32.mrf.mxu0
        %v1866 = vpop.f32.mrf.mxu0
        %v1867 = vpop.f32.mrf.mxu0
        %1868 = vdwg.mxu0
        %1870 = vrot.lane.b32.xlu0 %v1134, 112
        %v1871 = vpop.permute.xlu0 %1870
        %v1873 = vsel %vm1334, %v1817, 0
        %v1876 = vsel %vm1386, %v1871, 0
        %1878 = vmatprep.subr.bf16.mxu0 0
        %1879 = vmatpush1.bf16.msra.mxu0 0
        %1880 = vmatprep.subr.bf16.mxu0 0
        %1881 = vmatpush1.bf16.msra.mxu0 0
        %1882 = vmatprep.subr.bf16.mxu0 0
        %1883 = vmatpush1.bf16.msra.mxu0 0
        %1884 = vmatprep.subr.bf16.mxu0 0
        %1885 = vmatpush1.bf16.msra.mxu0 0
        %1886 = vmatprep.subr.bf16.mxu0 0
        %1887 = vmatpush1.bf16.msra.mxu0 0
        %1888 = vmatprep.subr.bf16.mxu0 0
        %1889 = vmatpush1.bf16.msra.mxu0 0
        %1890 = vmatprep.subr.bf16.mxu0 0
        %1891 = vmatpush1.bf16.msra.mxu0 0
        %1892 = vmatprep.subr.bf16.mxu0 0
        %1893 = vmatpush1.bf16.msra.mxu0 %v1876
        %1894 = vmatprep.subr.bf16.mxu0 0
        %1895 = vmatpush2.bf16.msra.mxu0 0
        %1896 = vmatprep.subr.bf16.mxu0 0
        %1897 = vmatpush2.bf16.msra.mxu0 0
        %1898 = vmatprep.subr.bf16.mxu0 0
        %1899 = vmatpush2.bf16.msra.mxu0 0
        %1900 = vmatprep.subr.bf16.mxu0 0
        %1901 = vmatpush2.bf16.msra.mxu0 0
        %1902 = vmatprep.subr.bf16.mxu0 0
        %1903 = vmatpush2.bf16.msra.mxu0 0
        %1904 = vmatprep.subr.bf16.mxu0 0
        %1905 = vmatpush2.bf16.msra.mxu0 0
        %1906 = vmatprep.subr.bf16.mxu0 0
        %1907 = vmatpush2.bf16.msra.mxu0 0
        %1908 = vmatprep.subr.bf16.mxu0 0
        %1909 = vmatpush2.bf16.msra.mxu0 0
        %1910 = vmatprep.mubr.bf16.mxu0 0
        %1911 = vmatmul.mubr.bf16.gmra.mxu0 %v1873
        %v1912 = vpop.f32.mrf.mxu0
        %v1913 = vadd.f32 0.0, %v1912
        %v1914 = vpop.f32.mrf.mxu0
        %v1915 = vpop.f32.mrf.mxu0
        %v1916 = vpop.f32.mrf.mxu0
        %1917 = vdwg.mxu0
        %1919 = vrot.lane.b32.xlu0 %v1135, 112
        %v1920 = vpop.permute.xlu0 %1919
        %v1922 = vsel %vm1334, %v1818, 0
        %v1925 = vsel %vm1386, %v1920, 0
        %1927 = vmatprep.subr.bf16.mxu0 0
        %1928 = vmatpush1.bf16.msra.mxu0 0
        %1929 = vmatprep.subr.bf16.mxu0 0
        %1930 = vmatpush1.bf16.msra.mxu0 0
        %1931 = vmatprep.subr.bf16.mxu0 0
        %1932 = vmatpush1.bf16.msra.mxu0 0
        %1933 = vmatprep.subr.bf16.mxu0 0
        %1934 = vmatpush1.bf16.msra.mxu0 0
        %1935 = vmatprep.subr.bf16.mxu0 0
        %1936 = vmatpush1.bf16.msra.mxu0 0
        %1937 = vmatprep.subr.bf16.mxu0 0
        %1938 = vmatpush1.bf16.msra.mxu0 0
        %1939 = vmatprep.subr.bf16.mxu0 0
        %1940 = vmatpush1.bf16.msra.mxu0 0
        %1941 = vmatprep.subr.bf16.mxu0 0
        %1942 = vmatpush1.bf16.msra.mxu0 %v1925
        %1943 = vmatprep.subr.bf16.mxu0 0
        %1944 = vmatpush2.bf16.msra.mxu0 0
        %1945 = vmatprep.subr.bf16.mxu0 0
        %1946 = vmatpush2.bf16.msra.mxu0 0
        %1947 = vmatprep.subr.bf16.mxu0 0
        %1948 = vmatpush2.bf16.msra.mxu0 0
        %1949 = vmatprep.subr.bf16.mxu0 0
        %1950 = vmatpush2.bf16.msra.mxu0 0
        %1951 = vmatprep.subr.bf16.mxu0 0
        %1952 = vmatpush2.bf16.msra.mxu0 0
        %1953 = vmatprep.subr.bf16.mxu0 0
        %1954 = vmatpush2.bf16.msra.mxu0 0
        %1955 = vmatprep.subr.bf16.mxu0 0
        %1956 = vmatpush2.bf16.msra.mxu0 0
        %1957 = vmatprep.subr.bf16.mxu0 0
        %1958 = vmatpush2.bf16.msra.mxu0 0
        %1959 = vmatprep.mubr.bf16.mxu0 0
        %1960 = vmatmul.mubr.bf16.gmra.mxu0 %v1922
        %v1961 = vpop.f32.mrf.mxu0
        %v1962 = vadd.f32 0.0, %v1961
        %v1963 = vpop.f32.mrf.mxu0
        %v1964 = vpop.f32.mrf.mxu0
        %v1965 = vpop.f32.mrf.mxu0
        %1966 = vdwg.mxu0
        %1968 = vrot.lane.b32.xlu0 %v1136, 112
        %v1969 = vpop.permute.xlu0 %1968
        %v1971 = vsel %vm1334, %v1819, 0
        %v1974 = vsel %vm1386, %v1969, 0
        %1976 = vmatprep.subr.bf16.mxu0 0
        %1977 = vmatpush1.bf16.msra.mxu0 0
        %1978 = vmatprep.subr.bf16.mxu0 0
        %1979 = vmatpush1.bf16.msra.mxu0 0
        %1980 = vmatprep.subr.bf16.mxu0 0
        %1981 = vmatpush1.bf16.msra.mxu0 0
        %1982 = vmatprep.subr.bf16.mxu0 0
        %1983 = vmatpush1.bf16.msra.mxu0 0
        %1984 = vmatprep.subr.bf16.mxu0 0
        %1985 = vmatpush1.bf16.msra.mxu0 0
        %1986 = vmatprep.subr.bf16.mxu0 0
        %1987 = vmatpush1.bf16.msra.mxu0 0
        %1988 = vmatprep.subr.bf16.mxu0 0
        %1989 = vmatpush1.bf16.msra.mxu0 0
        %1990 = vmatprep.subr.bf16.mxu0 0
        %1991 = vmatpush1.bf16.msra.mxu0 %v1974
        %1992 = vmatprep.subr.bf16.mxu0 0
        %1993 = vmatpush2.bf16.msra.mxu0 0
        %1994 = vmatprep.subr.bf16.mxu0 0
        %1995 = vmatpush2.bf16.msra.mxu0 0
        %1996 = vmatprep.subr.bf16.mxu0 0
        %1997 = vmatpush2.bf16.msra.mxu0 0
        %1998 = vmatprep.subr.bf16.mxu0 0
        %1999 = vmatpush2.bf16.msra.mxu0 0
        %2000 = vmatprep.subr.bf16.mxu0 0
        %2001 = vmatpush2.bf16.msra.mxu0 0
        %2002 = vmatprep.subr.bf16.mxu0 0
        %2003 = vmatpush2.bf16.msra.mxu0 0
        %2004 = vmatprep.subr.bf16.mxu0 0
        %2005 = vmatpush2.bf16.msra.mxu0 0
        %2006 = vmatprep.subr.bf16.mxu0 0
        %2007 = vmatpush2.bf16.msra.mxu0 0
        %2008 = vmatprep.mubr.bf16.mxu0 0
        %2009 = vmatmul.mubr.bf16.gmra.mxu0 %v1971
        %v2010 = vpop.f32.mrf.mxu0
        %v2011 = vadd.f32 0.0, %v2010
        %v2012 = vpop.f32.mrf.mxu0
        %v2013 = vpop.f32.mrf.mxu0
        %v2014 = vpop.f32.mrf.mxu0
        %2015 = vdwg.mxu0
        %v2016 = vpack.c.bf16 %v1913, %v1864
        %v2017 = vpack.c.bf16 %v2011, %v1962
        %s2018 = scalar_lea.vmem [#allocation11], 8
        %v2019 = vld [vmem:[%s2018] sm:$0xf]
        %v2020 = vld [vmem:[%s2018 + $0x4] sm:$0xf]
        %v2023 = vunpack.c.l.b16 %v2019
        %v2024 = vunpack.c.l.b16 %v2020
        %v2025 = vpack.c.b16 %v2024, %v2023
        %v2028 = vsel %vm1140, %v2016, 0
        %v2031 = vsel %vm1140, %v2017, 0
        %2033 = vmatprep.subr.bf16.mxu0 0
        %2034 = vmatpush1.bf16.msra.mxu0 0
        %2035 = vmatprep.subr.bf16.mxu0 0
        %2036 = vmatpush1.bf16.msra.mxu0 0
        %2037 = vmatprep.subr.bf16.mxu0 0
        %2038 = vmatpush1.bf16.msra.mxu0 0
        %2039 = vmatprep.subr.bf16.mxu0 0
        %2040 = vmatpush1.bf16.msra.mxu0 0
        %2041 = vmatprep.subr.bf16.mxu0 0
        %2042 = vmatpush1.bf16.msra.mxu0 0
        %2043 = vmatprep.subr.bf16.mxu0 0
        %2044 = vmatpush1.bf16.msra.mxu0 0
        %2045 = vmatprep.subr.bf16.mxu0 0
        %2046 = vmatpush1.bf16.msra.mxu0 0
        %2047 = vmatprep.subr.bf16.mxu0 0
        %2048 = vmatpush1.bf16.msra.mxu0 %v2025
        %2049 = vmatprep.subr.bf16.mxu0 0
        %2050 = vmatpush2.bf16.msra.mxu0 0
        %2051 = vmatprep.subr.bf16.mxu0 0
        %2052 = vmatpush2.bf16.msra.mxu0 0
        %2053 = vmatprep.subr.bf16.mxu0 0
        %2054 = vmatpush2.bf16.msra.mxu0 0
        %2055 = vmatprep.subr.bf16.mxu0 0
        %2056 = vmatpush2.bf16.msra.mxu0 0
        %2057 = vmatprep.subr.bf16.mxu0 0
        %2058 = vmatpush2.bf16.msra.mxu0 0
        %2059 = vmatprep.subr.bf16.mxu0 0
        %2060 = vmatpush2.bf16.msra.mxu0 0
        %2061 = vmatprep.subr.bf16.mxu0 0
        %2062 = vmatpush2.bf16.msra.mxu0 0
        %2063 = vmatprep.subr.bf16.mxu0 0
        %2064 = vmatpush2.bf16.msra.mxu0 0
        %2065 = vmatprep.mubr.bf16.mxu0 0
        %2066 = vmatmul.mubr.bf16.gmra.mxu0 %v2028
        %v2067 = vpop.f32.mrf.mxu0
        %v2068 = vadd.f32 0.0, %v2067
        %v2069 = vpop.f32.mrf.mxu0
        %v2070 = vpop.f32.mrf.mxu0
        %v2071 = vadd.f32 0.0, %v2070
        %v2072 = vpop.f32.mrf.mxu0
        %2073 = vmatprep.mubr.bf16.mxu0 0
        %2074 = vmatmul.mubr.bf16.gmra.mxu0 %v2031
        %v2075 = vpop.f32.mrf.mxu0
        %v2076 = vadd.f32 0.0, %v2075
        %v2077 = vpop.f32.mrf.mxu0
        %v2078 = vpop.f32.mrf.mxu0
        %v2079 = vadd.f32 0.0, %v2078
        %v2080 = vpop.f32.mrf.mxu0
        %2081 = vdwg.mxu0
        %v2084 = vunpack.c.l.b16 %v1570
        %v2085 = vunpack.c.l.b16 %v1571
        %v2086 = vpack.c.b16 %v2085, %v2084
        %v2089 = vsel %vm1140, %v1568, 0
        %v2092 = vsel %vm1140, %v1569, 0
        %2094 = vmatprep.subr.bf16.mxu0 0
        %2095 = vmatpush1.bf16.msra.mxu0 0
        %2096 = vmatprep.subr.bf16.mxu0 0
        %2097 = vmatpush1.bf16.msra.mxu0 0
        %2098 = vmatprep.subr.bf16.mxu0 0
        %2099 = vmatpush1.bf16.msra.mxu0 0
        %2100 = vmatprep.subr.bf16.mxu0 0
        %2101 = vmatpush1.bf16.msra.mxu0 0
        %2102 = vmatprep.subr.bf16.mxu0 0
        %2103 = vmatpush1.bf16.msra.mxu0 0
        %2104 = vmatprep.subr.bf16.mxu0 0
        %2105 = vmatpush1.bf16.msra.mxu0 0
        %2106 = vmatprep.subr.bf16.mxu0 0
        %2107 = vmatpush1.bf16.msra.mxu0 0
        %2108 = vmatprep.subr.bf16.mxu0 0
        %2109 = vmatpush1.bf16.msra.mxu0 %v2086
        %2110 = vmatprep.subr.bf16.mxu0 0
        %2111 = vmatpush2.bf16.msra.mxu0 0
        %2112 = vmatprep.subr.bf16.mxu0 0
        %2113 = vmatpush2.bf16.msra.mxu0 0
        %2114 = vmatprep.subr.bf16.mxu0 0
        %2115 = vmatpush2.bf16.msra.mxu0 0
        %2116 = vmatprep.subr.bf16.mxu0 0
        %2117 = vmatpush2.bf16.msra.mxu0 0
        %2118 = vmatprep.subr.bf16.mxu0 0
        %2119 = vmatpush2.bf16.msra.mxu0 0
        %2120 = vmatprep.subr.bf16.mxu0 0
        %2121 = vmatpush2.bf16.msra.mxu0 0
        %2122 = vmatprep.subr.bf16.mxu0 0
        %2123 = vmatpush2.bf16.msra.mxu0 0
        %2124 = vmatprep.subr.bf16.mxu0 0
        %2125 = vmatpush2.bf16.msra.mxu0 0
        %2126 = vmatprep.mubr.bf16.mxu0 0
        %2127 = vmatmul.mubr.bf16.gmra.mxu0 %v2089
        %v2128 = vpop.f32.mrf.mxu0
        %v2129 = vadd.f32 %v2068, %v2128
        %v2130 = vpop.f32.mrf.mxu0
        %v2131 = vpop.f32.mrf.mxu0
        %v2132 = vadd.f32 %v2071, %v2131
        %v2133 = vpop.f32.mrf.mxu0
        %2134 = vmatprep.mubr.bf16.mxu0 0
        %2135 = vmatmul.mubr.bf16.gmra.mxu0 %v2092
        %v2136 = vpop.f32.mrf.mxu0
        %v2137 = vadd.f32 %v2076, %v2136
        %v2138 = vpop.f32.mrf.mxu0
        %v2139 = vpop.f32.mrf.mxu0
        %v2140 = vadd.f32 %v2079, %v2139
        %v2141 = vpop.f32.mrf.mxu0
        %2142 = vdwg.mxu0
        %2143 = vrot.lane.b32.xlu0 %v1129, 96
        %v2144 = vpop.permute.xlu0 %2143
        %2145 = vrot.lane.b32.xlu0 %v1129, 32
        %v2146 = vpop.permute.xlu0 %2145
        %v2148 = vsel %vm1140, %v2144, 0
        %v2151 = vsel %vm1140, %v2146, 0
        %2153 = vmatprep.subr.bf16.mxu0 0
        %2154 = vmatpush1.bf16.xpose.msra.mxu0 0
        %2155 = vmatprep.subr.bf16.mxu0 0
        %2156 = vmatpush1.bf16.xpose.msra.mxu0 0
        %2157 = vmatprep.subr.bf16.mxu0 0
        %2158 = vmatpush1.bf16.xpose.msra.mxu0 0
        %2159 = vmatprep.subr.bf16.mxu0 0
        %2160 = vmatpush1.bf16.xpose.msra.mxu0 0
        %2161 = vmatprep.subr.bf16.mxu0 0
        %2162 = vmatpush1.bf16.xpose.msra.mxu0 0
        %2163 = vmatprep.subr.bf16.mxu0 0
        %2164 = vmatpush1.bf16.xpose.msra.mxu0 0
        %2165 = vmatprep.subr.bf16.mxu0 0
        %2166 = vmatpush1.bf16.xpose.msra.mxu0 0
        %2167 = vmatprep.subr.bf16.mxu0 0
        %2168 = vmatpush1.bf16.xpose.msra.mxu0 %v2151
        %2169 = vmatprep.subr.bf16.mxu0 0
        %2170 = vmatpush2.bf16.xpose.msra.mxu0 0
        %2171 = vmatprep.subr.bf16.mxu0 0
        %2172 = vmatpush2.bf16.xpose.msra.mxu0 0
        %2173 = vmatprep.subr.bf16.mxu0 0
        %2174 = vmatpush2.bf16.xpose.msra.mxu0 0
        %2175 = vmatprep.subr.bf16.mxu0 0
        %2176 = vmatpush2.bf16.xpose.msra.mxu0 0
        %2177 = vmatprep.subr.bf16.mxu0 0
        %2178 = vmatpush2.bf16.xpose.msra.mxu0 0
        %2179 = vmatprep.subr.bf16.mxu0 0
        %2180 = vmatpush2.bf16.xpose.msra.mxu0 0
        %2181 = vmatprep.subr.bf16.mxu0 0
        %2182 = vmatpush2.bf16.xpose.msra.mxu0 0
        %2183 = vmatprep.subr.bf16.mxu0 0
        %2184 = vmatpush2.bf16.xpose.msra.mxu0 0
        %2185 = vmatprep.mubr.bf16.mxu0 0
        %2186 = vmatmul.mubr.bf16.gmra.mxu0 %v2148
        %v2187 = vpop.f32.mrf.mxu0
        %v2188 = vadd.f32 0.0, %v2187
        %v2189 = vpop.f32.mrf.mxu0
        %v2190 = vpop.f32.mrf.mxu0
        %v2191 = vpop.f32.mrf.mxu0
        %2192 = vdwg.mxu0
        %2193 = vrot.lane.b32.xlu0 %v1130, 96
        %v2194 = vpop.permute.xlu0 %2193
        %2195 = vrot.lane.b32.xlu0 %v1130, 32
        %v2196 = vpop.permute.xlu0 %2195
        %v2198 = vsel %vm1140, %v2194, 0
        %v2201 = vsel %vm1140, %v2196, 0
        %2203 = vmatprep.subr.bf16.mxu0 0
        %2204 = vmatpush1.bf16.xpose.msra.mxu0 0
        %2205 = vmatprep.subr.bf16.mxu0 0
        %2206 = vmatpush1.bf16.xpose.msra.mxu0 0
        %2207 = vmatprep.subr.bf16.mxu0 0
        %2208 = vmatpush1.bf16.xpose.msra.mxu0 0
        %2209 = vmatprep.subr.bf16.mxu0 0
        %2210 = vmatpush1.bf16.xpose.msra.mxu0 0
        %2211 = vmatprep.subr.bf16.mxu0 0
        %2212 = vmatpush1.bf16.xpose.msra.mxu0 0
        %2213 = vmatprep.subr.bf16.mxu0 0
        %2214 = vmatpush1.bf16.xpose.msra.mxu0 0
        %2215 = vmatprep.subr.bf16.mxu0 0
        %2216 = vmatpush1.bf16.xpose.msra.mxu0 0
        %2217 = vmatprep.subr.bf16.mxu0 0
        %2218 = vmatpush1.bf16.xpose.msra.mxu0 %v2201
        %2219 = vmatprep.subr.bf16.mxu0 0
        %2220 = vmatpush2.bf16.xpose.msra.mxu0 0
        %2221 = vmatprep.subr.bf16.mxu0 0
        %2222 = vmatpush2.bf16.xpose.msra.mxu0 0
        %2223 = vmatprep.subr.bf16.mxu0 0
        %2224 = vmatpush2.bf16.xpose.msra.mxu0 0
        %2225 = vmatprep.subr.bf16.mxu0 0
        %2226 = vmatpush2.bf16.xpose.msra.mxu0 0
        %2227 = vmatprep.subr.bf16.mxu0 0
        %2228 = vmatpush2.bf16.xpose.msra.mxu0 0
        %2229 = vmatprep.subr.bf16.mxu0 0
        %2230 = vmatpush2.bf16.xpose.msra.mxu0 0
        %2231 = vmatprep.subr.bf16.mxu0 0
        %2232 = vmatpush2.bf16.xpose.msra.mxu0 0
        %2233 = vmatprep.subr.bf16.mxu0 0
        %2234 = vmatpush2.bf16.xpose.msra.mxu0 0
        %2235 = vmatprep.mubr.bf16.mxu0 0
        %2236 = vmatmul.mubr.bf16.gmra.mxu0 %v2198
        %v2237 = vpop.f32.mrf.mxu0
        %v2238 = vadd.f32 0.0, %v2237
        %v2239 = vpop.f32.mrf.mxu0
        %v2240 = vpop.f32.mrf.mxu0
        %v2241 = vpop.f32.mrf.mxu0
        %2242 = vdwg.mxu0
        %2243 = vrot.lane.b32.xlu0 %v1131, 96
        %v2244 = vpop.permute.xlu0 %2243
        %2245 = vrot.lane.b32.xlu0 %v1131, 32
        %v2246 = vpop.permute.xlu0 %2245
        %v2248 = vsel %vm1140, %v2244, 0
        %v2251 = vsel %vm1140, %v2246, 0
        %2253 = vmatprep.subr.bf16.mxu0 0
        %2254 = vmatpush1.bf16.xpose.msra.mxu0 0
        %2255 = vmatprep.subr.bf16.mxu0 0
        %2256 = vmatpush1.bf16.xpose.msra.mxu0 0
        %2257 = vmatprep.subr.bf16.mxu0 0
        %2258 = vmatpush1.bf16.xpose.msra.mxu0 0
        %2259 = vmatprep.subr.bf16.mxu0 0
        %2260 = vmatpush1.bf16.xpose.msra.mxu0 0
        %2261 = vmatprep.subr.bf16.mxu0 0
        %2262 = vmatpush1.bf16.xpose.msra.mxu0 0
        %2263 = vmatprep.subr.bf16.mxu0 0
        %2264 = vmatpush1.bf16.xpose.msra.mxu0 0
        %2265 = vmatprep.subr.bf16.mxu0 0
        %2266 = vmatpush1.bf16.xpose.msra.mxu0 0
        %2267 = vmatprep.subr.bf16.mxu0 0
        %2268 = vmatpush1.bf16.xpose.msra.mxu0 %v2251
        %2269 = vmatprep.subr.bf16.mxu0 0
        %2270 = vmatpush2.bf16.xpose.msra.mxu0 0
        %2271 = vmatprep.subr.bf16.mxu0 0
        %2272 = vmatpush2.bf16.xpose.msra.mxu0 0
        %2273 = vmatprep.subr.bf16.mxu0 0
        %2274 = vmatpush2.bf16.xpose.msra.mxu0 0
        %2275 = vmatprep.subr.bf16.mxu0 0
        %2276 = vmatpush2.bf16.xpose.msra.mxu0 0
        %2277 = vmatprep.subr.bf16.mxu0 0
        %2278 = vmatpush2.bf16.xpose.msra.mxu0 0
        %2279 = vmatprep.subr.bf16.mxu0 0
        %2280 = vmatpush2.bf16.xpose.msra.mxu0 0
        %2281 = vmatprep.subr.bf16.mxu0 0
        %2282 = vmatpush2.bf16.xpose.msra.mxu0 0
        %2283 = vmatprep.subr.bf16.mxu0 0
        %2284 = vmatpush2.bf16.xpose.msra.mxu0 0
        %2285 = vmatprep.mubr.bf16.mxu0 0
        %2286 = vmatmul.mubr.bf16.gmra.mxu0 %v2248
        %v2287 = vpop.f32.mrf.mxu0
        %v2288 = vadd.f32 0.0, %v2287
        %v2289 = vpop.f32.mrf.mxu0
        %v2290 = vpop.f32.mrf.mxu0
        %v2291 = vpop.f32.mrf.mxu0
        %2292 = vdwg.mxu0
        %2293 = vrot.lane.b32.xlu0 %v1132, 96
        %v2294 = vpop.permute.xlu0 %2293
        %2295 = vrot.lane.b32.xlu0 %v1132, 32
        %v2296 = vpop.permute.xlu0 %2295
        %v2298 = vsel %vm1140, %v2294, 0
        %v2301 = vsel %vm1140, %v2296, 0
        %2303 = vmatprep.subr.bf16.mxu0 0
        %2304 = vmatpush1.bf16.xpose.msra.mxu0 0
        %2305 = vmatprep.subr.bf16.mxu0 0
        %2306 = vmatpush1.bf16.xpose.msra.mxu0 0
        %2307 = vmatprep.subr.bf16.mxu0 0
        %2308 = vmatpush1.bf16.xpose.msra.mxu0 0
        %2309 = vmatprep.subr.bf16.mxu0 0
        %2310 = vmatpush1.bf16.xpose.msra.mxu0 0
        %2311 = vmatprep.subr.bf16.mxu0 0
        %2312 = vmatpush1.bf16.xpose.msra.mxu0 0
        %2313 = vmatprep.subr.bf16.mxu0 0
        %2314 = vmatpush1.bf16.xpose.msra.mxu0 0
        %2315 = vmatprep.subr.bf16.mxu0 0
        %2316 = vmatpush1.bf16.xpose.msra.mxu0 0
        %2317 = vmatprep.subr.bf16.mxu0 0
        %2318 = vmatpush1.bf16.xpose.msra.mxu0 %v2301
        %2319 = vmatprep.subr.bf16.mxu0 0
        %2320 = vmatpush2.bf16.xpose.msra.mxu0 0
        %2321 = vmatprep.subr.bf16.mxu0 0
        %2322 = vmatpush2.bf16.xpose.msra.mxu0 0
        %2323 = vmatprep.subr.bf16.mxu0 0
        %2324 = vmatpush2.bf16.xpose.msra.mxu0 0
        %2325 = vmatprep.subr.bf16.mxu0 0
        %2326 = vmatpush2.bf16.xpose.msra.mxu0 0
        %2327 = vmatprep.subr.bf16.mxu0 0
        %2328 = vmatpush2.bf16.xpose.msra.mxu0 0
        %2329 = vmatprep.subr.bf16.mxu0 0
        %2330 = vmatpush2.bf16.xpose.msra.mxu0 0
        %2331 = vmatprep.subr.bf16.mxu0 0
        %2332 = vmatpush2.bf16.xpose.msra.mxu0 0
        %2333 = vmatprep.subr.bf16.mxu0 0
        %2334 = vmatpush2.bf16.xpose.msra.mxu0 0
        %2335 = vmatprep.mubr.bf16.mxu0 0
        %2336 = vmatmul.mubr.bf16.gmra.mxu0 %v2298
        %v2337 = vpop.f32.mrf.mxu0
        %v2338 = vadd.f32 0.0, %v2337
        %v2339 = vpop.f32.mrf.mxu0
        %v2340 = vpop.f32.mrf.mxu0
        %v2341 = vpop.f32.mrf.mxu0
        %2342 = vdwg.mxu0
        %v2343 = vsel %vm1334, %v2188, -inf
        %2344 = vmax.xlane.f32.xlu0 %v2343
        %v2345 = vpop.xlane.xlu0 %2344
        %v2346 = vsel %vm1334, %v2238, -inf
        %2347 = vmax.xlane.f32.xlu0 %v2346
        %v2348 = vpop.xlane.xlu0 %2347
        %v2349 = vsel %vm1334, %v2288, -inf
        %2350 = vmax.xlane.f32.xlu0 %v2349
        %v2351 = vpop.xlane.xlu0 %2350
        %v2352 = vsel %vm1334, %v2338, -inf
        %2353 = vmax.xlane.f32.xlu0 %v2352
        %v2354 = vpop.xlane.xlu0 %2353
        %v2355 = vsub.f32 %v2188, %v2345
        %v2356 = vsub.f32 %v2238, %v2348
        %v2357 = vsub.f32 %v2288, %v2351
        %v2358 = vsub.f32 %v2338, %v2354
        %v2359 = vmul.f32 %v2355, 1.442695
        %v2360 = vpow.pop %v2359
        %v2361 = vmul.f32 %v2356, 1.442695
        %v2362 = vpow.pop %v2361
        %v2363 = vmul.f32 %v2357, 1.442695
        %v2364 = vpow.pop %v2363
        %v2365 = vmul.f32 %v2358, 1.442695
        %v2366 = vpow.pop %v2365
        %v2367 = vsel %vm1334, %v2360, 0.0
        %2368 = vadd.xlane.f32.xlu0 %v2367
        %v2369 = vpop.xlane.xlu0 %2368
        %v2370 = vsel %vm1334, %v2362, 0.0
        %2371 = vadd.xlane.f32.xlu0 %v2370
        %v2372 = vpop.xlane.xlu0 %2371
        %v2373 = vsel %vm1334, %v2364, 0.0
        %2374 = vadd.xlane.f32.xlu0 %v2373
        %v2375 = vpop.xlane.xlu0 %2374
        %v2376 = vsel %vm1334, %v2366, 0.0
        %2377 = vadd.xlane.f32.xlu0 %v2376
        %v2378 = vpop.xlane.xlu0 %2377
        %v2379 = vrcp.pop %v2369
        %v2380 = vrcp.pop %v2372
        %v2381 = vrcp.pop %v2375
        %v2382 = vrcp.pop %v2378
        %v2383 = vmul.f32 %v2360, %v2379
        %v2384 = vmul.f32 %v2362, %v2380
        %v2385 = vmul.f32 %v2364, %v2381
        %v2386 = vmul.f32 %v2366, %v2382
        %v2387 = vpack.c.bf16 %v2383, %v2383
        %v2388 = vpack.c.bf16 %v2384, %v2384
        %v2389 = vpack.c.bf16 %v2385, %v2385
        %v2390 = vpack.c.bf16 %v2386, %v2386
        %2391 = vrot.lane.b32.xlu0 %v1133, 96
        %v2392 = vpop.permute.xlu0 %2391
        %v2394 = vsel %vm1334, %v2387, 0
        %v2397 = vsel %vm1386, %v2392, 0
        %2399 = vmatprep.subr.bf16.mxu0 0
        %2400 = vmatpush1.bf16.msra.mxu0 0
        %2401 = vmatprep.subr.bf16.mxu0 0
        %2402 = vmatpush1.bf16.msra.mxu0 0
        %2403 = vmatprep.subr.bf16.mxu0 0
        %2404 = vmatpush1.bf16.msra.mxu0 0
        %2405 = vmatprep.subr.bf16.mxu0 0
        %2406 = vmatpush1.bf16.msra.mxu0 0
        %2407 = vmatprep.subr.bf16.mxu0 0
        %2408 = vmatpush1.bf16.msra.mxu0 0
        %2409 = vmatprep.subr.bf16.mxu0 0
        %2410 = vmatpush1.bf16.msra.mxu0 0
        %2411 = vmatprep.subr.bf16.mxu0 0
        %2412 = vmatpush1.bf16.msra.mxu0 0
        %2413 = vmatprep.subr.bf16.mxu0 0
        %2414 = vmatpush1.bf16.msra.mxu0 %v2397
        %2415 = vmatprep.subr.bf16.mxu0 0
        %2416 = vmatpush2.bf16.msra.mxu0 0
        %2417 = vmatprep.subr.bf16.mxu0 0
        %2418 = vmatpush2.bf16.msra.mxu0 0
        %2419 = vmatprep.subr.bf16.mxu0 0
        %2420 = vmatpush2.bf16.msra.mxu0 0
        %2421 = vmatprep.subr.bf16.mxu0 0
        %2422 = vmatpush2.bf16.msra.mxu0 0
        %2423 = vmatprep.subr.bf16.mxu0 0
        %2424 = vmatpush2.bf16.msra.mxu0 0
        %2425 = vmatprep.subr.bf16.mxu0 0
        %2426 = vmatpush2.bf16.msra.mxu0 0
        %2427 = vmatprep.subr.bf16.mxu0 0
        %2428 = vmatpush2.bf16.msra.mxu0 0
        %2429 = vmatprep.subr.bf16.mxu0 0
        %2430 = vmatpush2.bf16.msra.mxu0 0
        %2431 = vmatprep.mubr.bf16.mxu0 0
        %2432 = vmatmul.mubr.bf16.gmra.mxu0 %v2394
        %v2433 = vpop.f32.mrf.mxu0
        %v2434 = vadd.f32 0.0, %v2433
        %v2435 = vpop.f32.mrf.mxu0
        %v2436 = vpop.f32.mrf.mxu0
        %v2437 = vpop.f32.mrf.mxu0
        %2438 = vdwg.mxu0
        %2439 = vrot.lane.b32.xlu0 %v1134, 96
        %v2440 = vpop.permute.xlu0 %2439
        %v2442 = vsel %vm1334, %v2388, 0
        %v2445 = vsel %vm1386, %v2440, 0
        %2447 = vmatprep.subr.bf16.mxu0 0
        %2448 = vmatpush1.bf16.msra.mxu0 0
        %2449 = vmatprep.subr.bf16.mxu0 0
        %2450 = vmatpush1.bf16.msra.mxu0 0
        %2451 = vmatprep.subr.bf16.mxu0 0
        %2452 = vmatpush1.bf16.msra.mxu0 0
        %2453 = vmatprep.subr.bf16.mxu0 0
        %2454 = vmatpush1.bf16.msra.mxu0 0
        %2455 = vmatprep.subr.bf16.mxu0 0
        %2456 = vmatpush1.bf16.msra.mxu0 0
        %2457 = vmatprep.subr.bf16.mxu0 0
        %2458 = vmatpush1.bf16.msra.mxu0 0
        %2459 = vmatprep.subr.bf16.mxu0 0
        %2460 = vmatpush1.bf16.msra.mxu0 0
        %2461 = vmatprep.subr.bf16.mxu0 0
        %2462 = vmatpush1.bf16.msra.mxu0 %v2445
        %2463 = vmatprep.subr.bf16.mxu0 0
        %2464 = vmatpush2.bf16.msra.mxu0 0
        %2465 = vmatprep.subr.bf16.mxu0 0
        %2466 = vmatpush2.bf16.msra.mxu0 0
        %2467 = vmatprep.subr.bf16.mxu0 0
        %2468 = vmatpush2.bf16.msra.mxu0 0
        %2469 = vmatprep.subr.bf16.mxu0 0
        %2470 = vmatpush2.bf16.msra.mxu0 0
        %2471 = vmatprep.subr.bf16.mxu0 0
        %2472 = vmatpush2.bf16.msra.mxu0 0
        %2473 = vmatprep.subr.bf16.mxu0 0
        %2474 = vmatpush2.bf16.msra.mxu0 0
        %2475 = vmatprep.subr.bf16.mxu0 0
        %2476 = vmatpush2.bf16.msra.mxu0 0
        %2477 = vmatprep.subr.bf16.mxu0 0
        %2478 = vmatpush2.bf16.msra.mxu0 0
        %2479 = vmatprep.mubr.bf16.mxu0 0
        %2480 = vmatmul.mubr.bf16.gmra.mxu0 %v2442
        %v2481 = vpop.f32.mrf.mxu0
        %v2482 = vadd.f32 0.0, %v2481
        %v2483 = vpop.f32.mrf.mxu0
        %v2484 = vpop.f32.mrf.mxu0
        %v2485 = vpop.f32.mrf.mxu0
        %2486 = vdwg.mxu0
        %2487 = vrot.lane.b32.xlu0 %v1135, 96
        %v2488 = vpop.permute.xlu0 %2487
        %v2490 = vsel %vm1334, %v2389, 0
        %v2493 = vsel %vm1386, %v2488, 0
        %2495 = vmatprep.subr.bf16.mxu0 0
        %2496 = vmatpush1.bf16.msra.mxu0 0
        %2497 = vmatprep.subr.bf16.mxu0 0
        %2498 = vmatpush1.bf16.msra.mxu0 0
        %2499 = vmatprep.subr.bf16.mxu0 0
        %2500 = vmatpush1.bf16.msra.mxu0 0
        %2501 = vmatprep.subr.bf16.mxu0 0
        %2502 = vmatpush1.bf16.msra.mxu0 0
        %2503 = vmatprep.subr.bf16.mxu0 0
        %2504 = vmatpush1.bf16.msra.mxu0 0
        %2505 = vmatprep.subr.bf16.mxu0 0
        %2506 = vmatpush1.bf16.msra.mxu0 0
        %2507 = vmatprep.subr.bf16.mxu0 0
        %2508 = vmatpush1.bf16.msra.mxu0 0
        %2509 = vmatprep.subr.bf16.mxu0 0
        %2510 = vmatpush1.bf16.msra.mxu0 %v2493
        %2511 = vmatprep.subr.bf16.mxu0 0
        %2512 = vmatpush2.bf16.msra.mxu0 0
        %2513 = vmatprep.subr.bf16.mxu0 0
        %2514 = vmatpush2.bf16.msra.mxu0 0
        %2515 = vmatprep.subr.bf16.mxu0 0
        %2516 = vmatpush2.bf16.msra.mxu0 0
        %2517 = vmatprep.subr.bf16.mxu0 0
        %2518 = vmatpush2.bf16.msra.mxu0 0
        %2519 = vmatprep.subr.bf16.mxu0 0
        %2520 = vmatpush2.bf16.msra.mxu0 0
        %2521 = vmatprep.subr.bf16.mxu0 0
        %2522 = vmatpush2.bf16.msra.mxu0 0
        %2523 = vmatprep.subr.bf16.mxu0 0
        %2524 = vmatpush2.bf16.msra.mxu0 0
        %2525 = vmatprep.subr.bf16.mxu0 0
        %2526 = vmatpush2.bf16.msra.mxu0 0
        %2527 = vmatprep.mubr.bf16.mxu0 0
        %2528 = vmatmul.mubr.bf16.gmra.mxu0 %v2490
        %v2529 = vpop.f32.mrf.mxu0
        %v2530 = vadd.f32 0.0, %v2529
        %v2531 = vpop.f32.mrf.mxu0
        %v2532 = vpop.f32.mrf.mxu0
        %v2533 = vpop.f32.mrf.mxu0
        %2534 = vdwg.mxu0
        %2535 = vrot.lane.b32.xlu0 %v1136, 96
        %v2536 = vpop.permute.xlu0 %2535
        %v2538 = vsel %vm1334, %v2390, 0
        %v2541 = vsel %vm1386, %v2536, 0
        %2543 = vmatprep.subr.bf16.mxu0 0
        %2544 = vmatpush1.bf16.msra.mxu0 0
        %2545 = vmatprep.subr.bf16.mxu0 0
        %2546 = vmatpush1.bf16.msra.mxu0 0
        %2547 = vmatprep.subr.bf16.mxu0 0
        %2548 = vmatpush1.bf16.msra.mxu0 0
        %2549 = vmatprep.subr.bf16.mxu0 0
        %2550 = vmatpush1.bf16.msra.mxu0 0
        %2551 = vmatprep.subr.bf16.mxu0 0
        %2552 = vmatpush1.bf16.msra.mxu0 0
        %2553 = vmatprep.subr.bf16.mxu0 0
        %2554 = vmatpush1.bf16.msra.mxu0 0
        %2555 = vmatprep.subr.bf16.mxu0 0
        %2556 = vmatpush1.bf16.msra.mxu0 0
        %2557 = vmatprep.subr.bf16.mxu0 0
        %2558 = vmatpush1.bf16.msra.mxu0 %v2541
        %2559 = vmatprep.subr.bf16.mxu0 0
        %2560 = vmatpush2.bf16.msra.mxu0 0
        %2561 = vmatprep.subr.bf16.mxu0 0
        %2562 = vmatpush2.bf16.msra.mxu0 0
        %2563 = vmatprep.subr.bf16.mxu0 0
        %2564 = vmatpush2.bf16.msra.mxu0 0
        %2565 = vmatprep.subr.bf16.mxu0 0
        %2566 = vmatpush2.bf16.msra.mxu0 0
        %2567 = vmatprep.subr.bf16.mxu0 0
        %2568 = vmatpush2.bf16.msra.mxu0 0
        %2569 = vmatprep.subr.bf16.mxu0 0
        %2570 = vmatpush2.bf16.msra.mxu0 0
        %2571 = vmatprep.subr.bf16.mxu0 0
        %2572 = vmatpush2.bf16.msra.mxu0 0
        %2573 = vmatprep.subr.bf16.mxu0 0
        %2574 = vmatpush2.bf16.msra.mxu0 0
        %2575 = vmatprep.mubr.bf16.mxu0 0
        %2576 = vmatmul.mubr.bf16.gmra.mxu0 %v2538
        %v2577 = vpop.f32.mrf.mxu0
        %v2578 = vadd.f32 0.0, %v2577
        %v2579 = vpop.f32.mrf.mxu0
        %v2580 = vpop.f32.mrf.mxu0
        %v2581 = vpop.f32.mrf.mxu0
        %2582 = vdwg.mxu0
        %v2583 = vpack.c.bf16 %v2482, %v2434
        %v2584 = vpack.c.bf16 %v2578, %v2530
        %s2585 = scalar_lea.vmem [#allocation11], 16
        %v2586 = vld [vmem:[%s2585] sm:$0xf]
        %v2587 = vld [vmem:[%s2585 + $0x4] sm:$0xf]
        %v2590 = vunpack.c.l.b16 %v2586
        %v2591 = vunpack.c.l.b16 %v2587
        %v2592 = vpack.c.b16 %v2591, %v2590
        %v2595 = vsel %vm1140, %v2583, 0
        %v2598 = vsel %vm1140, %v2584, 0
        %2600 = vmatprep.subr.bf16.mxu0 0
        %2601 = vmatpush1.bf16.msra.mxu0 0
        %2602 = vmatprep.subr.bf16.mxu0 0
        %2603 = vmatpush1.bf16.msra.mxu0 0
        %2604 = vmatprep.subr.bf16.mxu0 0
        %2605 = vmatpush1.bf16.msra.mxu0 0
        %2606 = vmatprep.subr.bf16.mxu0 0
        %2607 = vmatpush1.bf16.msra.mxu0 0
        %2608 = vmatprep.subr.bf16.mxu0 0
        %2609 = vmatpush1.bf16.msra.mxu0 0
        %2610 = vmatprep.subr.bf16.mxu0 0
        %2611 = vmatpush1.bf16.msra.mxu0 0
        %2612 = vmatprep.subr.bf16.mxu0 0
        %2613 = vmatpush1.bf16.msra.mxu0 0
        %2614 = vmatprep.subr.bf16.mxu0 0
        %2615 = vmatpush1.bf16.msra.mxu0 %v2592
        %2616 = vmatprep.subr.bf16.mxu0 0
        %2617 = vmatpush2.bf16.msra.mxu0 0
        %2618 = vmatprep.subr.bf16.mxu0 0
        %2619 = vmatpush2.bf16.msra.mxu0 0
        %2620 = vmatprep.subr.bf16.mxu0 0
        %2621 = vmatpush2.bf16.msra.mxu0 0
        %2622 = vmatprep.subr.bf16.mxu0 0
        %2623 = vmatpush2.bf16.msra.mxu0 0
        %2624 = vmatprep.subr.bf16.mxu0 0
        %2625 = vmatpush2.bf16.msra.mxu0 0
        %2626 = vmatprep.subr.bf16.mxu0 0
        %2627 = vmatpush2.bf16.msra.mxu0 0
        %2628 = vmatprep.subr.bf16.mxu0 0
        %2629 = vmatpush2.bf16.msra.mxu0 0
        %2630 = vmatprep.subr.bf16.mxu0 0
        %2631 = vmatpush2.bf16.msra.mxu0 0
        %2632 = vmatprep.mubr.bf16.mxu0 0
        %2633 = vmatmul.mubr.bf16.gmra.mxu0 %v2595
        %v2634 = vpop.f32.mrf.mxu0
        %v2635 = vadd.f32 0.0, %v2634
        %v2636 = vpop.f32.mrf.mxu0
        %v2637 = vpop.f32.mrf.mxu0
        %v2638 = vadd.f32 0.0, %v2637
        %v2639 = vpop.f32.mrf.mxu0
        %2640 = vmatprep.mubr.bf16.mxu0 0
        %2641 = vmatmul.mubr.bf16.gmra.mxu0 %v2598
        %v2642 = vpop.f32.mrf.mxu0
        %v2643 = vadd.f32 0.0, %v2642
        %v2644 = vpop.f32.mrf.mxu0
        %v2645 = vpop.f32.mrf.mxu0
        %v2646 = vadd.f32 0.0, %v2645
        %v2647 = vpop.f32.mrf.mxu0
        %2648 = vdwg.mxu0
        %v2649 = vadd.f32 %v2129, %v2635
        %v2650 = vadd.f32 %v2132, %v2638
        %v2651 = vadd.f32 %v2137, %v2643
        %v2652 = vadd.f32 %v2140, %v2646
        %2653 = vrot.lane.b32.xlu0 %v1129, 80
        %v2654 = vpop.permute.xlu0 %2653
        %2655 = vrot.lane.b32.xlu0 %v1129, 16
        %v2656 = vpop.permute.xlu0 %2655
        %v2658 = vsel %vm1140, %v2654, 0
        %v2661 = vsel %vm1140, %v2656, 0
        %2663 = vmatprep.subr.bf16.mxu0 0
        %2664 = vmatpush1.bf16.xpose.msra.mxu0 0
        %2665 = vmatprep.subr.bf16.mxu0 0
        %2666 = vmatpush1.bf16.xpose.msra.mxu0 0
        %2667 = vmatprep.subr.bf16.mxu0 0
        %2668 = vmatpush1.bf16.xpose.msra.mxu0 0
        %2669 = vmatprep.subr.bf16.mxu0 0
        %2670 = vmatpush1.bf16.xpose.msra.mxu0 0
        %2671 = vmatprep.subr.bf16.mxu0 0
        %2672 = vmatpush1.bf16.xpose.msra.mxu0 0
        %2673 = vmatprep.subr.bf16.mxu0 0
        %2674 = vmatpush1.bf16.xpose.msra.mxu0 0
        %2675 = vmatprep.subr.bf16.mxu0 0
        %2676 = vmatpush1.bf16.xpose.msra.mxu0 0
        %2677 = vmatprep.subr.bf16.mxu0 0
        %2678 = vmatpush1.bf16.xpose.msra.mxu0 %v2661
        %2679 = vmatprep.subr.bf16.mxu0 0
        %2680 = vmatpush2.bf16.xpose.msra.mxu0 0
        %2681 = vmatprep.subr.bf16.mxu0 0
        %2682 = vmatpush2.bf16.xpose.msra.mxu0 0
        %2683 = vmatprep.subr.bf16.mxu0 0
        %2684 = vmatpush2.bf16.xpose.msra.mxu0 0
        %2685 = vmatprep.subr.bf16.mxu0 0
        %2686 = vmatpush2.bf16.xpose.msra.mxu0 0
        %2687 = vmatprep.subr.bf16.mxu0 0
        %2688 = vmatpush2.bf16.xpose.msra.mxu0 0
        %2689 = vmatprep.subr.bf16.mxu0 0
        %2690 = vmatpush2.bf16.xpose.msra.mxu0 0
        %2691 = vmatprep.subr.bf16.mxu0 0
        %2692 = vmatpush2.bf16.xpose.msra.mxu0 0
        %2693 = vmatprep.subr.bf16.mxu0 0
        %2694 = vmatpush2.bf16.xpose.msra.mxu0 0
        %2695 = vmatprep.mubr.bf16.mxu0 0
        %2696 = vmatmul.mubr.bf16.gmra.mxu0 %v2658
        %v2697 = vpop.f32.mrf.mxu0
        %v2698 = vadd.f32 0.0, %v2697
        %v2699 = vpop.f32.mrf.mxu0
        %v2700 = vpop.f32.mrf.mxu0
        %v2701 = vpop.f32.mrf.mxu0
        %2702 = vdwg.mxu0
        %2703 = vrot.lane.b32.xlu0 %v1130, 80
        %v2704 = vpop.permute.xlu0 %2703
        %2705 = vrot.lane.b32.xlu0 %v1130, 16
        %v2706 = vpop.permute.xlu0 %2705
        %v2708 = vsel %vm1140, %v2704, 0
        %v2711 = vsel %vm1140, %v2706, 0
        %2713 = vmatprep.subr.bf16.mxu0 0
        %2714 = vmatpush1.bf16.xpose.msra.mxu0 0
        %2715 = vmatprep.subr.bf16.mxu0 0
        %2716 = vmatpush1.bf16.xpose.msra.mxu0 0
        %2717 = vmatprep.subr.bf16.mxu0 0
        %2718 = vmatpush1.bf16.xpose.msra.mxu0 0
        %2719 = vmatprep.subr.bf16.mxu0 0
        %2720 = vmatpush1.bf16.xpose.msra.mxu0 0
        %2721 = vmatprep.subr.bf16.mxu0 0
        %2722 = vmatpush1.bf16.xpose.msra.mxu0 0
        %2723 = vmatprep.subr.bf16.mxu0 0
        %2724 = vmatpush1.bf16.xpose.msra.mxu0 0
        %2725 = vmatprep.subr.bf16.mxu0 0
        %2726 = vmatpush1.bf16.xpose.msra.mxu0 0
        %2727 = vmatprep.subr.bf16.mxu0 0
        %2728 = vmatpush1.bf16.xpose.msra.mxu0 %v2711
        %2729 = vmatprep.subr.bf16.mxu0 0
        %2730 = vmatpush2.bf16.xpose.msra.mxu0 0
        %2731 = vmatprep.subr.bf16.mxu0 0
        %2732 = vmatpush2.bf16.xpose.msra.mxu0 0
        %2733 = vmatprep.subr.bf16.mxu0 0
        %2734 = vmatpush2.bf16.xpose.msra.mxu0 0
        %2735 = vmatprep.subr.bf16.mxu0 0
        %2736 = vmatpush2.bf16.xpose.msra.mxu0 0
        %2737 = vmatprep.subr.bf16.mxu0 0
        %2738 = vmatpush2.bf16.xpose.msra.mxu0 0
        %2739 = vmatprep.subr.bf16.mxu0 0
        %2740 = vmatpush2.bf16.xpose.msra.mxu0 0
        %2741 = vmatprep.subr.bf16.mxu0 0
        %2742 = vmatpush2.bf16.xpose.msra.mxu0 0
        %2743 = vmatprep.subr.bf16.mxu0 0
        %2744 = vmatpush2.bf16.xpose.msra.mxu0 0
        %2745 = vmatprep.mubr.bf16.mxu0 0
        %2746 = vmatmul.mubr.bf16.gmra.mxu0 %v2708
        %v2747 = vpop.f32.mrf.mxu0
        %v2748 = vadd.f32 0.0, %v2747
        %v2749 = vpop.f32.mrf.mxu0
        %v2750 = vpop.f32.mrf.mxu0
        %v2751 = vpop.f32.mrf.mxu0
        %2752 = vdwg.mxu0
        %2753 = vrot.lane.b32.xlu0 %v1131, 80
        %v2754 = vpop.permute.xlu0 %2753
        %2755 = vrot.lane.b32.xlu0 %v1131, 16
        %v2756 = vpop.permute.xlu0 %2755
        %v2758 = vsel %vm1140, %v2754, 0
        %v2761 = vsel %vm1140, %v2756, 0
        %2763 = vmatprep.subr.bf16.mxu0 0
        %2764 = vmatpush1.bf16.xpose.msra.mxu0 0
        %2765 = vmatprep.subr.bf16.mxu0 0
        %2766 = vmatpush1.bf16.xpose.msra.mxu0 0
        %2767 = vmatprep.subr.bf16.mxu0 0
        %2768 = vmatpush1.bf16.xpose.msra.mxu0 0
        %2769 = vmatprep.subr.bf16.mxu0 0
        %2770 = vmatpush1.bf16.xpose.msra.mxu0 0
        %2771 = vmatprep.subr.bf16.mxu0 0
        %2772 = vmatpush1.bf16.xpose.msra.mxu0 0
        %2773 = vmatprep.subr.bf16.mxu0 0
        %2774 = vmatpush1.bf16.xpose.msra.mxu0 0
        %2775 = vmatprep.subr.bf16.mxu0 0
        %2776 = vmatpush1.bf16.xpose.msra.mxu0 0
        %2777 = vmatprep.subr.bf16.mxu0 0
        %2778 = vmatpush1.bf16.xpose.msra.mxu0 %v2761
        %2779 = vmatprep.subr.bf16.mxu0 0
        %2780 = vmatpush2.bf16.xpose.msra.mxu0 0
        %2781 = vmatprep.subr.bf16.mxu0 0
        %2782 = vmatpush2.bf16.xpose.msra.mxu0 0
        %2783 = vmatprep.subr.bf16.mxu0 0
        %2784 = vmatpush2.bf16.xpose.msra.mxu0 0
        %2785 = vmatprep.subr.bf16.mxu0 0
        %2786 = vmatpush2.bf16.xpose.msra.mxu0 0
        %2787 = vmatprep.subr.bf16.mxu0 0
        %2788 = vmatpush2.bf16.xpose.msra.mxu0 0
        %2789 = vmatprep.subr.bf16.mxu0 0
        %2790 = vmatpush2.bf16.xpose.msra.mxu0 0
        %2791 = vmatprep.subr.bf16.mxu0 0
        %2792 = vmatpush2.bf16.xpose.msra.mxu0 0
        %2793 = vmatprep.subr.bf16.mxu0 0
        %2794 = vmatpush2.bf16.xpose.msra.mxu0 0
        %2795 = vmatprep.mubr.bf16.mxu0 0
        %2796 = vmatmul.mubr.bf16.gmra.mxu0 %v2758
        %v2797 = vpop.f32.mrf.mxu0
        %v2798 = vadd.f32 0.0, %v2797
        %v2799 = vpop.f32.mrf.mxu0
        %v2800 = vpop.f32.mrf.mxu0
        %v2801 = vpop.f32.mrf.mxu0
        %2802 = vdwg.mxu0
        %2803 = vrot.lane.b32.xlu0 %v1132, 80
        %v2804 = vpop.permute.xlu0 %2803
        %2805 = vrot.lane.b32.xlu0 %v1132, 16
        %v2806 = vpop.permute.xlu0 %2805
        %v2808 = vsel %vm1140, %v2804, 0
        %v2811 = vsel %vm1140, %v2806, 0
        %2813 = vmatprep.subr.bf16.mxu0 0
        %2814 = vmatpush1.bf16.xpose.msra.mxu0 0
        %2815 = vmatprep.subr.bf16.mxu0 0
        %2816 = vmatpush1.bf16.xpose.msra.mxu0 0
        %2817 = vmatprep.subr.bf16.mxu0 0
        %2818 = vmatpush1.bf16.xpose.msra.mxu0 0
        %2819 = vmatprep.subr.bf16.mxu0 0
        %2820 = vmatpush1.bf16.xpose.msra.mxu0 0
        %2821 = vmatprep.subr.bf16.mxu0 0
        %2822 = vmatpush1.bf16.xpose.msra.mxu0 0
        %2823 = vmatprep.subr.bf16.mxu0 0
        %2824 = vmatpush1.bf16.xpose.msra.mxu0 0
        %2825 = vmatprep.subr.bf16.mxu0 0
        %2826 = vmatpush1.bf16.xpose.msra.mxu0 0
        %2827 = vmatprep.subr.bf16.mxu0 0
        %2828 = vmatpush1.bf16.xpose.msra.mxu0 %v2811
        %2829 = vmatprep.subr.bf16.mxu0 0
        %2830 = vmatpush2.bf16.xpose.msra.mxu0 0
        %2831 = vmatprep.subr.bf16.mxu0 0
        %2832 = vmatpush2.bf16.xpose.msra.mxu0 0
        %2833 = vmatprep.subr.bf16.mxu0 0
        %2834 = vmatpush2.bf16.xpose.msra.mxu0 0
        %2835 = vmatprep.subr.bf16.mxu0 0
        %2836 = vmatpush2.bf16.xpose.msra.mxu0 0
        %2837 = vmatprep.subr.bf16.mxu0 0
        %2838 = vmatpush2.bf16.xpose.msra.mxu0 0
        %2839 = vmatprep.subr.bf16.mxu0 0
        %2840 = vmatpush2.bf16.xpose.msra.mxu0 0
        %2841 = vmatprep.subr.bf16.mxu0 0
        %2842 = vmatpush2.bf16.xpose.msra.mxu0 0
        %2843 = vmatprep.subr.bf16.mxu0 0
        %2844 = vmatpush2.bf16.xpose.msra.mxu0 0
        %2845 = vmatprep.mubr.bf16.mxu0 0
        %2846 = vmatmul.mubr.bf16.gmra.mxu0 %v2808
        %v2847 = vpop.f32.mrf.mxu0
        %v2848 = vadd.f32 0.0, %v2847
        %v2849 = vpop.f32.mrf.mxu0
        %v2850 = vpop.f32.mrf.mxu0
        %v2851 = vpop.f32.mrf.mxu0
        %2852 = vdwg.mxu0
        %v2853 = vsel %vm1334, %v2698, -inf
        %2854 = vmax.xlane.f32.xlu0 %v2853
        %v2855 = vpop.xlane.xlu0 %2854
        %v2856 = vsel %vm1334, %v2748, -inf
        %2857 = vmax.xlane.f32.xlu0 %v2856
        %v2858 = vpop.xlane.xlu0 %2857
        %v2859 = vsel %vm1334, %v2798, -inf
        %2860 = vmax.xlane.f32.xlu0 %v2859
        %v2861 = vpop.xlane.xlu0 %2860
        %v2862 = vsel %vm1334, %v2848, -inf
        %2863 = vmax.xlane.f32.xlu0 %v2862
        %v2864 = vpop.xlane.xlu0 %2863
        %v2865 = vsub.f32 %v2698, %v2855
        %v2866 = vsub.f32 %v2748, %v2858
        %v2867 = vsub.f32 %v2798, %v2861
        %v2868 = vsub.f32 %v2848, %v2864
        %v2869 = vmul.f32 %v2865, 1.442695
        %v2870 = vpow.pop %v2869
        %v2871 = vmul.f32 %v2866, 1.442695
        %v2872 = vpow.pop %v2871
        %v2873 = vmul.f32 %v2867, 1.442695
        %v2874 = vpow.pop %v2873
        %v2875 = vmul.f32 %v2868, 1.442695
        %v2876 = vpow.pop %v2875
        %v2877 = vsel %vm1334, %v2870, 0.0
        %2878 = vadd.xlane.f32.xlu0 %v2877
        %v2879 = vpop.xlane.xlu0 %2878
        %v2880 = vsel %vm1334, %v2872, 0.0
        %2881 = vadd.xlane.f32.xlu0 %v2880
        %v2882 = vpop.xlane.xlu0 %2881
        %v2883 = vsel %vm1334, %v2874, 0.0
        %2884 = vadd.xlane.f32.xlu0 %v2883
        %v2885 = vpop.xlane.xlu0 %2884
        %v2886 = vsel %vm1334, %v2876, 0.0
        %2887 = vadd.xlane.f32.xlu0 %v2886
        %v2888 = vpop.xlane.xlu0 %2887
        %v2889 = vrcp.pop %v2879
        %v2890 = vrcp.pop %v2882
        %v2891 = vrcp.pop %v2885
        %v2892 = vrcp.pop %v2888
        %v2893 = vmul.f32 %v2870, %v2889
        %v2894 = vmul.f32 %v2872, %v2890
        %v2895 = vmul.f32 %v2874, %v2891
        %v2896 = vmul.f32 %v2876, %v2892
        %v2897 = vpack.c.bf16 %v2893, %v2893
        %v2898 = vpack.c.bf16 %v2894, %v2894
        %v2899 = vpack.c.bf16 %v2895, %v2895
        %v2900 = vpack.c.bf16 %v2896, %v2896
        %2901 = vrot.lane.b32.xlu0 %v1133, 80
        %v2902 = vpop.permute.xlu0 %2901
        %v2904 = vsel %vm1334, %v2897, 0
        %v2907 = vsel %vm1386, %v2902, 0
        %2909 = vmatprep.subr.bf16.mxu0 0
        %2910 = vmatpush1.bf16.msra.mxu0 0
        %2911 = vmatprep.subr.bf16.mxu0 0
        %2912 = vmatpush1.bf16.msra.mxu0 0
        %2913 = vmatprep.subr.bf16.mxu0 0
        %2914 = vmatpush1.bf16.msra.mxu0 0
        %2915 = vmatprep.subr.bf16.mxu0 0
        %2916 = vmatpush1.bf16.msra.mxu0 0
        %2917 = vmatprep.subr.bf16.mxu0 0
        %2918 = vmatpush1.bf16.msra.mxu0 0
        %2919 = vmatprep.subr.bf16.mxu0 0
        %2920 = vmatpush1.bf16.msra.mxu0 0
        %2921 = vmatprep.subr.bf16.mxu0 0
        %2922 = vmatpush1.bf16.msra.mxu0 0
        %2923 = vmatprep.subr.bf16.mxu0 0
        %2924 = vmatpush1.bf16.msra.mxu0 %v2907
        %2925 = vmatprep.subr.bf16.mxu0 0
        %2926 = vmatpush2.bf16.msra.mxu0 0
        %2927 = vmatprep.subr.bf16.mxu0 0
        %2928 = vmatpush2.bf16.msra.mxu0 0
        %2929 = vmatprep.subr.bf16.mxu0 0
        %2930 = vmatpush2.bf16.msra.mxu0 0
        %2931 = vmatprep.subr.bf16.mxu0 0
        %2932 = vmatpush2.bf16.msra.mxu0 0
        %2933 = vmatprep.subr.bf16.mxu0 0
        %2934 = vmatpush2.bf16.msra.mxu0 0
        %2935 = vmatprep.subr.bf16.mxu0 0
        %2936 = vmatpush2.bf16.msra.mxu0 0
        %2937 = vmatprep.subr.bf16.mxu0 0
        %2938 = vmatpush2.bf16.msra.mxu0 0
        %2939 = vmatprep.subr.bf16.mxu0 0
        %2940 = vmatpush2.bf16.msra.mxu0 0
        %2941 = vmatprep.mubr.bf16.mxu0 0
        %2942 = vmatmul.mubr.bf16.gmra.mxu0 %v2904
        %v2943 = vpop.f32.mrf.mxu0
        %v2944 = vadd.f32 0.0, %v2943
        %v2945 = vpop.f32.mrf.mxu0
        %v2946 = vpop.f32.mrf.mxu0
        %v2947 = vpop.f32.mrf.mxu0
        %2948 = vdwg.mxu0
        %2949 = vrot.lane.b32.xlu0 %v1134, 80
        %v2950 = vpop.permute.xlu0 %2949
        %v2952 = vsel %vm1334, %v2898, 0
        %v2955 = vsel %vm1386, %v2950, 0
        %2957 = vmatprep.subr.bf16.mxu0 0
        %2958 = vmatpush1.bf16.msra.mxu0 0
        %2959 = vmatprep.subr.bf16.mxu0 0
        %2960 = vmatpush1.bf16.msra.mxu0 0
        %2961 = vmatprep.subr.bf16.mxu0 0
        %2962 = vmatpush1.bf16.msra.mxu0 0
        %2963 = vmatprep.subr.bf16.mxu0 0
        %2964 = vmatpush1.bf16.msra.mxu0 0
        %2965 = vmatprep.subr.bf16.mxu0 0
        %2966 = vmatpush1.bf16.msra.mxu0 0
        %2967 = vmatprep.subr.bf16.mxu0 0
        %2968 = vmatpush1.bf16.msra.mxu0 0
        %2969 = vmatprep.subr.bf16.mxu0 0
        %2970 = vmatpush1.bf16.msra.mxu0 0
        %2971 = vmatprep.subr.bf16.mxu0 0
        %2972 = vmatpush1.bf16.msra.mxu0 %v2955
        %2973 = vmatprep.subr.bf16.mxu0 0
        %2974 = vmatpush2.bf16.msra.mxu0 0
        %2975 = vmatprep.subr.bf16.mxu0 0
        %2976 = vmatpush2.bf16.msra.mxu0 0
        %2977 = vmatprep.subr.bf16.mxu0 0
        %2978 = vmatpush2.bf16.msra.mxu0 0
        %2979 = vmatprep.subr.bf16.mxu0 0
        %2980 = vmatpush2.bf16.msra.mxu0 0
        %2981 = vmatprep.subr.bf16.mxu0 0
        %2982 = vmatpush2.bf16.msra.mxu0 0
        %2983 = vmatprep.subr.bf16.mxu0 0
        %2984 = vmatpush2.bf16.msra.mxu0 0
        %2985 = vmatprep.subr.bf16.mxu0 0
        %2986 = vmatpush2.bf16.msra.mxu0 0
        %2987 = vmatprep.subr.bf16.mxu0 0
        %2988 = vmatpush2.bf16.msra.mxu0 0
        %2989 = vmatprep.mubr.bf16.mxu0 0
        %2990 = vmatmul.mubr.bf16.gmra.mxu0 %v2952
        %v2991 = vpop.f32.mrf.mxu0
        %v2992 = vadd.f32 0.0, %v2991
        %v2993 = vpop.f32.mrf.mxu0
        %v2994 = vpop.f32.mrf.mxu0
        %v2995 = vpop.f32.mrf.mxu0
        %2996 = vdwg.mxu0
        %2997 = vrot.lane.b32.xlu0 %v1135, 80
        %v2998 = vpop.permute.xlu0 %2997
        %v3000 = vsel %vm1334, %v2899, 0
        %v3003 = vsel %vm1386, %v2998, 0
        %3005 = vmatprep.subr.bf16.mxu0 0
        %3006 = vmatpush1.bf16.msra.mxu0 0
        %3007 = vmatprep.subr.bf16.mxu0 0
        %3008 = vmatpush1.bf16.msra.mxu0 0
        %3009 = vmatprep.subr.bf16.mxu0 0
        %3010 = vmatpush1.bf16.msra.mxu0 0
        %3011 = vmatprep.subr.bf16.mxu0 0
        %3012 = vmatpush1.bf16.msra.mxu0 0
        %3013 = vmatprep.subr.bf16.mxu0 0
        %3014 = vmatpush1.bf16.msra.mxu0 0
        %3015 = vmatprep.subr.bf16.mxu0 0
        %3016 = vmatpush1.bf16.msra.mxu0 0
        %3017 = vmatprep.subr.bf16.mxu0 0
        %3018 = vmatpush1.bf16.msra.mxu0 0
        %3019 = vmatprep.subr.bf16.mxu0 0
        %3020 = vmatpush1.bf16.msra.mxu0 %v3003
        %3021 = vmatprep.subr.bf16.mxu0 0
        %3022 = vmatpush2.bf16.msra.mxu0 0
        %3023 = vmatprep.subr.bf16.mxu0 0
        %3024 = vmatpush2.bf16.msra.mxu0 0
        %3025 = vmatprep.subr.bf16.mxu0 0
        %3026 = vmatpush2.bf16.msra.mxu0 0
        %3027 = vmatprep.subr.bf16.mxu0 0
        %3028 = vmatpush2.bf16.msra.mxu0 0
        %3029 = vmatprep.subr.bf16.mxu0 0
        %3030 = vmatpush2.bf16.msra.mxu0 0
        %3031 = vmatprep.subr.bf16.mxu0 0
        %3032 = vmatpush2.bf16.msra.mxu0 0
        %3033 = vmatprep.subr.bf16.mxu0 0
        %3034 = vmatpush2.bf16.msra.mxu0 0
        %3035 = vmatprep.subr.bf16.mxu0 0
        %3036 = vmatpush2.bf16.msra.mxu0 0
        %3037 = vmatprep.mubr.bf16.mxu0 0
        %3038 = vmatmul.mubr.bf16.gmra.mxu0 %v3000
        %v3039 = vpop.f32.mrf.mxu0
        %v3040 = vadd.f32 0.0, %v3039
        %v3041 = vpop.f32.mrf.mxu0
        %v3042 = vpop.f32.mrf.mxu0
        %v3043 = vpop.f32.mrf.mxu0
        %3044 = vdwg.mxu0
        %3045 = vrot.lane.b32.xlu0 %v1136, 80
        %v3046 = vpop.permute.xlu0 %3045
        %v3048 = vsel %vm1334, %v2900, 0
        %v3051 = vsel %vm1386, %v3046, 0
        %3053 = vmatprep.subr.bf16.mxu0 0
        %3054 = vmatpush1.bf16.msra.mxu0 0
        %3055 = vmatprep.subr.bf16.mxu0 0
        %3056 = vmatpush1.bf16.msra.mxu0 0
        %3057 = vmatprep.subr.bf16.mxu0 0
        %3058 = vmatpush1.bf16.msra.mxu0 0
        %3059 = vmatprep.subr.bf16.mxu0 0
        %3060 = vmatpush1.bf16.msra.mxu0 0
        %3061 = vmatprep.subr.bf16.mxu0 0
        %3062 = vmatpush1.bf16.msra.mxu0 0
        %3063 = vmatprep.subr.bf16.mxu0 0
        %3064 = vmatpush1.bf16.msra.mxu0 0
        %3065 = vmatprep.subr.bf16.mxu0 0
        %3066 = vmatpush1.bf16.msra.mxu0 0
        %3067 = vmatprep.subr.bf16.mxu0 0
        %3068 = vmatpush1.bf16.msra.mxu0 %v3051
        %3069 = vmatprep.subr.bf16.mxu0 0
        %3070 = vmatpush2.bf16.msra.mxu0 0
        %3071 = vmatprep.subr.bf16.mxu0 0
        %3072 = vmatpush2.bf16.msra.mxu0 0
        %3073 = vmatprep.subr.bf16.mxu0 0
        %3074 = vmatpush2.bf16.msra.mxu0 0
        %3075 = vmatprep.subr.bf16.mxu0 0
        %3076 = vmatpush2.bf16.msra.mxu0 0
        %3077 = vmatprep.subr.bf16.mxu0 0
        %3078 = vmatpush2.bf16.msra.mxu0 0
        %3079 = vmatprep.subr.bf16.mxu0 0
        %3080 = vmatpush2.bf16.msra.mxu0 0
        %3081 = vmatprep.subr.bf16.mxu0 0
        %3082 = vmatpush2.bf16.msra.mxu0 0
        %3083 = vmatprep.subr.bf16.mxu0 0
        %3084 = vmatpush2.bf16.msra.mxu0 0
        %3085 = vmatprep.mubr.bf16.mxu0 0
        %3086 = vmatmul.mubr.bf16.gmra.mxu0 %v3048
        %v3087 = vpop.f32.mrf.mxu0
        %v3088 = vadd.f32 0.0, %v3087
        %v3089 = vpop.f32.mrf.mxu0
        %v3090 = vpop.f32.mrf.mxu0
        %v3091 = vpop.f32.mrf.mxu0
        %3092 = vdwg.mxu0
        %v3093 = vpack.c.bf16 %v2992, %v2944
        %v3094 = vpack.c.bf16 %v3088, %v3040
        %s3095 = scalar_lea.vmem [#allocation11], 24
        %v3096 = vld [vmem:[%s3095] sm:$0xf]
        %v3097 = vld [vmem:[%s3095 + $0x4] sm:$0xf]
        %v3100 = vunpack.c.l.b16 %v3096
        %v3101 = vunpack.c.l.b16 %v3097
        %v3102 = vpack.c.b16 %v3101, %v3100
        %v3105 = vsel %vm1140, %v3093, 0
        %v3108 = vsel %vm1140, %v3094, 0
        %3110 = vmatprep.subr.bf16.mxu0 0
        %3111 = vmatpush1.bf16.msra.mxu0 0
        %3112 = vmatprep.subr.bf16.mxu0 0
        %3113 = vmatpush1.bf16.msra.mxu0 0
        %3114 = vmatprep.subr.bf16.mxu0 0
        %3115 = vmatpush1.bf16.msra.mxu0 0
        %3116 = vmatprep.subr.bf16.mxu0 0
        %3117 = vmatpush1.bf16.msra.mxu0 0
        %3118 = vmatprep.subr.bf16.mxu0 0
        %3119 = vmatpush1.bf16.msra.mxu0 0
        %3120 = vmatprep.subr.bf16.mxu0 0
        %3121 = vmatpush1.bf16.msra.mxu0 0
        %3122 = vmatprep.subr.bf16.mxu0 0
        %3123 = vmatpush1.bf16.msra.mxu0 0
        %3124 = vmatprep.subr.bf16.mxu0 0
        %3125 = vmatpush1.bf16.msra.mxu0 %v3102
        %3126 = vmatprep.subr.bf16.mxu0 0
        %3127 = vmatpush2.bf16.msra.mxu0 0
        %3128 = vmatprep.subr.bf16.mxu0 0
        %3129 = vmatpush2.bf16.msra.mxu0 0
        %3130 = vmatprep.subr.bf16.mxu0 0
        %3131 = vmatpush2.bf16.msra.mxu0 0
        %3132 = vmatprep.subr.bf16.mxu0 0
        %3133 = vmatpush2.bf16.msra.mxu0 0
        %3134 = vmatprep.subr.bf16.mxu0 0
        %3135 = vmatpush2.bf16.msra.mxu0 0
        %3136 = vmatprep.subr.bf16.mxu0 0
        %3137 = vmatpush2.bf16.msra.mxu0 0
        %3138 = vmatprep.subr.bf16.mxu0 0
        %3139 = vmatpush2.bf16.msra.mxu0 0
        %3140 = vmatprep.subr.bf16.mxu0 0
        %3141 = vmatpush2.bf16.msra.mxu0 0
        %3142 = vmatprep.mubr.bf16.mxu0 0
        %3143 = vmatmul.mubr.bf16.gmra.mxu0 %v3105
        %v3144 = vpop.f32.mrf.mxu0
        %v3145 = vadd.f32 0.0, %v3144
        %v3146 = vpop.f32.mrf.mxu0
        %v3147 = vpop.f32.mrf.mxu0
        %v3148 = vadd.f32 0.0, %v3147
        %v3149 = vpop.f32.mrf.mxu0
        %3150 = vmatprep.mubr.bf16.mxu0 0
        %3151 = vmatmul.mubr.bf16.gmra.mxu0 %v3108
        %v3152 = vpop.f32.mrf.mxu0
        %v3153 = vadd.f32 0.0, %v3152
        %v3154 = vpop.f32.mrf.mxu0
        %v3155 = vpop.f32.mrf.mxu0
        %v3156 = vadd.f32 0.0, %v3155
        %v3157 = vpop.f32.mrf.mxu0
        %3158 = vdwg.mxu0
        %v3159 = vadd.f32 %v2649, %v3145
        %v3160 = vadd.f32 %v2650, %v3148
        %v3161 = vadd.f32 %v2651, %v3153
        %v3162 = vadd.f32 %v2652, %v3156
        %v3163 = vadd.f32 %v929, %v3159
        %v3164 = vadd.f32 %v930, %v3160
        %v3165 = vadd.f32 %v931, %v3161
        %v3166 = vadd.f32 %v932, %v3162
        %v3167 = vld [vmem:[#allocation13] sm:$0x1]
        %v3169 = vlaneseq
        %v3170 = vshrl.u32 %v3169, 7
        %v3171 = vsub.s32 0, %v3170
        %v3172 = vrot.slane %v3167, %v3171
        %v3174 = vadd.f32 %v3163, %v3172
        %v3175 = vadd.f32 %v3164, %v3172
        %v3176 = vadd.f32 %v3165, %v3172
        %v3177 = vadd.f32 %v3166, %v3172
        %v3178 = vld [vmem:[#allocation14] sm:$0x1]
        %v3179 = vld [vmem:[#allocation16] sm:$0x1]
        %v3180 = vsel %vm849, %v3174, 0.0
        %3181 = vadd.xlane.f32.xlu0 %v3180
        %v3182 = vpop.xlane.xlu0 %3181
        %v3183 = vsel %vm849, %v3175, 0.0
        %3184 = vadd.xlane.f32.xlu0 %v3183
        %v3185 = vpop.xlane.xlu0 %3184
        %v3186 = vsel %vm849, %v3176, 0.0
        %3187 = vadd.xlane.f32.xlu0 %v3186
        %v3188 = vpop.xlane.xlu0 %3187
        %v3189 = vsel %vm849, %v3177, 0.0
        %3190 = vadd.xlane.f32.xlu0 %v3189
        %v3191 = vpop.xlane.xlu0 %3190
        %v3192 = vmul.f32 %v3182, %v947
        %v3193 = vmul.f32 %v3185, %v947
        %v3194 = vmul.f32 %v3188, %v947
        %v3195 = vmul.f32 %v3191, %v947
        %v3196 = vsub.f32 %v3174, %v3192
        %v3197 = vsub.f32 %v3175, %v3193
        %v3198 = vsub.f32 %v3176, %v3194
        %v3199 = vsub.f32 %v3177, %v3195
        %v3200 = vmul.f32 %v3196, %v3196
        %v3201 = vmul.f32 %v3197, %v3197
        %v3202 = vmul.f32 %v3198, %v3198
        %v3203 = vmul.f32 %v3199, %v3199
        %v3204 = vsel %vm849, %v3200, 0.0
        %3205 = vadd.xlane.f32.xlu0 %v3204
        %v3206 = vpop.xlane.xlu0 %3205
        %v3207 = vsel %vm849, %v3201, 0.0
        %3208 = vadd.xlane.f32.xlu0 %v3207
        %v3209 = vpop.xlane.xlu0 %3208
        %v3210 = vsel %vm849, %v3202, 0.0
        %3211 = vadd.xlane.f32.xlu0 %v3210
        %v3212 = vpop.xlane.xlu0 %3211
        %v3213 = vsel %vm849, %v3203, 0.0
        %3214 = vadd.xlane.f32.xlu0 %v3213
        %v3215 = vpop.xlane.xlu0 %3214
        %v3216 = vmul.f32 %v3206, %v947
        %v3217 = vmul.f32 %v3209, %v947
        %v3218 = vmul.f32 %v3212, %v947
        %v3219 = vmul.f32 %v3215, %v947
        %v3220 = vadd.f32 %v3216, 1e-05
        %v3221 = vadd.f32 %v3217, 1e-05
        %v3222 = vadd.f32 %v3218, 1e-05
        %v3223 = vadd.f32 %v3219, 1e-05
        %v3224 = vrsqrt.pop %v3220
        %v3225 = vrsqrt.pop %v3221
        %v3226 = vrsqrt.pop %v3222
        %v3227 = vrsqrt.pop %v3223
        %v3228 = vmul.f32 %v3196, %v3224
        %v3229 = vmul.f32 %v3197, %v3225
        %v3230 = vmul.f32 %v3198, %v3226
        %v3231 = vmul.f32 %v3199, %v3227
        %v3233 = vlaneseq
        %v3234 = vshrl.u32 %v3233, 7
        %v3235 = vsub.s32 0, %v3234
        %v3236 = vrot.slane %v3178, %v3235
        %v3238 = vmul.f32 %v3228, %v3236
        %v3239 = vmul.f32 %v3229, %v3236
        %v3240 = vmul.f32 %v3230, %v3236
        %v3241 = vmul.f32 %v3231, %v3236
        %v3243 = vlaneseq
        %v3244 = vshrl.u32 %v3243, 7
        %v3245 = vsub.s32 0, %v3244
        %v3246 = vrot.slane %v3179, %v3245
        %v3248 = vadd.f32 %v3238, %v3246
        %v3249 = vadd.f32 %v3239, %v3246
        %v3250 = vadd.f32 %v3240, %v3246
        %v3251 = vadd.f32 %v3241, %v3246
        %v3252 = vpack.c.bf16 %v3249, %v3248
        %v3253 = vpack.c.bf16 %v3251, %v3250
        %v3254 = vld [vmem:[%s15] sm:$0x1]
        %v3256 = vlaneseq
        %v3257 = vshrl.u32 %v3256, 7
        %v3258 = vsub.s32 0, %v3257
        %v3259 = vrot.slane %v3254, %v3258
        %v3261 = vadd.f32 %v3174, %v3259
        %v3262 = vadd.f32 %v3175, %v3259
        %v3263 = vadd.f32 %v3176, %v3259
        %v3264 = vadd.f32 %v3177, %v3259
        %v3265 = vld [vmem:[%s12] sm:$0xf]
        %v3266 = vld [vmem:[%s12 + $0x8] sm:$0xf]
        %v3267 = vld [vmem:[%s12 + $0x10] sm:$0xf]
        %v3268 = vld [vmem:[%s12 + $0x18] sm:$0xf]
        %v3269 = vld [vmem:[%s12 + $0x20] sm:$0xf]
        %v3270 = vld [vmem:[%s12 + $0x28] sm:$0xf]
        %v3271 = vld [vmem:[%s12 + $0x30] sm:$0xf]
        %v3272 = vld [vmem:[%s12 + $0x38] sm:$0xf]
        %v3273 = vld [vmem:[%s13] sm:$0x1]
        %v3275 = vlaneseq
        %v3276 = vshrl.u32 %v3275, 7
        %v3277 = vsub.s32 0, %v3276
        %v3278 = vrot.slane %v3273, %v3277
        %v3288 = vunpack.c.l.b16 %v3265
        %v3289 = vunpack.c.l.b16 %v3266
        %v3290 = vunpack.c.l.b16 %v3267
        %v3291 = vunpack.c.l.b16 %v3268
        %v3292 = vunpack.c.l.b16 %v3269
        %v3293 = vunpack.c.l.b16 %v3270
        %v3294 = vunpack.c.l.b16 %v3271
        %v3295 = vunpack.c.l.b16 %v3272
        %v3296 = vpack.c.b16 %v3289, %v3288
        %v3297 = vpack.c.b16 %v3291, %v3290
        %v3298 = vpack.c.b16 %v3293, %v3292
        %v3299 = vpack.c.b16 %v3295, %v3294
        %v3305 = vsel %vm849, %v3252, 0
        %v3308 = vsel %vm849, %v3253, 0
        %3310 = vmatprep.subr.bf16.mxu0 0
        %3311 = vmatpush1.bf16.msra.mxu0 0
        %3312 = vmatprep.subr.bf16.mxu0 0
        %3313 = vmatpush1.bf16.msra.mxu0 0
        %3314 = vmatprep.subr.bf16.mxu0 0
        %3315 = vmatpush1.bf16.msra.mxu0 0
        %3316 = vmatprep.subr.bf16.mxu0 0
        %3317 = vmatpush1.bf16.msra.mxu0 0
        %3318 = vmatprep.subr.bf16.mxu0 0
        %3319 = vmatpush1.bf16.msra.mxu0 %v3299
        %3320 = vmatprep.subr.bf16.mxu0 0
        %3321 = vmatpush1.bf16.msra.mxu0 %v3298
        %3322 = vmatprep.subr.bf16.mxu0 0
        %3323 = vmatpush1.bf16.msra.mxu0 %v3297
        %3324 = vmatprep.subr.bf16.mxu0 0
        %3325 = vmatpush1.bf16.msra.mxu0 %v3296
        %3326 = vmatprep.subr.bf16.mxu0 0
        %3327 = vmatpush2.bf16.msra.mxu0 0
        %3328 = vmatprep.subr.bf16.mxu0 0
        %3329 = vmatpush2.bf16.msra.mxu0 0
        %3330 = vmatprep.subr.bf16.mxu0 0
        %3331 = vmatpush2.bf16.msra.mxu0 0
        %3332 = vmatprep.subr.bf16.mxu0 0
        %3333 = vmatpush2.bf16.msra.mxu0 0
        %3334 = vmatprep.subr.bf16.mxu0 0
        %3335 = vmatpush2.bf16.msra.mxu0 0
        %3336 = vmatprep.subr.bf16.mxu0 0
        %3337 = vmatpush2.bf16.msra.mxu0 0
        %3338 = vmatprep.subr.bf16.mxu0 0
        %3339 = vmatpush2.bf16.msra.mxu0 0
        %3340 = vmatprep.subr.bf16.mxu0 0
        %3341 = vmatpush2.bf16.msra.mxu0 0
        %3342 = vmatprep.mubr.bf16.mxu0 0
        %3343 = vmatmul.mubr.bf16.gmra.mxu0 %v3305
        %v3344 = vpop.f32.mrf.mxu0
        %v3345 = vadd.f32 %v3278, %v3344
        %v3346 = vpop.f32.mrf.mxu0
        %v3347 = vpop.f32.mrf.mxu0
        %v3348 = vadd.f32 %v3278, %v3347
        %v3349 = vpop.f32.mrf.mxu0
        %3350 = vmatprep.mubr.bf16.mxu0 0
        %3351 = vmatmul.mubr.bf16.gmra.mxu0 %v3308
        %v3352 = vpop.f32.mrf.mxu0
        %v3353 = vadd.f32 %v3278, %v3352
        %v3354 = vpop.f32.mrf.mxu0
        %v3355 = vpop.f32.mrf.mxu0
        %v3356 = vadd.f32 %v3278, %v3355
        %v3357 = vpop.f32.mrf.mxu0
        %3358 = vdwg.mxu0
        %v3359 = vmul.f32 %v3345, %v3345
        %v3360 = vmul.f32 %v3348, %v3348
        %v3361 = vmul.f32 %v3353, %v3353
        %v3362 = vmul.f32 %v3356, %v3356
        %v3363 = vmul.f32 %v3345, %v3359
        %v3364 = vmul.f32 %v3348, %v3360
        %v3365 = vmul.f32 %v3353, %v3361
        %v3366 = vmul.f32 %v3356, %v3362
        %v3367 = vmul.f32 %v3363, 0.044715
        %v3368 = vmul.f32 %v3364, 0.044715
        %v3369 = vmul.f32 %v3365, 0.044715
        %v3370 = vmul.f32 %v3366, 0.044715
        %v3371 = vadd.f32 %v3345, %v3367
        %v3372 = vadd.f32 %v3348, %v3368
        %v3373 = vadd.f32 %v3353, %v3369
        %v3374 = vadd.f32 %v3356, %v3370
        %v3375 = vmul.f32 %v3371, 0.7978846
        %v3376 = vmul.f32 %v3372, 0.7978846
        %v3377 = vmul.f32 %v3373, 0.7978846
        %v3378 = vmul.f32 %v3374, 0.7978846
        %v3379 = vtanh.pop %v3375
        %v3380 = vtanh.pop %v3376
        %v3381 = vtanh.pop %v3377
        %v3382 = vtanh.pop %v3378
        %v3383 = vadd.f32 %v3379, 1.0
        %v3384 = vadd.f32 %v3380, 1.0
        %v3385 = vadd.f32 %v3381, 1.0
        %v3386 = vadd.f32 %v3382, 1.0
        %v3387 = vmul.f32 %v3383, 0.5
        %v3388 = vmul.f32 %v3384, 0.5
        %v3389 = vmul.f32 %v3385, 0.5
        %v3390 = vmul.f32 %v3386, 0.5
        %v3391 = vmul.f32 %v3345, %v3387
        %v3392 = vmul.f32 %v3348, %v3388
        %v3393 = vmul.f32 %v3353, %v3389
        %v3394 = vmul.f32 %v3356, %v3390
        %v3395 = vpack.c.bf16 %v3392, %v3391
        %v3396 = vpack.c.bf16 %v3394, %v3393
        %v3397 = vld [vmem:[%s14] sm:$0xf]
        %v3398 = vld [vmem:[%s14 + $0x4] sm:$0xf]
        %v3399 = vld [vmem:[%s14 + $0x8] sm:$0xf]
        %v3400 = vld [vmem:[%s14 + $0xc] sm:$0xf]
        %v3401 = vld [vmem:[%s14 + $0x10] sm:$0xf]
        %v3402 = vld [vmem:[%s14 + $0x14] sm:$0xf]
        %v3403 = vld [vmem:[%s14 + $0x18] sm:$0xf]
        %v3404 = vld [vmem:[%s14 + $0x1c] sm:$0xf]
        %v3405 = vld [vmem:[%s14 + $0x20] sm:$0xf]
        %v3406 = vld [vmem:[%s14 + $0x24] sm:$0xf]
        %v3407 = vld [vmem:[%s14 + $0x28] sm:$0xf]
        %v3408 = vld [vmem:[%s14 + $0x2c] sm:$0xf]
        %v3409 = vld [vmem:[%s14 + $0x30] sm:$0xf]
        %v3410 = vld [vmem:[%s14 + $0x34] sm:$0xf]
        %v3411 = vld [vmem:[%s14 + $0x38] sm:$0xf]
        %v3412 = vld [vmem:[%s14 + $0x3c] sm:$0xf]
        %v3429 = vunpack.c.l.b16 %v3397
        %v3430 = vunpack.c.l.b16 %v3398
        %v3431 = vunpack.c.l.b16 %v3399
        %v3432 = vunpack.c.l.b16 %v3400
        %v3433 = vunpack.c.l.b16 %v3401
        %v3434 = vunpack.c.l.b16 %v3402
        %v3435 = vunpack.c.l.b16 %v3403
        %v3436 = vunpack.c.l.b16 %v3404
        %v3437 = vunpack.c.l.b16 %v3405
        %v3438 = vunpack.c.l.b16 %v3406
        %v3439 = vunpack.c.l.b16 %v3407
        %v3440 = vunpack.c.l.b16 %v3408
        %v3441 = vunpack.c.l.b16 %v3409
        %v3442 = vunpack.c.l.b16 %v3410
        %v3443 = vunpack.c.l.b16 %v3411
        %v3444 = vunpack.c.l.b16 %v3412
        %v3445 = vpack.c.b16 %v3430, %v3429
        %v3446 = vpack.c.b16 %v3432, %v3431
        %v3447 = vpack.c.b16 %v3434, %v3433
        %v3448 = vpack.c.b16 %v3436, %v3435
        %v3449 = vpack.c.b16 %v3438, %v3437
        %v3450 = vpack.c.b16 %v3440, %v3439
        %v3451 = vpack.c.b16 %v3442, %v3441
        %v3452 = vpack.c.b16 %v3444, %v3443
        %3461 = vmatprep.subr.bf16.mxu0 0
        %3462 = vmatpush1.bf16.msra.mxu0 %v3452
        %3463 = vmatprep.subr.bf16.mxu0 0
        %3464 = vmatpush1.bf16.msra.mxu0 %v3451
        %3465 = vmatprep.subr.bf16.mxu0 0
        %3466 = vmatpush1.bf16.msra.mxu0 %v3450
        %3467 = vmatprep.subr.bf16.mxu0 0
        %3468 = vmatpush1.bf16.msra.mxu0 %v3449
        %3469 = vmatprep.subr.bf16.mxu0 0
        %3470 = vmatpush1.bf16.msra.mxu0 %v3448
        %3471 = vmatprep.subr.bf16.mxu0 0
        %3472 = vmatpush1.bf16.msra.mxu0 %v3447
        %3473 = vmatprep.subr.bf16.mxu0 0
        %3474 = vmatpush1.bf16.msra.mxu0 %v3446
        %3475 = vmatprep.subr.bf16.mxu0 0
        %3476 = vmatpush1.bf16.msra.mxu0 %v3445
        %3477 = vmatprep.subr.bf16.mxu0 0
        %3478 = vmatpush2.bf16.msra.mxu0 0
        %3479 = vmatprep.subr.bf16.mxu0 0
        %3480 = vmatpush2.bf16.msra.mxu0 0
        %3481 = vmatprep.subr.bf16.mxu0 0
        %3482 = vmatpush2.bf16.msra.mxu0 0
        %3483 = vmatprep.subr.bf16.mxu0 0
        %3484 = vmatpush2.bf16.msra.mxu0 0
        %3485 = vmatprep.subr.bf16.mxu0 0
        %3486 = vmatpush2.bf16.msra.mxu0 0
        %3487 = vmatprep.subr.bf16.mxu0 0
        %3488 = vmatpush2.bf16.msra.mxu0 0
        %3489 = vmatprep.subr.bf16.mxu0 0
        %3490 = vmatpush2.bf16.msra.mxu0 0
        %3491 = vmatprep.subr.bf16.mxu0 0
        %3492 = vmatpush2.bf16.msra.mxu0 0
        %3493 = vmatprep.mubr.bf16.mxu0 0
        %3494 = vmatmul.mubr.bf16.gmra.mxu0 %v3395
        %v3495 = vpop.f32.mrf.mxu0
        %v3496 = vadd.f32 0.0, %v3495
        %v3497 = vpop.f32.mrf.mxu0
        %v3498 = vpop.f32.mrf.mxu0
        %v3499 = vadd.f32 0.0, %v3498
        %v3500 = vpop.f32.mrf.mxu0
        %3501 = vmatprep.mubr.bf16.mxu0 0
        %3502 = vmatmul.mubr.bf16.gmra.mxu0 %v3396
        %v3503 = vpop.f32.mrf.mxu0
        %v3504 = vadd.f32 0.0, %v3503
        %v3505 = vpop.f32.mrf.mxu0
        %v3506 = vpop.f32.mrf.mxu0
        %v3507 = vadd.f32 0.0, %v3506
        %v3508 = vpop.f32.mrf.mxu0
        %3509 = vdwg.mxu0
        %v3510 = vadd.f32 %v3261, %v3496
        %v3511 = vadd.f32 %v3262, %v3499
        %v3512 = vadd.f32 %v3263, %v3504
        %v3513 = vadd.f32 %v3264, %v3507
        %v3514 = vld [vmem:[%s12 + $0x4] sm:$0xf]
        %v3515 = vld [vmem:[%s12 + $0xc] sm:$0xf]
        %v3516 = vld [vmem:[%s12 + $0x14] sm:$0xf]
        %v3517 = vld [vmem:[%s12 + $0x1c] sm:$0xf]
        %v3518 = vld [vmem:[%s12 + $0x24] sm:$0xf]
        %v3519 = vld [vmem:[%s12 + $0x2c] sm:$0xf]
        %v3520 = vld [vmem:[%s12 + $0x34] sm:$0xf]
        %v3521 = vld [vmem:[%s12 + $0x3c] sm:$0xf]
        %v3522 = vld [vmem:[%s13 + $0x1] sm:$0x1]
        %v3524 = vlaneseq
        %v3525 = vshrl.u32 %v3524, 7
        %v3526 = vsub.s32 0, %v3525
        %v3527 = vrot.slane %v3522, %v3526
        %v3537 = vunpack.c.l.b16 %v3514
        %v3538 = vunpack.c.l.b16 %v3515
        %v3539 = vunpack.c.l.b16 %v3516
        %v3540 = vunpack.c.l.b16 %v3517
        %v3541 = vunpack.c.l.b16 %v3518
        %v3542 = vunpack.c.l.b16 %v3519
        %v3543 = vunpack.c.l.b16 %v3520
        %v3544 = vunpack.c.l.b16 %v3521
        %v3545 = vpack.c.b16 %v3538, %v3537
        %v3546 = vpack.c.b16 %v3540, %v3539
        %v3547 = vpack.c.b16 %v3542, %v3541
        %v3548 = vpack.c.b16 %v3544, %v3543
        %3553 = vmatprep.subr.bf16.mxu0 0
        %3554 = vmatpush1.bf16.msra.mxu0 0
        %3555 = vmatprep.subr.bf16.mxu0 0
        %3556 = vmatpush1.bf16.msra.mxu0 0
        %3557 = vmatprep.subr.bf16.mxu0 0
        %3558 = vmatpush1.bf16.msra.mxu0 0
        %3559 = vmatprep.subr.bf16.mxu0 0
        %3560 = vmatpush1.bf16.msra.mxu0 0
        %3561 = vmatprep.subr.bf16.mxu0 0
        %3562 = vmatpush1.bf16.msra.mxu0 %v3548
        %3563 = vmatprep.subr.bf16.mxu0 0
        %3564 = vmatpush1.bf16.msra.mxu0 %v3547
        %3565 = vmatprep.subr.bf16.mxu0 0
        %3566 = vmatpush1.bf16.msra.mxu0 %v3546
        %3567 = vmatprep.subr.bf16.mxu0 0
        %3568 = vmatpush1.bf16.msra.mxu0 %v3545
        %3569 = vmatprep.subr.bf16.mxu0 0
        %3570 = vmatpush2.bf16.msra.mxu0 0
        %3571 = vmatprep.subr.bf16.mxu0 0
        %3572 = vmatpush2.bf16.msra.mxu0 0
        %3573 = vmatprep.subr.bf16.mxu0 0
        %3574 = vmatpush2.bf16.msra.mxu0 0
        %3575 = vmatprep.subr.bf16.mxu0 0
        %3576 = vmatpush2.bf16.msra.mxu0 0
        %3577 = vmatprep.subr.bf16.mxu0 0
        %3578 = vmatpush2.bf16.msra.mxu0 0
        %3579 = vmatprep.subr.bf16.mxu0 0
        %3580 = vmatpush2.bf16.msra.mxu0 0
        %3581 = vmatprep.subr.bf16.mxu0 0
        %3582 = vmatpush2.bf16.msra.mxu0 0
        %3583 = vmatprep.subr.bf16.mxu0 0
        %3584 = vmatpush2.bf16.msra.mxu0 0
        %3585 = vmatprep.mubr.bf16.mxu0 0
        %3586 = vmatmul.mubr.bf16.gmra.mxu0 %v3305
        %v3587 = vpop.f32.mrf.mxu0
        %v3588 = vadd.f32 %v3527, %v3587
        %v3589 = vpop.f32.mrf.mxu0
        %v3590 = vpop.f32.mrf.mxu0
        %v3591 = vadd.f32 %v3527, %v3590
        %v3592 = vpop.f32.mrf.mxu0
        %3593 = vmatprep.mubr.bf16.mxu0 0
        %3594 = vmatmul.mubr.bf16.gmra.mxu0 %v3308
        %v3595 = vpop.f32.mrf.mxu0
        %v3596 = vadd.f32 %v3527, %v3595
        %v3597 = vpop.f32.mrf.mxu0
        %v3598 = vpop.f32.mrf.mxu0
        %v3599 = vadd.f32 %v3527, %v3598
        %v3600 = vpop.f32.mrf.mxu0
        %3601 = vdwg.mxu0
        %v3602 = vmul.f32 %v3588, %v3588
        %v3603 = vmul.f32 %v3591, %v3591
        %v3604 = vmul.f32 %v3596, %v3596
        %v3605 = vmul.f32 %v3599, %v3599
        %v3606 = vmul.f32 %v3588, %v3602
        %v3607 = vmul.f32 %v3591, %v3603
        %v3608 = vmul.f32 %v3596, %v3604
        %v3609 = vmul.f32 %v3599, %v3605
        %v3610 = vmul.f32 %v3606, 0.044715
        %v3611 = vmul.f32 %v3607, 0.044715
        %v3612 = vmul.f32 %v3608, 0.044715
        %v3613 = vmul.f32 %v3609, 0.044715
        %v3614 = vadd.f32 %v3588, %v3610
        %v3615 = vadd.f32 %v3591, %v3611
        %v3616 = vadd.f32 %v3596, %v3612
        %v3617 = vadd.f32 %v3599, %v3613
        %v3618 = vmul.f32 %v3614, 0.7978846
        %v3619 = vmul.f32 %v3615, 0.7978846
        %v3620 = vmul.f32 %v3616, 0.7978846
        %v3621 = vmul.f32 %v3617, 0.7978846
        %v3622 = vtanh.pop %v3618
        %v3623 = vtanh.pop %v3619
        %v3624 = vtanh.pop %v3620
        %v3625 = vtanh.pop %v3621
        %v3626 = vadd.f32 %v3622, 1.0
        %v3627 = vadd.f32 %v3623, 1.0
        %v3628 = vadd.f32 %v3624, 1.0
        %v3629 = vadd.f32 %v3625, 1.0
        %v3630 = vmul.f32 %v3626, 0.5
        %v3631 = vmul.f32 %v3627, 0.5
        %v3632 = vmul.f32 %v3628, 0.5
        %v3633 = vmul.f32 %v3629, 0.5
        %v3634 = vmul.f32 %v3588, %v3630
        %v3635 = vmul.f32 %v3591, %v3631
        %v3636 = vmul.f32 %v3596, %v3632
        %v3637 = vmul.f32 %v3599, %v3633
        %v3638 = vpack.c.bf16 %v3635, %v3634
        %v3639 = vpack.c.bf16 %v3637, %v3636
        %v3640 = vld [vmem:[%s14 + $0x40] sm:$0xf]
        %v3641 = vld [vmem:[%s14 + $0x44] sm:$0xf]
        %v3642 = vld [vmem:[%s14 + $0x48] sm:$0xf]
        %v3643 = vld [vmem:[%s14 + $0x4c] sm:$0xf]
        %v3644 = vld [vmem:[%s14 + $0x50] sm:$0xf]
        %v3645 = vld [vmem:[%s14 + $0x54] sm:$0xf]
        %v3646 = vld [vmem:[%s14 + $0x58] sm:$0xf]
        %v3647 = vld [vmem:[%s14 + $0x5c] sm:$0xf]
        %v3648 = vld [vmem:[%s14 + $0x60] sm:$0xf]
        %v3649 = vld [vmem:[%s14 + $0x64] sm:$0xf]
        %v3650 = vld [vmem:[%s14 + $0x68] sm:$0xf]
        %v3651 = vld [vmem:[%s14 + $0x6c] sm:$0xf]
        %v3652 = vld [vmem:[%s14 + $0x70] sm:$0xf]
        %v3653 = vld [vmem:[%s14 + $0x74] sm:$0xf]
        %v3654 = vld [vmem:[%s14 + $0x78] sm:$0xf]
        %v3655 = vld [vmem:[%s14 + $0x7c] sm:$0xf]
        %v3672 = vunpack.c.l.b16 %v3640
        %v3673 = vunpack.c.l.b16 %v3641
        %v3674 = vunpack.c.l.b16 %v3642
        %v3675 = vunpack.c.l.b16 %v3643
        %v3676 = vunpack.c.l.b16 %v3644
        %v3677 = vunpack.c.l.b16 %v3645
        %v3678 = vunpack.c.l.b16 %v3646
        %v3679 = vunpack.c.l.b16 %v3647
        %v3680 = vunpack.c.l.b16 %v3648
        %v3681 = vunpack.c.l.b16 %v3649
        %v3682 = vunpack.c.l.b16 %v3650
        %v3683 = vunpack.c.l.b16 %v3651
        %v3684 = vunpack.c.l.b16 %v3652
        %v3685 = vunpack.c.l.b16 %v3653
        %v3686 = vunpack.c.l.b16 %v3654
        %v3687 = vunpack.c.l.b16 %v3655
        %v3688 = vpack.c.b16 %v3673, %v3672
        %v3689 = vpack.c.b16 %v3675, %v3674
        %v3690 = vpack.c.b16 %v3677, %v3676
        %v3691 = vpack.c.b16 %v3679, %v3678
        %v3692 = vpack.c.b16 %v3681, %v3680
        %v3693 = vpack.c.b16 %v3683, %v3682
        %v3694 = vpack.c.b16 %v3685, %v3684
        %v3695 = vpack.c.b16 %v3687, %v3686
        %3704 = vmatprep.subr.bf16.mxu0 0
        %3705 = vmatpush1.bf16.msra.mxu0 %v3695
        %3706 = vmatprep.subr.bf16.mxu0 0
        %3707 = vmatpush1.bf16.msra.mxu0 %v3694
        %3708 = vmatprep.subr.bf16.mxu0 0
        %3709 = vmatpush1.bf16.msra.mxu0 %v3693
        %3710 = vmatprep.subr.bf16.mxu0 0
        %3711 = vmatpush1.bf16.msra.mxu0 %v3692
        %3712 = vmatprep.subr.bf16.mxu0 0
        %3713 = vmatpush1.bf16.msra.mxu0 %v3691
        %3714 = vmatprep.subr.bf16.mxu0 0
        %3715 = vmatpush1.bf16.msra.mxu0 %v3690
        %3716 = vmatprep.subr.bf16.mxu0 0
        %3717 = vmatpush1.bf16.msra.mxu0 %v3689
        %3718 = vmatprep.subr.bf16.mxu0 0
        %3719 = vmatpush1.bf16.msra.mxu0 %v3688
        %3720 = vmatprep.subr.bf16.mxu0 0
        %3721 = vmatpush2.bf16.msra.mxu0 0
        %3722 = vmatprep.subr.bf16.mxu0 0
        %3723 = vmatpush2.bf16.msra.mxu0 0
        %3724 = vmatprep.subr.bf16.mxu0 0
        %3725 = vmatpush2.bf16.msra.mxu0 0
        %3726 = vmatprep.subr.bf16.mxu0 0
        %3727 = vmatpush2.bf16.msra.mxu0 0
        %3728 = vmatprep.subr.bf16.mxu0 0
        %3729 = vmatpush2.bf16.msra.mxu0 0
        %3730 = vmatprep.subr.bf16.mxu0 0
        %3731 = vmatpush2.bf16.msra.mxu0 0
        %3732 = vmatprep.subr.bf16.mxu0 0
        %3733 = vmatpush2.bf16.msra.mxu0 0
        %3734 = vmatprep.subr.bf16.mxu0 0
        %3735 = vmatpush2.bf16.msra.mxu0 0
        %3736 = vmatprep.mubr.bf16.mxu0 0
        %3737 = vmatmul.mubr.bf16.gmra.mxu0 %v3638
        %v3738 = vpop.f32.mrf.mxu0
        %v3739 = vadd.f32 0.0, %v3738
        %v3740 = vpop.f32.mrf.mxu0
        %v3741 = vpop.f32.mrf.mxu0
        %v3742 = vadd.f32 0.0, %v3741
        %v3743 = vpop.f32.mrf.mxu0
        %3744 = vmatprep.mubr.bf16.mxu0 0
        %3745 = vmatmul.mubr.bf16.gmra.mxu0 %v3639
        %v3746 = vpop.f32.mrf.mxu0
        %v3747 = vadd.f32 0.0, %v3746
        %v3748 = vpop.f32.mrf.mxu0
        %v3749 = vpop.f32.mrf.mxu0
        %v3750 = vadd.f32 0.0, %v3749
        %v3751 = vpop.f32.mrf.mxu0
        %3752 = vdwg.mxu0
        %v3753 = vadd.f32 %v3510, %v3739
        %v3754 = vadd.f32 %v3511, %v3742
        %v3755 = vadd.f32 %v3512, %v3747
        %v3756 = vadd.f32 %v3513, %v3750
        %v3757 = vld [vmem:[%s790] sm:$0x1]
        %v3758 = vld [vmem:[%s790 + $0x1] sm:$0x1]
        %v3759 = vld [vmem:[%s790 + $0x2] sm:$0x1]
        %v3760 = vld [vmem:[%s790 + $0x3] sm:$0x1]
        %v3761 = vld [vmem:[%s795] sm:$0x1]
        %v3762 = vld [vmem:[%s795 + $0x1] sm:$0x1]
        %v3763 = vld [vmem:[%s795 + $0x2] sm:$0x1]
        %v3764 = vld [vmem:[%s795 + $0x3] sm:$0x1]
        %3769 = vrot.lane.b32.xlu0 %v3753, 64
        %v3770 = vpop.permute.xlu0 %3769
        %3771 = vrot.lane.b32.xlu0 %v3754, 64
        %v3772 = vpop.permute.xlu0 %3771
        %3773 = vrot.lane.b32.xlu0 %v3755, 64
        %v3774 = vpop.permute.xlu0 %3773
        %3775 = vrot.lane.b32.xlu0 %v3756, 64
        %v3776 = vpop.permute.xlu0 %3775
        %v3781 = vsel %vm849, %v3753, %v3770
        %v3782 = vsel %vm849, %v3754, %v3772
        %v3783 = vsel %vm849, %v3755, %v3774
        %v3784 = vsel %vm849, %v3756, %v3776
        %v3789 = vlaneseq
        %v3790 = vshrl.u32 %v3789, 7
        %v3791 = vsub.s32 0, %v3790
        %v3792 = vrot.slane %v3757, %v3791
        %v3793 = vlaneseq
        %v3794 = vshrl.u32 %v3793, 7
        %v3795 = vsub.s32 0, %v3794
        %v3796 = vrot.slane %v3758, %v3795
        %v3797 = vlaneseq
        %v3798 = vshrl.u32 %v3797, 7
        %v3799 = vsub.s32 0, %v3798
        %v3800 = vrot.slane %v3759, %v3799
        %v3801 = vlaneseq
        %v3802 = vshrl.u32 %v3801, 7
        %v3803 = vsub.s32 0, %v3802
        %v3804 = vrot.slane %v3760, %v3803
        %v3809 = vmul.f32 %v3781, %v3792
        %v3810 = vmul.f32 %v3782, %v3796
        %v3811 = vmul.f32 %v3783, %v3800
        %v3812 = vmul.f32 %v3784, %v3804
        %v3817 = vlaneseq
        %v3818 = vshrl.u32 %v3817, 7
        %v3819 = vsub.s32 0, %v3818
        %v3820 = vrot.slane %v3761, %v3819
        %v3821 = vlaneseq
        %v3822 = vshrl.u32 %v3821, 7
        %v3823 = vsub.s32 0, %v3822
        %v3824 = vrot.slane %v3762, %v3823
        %v3825 = vlaneseq
        %v3826 = vshrl.u32 %v3825, 7
        %v3827 = vsub.s32 0, %v3826
        %v3828 = vrot.slane %v3763, %v3827
        %v3829 = vlaneseq
        %v3830 = vshrl.u32 %v3829, 7
        %v3831 = vsub.s32 0, %v3830
        %v3832 = vrot.slane %v3764, %v3831
        %v3837 = vadd.f32 %v3809, %v3820
        %v3838 = vadd.f32 %v3810, %v3824
        %v3839 = vadd.f32 %v3811, %v3828
        %v3840 = vadd.f32 %v3812, %v3832
        %3841 = vst [vmem:[%s779] sm:$0xff] %v3837
        %3842 = vst [vmem:[%s779 + $0x8] sm:$0xff] %v3838
        %3843 = vst [vmem:[%s779 + $0x10] sm:$0xff] %v3839
        %3844 = vst [vmem:[%s779 + $0x18] sm:$0xff] %v3840
        %3845 = vrot.lane.b32.xlu0 %v3757, 64
        %v3846 = vpop.permute.xlu0 %3845
        %3847 = vrot.lane.b32.xlu0 %v3758, 64
        %v3848 = vpop.permute.xlu0 %3847
        %3849 = vrot.lane.b32.xlu0 %v3759, 64
        %v3850 = vpop.permute.xlu0 %3849
        %3851 = vrot.lane.b32.xlu0 %v3760, 64
        %v3852 = vpop.permute.xlu0 %3851
        %v3857 = vsub.f32 %v3757, %v3846
        %v3858 = vsub.f32 %v3758, %v3848
        %v3859 = vsub.f32 %v3759, %v3850
        %v3860 = vsub.f32 %v3760, %v3852
        %3861 = vrot.lane.b32.xlu0 %v3761, 64
        %v3862 = vpop.permute.xlu0 %3861
        %3863 = vrot.lane.b32.xlu0 %v3762, 64
        %v3864 = vpop.permute.xlu0 %3863
        %3865 = vrot.lane.b32.xlu0 %v3763, 64
        %v3866 = vpop.permute.xlu0 %3865
        %3867 = vrot.lane.b32.xlu0 %v3764, 64
        %v3868 = vpop.permute.xlu0 %3867
        %v3873 = vsub.f32 %v3761, %v3862
        %v3874 = vsub.f32 %v3762, %v3864
        %v3875 = vsub.f32 %v3763, %v3866
        %v3876 = vsub.f32 %v3764, %v3868
        %v3881 = vlaneseq
        %v3882 = vshrl.u32 %v3881, 7
        %v3883 = vsub.s32 0, %v3882
        %v3884 = vrot.slane %v3857, %v3883
        %v3885 = vlaneseq
        %v3886 = vshrl.u32 %v3885, 7
        %v3887 = vsub.s32 0, %v3886
        %v3888 = vrot.slane %v3858, %v3887
        %v3889 = vlaneseq
        %v3890 = vshrl.u32 %v3889, 7
        %v3891 = vsub.s32 0, %v3890
        %v3892 = vrot.slane %v3859, %v3891
        %v3893 = vlaneseq
        %v3894 = vshrl.u32 %v3893, 7
        %v3895 = vsub.s32 0, %v3894
        %v3896 = vrot.slane %v3860, %v3895
        %3897 = vrot.lane.b32.xlu0 %v3884, 64
        %v3898 = vpop.permute.xlu0 %3897
        %3899 = vrot.lane.b32.xlu0 %v3888, 64
        %v3900 = vpop.permute.xlu0 %3899
        %3901 = vrot.lane.b32.xlu0 %v3892, 64
        %v3902 = vpop.permute.xlu0 %3901
        %3903 = vrot.lane.b32.xlu0 %v3896, 64
        %v3904 = vpop.permute.xlu0 %3903
        %v3909 = vmul.f32 %v3753, %v3898
        %v3910 = vmul.f32 %v3754, %v3900
        %v3911 = vmul.f32 %v3755, %v3902
        %v3912 = vmul.f32 %v3756, %v3904
        %v3917 = vlaneseq
        %v3918 = vshrl.u32 %v3917, 7
        %v3919 = vsub.s32 0, %v3918
        %v3920 = vrot.slane %v3873, %v3919
        %v3921 = vlaneseq
        %v3922 = vshrl.u32 %v3921, 7
        %v3923 = vsub.s32 0, %v3922
        %v3924 = vrot.slane %v3874, %v3923
        %v3925 = vlaneseq
        %v3926 = vshrl.u32 %v3925, 7
        %v3927 = vsub.s32 0, %v3926
        %v3928 = vrot.slane %v3875, %v3927
        %v3929 = vlaneseq
        %v3930 = vshrl.u32 %v3929, 7
        %v3931 = vsub.s32 0, %v3930
        %v3932 = vrot.slane %v3876, %v3931
        %3933 = vrot.lane.b32.xlu0 %v3920, 64
        %v3934 = vpop.permute.xlu0 %3933
        %3935 = vrot.lane.b32.xlu0 %v3924, 64
        %v3936 = vpop.permute.xlu0 %3935
        %3937 = vrot.lane.b32.xlu0 %v3928, 64
        %v3938 = vpop.permute.xlu0 %3937
        %3939 = vrot.lane.b32.xlu0 %v3932, 64
        %v3940 = vpop.permute.xlu0 %3939
        %v3945 = vadd.f32 %v3909, %v3934
        %v3946 = vadd.f32 %v3910, %v3936
        %v3947 = vadd.f32 %v3911, %v3938
        %v3948 = vadd.f32 %v3912, %v3940
        %v3949 = vxor.u32 %v3945, 2147483648
        %v3950 = vxor.u32 %v3946, 2147483648
        %v3951 = vxor.u32 %v3947, 2147483648
        %v3952 = vxor.u32 %v3948, 2147483648
        %v3953 = vmul.f32 %v3949, 1.442695
        %v3954 = vpow.pop %v3953
        %v3955 = vmul.f32 %v3950, 1.442695
        %v3956 = vpow.pop %v3955
        %v3957 = vmul.f32 %v3951, 1.442695
        %v3958 = vpow.pop %v3957
        %v3959 = vmul.f32 %v3952, 1.442695
        %v3960 = vpow.pop %v3959
        %v3961 = vadd.f32 %v3954, 1.0
        %v3962 = vadd.f32 %v3956, 1.0
        %v3963 = vadd.f32 %v3958, 1.0
        %v3964 = vadd.f32 %v3960, 1.0
        %v3965 = vrcp.pop %v3961
        %v3966 = vmul.f32 1.0, %v3965
        %v3967 = vrcp.pop %v3962
        %v3968 = vmul.f32 1.0, %v3967
        %v3969 = vrcp.pop %v3963
        %v3970 = vmul.f32 1.0, %v3969
        %v3971 = vrcp.pop %v3964
        %v3972 = vmul.f32 1.0, %v3971
        %3973 = vst.msk [vmem:[%s772] sm:$0xff] %vm849, %v3966
        %3974 = vst.msk [vmem:[%s772 + $0x8] sm:$0xff] %vm849, %v3968
        %3975 = vst.msk [vmem:[%s772 + $0x10] sm:$0xff] %vm849, %v3970
        %3976 = vst.msk [vmem:[%s772 + $0x18] sm:$0xff] %vm849, %v3972
        %s3977 = sand.u32 %s450, 1
        %s3978 = scalar_lea.sflag [#allocation4], %s3977
        %s3979 = sand.u32 %s450, 1
        %s3980 = smul.addr %s3979, 32
        %s3981 = scalar_lea.vmem [#allocation17], %s3980
        %s3982 = sand.u32 %s476, 1
        %s3983 = scalar_lea.sflag [#allocation19], %s3982
        %s3984 = sand.u32 %s476, 1
        %s3985 = smul.addr %s3984, 32
        %s3986 = scalar_lea.vmem [#allocation18], %s3985
        // Predicated region
        $region129: #{tpu_custom_call.1} parent=91 // pred_check
          %p3987 = pneg %p460
        $region130: #{tpu_custom_call.1} parent=91 // pred_check_branch
          %3989 = sbr.rel (%p3987) target = $region132
        $region131: #{tpu_custom_call.1} parent=91 // pred_region
          %s3990 = smul.u32 4, %s44
          %s3992 = ssub.s32 512, 512
          %3993 = vsyncadd %s3978, %s3992
          %s3994 = smul.addr %s3990, 128
          %s3995 = scalar_lea.hbm %s18, %s3994
          %s3996 = sshll.u32 %s3981, 4
          %s3997 = int_to_ptr.vmem [resolvable:$true] %s3996
          %4002 = dma.vmem_to_hbm [thread:$0]  %s3997, 512, %s3995, %s3978, 128, 128, 8
        $region132: #{tpu_custom_call.1} parent=91 // pred_fallthru
          _
        // Predicated region
        $region133: #{tpu_custom_call.1} parent=91 // pred_check
          %p4003 = pneg %p486
        $region134: #{tpu_custom_call.1} parent=91 // pred_check_branch
          %4005 = sbr.rel (%p4003) target = $region136
        $region135: #{tpu_custom_call.1} parent=91 // pred_region
          %s4006 = smul.u32 4, %s44
          %s4008 = ssub.s32 512, 512
          %4009 = vsyncadd %s3983, %s4008
          %s4010 = smul.addr %s4006, 128
          %s4011 = scalar_lea.hbm %s19, %s4010
          %s4012 = sshll.u32 %s3986, 4
          %s4013 = int_to_ptr.vmem [resolvable:$true] %s4012
          %4018 = dma.vmem_to_hbm [thread:$0]  %s4013, 512, %s4011, %s3983, 128, 128, 8
        $region136: #{tpu_custom_call.1} parent=91 // pred_fallthru
          _
      $region92: #{tpu_custom_call.1} parent=5 // pred_fallthru
        _
      %p4019 = scmp.le.s32.totalorder 2, %s39
      // Predicated region
      $region137: #{tpu_custom_call.1} parent=5 // pred_check
        %p4020 = pneg %p4019
      $region138: #{tpu_custom_call.1} parent=5 // pred_check_branch
        %4022 = sbr.rel (%p4020) target = $region140
      $region139: #{tpu_custom_call.1} parent=5 // pred_region
        %s4023 = ssub.s32 %s39, 2
        // Predicated region
        $region141: #{tpu_custom_call.1} parent=139 // pred_check
          %p4024 = pneg %p466
        $region142: #{tpu_custom_call.1} parent=139 // pred_check_branch
          %4026 = sbr.rel (%p4024) target = $region144
        $region143: #{tpu_custom_call.1} parent=139 // pred_region
          %s4027 = sand.u32 %s451, 1
          %s4028 = scalar_lea.sflag [#allocation4], %s4027
          %s4029 = sand.u32 %s451, 1
          %s4030 = smul.addr %s4029, 32
          %s4031 = scalar_lea.vmem [#allocation17], %s4030
          %4032 = dma.done %s4028, 512
        $region144: #{tpu_custom_call.1} parent=139 // pred_fallthru
          _
        // Predicated region
        $region145: #{tpu_custom_call.1} parent=139 // pred_check
          %p4033 = pneg %p492
        $region146: #{tpu_custom_call.1} parent=139 // pred_check_branch
          %4035 = sbr.rel (%p4033) target = $region148
        $region147: #{tpu_custom_call.1} parent=139 // pred_region
          %s4036 = sand.u32 %s477, 1
          %s4037 = scalar_lea.sflag [#allocation19], %s4036
          %s4038 = sand.u32 %s477, 1
          %s4039 = smul.addr %s4038, 32
          %s4040 = scalar_lea.vmem [#allocation18], %s4039
          %4041 = dma.done %s4037, 512
        $region148: #{tpu_custom_call.1} parent=139 // pred_fallthru
          _
      $region140: #{tpu_custom_call.1} parent=5 // pred_fallthru
        _
    $region6: #{tpu_custom_call.1} parent=1 // loop_footer
      %s43 = sadd.s32 1, %s39
    $region7: #{tpu_custom_call.1} parent=1 // loop_footer_branch
      %38 = sbr.rel target = $region3
    $region8: #{tpu_custom_call.1} parent=1 // loop_exit
      _
    %4042 = vsyncpa [#allocation3], 1
    %s4043 = scalar_lea.sflag [#allocation3], 1
    %4044 = vsyncpa %s4043, 1
    %4045 = vsyncpa [#allocation6], 1
    %4046 = vsyncpa [#allocation9], 1
    %4047 = vsyncpa [#allocation12], 1
    %4048 = vsyncpa [#allocation15], 1
    %4049 = vsyncpa [#allocation4], 1
    %s4050 = scalar_lea.sflag [#allocation4], 1
    %4051 = vsyncpa %s4050, 1
    %4052 = vsyncpa [#allocation19], 1
    %s4053 = scalar_lea.sflag [#allocation19], 1
    %4054 = vsyncpa %s4053, 1

// kernel: tpu_custom_call.1
$region0: #{tpu_custom_call.1}
  #allocation0 [shape = 'u32[]', space=smem, size = 0x4, offset = 0x4, fixed_abs, tag = 'smem constant byte address 0x4 - core index']
  #allocation1 [shape = 'u32[144,128]{1,0:T(1,128)}', space=vmem, size = 0x12000, scoped, tag = 'internal scratch']
  %s0 = inlined_call_operand.vmem [shape: f32[8,8,64], index: 0, kind: input, shape index: {}]
  %s1 = inlined_call_operand.hbm [shape: f32[8,1,64], index: 1, kind: input, shape index: {}]
  %s2 = inlined_call_operand.hbm [shape: bf16[64,64], index: 2, kind: input, shape index: {}]
  %s3 = inlined_call_operand.hbm [shape: f32[1,64], index: 3, kind: input, shape index: {}]
  %s4 = inlined_call_operand.hbm [shape: f32[1,64], index: 4, kind: input, shape index: {}]
  %s5 = inlined_call_operand.hbm [shape: f32[1,64], index: 5, kind: input, shape index: {}]
  %s6 = inlined_call_operand.vmem [shape: bf16[64,192], index: 6, kind: input, shape index: {}]
  %s7 = inlined_call_operand.vmem [shape: f32[1,192], index: 7, kind: input, shape index: {}]
  %s8 = inlined_call_operand.hbm [shape: bf16[4,16,64], index: 8, kind: input, shape index: {}]
  %s9 = inlined_call_operand.hbm [shape: f32[1,64], index: 9, kind: input, shape index: {}]
  %s10 = inlined_call_operand.hbm [shape: f32[1,64], index: 10, kind: input, shape index: {}]
  %s11 = inlined_call_operand.hbm [shape: f32[1,64], index: 11, kind: input, shape index: {}]
  %s12 = inlined_call_operand.vmem [shape: bf16[64,256], index: 12, kind: input, shape index: {}]
  %s13 = inlined_call_operand.vmem [shape: f32[1,256], index: 13, kind: input, shape index: {}]
  %s14 = inlined_call_operand.vmem [shape: bf16[256,64], index: 14, kind: input, shape index: {}]
  %s15 = inlined_call_operand.vmem [shape: f32[1,64], index: 15, kind: input, shape index: {}]
  %s16 = inlined_call_operand.vmem [shape: f32[8,1,128], index: 16, kind: input, shape index: {}]
  %s17 = inlined_call_operand.vmem [shape: f32[8,1,128], index: 17, kind: input, shape index: {}]
  %s18 = inlined_call_operand.hbm [shape: f32[8,8,64], index: 18, kind: output, shape index: {0}]
  %s19 = inlined_call_operand.hbm [shape: f32[8,8,128], index: 19, kind: output, shape index: {1}]
  %20 = xla_tuple %s18, %s19
  %s21 = sld [smem:[#allocation0]]
  $region149: #{tpu_custom_call.1} parent=0
    _
  %s23 = ssub.s32 1, %s21
  %s24 = scalar_select 0, %s23, %s21
  $region1: #{tpu_custom_call.1} parent=0
    #allocation2 [shape = 'u8[4096]{0}', space=vmem, size = 0x1000, scoped, tag = 'input window, operand 1']
    #allocation3 [shape = 's32[2]{0}', space=sflag, size = 0x8, scoped, tag = 'scoped memory for tpu_custom_call.1']
    #allocation4 [shape = 's32[2]{0}', space=sflag, size = 0x8, scoped, tag = 'scoped memory for tpu_custom_call.1']
    #allocation5 [shape = 'u8[16384]{0}', space=vmem, size = 0x4000, scoped, tag = 'input window, operand 2, single buffered']
    #allocation6 [shape = 's32[1]{0}', space=sflag, size = 0x4, scoped, tag = 'scoped memory for tpu_custom_call.1']
    #allocation7 [shape = 'u8[512]{0}', space=vmem, size = 0x400, scoped, tag = 'input window, operand 3, single buffered']
    #allocation8 [shape = 'u8[512]{0}', space=vmem, size = 0x400, scoped, tag = 'input window, operand 4, single buffered']
    #allocation9 [shape = 's32[1]{0}', space=sflag, size = 0x4, scoped, tag = 'scoped memory for tpu_custom_call.1']
    #allocation10 [shape = 'u8[512]{0}', space=vmem, size = 0x400, scoped, tag = 'input window, operand 5, single buffered']
    #allocation11 [shape = 'u8[16384]{0}', space=vmem, size = 0x4000, scoped, tag = 'input window, operand 8, single buffered']
    #allocation12 [shape = 's32[1]{0}', space=sflag, size = 0x4, scoped, tag = 'scoped memory for tpu_custom_call.1']
    #allocation13 [shape = 'u8[512]{0}', space=vmem, size = 0x400, scoped, tag = 'input window, operand 9, single buffered']
    #allocation14 [shape = 'u8[512]{0}', space=vmem, size = 0x400, scoped, tag = 'input window, operand 10, single buffered']
    #allocation15 [shape = 's32[1]{0}', space=sflag, size = 0x4, scoped, tag = 'scoped memory for tpu_custom_call.1']
    #allocation16 [shape = 'u8[512]{0}', space=vmem, size = 0x400, scoped, tag = 'input window, operand 11, single buffered']
    #allocation17 [shape = 'u8[32768]{0}', space=vmem, size = 0x8000, scoped, tag = 'output window, operand 0']
    #allocation18 [shape = 'u8[32768]{0}', space=vmem, size = 0x8000, scoped, tag = 'output window, operand 1']
    #allocation19 [shape = 's32[2]{0}', space=sflag, size = 0x8, scoped, tag = 'scoped memory for tpu_custom_call.1']
    %25 = vsyncpa [#allocation3], 0
    %s26 = scalar_lea.sflag [#allocation3], 1
    %27 = vsyncpa %s26, 0
    %28 = vsyncpa [#allocation6], 0
    %29 = vsyncpa [#allocation9], 0
    %30 = vsyncpa [#allocation12], 0
    %31 = vsyncpa [#allocation15], 0
    %32 = vsyncpa [#allocation4], 0
    %s33 = scalar_lea.sflag [#allocation4], 1
    %34 = vsyncpa %s33, 0
    %35 = vsyncpa [#allocation19], 0
    %s36 = scalar_lea.sflag [#allocation19], 1
    %37 = vsyncpa %s36, 0
    loop: start=0, step=1, limit=4
    $region2: #{tpu_custom_call.1} parent=1 // loop_pre_header
      _
    $region3: #{tpu_custom_call.1} parent=1 // loop_header
      %s39 = sphi 0, %s43
      %p40 = scmp.ge.s32.totalorder %s39, 4
      %s49 = sphi 0, %s51
      %s52 = sphi 0, %s49
      %s53 = sphi 0, %s52
      %s69 = sphi 0, %s53
      %s75 = sphi 0, %s77
      %s78 = sphi 0, %s75
      %s79 = sphi 0, %s78
      %s95 = sphi 0, %s79
      %s99 = sphi 0, %s99
      %s101 = sphi 0, %s99
      %s102 = sphi 0, %s101
      %s116 = sphi 0, %s102
      %s120 = sphi 0, %s120
      %s122 = sphi 0, %s120
      %s123 = sphi 0, %s122
      %s137 = sphi 0, %s123
      %s141 = sphi 0, %s141
      %s143 = sphi 0, %s141
      %s144 = sphi 0, %s143
      %s158 = sphi 0, %s144
      %s162 = sphi 0, %s162
      %s164 = sphi 0, %s162
      %s165 = sphi 0, %s164
      %s179 = sphi 0, %s165
      %s183 = sphi 0, %s183
      %s185 = sphi 0, %s183
      %s186 = sphi 0, %s185
      %s200 = sphi 0, %s186
      %s204 = sphi 0, %s204
      %s206 = sphi 0, %s204
      %s207 = sphi 0, %s206
      %s221 = sphi 0, %s207
      %s225 = sphi 0, %s225
      %s227 = sphi 0, %s225
      %s228 = sphi 0, %s227
      %s242 = sphi 0, %s228
      %s246 = sphi 0, %s246
      %s248 = sphi 0, %s246
      %s249 = sphi 0, %s248
      %s263 = sphi 0, %s249
      %s267 = sphi 0, %s267
      %s269 = sphi 0, %s267
      %s270 = sphi 0, %s269
      %s284 = sphi 0, %s270
      %s288 = sphi 0, %s288
      %s290 = sphi 0, %s288
      %s291 = sphi 0, %s290
      %s305 = sphi 0, %s291
      %s309 = sphi 0, %s309
      %s311 = sphi 0, %s309
      %s312 = sphi 0, %s311
      %s326 = sphi 0, %s312
      %s330 = sphi 0, %s330
      %s332 = sphi 0, %s330
      %s333 = sphi 0, %s332
      %s347 = sphi 0, %s333
      %s351 = sphi 0, %s351
      %s353 = sphi 0, %s351
      %s354 = sphi 0, %s353
      %s368 = sphi 0, %s354
      %s372 = sphi 0, %s372
      %s374 = sphi 0, %s372
      %s375 = sphi 0, %s374
      %s389 = sphi 0, %s375
      %s395 = sphi 0, %s397
      %s398 = sphi 0, %s395
      %s399 = sphi 0, %s398
      %s415 = sphi 0, %s399
      %s421 = sphi 0, %s423
      %s424 = sphi 0, %s421
      %s425 = sphi 0, %s424
      %s441 = sphi 0, %s425
      %s447 = sphi 0, %s449
      %s450 = sphi 0, %s447
      %s451 = sphi 0, %s450
      %s467 = sphi 0, %s451
      %s473 = sphi 0, %s475
      %s476 = sphi 0, %s473
      %s477 = sphi 0, %s476
      %s493 = sphi 0, %s477
    $region4: #{tpu_custom_call.1} parent=1 // loop_header_branch
      %42 = sbr.rel (%p40) target = $region8
    $region5: #{tpu_custom_call.1} parent=1 // loop_body
      %s44 = ssub.s32 %s39, 1
      %s45 = ssub.s32 %s39, 2
      %s46 = sadd.s32 %s39, 1
      %s47 = ssub.s32 %s39, %s46
      %p48 = scmp.eq.s32.totalorder %s47, 0
      %s50 = sadd.s32 %s49, 1
      %s51 = scalar_select %p48, %s49, %s50
      %p54 = pneg %p48
      %p55 = scmp.eq.s32.totalorder %s39, 1
      %p56 = por %p54, %p55
      %p57 = scmp.ne.s32.totalorder %s49, %s52
      %p58 = scmp.eq.s32.totalorder %s39, 0
      %p59 = por %p57, %p58
      %p60 = scmp.ne.s32.totalorder %s49, %s52
      %p61 = scmp.eq.s32.totalorder %s44, 1
      %p62 = por %p60, %p61
      %p63 = scmp.ne.s32.totalorder %s52, %s53
      %p64 = scmp.eq.s32.totalorder %s44, 0
      %p65 = por %p63, %p64
      %p66 = scmp.ne.s32.totalorder %s52, %s53
      %p67 = scmp.eq.s32.totalorder %s45, 1
      %p68 = por %p66, %p67
      %p70 = scmp.ne.s32.totalorder %s53, %s69
      %p71 = scmp.eq.s32.totalorder %s45, 0
      %p72 = por %p70, %p71
      %s73 = ssub.s32 %s39, %s46
      %p74 = scmp.eq.s32.totalorder %s73, 0
      %s76 = sadd.s32 %s75, 1
      %s77 = scalar_select %p74, %s75, %s76
      %p80 = pneg %p74
      %p81 = scmp.eq.s32.totalorder %s39, 1
      %p82 = por %p80, %p81
      %p83 = scmp.ne.s32.totalorder %s75, %s78
      %p84 = scmp.eq.s32.totalorder %s39, 0
      %p85 = por %p83, %p84
      %p86 = scmp.ne.s32.totalorder %s75, %s78
      %p87 = scmp.eq.s32.totalorder %s44, 1
      %p88 = por %p86, %p87
      %p89 = scmp.ne.s32.totalorder %s78, %s79
      %p90 = scmp.eq.s32.totalorder %s44, 0
      %p91 = por %p89, %p90
      %p92 = scmp.ne.s32.totalorder %s78, %s79
      %p93 = scmp.eq.s32.totalorder %s45, 1
      %p94 = por %p92, %p93
      %p96 = scmp.ne.s32.totalorder %s79, %s95
      %p97 = scmp.eq.s32.totalorder %s45, 0
      %p98 = por %p96, %p97
      %s100 = sadd.s32 %s99, 1
      %p103 = scmp.eq.s32.totalorder %s39, 1
      %p104 = scmp.ne.s32.totalorder %s99, %s101
      %p105 = scmp.eq.s32.totalorder %s39, 0
      %p106 = por %p104, %p105
      %p107 = scmp.ne.s32.totalorder %s99, %s101
      %p108 = scmp.eq.s32.totalorder %s44, 1
      %p109 = por %p107, %p108
      %p110 = scmp.ne.s32.totalorder %s101, %s102
      %p111 = scmp.eq.s32.totalorder %s44, 0
      %p112 = por %p110, %p111
      %p113 = scmp.ne.s32.totalorder %s101, %s102
      %p114 = scmp.eq.s32.totalorder %s45, 1
      %p115 = por %p113, %p114
      %p117 = scmp.ne.s32.totalorder %s102, %s116
      %p118 = scmp.eq.s32.totalorder %s45, 0
      %p119 = por %p117, %p118
      %s121 = sadd.s32 %s120, 1
      %p124 = scmp.eq.s32.totalorder %s39, 1
      %p125 = scmp.ne.s32.totalorder %s120, %s122
      %p126 = scmp.eq.s32.totalorder %s39, 0
      %p127 = por %p125, %p126
      %p128 = scmp.ne.s32.totalorder %s120, %s122
      %p129 = scmp.eq.s32.totalorder %s44, 1
      %p130 = por %p128, %p129
      %p131 = scmp.ne.s32.totalorder %s122, %s123
      %p132 = scmp.eq.s32.totalorder %s44, 0
      %p133 = por %p131, %p132
      %p134 = scmp.ne.s32.totalorder %s122, %s123
      %p135 = scmp.eq.s32.totalorder %s45, 1
      %p136 = por %p134, %p135
      %p138 = scmp.ne.s32.totalorder %s123, %s137
      %p139 = scmp.eq.s32.totalorder %s45, 0
      %p140 = por %p138, %p139
      %s142 = sadd.s32 %s141, 1
      %p145 = scmp.eq.s32.totalorder %s39, 1
      %p146 = scmp.ne.s32.totalorder %s141, %s143
      %p147 = scmp.eq.s32.totalorder %s39, 0
      %p148 = por %p146, %p147
      %p149 = scmp.ne.s32.totalorder %s141, %s143
      %p150 = scmp.eq.s32.totalorder %s44, 1
      %p151 = por %p149, %p150
      %p152 = scmp.ne.s32.totalorder %s143, %s144
      %p153 = scmp.eq.s32.totalorder %s44, 0
      %p154 = por %p152, %p153
      %p155 = scmp.ne.s32.totalorder %s143, %s144
      %p156 = scmp.eq.s32.totalorder %s45, 1
      %p157 = por %p155, %p156
      %p159 = scmp.ne.s32.totalorder %s144, %s158
      %p160 = scmp.eq.s32.totalorder %s45, 0
      %p161 = por %p159, %p160
      %s163 = sadd.s32 %s162, 1
      %p166 = scmp.eq.s32.totalorder %s39, 1
      %p167 = scmp.ne.s32.totalorder %s162, %s164
      %p168 = scmp.eq.s32.totalorder %s39, 0
      %p169 = por %p167, %p168
      %p170 = scmp.ne.s32.totalorder %s162, %s164
      %p171 = scmp.eq.s32.totalorder %s44, 1
      %p172 = por %p170, %p171
      %p173 = scmp.ne.s32.totalorder %s164, %s165
      %p174 = scmp.eq.s32.totalorder %s44, 0
      %p175 = por %p173, %p174
      %p176 = scmp.ne.s32.totalorder %s164, %s165
      %p177 = scmp.eq.s32.totalorder %s45, 1
      %p178 = por %p176, %p177
      %p180 = scmp.ne.s32.totalorder %s165, %s179
      %p181 = scmp.eq.s32.totalorder %s45, 0
      %p182 = por %p180, %p181
      %s184 = sadd.s32 %s183, 1
      %p187 = scmp.eq.s32.totalorder %s39, 1
      %p188 = scmp.ne.s32.totalorder %s183, %s185
      %p189 = scmp.eq.s32.totalorder %s39, 0
      %p190 = por %p188, %p189
      %p191 = scmp.ne.s32.totalorder %s183, %s185
      %p192 = scmp.eq.s32.totalorder %s44, 1
      %p193 = por %p191, %p192
      %p194 = scmp.ne.s32.totalorder %s185, %s186
      %p195 = scmp.eq.s32.totalorder %s44, 0
      %p196 = por %p194, %p195
      %p197 = scmp.ne.s32.totalorder %s185, %s186
      %p198 = scmp.eq.s32.totalorder %s45, 1
      %p199 = por %p197, %p198
      %p201 = scmp.ne.s32.totalorder %s186, %s200
      %p202 = scmp.eq.s32.totalorder %s45, 0
      %p203 = por %p201, %p202
      %s205 = sadd.s32 %s204, 1
      %p208 = scmp.eq.s32.totalorder %s39, 1
      %p209 = scmp.ne.s32.totalorder %s204, %s206
      %p210 = scmp.eq.s32.totalorder %s39, 0
      %p211 = por %p209, %p210
      %p212 = scmp.ne.s32.totalorder %s204, %s206
      %p213 = scmp.eq.s32.totalorder %s44, 1
      %p214 = por %p212, %p213
      %p215 = scmp.ne.s32.totalorder %s206, %s207
      %p216 = scmp.eq.s32.totalorder %s44, 0
      %p217 = por %p215, %p216
      %p218 = scmp.ne.s32.totalorder %s206, %s207
      %p219 = scmp.eq.s32.totalorder %s45, 1
      %p220 = por %p218, %p219
      %p222 = scmp.ne.s32.totalorder %s207, %s221
      %p223 = scmp.eq.s32.totalorder %s45, 0
      %p224 = por %p222, %p223
      %s226 = sadd.s32 %s225, 1
      %p229 = scmp.eq.s32.totalorder %s39, 1
      %p230 = scmp.ne.s32.totalorder %s225, %s227
      %p231 = scmp.eq.s32.totalorder %s39, 0
      %p232 = por %p230, %p231
      %p233 = scmp.ne.s32.totalorder %s225, %s227
      %p234 = scmp.eq.s32.totalorder %s44, 1
      %p235 = por %p233, %p234
      %p236 = scmp.ne.s32.totalorder %s227, %s228
      %p237 = scmp.eq.s32.totalorder %s44, 0
      %p238 = por %p236, %p237
      %p239 = scmp.ne.s32.totalorder %s227, %s228
      %p240 = scmp.eq.s32.totalorder %s45, 1
      %p241 = por %p239, %p240
      %p243 = scmp.ne.s32.totalorder %s228, %s242
      %p244 = scmp.eq.s32.totalorder %s45, 0
      %p245 = por %p243, %p244
      %s247 = sadd.s32 %s246, 1
      %p250 = scmp.eq.s32.totalorder %s39, 1
      %p251 = scmp.ne.s32.totalorder %s246, %s248
      %p252 = scmp.eq.s32.totalorder %s39, 0
      %p253 = por %p251, %p252
      %p254 = scmp.ne.s32.totalorder %s246, %s248
      %p255 = scmp.eq.s32.totalorder %s44, 1
      %p256 = por %p254, %p255
      %p257 = scmp.ne.s32.totalorder %s248, %s249
      %p258 = scmp.eq.s32.totalorder %s44, 0
      %p259 = por %p257, %p258
      %p260 = scmp.ne.s32.totalorder %s248, %s249
      %p261 = scmp.eq.s32.totalorder %s45, 1
      %p262 = por %p260, %p261
      %p264 = scmp.ne.s32.totalorder %s249, %s263
      %p265 = scmp.eq.s32.totalorder %s45, 0
      %p266 = por %p264, %p265
      %s268 = sadd.s32 %s267, 1
      %p271 = scmp.eq.s32.totalorder %s39, 1
      %p272 = scmp.ne.s32.totalorder %s267, %s269
      %p273 = scmp.eq.s32.totalorder %s39, 0
      %p274 = por %p272, %p273
      %p275 = scmp.ne.s32.totalorder %s267, %s269
      %p276 = scmp.eq.s32.totalorder %s44, 1
      %p277 = por %p275, %p276
      %p278 = scmp.ne.s32.totalorder %s269, %s270
      %p279 = scmp.eq.s32.totalorder %s44, 0
      %p280 = por %p278, %p279
      %p281 = scmp.ne.s32.totalorder %s269, %s270
      %p282 = scmp.eq.s32.totalorder %s45, 1
      %p283 = por %p281, %p282
      %p285 = scmp.ne.s32.totalorder %s270, %s284
      %p286 = scmp.eq.s32.totalorder %s45, 0
      %p287 = por %p285, %p286
      %s289 = sadd.s32 %s288, 1
      %p292 = scmp.eq.s32.totalorder %s39, 1
      %p293 = scmp.ne.s32.totalorder %s288, %s290
      %p294 = scmp.eq.s32.totalorder %s39, 0
      %p295 = por %p293, %p294
      %p296 = scmp.ne.s32.totalorder %s288, %s290
      %p297 = scmp.eq.s32.totalorder %s44, 1
      %p298 = por %p296, %p297
      %p299 = scmp.ne.s32.totalorder %s290, %s291
      %p300 = scmp.eq.s32.totalorder %s44, 0
      %p301 = por %p299, %p300
      %p302 = scmp.ne.s32.totalorder %s290, %s291
      %p303 = scmp.eq.s32.totalorder %s45, 1
      %p304 = por %p302, %p303
      %p306 = scmp.ne.s32.totalorder %s291, %s305
      %p307 = scmp.eq.s32.totalorder %s45, 0
      %p308 = por %p306, %p307
      %s310 = sadd.s32 %s309, 1
      %p313 = scmp.eq.s32.totalorder %s39, 1
      %p314 = scmp.ne.s32.totalorder %s309, %s311
      %p315 = scmp.eq.s32.totalorder %s39, 0
      %p316 = por %p314, %p315
      %p317 = scmp.ne.s32.totalorder %s309, %s311
      %p318 = scmp.eq.s32.totalorder %s44, 1
      %p319 = por %p317, %p318
      %p320 = scmp.ne.s32.totalorder %s311, %s312
      %p321 = scmp.eq.s32.totalorder %s44, 0
      %p322 = por %p320, %p321
      %p323 = scmp.ne.s32.totalorder %s311, %s312
      %p324 = scmp.eq.s32.totalorder %s45, 1
      %p325 = por %p323, %p324
      %p327 = scmp.ne.s32.totalorder %s312, %s326
      %p328 = scmp.eq.s32.totalorder %s45, 0
      %p329 = por %p327, %p328
      %s331 = sadd.s32 %s330, 1
      %p334 = scmp.eq.s32.totalorder %s39, 1
      %p335 = scmp.ne.s32.totalorder %s330, %s332
      %p336 = scmp.eq.s32.totalorder %s39, 0
      %p337 = por %p335, %p336
      %p338 = scmp.ne.s32.totalorder %s330, %s332
      %p339 = scmp.eq.s32.totalorder %s44, 1
      %p340 = por %p338, %p339
      %p341 = scmp.ne.s32.totalorder %s332, %s333
      %p342 = scmp.eq.s32.totalorder %s44, 0
      %p343 = por %p341, %p342
      %p344 = scmp.ne.s32.totalorder %s332, %s333
      %p345 = scmp.eq.s32.totalorder %s45, 1
      %p346 = por %p344, %p345
      %p348 = scmp.ne.s32.totalorder %s333, %s347
      %p349 = scmp.eq.s32.totalorder %s45, 0
      %p350 = por %p348, %p349
      %s352 = sadd.s32 %s351, 1
      %p355 = scmp.eq.s32.totalorder %s39, 1
      %p356 = scmp.ne.s32.totalorder %s351, %s353
      %p357 = scmp.eq.s32.totalorder %s39, 0
      %p358 = por %p356, %p357
      %p359 = scmp.ne.s32.totalorder %s351, %s353
      %p360 = scmp.eq.s32.totalorder %s44, 1
      %p361 = por %p359, %p360
      %p362 = scmp.ne.s32.totalorder %s353, %s354
      %p363 = scmp.eq.s32.totalorder %s44, 0
      %p364 = por %p362, %p363
      %p365 = scmp.ne.s32.totalorder %s353, %s354
      %p366 = scmp.eq.s32.totalorder %s45, 1
      %p367 = por %p365, %p366
      %p369 = scmp.ne.s32.totalorder %s354, %s368
      %p370 = scmp.eq.s32.totalorder %s45, 0
      %p371 = por %p369, %p370
      %s373 = sadd.s32 %s372, 1
      %p376 = scmp.eq.s32.totalorder %s39, 1
      %p377 = scmp.ne.s32.totalorder %s372, %s374
      %p378 = scmp.eq.s32.totalorder %s39, 0
      %p379 = por %p377, %p378
      %p380 = scmp.ne.s32.totalorder %s372, %s374
      %p381 = scmp.eq.s32.totalorder %s44, 1
      %p382 = por %p380, %p381
      %p383 = scmp.ne.s32.totalorder %s374, %s375
      %p384 = scmp.eq.s32.totalorder %s44, 0
      %p385 = por %p383, %p384
      %p386 = scmp.ne.s32.totalorder %s374, %s375
      %p387 = scmp.eq.s32.totalorder %s45, 1
      %p388 = por %p386, %p387
      %p390 = scmp.ne.s32.totalorder %s375, %s389
      %p391 = scmp.eq.s32.totalorder %s45, 0
      %p392 = por %p390, %p391
      %s393 = ssub.s32 %s39, %s46
      %p394 = scmp.eq.s32.totalorder %s393, 0
      %s396 = sadd.s32 %s395, 1
      %s397 = scalar_select %p394, %s395, %s396
      %p400 = pneg %p394
      %p401 = scmp.eq.s32.totalorder %s39, 1
      %p402 = por %p400, %p401
      %p403 = scmp.ne.s32.totalorder %s395, %s398
      %p404 = scmp.eq.s32.totalorder %s39, 0
      %p405 = por %p403, %p404
      %p406 = scmp.ne.s32.totalorder %s395, %s398
      %p407 = scmp.eq.s32.totalorder %s44, 1
      %p408 = por %p406, %p407
      %p409 = scmp.ne.s32.totalorder %s398, %s399
      %p410 = scmp.eq.s32.totalorder %s44, 0
      %p411 = por %p409, %p410
      %p412 = scmp.ne.s32.totalorder %s398, %s399
      %p413 = scmp.eq.s32.totalorder %s45, 1
      %p414 = por %p412, %p413
      %p416 = scmp.ne.s32.totalorder %s399, %s415
      %p417 = scmp.eq.s32.totalorder %s45, 0
      %p418 = por %p416, %p417
      %s419 = ssub.s32 %s39, %s46
      %p420 = scmp.eq.s32.totalorder %s419, 0
      %s422 = sadd.s32 %s421, 1
      %s423 = scalar_select %p420, %s421, %s422
      %p426 = pneg %p420
      %p427 = scmp.eq.s32.totalorder %s39, 1
      %p428 = por %p426, %p427
      %p429 = scmp.ne.s32.totalorder %s421, %s424
      %p430 = scmp.eq.s32.totalorder %s39, 0
      %p431 = por %p429, %p430
      %p432 = scmp.ne.s32.totalorder %s421, %s424
      %p433 = scmp.eq.s32.totalorder %s44, 1
      %p434 = por %p432, %p433
      %p435 = scmp.ne.s32.totalorder %s424, %s425
      %p436 = scmp.eq.s32.totalorder %s44, 0
      %p437 = por %p435, %p436
      %p438 = scmp.ne.s32.totalorder %s424, %s425
      %p439 = scmp.eq.s32.totalorder %s45, 1
      %p440 = por %p438, %p439
      %p442 = scmp.ne.s32.totalorder %s425, %s441
      %p443 = scmp.eq.s32.totalorder %s45, 0
      %p444 = por %p442, %p443
      %s445 = ssub.s32 %s39, %s46
      %p446 = scmp.eq.s32.totalorder %s445, 0
      %s448 = sadd.s32 %s447, 1
      %s449 = scalar_select %p446, %s447, %s448
      %p452 = pneg %p446
      %p453 = scmp.eq.s32.totalorder %s39, 1
      %p454 = por %p452, %p453
      %p455 = scmp.ne.s32.totalorder %s447, %s450
      %p456 = scmp.eq.s32.totalorder %s39, 0
      %p457 = por %p455, %p456
      %p458 = scmp.ne.s32.totalorder %s447, %s450
      %p459 = scmp.eq.s32.totalorder %s44, 1
      %p460 = por %p458, %p459
      %p461 = scmp.ne.s32.totalorder %s450, %s451
      %p462 = scmp.eq.s32.totalorder %s44, 0
      %p463 = por %p461, %p462
      %p464 = scmp.ne.s32.totalorder %s450, %s451
      %p465 = scmp.eq.s32.totalorder %s45, 1
      %p466 = por %p464, %p465
      %p468 = scmp.ne.s32.totalorder %s451, %s467
      %p469 = scmp.eq.s32.totalorder %s45, 0
      %p470 = por %p468, %p469
      %s471 = ssub.s32 %s39, %s46
      %p472 = scmp.eq.s32.totalorder %s471, 0
      %s474 = sadd.s32 %s473, 1
      %s475 = scalar_select %p472, %s473, %s474
      %p478 = pneg %p472
      %p479 = scmp.eq.s32.totalorder %s39, 1
      %p480 = por %p478, %p479
      %p481 = scmp.ne.s32.totalorder %s473, %s476
      %p482 = scmp.eq.s32.totalorder %s39, 0
      %p483 = por %p481, %p482
      %p484 = scmp.ne.s32.totalorder %s473, %s476
      %p485 = scmp.eq.s32.totalorder %s44, 1
      %p486 = por %p484, %p485
      %p487 = scmp.ne.s32.totalorder %s476, %s477
      %p488 = scmp.eq.s32.totalorder %s44, 0
      %p489 = por %p487, %p488
      %p490 = scmp.ne.s32.totalorder %s476, %s477
      %p491 = scmp.eq.s32.totalorder %s45, 1
      %p492 = por %p490, %p491
      %p494 = scmp.ne.s32.totalorder %s477, %s493
      %p495 = scmp.eq.s32.totalorder %s45, 0
      %p496 = por %p494, %p495
      %p497 = scmp.le.s32.totalorder 1, %s39
      %p498 = scmp.lt.s32.totalorder %s39, 3
      %p499 = pnand %p497, %p498
      %p500 = pneg %p499
      // Predicated region
      $region9: #{tpu_custom_call.1} parent=5 // pred_check
        _
      $region10: #{tpu_custom_call.1} parent=5 // pred_check_branch
        %502 = sbr.rel (%p499) target = $region12
      $region11: #{tpu_custom_call.1} parent=5 // pred_region
        %s503 = ssub.s32 %s39, 1
        // Predicated region
        $region13: #{tpu_custom_call.1} parent=11 // pred_check
          %p504 = pneg %p112
        $region14: #{tpu_custom_call.1} parent=11 // pred_check_branch
          %506 = sbr.rel (%p504) target = $region16
        $region15: #{tpu_custom_call.1} parent=11 // pred_region
          %s508 = ssub.s32 512, 512
          %509 = vsyncadd [#allocation6], %s508
          %s510 = sshll.u32 [#allocation5], 4
          %s511 = int_to_ptr.vmem [resolvable:$true] %s510
          %516 = dma.hbm_to_vmem [thread:$0]  %s2, 512, %s511, [#allocation6], 64, 64, 4
        $region16: #{tpu_custom_call.1} parent=11 // pred_fallthru
          _
        // Predicated region
        $region17: #{tpu_custom_call.1} parent=11 // pred_check
          %p517 = pneg %p133
        $region18: #{tpu_custom_call.1} parent=11 // pred_check_branch
          %519 = sbr.rel (%p517) target = $region20
        $region19: #{tpu_custom_call.1} parent=11 // pred_region
          %s521 = ssub.s32 16, 16
          %522 = vsyncadd [#allocation6], %s521
          %s524 = sshll.u32 [#allocation7], 4
          %s525 = int_to_ptr.vmem [resolvable:$true] %s524
          %527 = dma.hbm_to_vmem [thread:$0]  %s3, 16, %s525, [#allocation6]
        $region20: #{tpu_custom_call.1} parent=11 // pred_fallthru
          _
        // Predicated region
        $region21: #{tpu_custom_call.1} parent=11 // pred_check
          %p528 = pneg %p154
        $region22: #{tpu_custom_call.1} parent=11 // pred_check_branch
          %530 = sbr.rel (%p528) target = $region24
        $region23: #{tpu_custom_call.1} parent=11 // pred_region
          %s532 = ssub.s32 16, 16
          %533 = vsyncadd [#allocation9], %s532
          %s535 = sshll.u32 [#allocation8], 4
          %s536 = int_to_ptr.vmem [resolvable:$true] %s535
          %538 = dma.hbm_to_vmem [thread:$0]  %s4, 16, %s536, [#allocation9]
        $region24: #{tpu_custom_call.1} parent=11 // pred_fallthru
          _
        // Predicated region
        $region25: #{tpu_custom_call.1} parent=11 // pred_check
          %p539 = pneg %p175
        $region26: #{tpu_custom_call.1} parent=11 // pred_check_branch
          %541 = sbr.rel (%p539) target = $region28
        $region27: #{tpu_custom_call.1} parent=11 // pred_region
          %s543 = ssub.s32 16, 16
          %544 = vsyncadd [#allocation9], %s543
          %s546 = sshll.u32 [#allocation10], 4
          %s547 = int_to_ptr.vmem [resolvable:$true] %s546
          %549 = dma.hbm_to_vmem [thread:$0]  %s5, 16, %s547, [#allocation9]
        $region28: #{tpu_custom_call.1} parent=11 // pred_fallthru
          _
        // Predicated region
        $region29: #{tpu_custom_call.1} parent=11 // pred_check
          %p550 = pneg %p196
        $region30: #{tpu_custom_call.1} parent=11 // pred_check_branch
          %552 = sbr.rel (%p550) target = $region32
        $region31: #{tpu_custom_call.1} parent=11 // pred_region
          _
        $region32: #{tpu_custom_call.1} parent=11 // pred_fallthru
          _
        // Predicated region
        $region33: #{tpu_custom_call.1} parent=11 // pred_check
          %p553 = pneg %p217
        $region34: #{tpu_custom_call.1} parent=11 // pred_check_branch
          %555 = sbr.rel (%p553) target = $region36
        $region35: #{tpu_custom_call.1} parent=11 // pred_region
          _
        $region36: #{tpu_custom_call.1} parent=11 // pred_fallthru
          _
        // Predicated region
        $region37: #{tpu_custom_call.1} parent=11 // pred_check
          %p556 = pneg %p238
        $region38: #{tpu_custom_call.1} parent=11 // pred_check_branch
          %558 = sbr.rel (%p556) target = $region40
        $region39: #{tpu_custom_call.1} parent=11 // pred_region
          %s560 = ssub.s32 512, 512
          %561 = vsyncadd [#allocation12], %s560
          %s562 = sshll.u32 [#allocation11], 4
          %s563 = int_to_ptr.vmem [resolvable:$true] %s562
          %568 = dma.hbm_to_vmem [thread:$0]  %s8, 512, %s563, [#allocation12], 64, 64, 4
        $region40: #{tpu_custom_call.1} parent=11 // pred_fallthru
          _
        // Predicated region
        $region41: #{tpu_custom_call.1} parent=11 // pred_check
          %p569 = pneg %p259
        $region42: #{tpu_custom_call.1} parent=11 // pred_check_branch
          %571 = sbr.rel (%p569) target = $region44
        $region43: #{tpu_custom_call.1} parent=11 // pred_region
          %s573 = ssub.s32 16, 16
          %574 = vsyncadd [#allocation12], %s573
          %s576 = sshll.u32 [#allocation13], 4
          %s577 = int_to_ptr.vmem [resolvable:$true] %s576
          %579 = dma.hbm_to_vmem [thread:$0]  %s9, 16, %s577, [#allocation12]
        $region44: #{tpu_custom_call.1} parent=11 // pred_fallthru
          _
        // Predicated region
        $region45: #{tpu_custom_call.1} parent=11 // pred_check
          %p580 = pneg %p280
        $region46: #{tpu_custom_call.1} parent=11 // pred_check_branch
          %582 = sbr.rel (%p580) target = $region48
        $region47: #{tpu_custom_call.1} parent=11 // pred_region
          %s584 = ssub.s32 16, 16
          %585 = vsyncadd [#allocation15], %s584
          %s587 = sshll.u32 [#allocation14], 4
          %s588 = int_to_ptr.vmem [resolvable:$true] %s587
          %590 = dma.hbm_to_vmem [thread:$0]  %s10, 16, %s588, [#allocation15]
        $region48: #{tpu_custom_call.1} parent=11 // pred_fallthru
          _
        // Predicated region
        $region49: #{tpu_custom_call.1} parent=11 // pred_check
          %p591 = pneg %p301
        $region50: #{tpu_custom_call.1} parent=11 // pred_check_branch
          %593 = sbr.rel (%p591) target = $region52
        $region51: #{tpu_custom_call.1} parent=11 // pred_region
          %s595 = ssub.s32 16, 16
          %596 = vsyncadd [#allocation15], %s595
          %s598 = sshll.u32 [#allocation16], 4
          %s599 = int_to_ptr.vmem [resolvable:$true] %s598
          %601 = dma.hbm_to_vmem [thread:$0]  %s11, 16, %s599, [#allocation15]
        $region52: #{tpu_custom_call.1} parent=11 // pred_fallthru
          _
        // Predicated region
        $region53: #{tpu_custom_call.1} parent=11 // pred_check
          %p602 = pneg %p322
        $region54: #{tpu_custom_call.1} parent=11 // pred_check_branch
          %604 = sbr.rel (%p602) target = $region56
        $region55: #{tpu_custom_call.1} parent=11 // pred_region
          _
        $region56: #{tpu_custom_call.1} parent=11 // pred_fallthru
          _
        // Predicated region
        $region57: #{tpu_custom_call.1} parent=11 // pred_check
          %p605 = pneg %p343
        $region58: #{tpu_custom_call.1} parent=11 // pred_check_branch
          %607 = sbr.rel (%p605) target = $region60
        $region59: #{tpu_custom_call.1} parent=11 // pred_region
          _
        $region60: #{tpu_custom_call.1} parent=11 // pred_fallthru
          _
        // Predicated region
        $region61: #{tpu_custom_call.1} parent=11 // pred_check
          %p608 = pneg %p364
        $region62: #{tpu_custom_call.1} parent=11 // pred_check_branch
          %610 = sbr.rel (%p608) target = $region64
        $region63: #{tpu_custom_call.1} parent=11 // pred_region
          _
        $region64: #{tpu_custom_call.1} parent=11 // pred_fallthru
          _
        // Predicated region
        $region65: #{tpu_custom_call.1} parent=11 // pred_check
          %p611 = pneg %p385
        $region66: #{tpu_custom_call.1} parent=11 // pred_check_branch
          %613 = sbr.rel (%p611) target = $region68
        $region67: #{tpu_custom_call.1} parent=11 // pred_region
          _
        $region68: #{tpu_custom_call.1} parent=11 // pred_fallthru
          _
      $region12: #{tpu_custom_call.1} parent=5 // pred_fallthru
        _
      %p614 = scmp.lt.s32.totalorder %s39, 2
      // Predicated region
      $region69: #{tpu_custom_call.1} parent=5 // pred_check
        %p615 = pneg %p614
      $region70: #{tpu_custom_call.1} parent=5 // pred_check_branch
        %617 = sbr.rel (%p615) target = $region72
      $region71: #{tpu_custom_call.1} parent=5 // pred_region
        // Predicated region
        $region73: #{tpu_custom_call.1} parent=71 // pred_check
          %p618 = pneg %p59
        $region74: #{tpu_custom_call.1} parent=71 // pred_check_branch
          %620 = sbr.rel (%p618) target = $region76
        $region75: #{tpu_custom_call.1} parent=71 // pred_region
          %s621 = smul.u32 4, %s39
          %p622 = scmp.lt.s32.totalorder %s621, 7
          %s623 = scalar_select %p622, %s621, 7
          %s624 = smul.addr %s623, 8
          %s625 = scalar_lea.vmem %s0, %s624
          %s626 = smul.u32 4, %s39
        $region76: #{tpu_custom_call.1} parent=71 // pred_fallthru
          _
        // Predicated region
        $region77: #{tpu_custom_call.1} parent=71 // pred_check
          %p627 = pneg %p85
        $region78: #{tpu_custom_call.1} parent=71 // pred_check_branch
          %629 = sbr.rel (%p627) target = $region80
        $region79: #{tpu_custom_call.1} parent=71 // pred_region
          %s630 = sand.u32 %s75, 1
          %s631 = scalar_lea.sflag [#allocation3], %s630
          %s632 = sand.u32 %s75, 1
          %s633 = smul.addr %s632, 4
          %s634 = scalar_lea.vmem [#allocation2], %s633
          %s635 = smul.u32 4, %s39
          %s637 = ssub.s32 64, 64
          %638 = vsyncadd %s631, %s637
          %s639 = smul.addr %s635, 16
          %s640 = scalar_lea.hbm %s1, %s639
          %s641 = sshll.u32 %s634, 4
          %s642 = int_to_ptr.vmem [resolvable:$true] %s641
          %647 = dma.hbm_to_vmem [thread:$0]  %s640, 64, %s642, %s631, 16, 16, 1
        $region80: #{tpu_custom_call.1} parent=71 // pred_fallthru
          _
        // Predicated region
        $region81: #{tpu_custom_call.1} parent=71 // pred_check
          %p648 = pneg %p405
        $region82: #{tpu_custom_call.1} parent=71 // pred_check_branch
          %650 = sbr.rel (%p648) target = $region84
        $region83: #{tpu_custom_call.1} parent=71 // pred_region
          %s651 = smul.u32 4, %s39
          %p652 = scmp.lt.s32.totalorder %s651, 7
          %s653 = scalar_select %p652, %s651, 7
          %s654 = scalar_lea.vmem %s16, %s653
          %s655 = smul.u32 4, %s39
        $region84: #{tpu_custom_call.1} parent=71 // pred_fallthru
          _
        // Predicated region
        $region85: #{tpu_custom_call.1} parent=71 // pred_check
          %p656 = pneg %p431
        $region86: #{tpu_custom_call.1} parent=71 // pred_check_branch
          %658 = sbr.rel (%p656) target = $region88
        $region87: #{tpu_custom_call.1} parent=71 // pred_region
          %s659 = smul.u32 4, %s39
          %p660 = scmp.lt.s32.totalorder %s659, 7
          %s661 = scalar_select %p660, %s659, 7
          %s662 = scalar_lea.vmem %s17, %s661
          %s663 = smul.u32 4, %s39
        $region88: #{tpu_custom_call.1} parent=71 // pred_fallthru
          _
      $region72: #{tpu_custom_call.1} parent=5 // pred_fallthru
        _
      %p664 = scmp.le.s32.totalorder 1, %s39
      %p665 = scmp.lt.s32.totalorder %s39, 3
      %p666 = pnand %p664, %p665
      %p667 = pneg %p666
      // Predicated region
      $region89: #{tpu_custom_call.1} parent=5 // pred_check
        _
      $region90: #{tpu_custom_call.1} parent=5 // pred_check_branch
        %669 = sbr.rel (%p666) target = $region92
      $region91: #{tpu_custom_call.1} parent=5 // pred_region
        %s670 = ssub.s32 %s39, 1
        %s671 = sand.u32 %s78, 1
        %s672 = scalar_lea.sflag [#allocation3], %s671
        %s673 = sand.u32 %s78, 1
        %s674 = smul.addr %s673, 4
        %s675 = scalar_lea.vmem [#allocation2], %s674
        // Predicated region
        $region93: #{tpu_custom_call.1} parent=91 // pred_check
          %p676 = pneg %p91
        $region94: #{tpu_custom_call.1} parent=91 // pred_check_branch
          %678 = sbr.rel (%p676) target = $region96
        $region95: #{tpu_custom_call.1} parent=91 // pred_region
          %679 = dma.done %s672, 64
        $region96: #{tpu_custom_call.1} parent=91 // pred_fallthru
          _
        // Predicated region
        $region97: #{tpu_custom_call.1} parent=91 // pred_check
          %p680 = pneg %p112
        $region98: #{tpu_custom_call.1} parent=91 // pred_check_branch
          %682 = sbr.rel (%p680) target = $region100
        $region99: #{tpu_custom_call.1} parent=91 // pred_region
          %683 = dma.done [#allocation6], 512
        $region100: #{tpu_custom_call.1} parent=91 // pred_fallthru
          _
        // Predicated region
        $region101: #{tpu_custom_call.1} parent=91 // pred_check
          %p684 = pneg %p133
        $region102: #{tpu_custom_call.1} parent=91 // pred_check_branch
          %686 = sbr.rel (%p684) target = $region104
        $region103: #{tpu_custom_call.1} parent=91 // pred_region
          %687 = dma.done [#allocation6], 16
        $region104: #{tpu_custom_call.1} parent=91 // pred_fallthru
          _
        // Predicated region
        $region105: #{tpu_custom_call.1} parent=91 // pred_check
          %p688 = pneg %p154
        $region106: #{tpu_custom_call.1} parent=91 // pred_check_branch
          %690 = sbr.rel (%p688) target = $region108
        $region107: #{tpu_custom_call.1} parent=91 // pred_region
          %691 = dma.done [#allocation9], 16
        $region108: #{tpu_custom_call.1} parent=91 // pred_fallthru
          _
        // Predicated region
        $region109: #{tpu_custom_call.1} parent=91 // pred_check
          %p692 = pneg %p175
        $region110: #{tpu_custom_call.1} parent=91 // pred_check_branch
          %694 = sbr.rel (%p692) target = $region112
        $region111: #{tpu_custom_call.1} parent=91 // pred_region
          %695 = dma.done [#allocation9], 16
        $region112: #{tpu_custom_call.1} parent=91 // pred_fallthru
          _
        // Predicated region
        $region113: #{tpu_custom_call.1} parent=91 // pred_check
          %p696 = pneg %p238
        $region114: #{tpu_custom_call.1} parent=91 // pred_check_branch
          %698 = sbr.rel (%p696) target = $region116
        $region115: #{tpu_custom_call.1} parent=91 // pred_region
          %699 = dma.done [#allocation12], 512
        $region116: #{tpu_custom_call.1} parent=91 // pred_fallthru
          _
        // Predicated region
        $region117: #{tpu_custom_call.1} parent=91 // pred_check
          %p700 = pneg %p259
        $region118: #{tpu_custom_call.1} parent=91 // pred_check_branch
          %702 = sbr.rel (%p700) target = $region120
        $region119: #{tpu_custom_call.1} parent=91 // pred_region
          %703 = dma.done [#allocation12], 16
        $region120: #{tpu_custom_call.1} parent=91 // pred_fallthru
          _
        // Predicated region
        $region121: #{tpu_custom_call.1} parent=91 // pred_check
          %p704 = pneg %p280
        $region122: #{tpu_custom_call.1} parent=91 // pred_check_branch
          %706 = sbr.rel (%p704) target = $region124
        $region123: #{tpu_custom_call.1} parent=91 // pred_region
          %707 = dma.done [#allocation15], 16
        $region124: #{tpu_custom_call.1} parent=91 // pred_fallthru
          _
        // Predicated region
        $region125: #{tpu_custom_call.1} parent=91 // pred_check
          %p708 = pneg %p301
        $region126: #{tpu_custom_call.1} parent=91 // pred_check_branch
          %710 = sbr.rel (%p708) target = $region128
        $region127: #{tpu_custom_call.1} parent=91 // pred_region
          %711 = dma.done [#allocation15], 16
        $region128: #{tpu_custom_call.1} parent=91 // pred_fallthru
          _
        %s712 = smul.u32 4, %s44
        %p713 = scmp.lt.s32.totalorder %s712, 7
        %s714 = scalar_select %p713, %s712, 7
        %s715 = smul.addr %s714, 8
        %s716 = scalar_lea.vmem %s0, %s715
        %p717 = pneg %p65
        %p718 = pneg %p62
        %s719 = sand.u32 %s78, 1
        %s720 = scalar_lea.sflag [#allocation3], %s719
        %s721 = sand.u32 %s78, 1
        %s722 = smul.addr %s721, 4
        %s723 = scalar_lea.vmem [#allocation2], %s722
        %p724 = pneg %p91
        %p725 = pneg %p88
        %p726 = pneg %p112
        %p727 = pneg %p109
        %p728 = pneg %p133
        %p729 = pneg %p130
        %p730 = pneg %p154
        %p731 = pneg %p151
        %p732 = pneg %p175
        %p733 = pneg %p172
        %p734 = pneg %p196
        %p735 = pneg %p193
        %p736 = pneg %p217
        %p737 = pneg %p214
        %p738 = pneg %p238
        %p739 = pneg %p235
        %p740 = pneg %p259
        %p741 = pneg %p256
        %p742 = pneg %p280
        %p743 = pneg %p277
        %p744 = pneg %p301
        %p745 = pneg %p298
        %p746 = pneg %p322
        %p747 = pneg %p319
        %p748 = pneg %p343
        %p749 = pneg %p340
        %p750 = pneg %p364
        %p751 = pneg %p361
        %p752 = pneg %p385
        %p753 = pneg %p382
        %s754 = smul.u32 4, %s44
        %p755 = scmp.lt.s32.totalorder %s754, 7
        %s756 = scalar_select %p755, %s754, 7
        %s757 = scalar_lea.vmem %s16, %s756
        %p758 = pneg %p411
        %p759 = pneg %p408
        %s760 = smul.u32 4, %s44
        %p761 = scmp.lt.s32.totalorder %s760, 7
        %s762 = scalar_select %p761, %s760, 7
        %s763 = scalar_lea.vmem %s17, %s762
        %p764 = pneg %p437
        %p765 = pneg %p434
        %p766 = pneg %p463
        %p767 = pneg %p460
        %s768 = sand.u32 %s450, 1
        %s769 = scalar_lea.sflag [#allocation4], %s768
        %s770 = sand.u32 %s450, 1
        %s771 = smul.addr %s770, 32
        %s772 = scalar_lea.vmem [#allocation17], %s771
        %p773 = pneg %p489
        %p774 = pneg %p486
        %s775 = sand.u32 %s476, 1
        %s776 = scalar_lea.sflag [#allocation19], %s775
        %s777 = sand.u32 %s476, 1
        %s778 = smul.addr %s777, 32
        %s779 = scalar_lea.vmem [#allocation18], %s778
        %s780 = smul.u32 4, %s44
        %p781 = scmp.lt.s32.totalorder %s780, 7
        %s782 = scalar_select %p781, %s780, 7
        %s783 = smul.addr %s782, 8
        %s784 = scalar_lea.vmem %s0, %s783
        %s785 = smul.u32 4, %s44
        %s786 = smul.u32 4, %s44
        %s787 = smul.u32 4, %s44
        %p788 = scmp.lt.s32.totalorder %s787, 7
        %s789 = scalar_select %p788, %s787, 7
        %s790 = scalar_lea.vmem %s16, %s789
        %s791 = smul.u32 4, %s44
        %s792 = smul.u32 4, %s44
        %p793 = scmp.lt.s32.totalorder %s792, 7
        %s794 = scalar_select %p793, %s792, 7
        %s795 = scalar_lea.vmem %s17, %s794
        %s796 = smul.u32 4, %s44
        %s797 = smul.u32 4, %s44
        %s798 = smul.u32 4, %s44
        %v800 = vld [vmem:[%s784] sm:$0xff]
        %v801 = vld [vmem:[%s784 + $0x8] sm:$0xff]
        %v802 = vld [vmem:[%s784 + $0x10] sm:$0xff]
        %v803 = vld [vmem:[%s784 + $0x18] sm:$0xff]
        %v804 = vld [vmem:[%s675] sm:$0x1]
        %v805 = vld [vmem:[%s675 + $0x1] sm:$0x1]
        %v806 = vld [vmem:[%s675 + $0x2] sm:$0x1]
        %v807 = vld [vmem:[%s675 + $0x3] sm:$0x1]
        %v808 = vpack.c.bf16 %v801, %v800
        %v809 = vpack.c.bf16 %v803, %v802
        %v810 = vld [vmem:[#allocation5] sm:$0xf]
        %v811 = vld [vmem:[#allocation5 + $0x4] sm:$0xf]
        %v812 = vld [vmem:[#allocation5 + $0x8] sm:$0xf]
        %v813 = vld [vmem:[#allocation5 + $0xc] sm:$0xf]
        %v814 = vld [vmem:[#allocation5 + $0x10] sm:$0xf]
        %v815 = vld [vmem:[#allocation5 + $0x14] sm:$0xf]
        %v816 = vld [vmem:[#allocation5 + $0x18] sm:$0xf]
        %v817 = vld [vmem:[#allocation5 + $0x1c] sm:$0xf]
        %v818 = vld [vmem:[#allocation7] sm:$0x1]
        %v820 = vlaneseq
        %v821 = vshrl.u32 %v820, 7
        %v822 = vsub.s32 0, %v821
        %v823 = vrot.slane %v818, %v822
        %v833 = vunpack.c.l.b16 %v810
        %v834 = vunpack.c.l.b16 %v811
        %v835 = vunpack.c.l.b16 %v812
        %v836 = vunpack.c.l.b16 %v813
        %v837 = vunpack.c.l.b16 %v814
        %v838 = vunpack.c.l.b16 %v815
        %v839 = vunpack.c.l.b16 %v816
        %v840 = vunpack.c.l.b16 %v817
        %v841 = vpack.c.b16 %v834, %v833
        %v842 = vpack.c.b16 %v836, %v835
        %v843 = vpack.c.b16 %v838, %v837
        %v844 = vpack.c.b16 %v840, %v839
        %vm849 = vcmask 523264
        %v851 = vsel %vm849, %v808, 0
        %v854 = vsel %vm849, %v809, 0
        %856 = vmatprep.subr.bf16.mxu0 0
        %857 = vmatpush1.bf16.msra.mxu0 0
        %858 = vmatprep.subr.bf16.mxu0 0
        %859 = vmatpush1.bf16.msra.mxu0 0
        %860 = vmatprep.subr.bf16.mxu0 0
        %861 = vmatpush1.bf16.msra.mxu0 0
        %862 = vmatprep.subr.bf16.mxu0 0
        %863 = vmatpush1.bf16.msra.mxu0 0
        %864 = vmatprep.subr.bf16.mxu0 0
        %865 = vmatpush1.bf16.msra.mxu0 %v844
        %866 = vmatprep.subr.bf16.mxu0 0
        %867 = vmatpush1.bf16.msra.mxu0 %v843
        %868 = vmatprep.subr.bf16.mxu0 0
        %869 = vmatpush1.bf16.msra.mxu0 %v842
        %870 = vmatprep.subr.bf16.mxu0 0
        %871 = vmatpush1.bf16.msra.mxu0 %v841
        %872 = vmatprep.subr.bf16.mxu0 0
        %873 = vmatpush2.bf16.msra.mxu0 0
        %874 = vmatprep.subr.bf16.mxu0 0
        %875 = vmatpush2.bf16.msra.mxu0 0
        %876 = vmatprep.subr.bf16.mxu0 0
        %877 = vmatpush2.bf16.msra.mxu0 0
        %878 = vmatprep.subr.bf16.mxu0 0
        %879 = vmatpush2.bf16.msra.mxu0 0
        %880 = vmatprep.subr.bf16.mxu0 0
        %881 = vmatpush2.bf16.msra.mxu0 0
        %882 = vmatprep.subr.bf16.mxu0 0
        %883 = vmatpush2.bf16.msra.mxu0 0
        %884 = vmatprep.subr.bf16.mxu0 0
        %885 = vmatpush2.bf16.msra.mxu0 0
        %886 = vmatprep.subr.bf16.mxu0 0
        %887 = vmatpush2.bf16.msra.mxu0 0
        %888 = vmatprep.mubr.bf16.mxu0 0
        %889 = vmatmul.mubr.bf16.gmra.mxu0 %v851
        %v890 = vpop.f32.mrf.mxu0
        %v891 = vadd.f32 %v823, %v890
        %v892 = vpop.f32.mrf.mxu0
        %v893 = vpop.f32.mrf.mxu0
        %v894 = vadd.f32 %v823, %v893
        %v895 = vpop.f32.mrf.mxu0
        %896 = vmatprep.mubr.bf16.mxu0 0
        %897 = vmatmul.mubr.bf16.gmra.mxu0 %v854
        %v898 = vpop.f32.mrf.mxu0
        %v899 = vadd.f32 %v823, %v898
        %v900 = vpop.f32.mrf.mxu0
        %v901 = vpop.f32.mrf.mxu0
        %v902 = vadd.f32 %v823, %v901
        %v903 = vpop.f32.mrf.mxu0
        %904 = vdwg.mxu0
        %v909 = vlaneseq
        %v910 = vshrl.u32 %v909, 7
        %v911 = vsub.s32 0, %v910
        %v912 = vrot.slane %v804, %v911
        %v913 = vlaneseq
        %v914 = vshrl.u32 %v913, 7
        %v915 = vsub.s32 0, %v914
        %v916 = vrot.slane %v805, %v915
        %v917 = vlaneseq
        %v918 = vshrl.u32 %v917, 7
        %v919 = vsub.s32 0, %v918
        %v920 = vrot.slane %v806, %v919
        %v921 = vlaneseq
        %v922 = vshrl.u32 %v921, 7
        %v923 = vsub.s32 0, %v922
        %v924 = vrot.slane %v807, %v923
        %v929 = vmul.f32 %v891, %v912
        %v930 = vmul.f32 %v894, %v916
        %v931 = vmul.f32 %v899, %v920
        %v932 = vmul.f32 %v902, %v924
        %v933 = vld [vmem:[#allocation8] sm:$0x1]
        %v934 = vld [vmem:[#allocation10] sm:$0x1]
        %v935 = vsel %vm849, %v929, 0.0
        %936 = vadd.xlane.f32.xlu0 %v935
        %v937 = vpop.xlane.xlu0 %936
        %v938 = vsel %vm849, %v930, 0.0
        %939 = vadd.xlane.f32.xlu0 %v938
        %v940 = vpop.xlane.xlu0 %939
        %v941 = vsel %vm849, %v931, 0.0
        %942 = vadd.xlane.f32.xlu0 %v941
        %v943 = vpop.xlane.xlu0 %942
        %v944 = vsel %vm849, %v932, 0.0
        %945 = vadd.xlane.f32.xlu0 %v944
        %v946 = vpop.xlane.xlu0 %945
        %v947 = vrcp.pop 64.0
        %v948 = vmul.f32 %v937, %v947
        %v949 = vmul.f32 %v940, %v947
        %v950 = vmul.f32 %v943, %v947
        %v951 = vmul.f32 %v946, %v947
        %v952 = vsub.f32 %v929, %v948
        %v953 = vsub.f32 %v930, %v949
        %v954 = vsub.f32 %v931, %v950
        %v955 = vsub.f32 %v932, %v951
        %v956 = vmul.f32 %v952, %v952
        %v957 = vmul.f32 %v953, %v953
        %v958 = vmul.f32 %v954, %v954
        %v959 = vmul.f32 %v955, %v955
        %v960 = vsel %vm849, %v956, 0.0
        %961 = vadd.xlane.f32.xlu0 %v960
        %v962 = vpop.xlane.xlu0 %961
        %v963 = vsel %vm849, %v957, 0.0
        %964 = vadd.xlane.f32.xlu0 %v963
        %v965 = vpop.xlane.xlu0 %964
        %v966 = vsel %vm849, %v958, 0.0
        %967 = vadd.xlane.f32.xlu0 %v966
        %v968 = vpop.xlane.xlu0 %967
        %v969 = vsel %vm849, %v959, 0.0
        %970 = vadd.xlane.f32.xlu0 %v969
        %v971 = vpop.xlane.xlu0 %970
        %v972 = vmul.f32 %v962, %v947
        %v973 = vmul.f32 %v965, %v947
        %v974 = vmul.f32 %v968, %v947
        %v975 = vmul.f32 %v971, %v947
        %v976 = vadd.f32 %v972, 1e-05
        %v977 = vadd.f32 %v973, 1e-05
        %v978 = vadd.f32 %v974, 1e-05
        %v979 = vadd.f32 %v975, 1e-05
        %v980 = vrsqrt.pop %v976
        %v981 = vrsqrt.pop %v977
        %v982 = vrsqrt.pop %v978
        %v983 = vrsqrt.pop %v979
        %v984 = vmul.f32 %v952, %v980
        %v985 = vmul.f32 %v953, %v981
        %v986 = vmul.f32 %v954, %v982
        %v987 = vmul.f32 %v955, %v983
        %v989 = vlaneseq
        %v990 = vshrl.u32 %v989, 7
        %v991 = vsub.s32 0, %v990
        %v992 = vrot.slane %v933, %v991
        %v994 = vmul.f32 %v984, %v992
        %v995 = vmul.f32 %v985, %v992
        %v996 = vmul.f32 %v986, %v992
        %v997 = vmul.f32 %v987, %v992
        %v999 = vlaneseq
        %v1000 = vshrl.u32 %v999, 7
        %v1001 = vsub.s32 0, %v1000
        %v1002 = vrot.slane %v934, %v1001
        %v1004 = vadd.f32 %v994, %v1002
        %v1005 = vadd.f32 %v995, %v1002
        %v1006 = vadd.f32 %v996, %v1002
        %v1007 = vadd.f32 %v997, %v1002
        %v1008 = vpack.c.bf16 %v1005, %v1004
        %v1009 = vpack.c.bf16 %v1007, %v1006
        %v1010 = vld [vmem:[%s6] sm:$0xff]
        %v1011 = vld [vmem:[%s6 + $0x8] sm:$0xff]
        %v1012 = vld [vmem:[%s6 + $0x10] sm:$0xff]
        %v1013 = vld [vmem:[%s6 + $0x18] sm:$0xff]
        %v1014 = vld [vmem:[%s6 + $0x20] sm:$0xff]
        %v1015 = vld [vmem:[%s6 + $0x28] sm:$0xff]
        %v1016 = vld [vmem:[%s6 + $0x30] sm:$0xff]
        %v1017 = vld [vmem:[%s6 + $0x38] sm:$0xff]
        %v1018 = vld [vmem:[%s7] sm:$0x3]
        %v1020 = vlaneseq
        %v1021 = vshrl.u32 %v1020, 7
        %v1022 = vsub.s32 0, %v1021
        %v1023 = vrot.slane %v1018, %v1022
        %v1024 = vlaneseq
        %v1025 = vshrl.u32 %v1024, 7
        %v1026 = vsub.s32 1, %v1025
        %v1027 = vrot.slane %v1018, %v1026
        %v1038 = vunpack.c.l.b16 %v1010
        %v1039 = vunpack.c.h.b16 %v1010
        %v1040 = vunpack.c.l.b16 %v1011
        %v1041 = vunpack.c.h.b16 %v1011
        %v1042 = vunpack.c.l.b16 %v1012
        %v1043 = vunpack.c.h.b16 %v1012
        %v1044 = vunpack.c.l.b16 %v1013
        %v1045 = vunpack.c.h.b16 %v1013
        %v1046 = vunpack.c.l.b16 %v1014
        %v1047 = vunpack.c.h.b16 %v1014
        %v1048 = vunpack.c.l.b16 %v1015
        %v1049 = vunpack.c.h.b16 %v1015
        %v1050 = vunpack.c.l.b16 %v1016
        %v1051 = vunpack.c.h.b16 %v1016
        %v1052 = vunpack.c.l.b16 %v1017
        %v1053 = vunpack.c.h.b16 %v1017
        %v1054 = vpack.c.b16 %v1040, %v1038
        %v1055 = vpack.c.b16 %v1041, %v1039
        %v1056 = vpack.c.b16 %v1044, %v1042
        %v1057 = vpack.c.b16 %v1045, %v1043
        %v1058 = vpack.c.b16 %v1048, %v1046
        %v1059 = vpack.c.b16 %v1049, %v1047
        %v1060 = vpack.c.b16 %v1052, %v1050
        %v1061 = vpack.c.b16 %v1053, %v1051
        %v1071 = vsel %vm849, %v1008, 0
        %v1074 = vsel %vm849, %v1009, 0
        %1076 = vmatprep.subr.bf16.mxu0 0
        %1077 = vmatpush1.bf16.msra.mxu0 0
        %1078 = vmatprep.subr.bf16.mxu0 0
        %1079 = vmatpush1.bf16.msra.mxu0 0
        %1080 = vmatprep.subr.bf16.mxu0 0
        %1081 = vmatpush1.bf16.msra.mxu0 0
        %1082 = vmatprep.subr.bf16.mxu0 0
        %1083 = vmatpush1.bf16.msra.mxu0 0
        %1084 = vmatprep.subr.bf16.mxu0 %v1061
        %1085 = vmatpush1.bf16.msra.mxu0 %v1060
        %1086 = vmatprep.subr.bf16.mxu0 %v1059
        %1087 = vmatpush1.bf16.msra.mxu0 %v1058
        %1088 = vmatprep.subr.bf16.mxu0 %v1057
        %1089 = vmatpush1.bf16.msra.mxu0 %v1056
        %1090 = vmatprep.subr.bf16.mxu0 %v1055
        %1091 = vmatpush1.bf16.msra.mxu0 %v1054
        %1092 = vmatprep.subr.bf16.mxu0 0
        %1093 = vmatpush2.bf16.msra.mxu0 0
        %1094 = vmatprep.subr.bf16.mxu0 0
        %1095 = vmatpush2.bf16.msra.mxu0 0
        %1096 = vmatprep.subr.bf16.mxu0 0
        %1097 = vmatpush2.bf16.msra.mxu0 0
        %1098 = vmatprep.subr.bf16.mxu0 0
        %1099 = vmatpush2.bf16.msra.mxu0 0
        %1100 = vmatprep.subr.bf16.mxu0 0
        %1101 = vmatpush2.bf16.msra.mxu0 0
        %1102 = vmatprep.subr.bf16.mxu0 0
        %1103 = vmatpush2.bf16.msra.mxu0 0
        %1104 = vmatprep.subr.bf16.mxu0 0
        %1105 = vmatpush2.bf16.msra.mxu0 0
        %1106 = vmatprep.subr.bf16.mxu0 0
        %1107 = vmatpush2.bf16.msra.mxu0 0
        %1108 = vmatprep.mubr.bf16.mxu0 0
        %1109 = vmatmul.mubr.bf16.gmra.mxu0 %v1071
        %v1110 = vpop.f32.mrf.mxu0
        %v1111 = vadd.f32 %v1023, %v1110
        %v1112 = vpop.f32.mrf.mxu0
        %v1113 = vadd.f32 %v1027, %v1112
        %v1114 = vpop.f32.mrf.mxu0
        %v1115 = vadd.f32 %v1023, %v1114
        %v1116 = vpop.f32.mrf.mxu0
        %v1117 = vadd.f32 %v1027, %v1116
        %1118 = vmatprep.mubr.bf16.mxu0 0
        %1119 = vmatmul.mubr.bf16.gmra.mxu0 %v1074
        %v1120 = vpop.f32.mrf.mxu0
        %v1121 = vadd.f32 %v1023, %v1120
        %v1122 = vpop.f32.mrf.mxu0
        %v1123 = vadd.f32 %v1027, %v1122
        %v1124 = vpop.f32.mrf.mxu0
        %v1125 = vadd.f32 %v1023, %v1124
        %v1126 = vpop.f32.mrf.mxu0
        %v1127 = vadd.f32 %v1027, %v1126
        %1128 = vdwg.mxu0
        %v1129 = vpack.c.bf16 %v1111, %v1111
        %v1130 = vpack.c.bf16 %v1115, %v1115
        %v1131 = vpack.c.bf16 %v1121, %v1121
        %v1132 = vpack.c.bf16 %v1125, %v1125
        %v1133 = vpack.c.bf16 %v1113, %v1113
        %v1134 = vpack.c.bf16 %v1117, %v1117
        %v1135 = vpack.c.bf16 %v1123, %v1123
        %v1136 = vpack.c.bf16 %v1127, %v1127
        %1138 = vrot.lane.b32.xlu0 %v1129, 64
        %v1139 = vpop.permute.xlu0 %1138
        %vm1140 = vcmask 130048
        %v1142 = vsel %vm1140, %v1129, 0
        %v1145 = vsel %vm1140, %v1139, 0
        %1147 = vmatprep.subr.bf16.mxu0 0
        %1148 = vmatpush1.bf16.xpose.msra.mxu0 0
        %1149 = vmatprep.subr.bf16.mxu0 0
        %1150 = vmatpush1.bf16.xpose.msra.mxu0 0
        %1151 = vmatprep.subr.bf16.mxu0 0
        %1152 = vmatpush1.bf16.xpose.msra.mxu0 0
        %1153 = vmatprep.subr.bf16.mxu0 0
        %1154 = vmatpush1.bf16.xpose.msra.mxu0 0
        %1155 = vmatprep.subr.bf16.mxu0 0
        %1156 = vmatpush1.bf16.xpose.msra.mxu0 0
        %1157 = vmatprep.subr.bf16.mxu0 0
        %1158 = vmatpush1.bf16.xpose.msra.mxu0 0
        %1159 = vmatprep.subr.bf16.mxu0 0
        %1160 = vmatpush1.bf16.xpose.msra.mxu0 0
        %1161 = vmatprep.subr.bf16.mxu0 0
        %1162 = vmatpush1.bf16.xpose.msra.mxu0 %v1145
        %1163 = vmatprep.subr.bf16.mxu0 0
        %1164 = vmatpush2.bf16.xpose.msra.mxu0 0
        %1165 = vmatprep.subr.bf16.mxu0 0
        %1166 = vmatpush2.bf16.xpose.msra.mxu0 0
        %1167 = vmatprep.subr.bf16.mxu0 0
        %1168 = vmatpush2.bf16.xpose.msra.mxu0 0
        %1169 = vmatprep.subr.bf16.mxu0 0
        %1170 = vmatpush2.bf16.xpose.msra.mxu0 0
        %1171 = vmatprep.subr.bf16.mxu0 0
        %1172 = vmatpush2.bf16.xpose.msra.mxu0 0
        %1173 = vmatprep.subr.bf16.mxu0 0
        %1174 = vmatpush2.bf16.xpose.msra.mxu0 0
        %1175 = vmatprep.subr.bf16.mxu0 0
        %1176 = vmatpush2.bf16.xpose.msra.mxu0 0
        %1177 = vmatprep.subr.bf16.mxu0 0
        %1178 = vmatpush2.bf16.xpose.msra.mxu0 0
        %1179 = vmatprep.mubr.bf16.mxu0 0
        %1180 = vmatmul.mubr.bf16.gmra.mxu0 %v1142
        %v1181 = vpop.f32.mrf.mxu0
        %v1182 = vadd.f32 0.0, %v1181
        %v1183 = vpop.f32.mrf.mxu0
        %v1184 = vpop.f32.mrf.mxu0
        %v1185 = vpop.f32.mrf.mxu0
        %1186 = vdwg.mxu0
        %1188 = vrot.lane.b32.xlu0 %v1130, 64
        %v1189 = vpop.permute.xlu0 %1188
        %v1191 = vsel %vm1140, %v1130, 0
        %v1194 = vsel %vm1140, %v1189, 0
        %1196 = vmatprep.subr.bf16.mxu0 0
        %1197 = vmatpush1.bf16.xpose.msra.mxu0 0
        %1198 = vmatprep.subr.bf16.mxu0 0
        %1199 = vmatpush1.bf16.xpose.msra.mxu0 0
        %1200 = vmatprep.subr.bf16.mxu0 0
        %1201 = vmatpush1.bf16.xpose.msra.mxu0 0
        %1202 = vmatprep.subr.bf16.mxu0 0
        %1203 = vmatpush1.bf16.xpose.msra.mxu0 0
        %1204 = vmatprep.subr.bf16.mxu0 0
        %1205 = vmatpush1.bf16.xpose.msra.mxu0 0
        %1206 = vmatprep.subr.bf16.mxu0 0
        %1207 = vmatpush1.bf16.xpose.msra.mxu0 0
        %1208 = vmatprep.subr.bf16.mxu0 0
        %1209 = vmatpush1.bf16.xpose.msra.mxu0 0
        %1210 = vmatprep.subr.bf16.mxu0 0
        %1211 = vmatpush1.bf16.xpose.msra.mxu0 %v1194
        %1212 = vmatprep.subr.bf16.mxu0 0
        %1213 = vmatpush2.bf16.xpose.msra.mxu0 0
        %1214 = vmatprep.subr.bf16.mxu0 0
        %1215 = vmatpush2.bf16.xpose.msra.mxu0 0
        %1216 = vmatprep.subr.bf16.mxu0 0
        %1217 = vmatpush2.bf16.xpose.msra.mxu0 0
        %1218 = vmatprep.subr.bf16.mxu0 0
        %1219 = vmatpush2.bf16.xpose.msra.mxu0 0
        %1220 = vmatprep.subr.bf16.mxu0 0
        %1221 = vmatpush2.bf16.xpose.msra.mxu0 0
        %1222 = vmatprep.subr.bf16.mxu0 0
        %1223 = vmatpush2.bf16.xpose.msra.mxu0 0
        %1224 = vmatprep.subr.bf16.mxu0 0
        %1225 = vmatpush2.bf16.xpose.msra.mxu0 0
        %1226 = vmatprep.subr.bf16.mxu0 0
        %1227 = vmatpush2.bf16.xpose.msra.mxu0 0
        %1228 = vmatprep.mubr.bf16.mxu0 0
        %1229 = vmatmul.mubr.bf16.gmra.mxu0 %v1191
        %v1230 = vpop.f32.mrf.mxu0
        %v1231 = vadd.f32 0.0, %v1230
        %v1232 = vpop.f32.mrf.mxu0
        %v1233 = vpop.f32.mrf.mxu0
        %v1234 = vpop.f32.mrf.mxu0
        %1235 = vdwg.mxu0
        %1237 = vrot.lane.b32.xlu0 %v1131, 64
        %v1238 = vpop.permute.xlu0 %1237
        %v1240 = vsel %vm1140, %v1131, 0
        %v1243 = vsel %vm1140, %v1238, 0
        %1245 = vmatprep.subr.bf16.mxu0 0
        %1246 = vmatpush1.bf16.xpose.msra.mxu0 0
        %1247 = vmatprep.subr.bf16.mxu0 0
        %1248 = vmatpush1.bf16.xpose.msra.mxu0 0
        %1249 = vmatprep.subr.bf16.mxu0 0
        %1250 = vmatpush1.bf16.xpose.msra.mxu0 0
        %1251 = vmatprep.subr.bf16.mxu0 0
        %1252 = vmatpush1.bf16.xpose.msra.mxu0 0
        %1253 = vmatprep.subr.bf16.mxu0 0
        %1254 = vmatpush1.bf16.xpose.msra.mxu0 0
        %1255 = vmatprep.subr.bf16.mxu0 0
        %1256 = vmatpush1.bf16.xpose.msra.mxu0 0
        %1257 = vmatprep.subr.bf16.mxu0 0
        %1258 = vmatpush1.bf16.xpose.msra.mxu0 0
        %1259 = vmatprep.subr.bf16.mxu0 0
        %1260 = vmatpush1.bf16.xpose.msra.mxu0 %v1243
        %1261 = vmatprep.subr.bf16.mxu0 0
        %1262 = vmatpush2.bf16.xpose.msra.mxu0 0
        %1263 = vmatprep.subr.bf16.mxu0 0
        %1264 = vmatpush2.bf16.xpose.msra.mxu0 0
        %1265 = vmatprep.subr.bf16.mxu0 0
        %1266 = vmatpush2.bf16.xpose.msra.mxu0 0
        %1267 = vmatprep.subr.bf16.mxu0 0
        %1268 = vmatpush2.bf16.xpose.msra.mxu0 0
        %1269 = vmatprep.subr.bf16.mxu0 0
        %1270 = vmatpush2.bf16.xpose.msra.mxu0 0
        %1271 = vmatprep.subr.bf16.mxu0 0
        %1272 = vmatpush2.bf16.xpose.msra.mxu0 0
        %1273 = vmatprep.subr.bf16.mxu0 0
        %1274 = vmatpush2.bf16.xpose.msra.mxu0 0
        %1275 = vmatprep.subr.bf16.mxu0 0
        %1276 = vmatpush2.bf16.xpose.msra.mxu0 0
        %1277 = vmatprep.mubr.bf16.mxu0 0
        %1278 = vmatmul.mubr.bf16.gmra.mxu0 %v1240
        %v1279 = vpop.f32.mrf.mxu0
        %v1280 = vadd.f32 0.0, %v1279
        %v1281 = vpop.f32.mrf.mxu0
        %v1282 = vpop.f32.mrf.mxu0
        %v1283 = vpop.f32.mrf.mxu0
        %1284 = vdwg.mxu0
        %1286 = vrot.lane.b32.xlu0 %v1132, 64
        %v1287 = vpop.permute.xlu0 %1286
        %v1289 = vsel %vm1140, %v1132, 0
        %v1292 = vsel %vm1140, %v1287, 0
        %1294 = vmatprep.subr.bf16.mxu0 0
        %1295 = vmatpush1.bf16.xpose.msra.mxu0 0
        %1296 = vmatprep.subr.bf16.mxu0 0
        %1297 = vmatpush1.bf16.xpose.msra.mxu0 0
        %1298 = vmatprep.subr.bf16.mxu0 0
        %1299 = vmatpush1.bf16.xpose.msra.mxu0 0
        %1300 = vmatprep.subr.bf16.mxu0 0
        %1301 = vmatpush1.bf16.xpose.msra.mxu0 0
        %1302 = vmatprep.subr.bf16.mxu0 0
        %1303 = vmatpush1.bf16.xpose.msra.mxu0 0
        %1304 = vmatprep.subr.bf16.mxu0 0
        %1305 = vmatpush1.bf16.xpose.msra.mxu0 0
        %1306 = vmatprep.subr.bf16.mxu0 0
        %1307 = vmatpush1.bf16.xpose.msra.mxu0 0
        %1308 = vmatprep.subr.bf16.mxu0 0
        %1309 = vmatpush1.bf16.xpose.msra.mxu0 %v1292
        %1310 = vmatprep.subr.bf16.mxu0 0
        %1311 = vmatpush2.bf16.xpose.msra.mxu0 0
        %1312 = vmatprep.subr.bf16.mxu0 0
        %1313 = vmatpush2.bf16.xpose.msra.mxu0 0
        %1314 = vmatprep.subr.bf16.mxu0 0
        %1315 = vmatpush2.bf16.xpose.msra.mxu0 0
        %1316 = vmatprep.subr.bf16.mxu0 0
        %1317 = vmatpush2.bf16.xpose.msra.mxu0 0
        %1318 = vmatprep.subr.bf16.mxu0 0
        %1319 = vmatpush2.bf16.xpose.msra.mxu0 0
        %1320 = vmatprep.subr.bf16.mxu0 0
        %1321 = vmatpush2.bf16.xpose.msra.mxu0 0
        %1322 = vmatprep.subr.bf16.mxu0 0
        %1323 = vmatpush2.bf16.xpose.msra.mxu0 0
        %1324 = vmatprep.subr.bf16.mxu0 0
        %1325 = vmatpush2.bf16.xpose.msra.mxu0 0
        %1326 = vmatprep.mubr.bf16.mxu0 0
        %1327 = vmatmul.mubr.bf16.gmra.mxu0 %v1289
        %v1328 = vpop.f32.mrf.mxu0
        %v1329 = vadd.f32 0.0, %v1328
        %v1330 = vpop.f32.mrf.mxu0
        %v1331 = vpop.f32.mrf.mxu0
        %v1332 = vpop.f32.mrf.mxu0
        %1333 = vdwg.mxu0
        %vm1334 = vcmask 64512
        %v1335 = vsel %vm1334, %v1182, -inf
        %1336 = vmax.xlane.f32.xlu0 %v1335
        %v1337 = vpop.xlane.xlu0 %1336
        %v1338 = vsel %vm1334, %v1231, -inf
        %1339 = vmax.xlane.f32.xlu0 %v1338
        %v1340 = vpop.xlane.xlu0 %1339
        %v1341 = vsel %vm1334, %v1280, -inf
        %1342 = vmax.xlane.f32.xlu0 %v1341
        %v1343 = vpop.xlane.xlu0 %1342
        %v1344 = vsel %vm1334, %v1329, -inf
        %1345 = vmax.xlane.f32.xlu0 %v1344
        %v1346 = vpop.xlane.xlu0 %1345
        %v1347 = vsub.f32 %v1182, %v1337
        %v1348 = vsub.f32 %v1231, %v1340
        %v1349 = vsub.f32 %v1280, %v1343
        %v1350 = vsub.f32 %v1329, %v1346
        %v1351 = vmul.f32 %v1347, 1.442695
        %v1352 = vpow.pop %v1351
        %v1353 = vmul.f32 %v1348, 1.442695
        %v1354 = vpow.pop %v1353
        %v1355 = vmul.f32 %v1349, 1.442695
        %v1356 = vpow.pop %v1355
        %v1357 = vmul.f32 %v1350, 1.442695
        %v1358 = vpow.pop %v1357
        %v1359 = vsel %vm1334, %v1352, 0.0
        %1360 = vadd.xlane.f32.xlu0 %v1359
        %v1361 = vpop.xlane.xlu0 %1360
        %v1362 = vsel %vm1334, %v1354, 0.0
        %1363 = vadd.xlane.f32.xlu0 %v1362
        %v1364 = vpop.xlane.xlu0 %1363
        %v1365 = vsel %vm1334, %v1356, 0.0
        %1366 = vadd.xlane.f32.xlu0 %v1365
        %v1367 = vpop.xlane.xlu0 %1366
        %v1368 = vsel %vm1334, %v1358, 0.0
        %1369 = vadd.xlane.f32.xlu0 %v1368
        %v1370 = vpop.xlane.xlu0 %1369
        %v1371 = vrcp.pop %v1361
        %v1372 = vrcp.pop %v1364
        %v1373 = vrcp.pop %v1367
        %v1374 = vrcp.pop %v1370
        %v1375 = vmul.f32 %v1352, %v1371
        %v1376 = vmul.f32 %v1354, %v1372
        %v1377 = vmul.f32 %v1356, %v1373
        %v1378 = vmul.f32 %v1358, %v1374
        %v1379 = vpack.c.bf16 %v1375, %v1375
        %v1380 = vpack.c.bf16 %v1376, %v1376
        %v1381 = vpack.c.bf16 %v1377, %v1377
        %v1382 = vpack.c.bf16 %v1378, %v1378
        %v1384 = vsel %vm1334, %v1379, 0
        %vm1386 = vcmask 1043456
        %v1388 = vsel %vm1386, %v1133, 0
        %1390 = vmatprep.subr.bf16.mxu0 0
        %1391 = vmatpush1.bf16.msra.mxu0 0
        %1392 = vmatprep.subr.bf16.mxu0 0
        %1393 = vmatpush1.bf16.msra.mxu0 0
        %1394 = vmatprep.subr.bf16.mxu0 0
        %1395 = vmatpush1.bf16.msra.mxu0 0
        %1396 = vmatprep.subr.bf16.mxu0 0
        %1397 = vmatpush1.bf16.msra.mxu0 0
        %1398 = vmatprep.subr.bf16.mxu0 0
        %1399 = vmatpush1.bf16.msra.mxu0 0
        %1400 = vmatprep.subr.bf16.mxu0 0
        %1401 = vmatpush1.bf16.msra.mxu0 0
        %1402 = vmatprep.subr.bf16.mxu0 0
        %1403 = vmatpush1.bf16.msra.mxu0 0
        %1404 = vmatprep.subr.bf16.mxu0 0
        %1405 = vmatpush1.bf16.msra.mxu0 %v1388
        %1406 = vmatprep.subr.bf16.mxu0 0
        %1407 = vmatpush2.bf16.msra.mxu0 0
        %1408 = vmatprep.subr.bf16.mxu0 0
        %1409 = vmatpush2.bf16.msra.mxu0 0
        %1410 = vmatprep.subr.bf16.mxu0 0
        %1411 = vmatpush2.bf16.msra.mxu0 0
        %1412 = vmatprep.subr.bf16.mxu0 0
        %1413 = vmatpush2.bf16.msra.mxu0 0
        %1414 = vmatprep.subr.bf16.mxu0 0
        %1415 = vmatpush2.bf16.msra.mxu0 0
        %1416 = vmatprep.subr.bf16.mxu0 0
        %1417 = vmatpush2.bf16.msra.mxu0 0
        %1418 = vmatprep.subr.bf16.mxu0 0
        %1419 = vmatpush2.bf16.msra.mxu0 0
        %1420 = vmatprep.subr.bf16.mxu0 0
        %1421 = vmatpush2.bf16.msra.mxu0 0
        %1422 = vmatprep.mubr.bf16.mxu0 0
        %1423 = vmatmul.mubr.bf16.gmra.mxu0 %v1384
        %v1424 = vpop.f32.mrf.mxu0
        %v1425 = vadd.f32 0.0, %v1424
        %v1426 = vpop.f32.mrf.mxu0
        %v1427 = vpop.f32.mrf.mxu0
        %v1428 = vpop.f32.mrf.mxu0
        %1429 = vdwg.mxu0
        %v1431 = vsel %vm1334, %v1380, 0
        %v1434 = vsel %vm1386, %v1134, 0
        %1436 = vmatprep.subr.bf16.mxu0 0
        %1437 = vmatpush1.bf16.msra.mxu0 0
        %1438 = vmatprep.subr.bf16.mxu0 0
        %1439 = vmatpush1.bf16.msra.mxu0 0
        %1440 = vmatprep.subr.bf16.mxu0 0
        %1441 = vmatpush1.bf16.msra.mxu0 0
        %1442 = vmatprep.subr.bf16.mxu0 0
        %1443 = vmatpush1.bf16.msra.mxu0 0
        %1444 = vmatprep.subr.bf16.mxu0 0
        %1445 = vmatpush1.bf16.msra.mxu0 0
        %1446 = vmatprep.subr.bf16.mxu0 0
        %1447 = vmatpush1.bf16.msra.mxu0 0
        %1448 = vmatprep.subr.bf16.mxu0 0
        %1449 = vmatpush1.bf16.msra.mxu0 0
        %1450 = vmatprep.subr.bf16.mxu0 0
        %1451 = vmatpush1.bf16.msra.mxu0 %v1434
        %1452 = vmatprep.subr.bf16.mxu0 0
        %1453 = vmatpush2.bf16.msra.mxu0 0
        %1454 = vmatprep.subr.bf16.mxu0 0
        %1455 = vmatpush2.bf16.msra.mxu0 0
        %1456 = vmatprep.subr.bf16.mxu0 0
        %1457 = vmatpush2.bf16.msra.mxu0 0
        %1458 = vmatprep.subr.bf16.mxu0 0
        %1459 = vmatpush2.bf16.msra.mxu0 0
        %1460 = vmatprep.subr.bf16.mxu0 0
        %1461 = vmatpush2.bf16.msra.mxu0 0
        %1462 = vmatprep.subr.bf16.mxu0 0
        %1463 = vmatpush2.bf16.msra.mxu0 0
        %1464 = vmatprep.subr.bf16.mxu0 0
        %1465 = vmatpush2.bf16.msra.mxu0 0
        %1466 = vmatprep.subr.bf16.mxu0 0
        %1467 = vmatpush2.bf16.msra.mxu0 0
        %1468 = vmatprep.mubr.bf16.mxu0 0
        %1469 = vmatmul.mubr.bf16.gmra.mxu0 %v1431
        %v1470 = vpop.f32.mrf.mxu0
        %v1471 = vadd.f32 0.0, %v1470
        %v1472 = vpop.f32.mrf.mxu0
        %v1473 = vpop.f32.mrf.mxu0
        %v1474 = vpop.f32.mrf.mxu0
        %1475 = vdwg.mxu0
        %v1477 = vsel %vm1334, %v1381, 0
        %v1480 = vsel %vm1386, %v1135, 0
        %1482 = vmatprep.subr.bf16.mxu0 0
        %1483 = vmatpush1.bf16.msra.mxu0 0
        %1484 = vmatprep.subr.bf16.mxu0 0
        %1485 = vmatpush1.bf16.msra.mxu0 0
        %1486 = vmatprep.subr.bf16.mxu0 0
        %1487 = vmatpush1.bf16.msra.mxu0 0
        %1488 = vmatprep.subr.bf16.mxu0 0
        %1489 = vmatpush1.bf16.msra.mxu0 0
        %1490 = vmatprep.subr.bf16.mxu0 0
        %1491 = vmatpush1.bf16.msra.mxu0 0
        %1492 = vmatprep.subr.bf16.mxu0 0
        %1493 = vmatpush1.bf16.msra.mxu0 0
        %1494 = vmatprep.subr.bf16.mxu0 0
        %1495 = vmatpush1.bf16.msra.mxu0 0
        %1496 = vmatprep.subr.bf16.mxu0 0
        %1497 = vmatpush1.bf16.msra.mxu0 %v1480
        %1498 = vmatprep.subr.bf16.mxu0 0
        %1499 = vmatpush2.bf16.msra.mxu0 0
        %1500 = vmatprep.subr.bf16.mxu0 0
        %1501 = vmatpush2.bf16.msra.mxu0 0
        %1502 = vmatprep.subr.bf16.mxu0 0
        %1503 = vmatpush2.bf16.msra.mxu0 0
        %1504 = vmatprep.subr.bf16.mxu0 0
        %1505 = vmatpush2.bf16.msra.mxu0 0
        %1506 = vmatprep.subr.bf16.mxu0 0
        %1507 = vmatpush2.bf16.msra.mxu0 0
        %1508 = vmatprep.subr.bf16.mxu0 0
        %1509 = vmatpush2.bf16.msra.mxu0 0
        %1510 = vmatprep.subr.bf16.mxu0 0
        %1511 = vmatpush2.bf16.msra.mxu0 0
        %1512 = vmatprep.subr.bf16.mxu0 0
        %1513 = vmatpush2.bf16.msra.mxu0 0
        %1514 = vmatprep.mubr.bf16.mxu0 0
        %1515 = vmatmul.mubr.bf16.gmra.mxu0 %v1477
        %v1516 = vpop.f32.mrf.mxu0
        %v1517 = vadd.f32 0.0, %v1516
        %v1518 = vpop.f32.mrf.mxu0
        %v1519 = vpop.f32.mrf.mxu0
        %v1520 = vpop.f32.mrf.mxu0
        %1521 = vdwg.mxu0
        %v1523 = vsel %vm1334, %v1382, 0
        %v1526 = vsel %vm1386, %v1136, 0
        %1528 = vmatprep.subr.bf16.mxu0 0
        %1529 = vmatpush1.bf16.msra.mxu0 0
        %1530 = vmatprep.subr.bf16.mxu0 0
        %1531 = vmatpush1.bf16.msra.mxu0 0
        %1532 = vmatprep.subr.bf16.mxu0 0
        %1533 = vmatpush1.bf16.msra.mxu0 0
        %1534 = vmatprep.subr.bf16.mxu0 0
        %1535 = vmatpush1.bf16.msra.mxu0 0
        %1536 = vmatprep.subr.bf16.mxu0 0
        %1537 = vmatpush1.bf16.msra.mxu0 0
        %1538 = vmatprep.subr.bf16.mxu0 0
        %1539 = vmatpush1.bf16.msra.mxu0 0
        %1540 = vmatprep.subr.bf16.mxu0 0
        %1541 = vmatpush1.bf16.msra.mxu0 0
        %1542 = vmatprep.subr.bf16.mxu0 0
        %1543 = vmatpush1.bf16.msra.mxu0 %v1526
        %1544 = vmatprep.subr.bf16.mxu0 0
        %1545 = vmatpush2.bf16.msra.mxu0 0
        %1546 = vmatprep.subr.bf16.mxu0 0
        %1547 = vmatpush2.bf16.msra.mxu0 0
        %1548 = vmatprep.subr.bf16.mxu0 0
        %1549 = vmatpush2.bf16.msra.mxu0 0
        %1550 = vmatprep.subr.bf16.mxu0 0
        %1551 = vmatpush2.bf16.msra.mxu0 0
        %1552 = vmatprep.subr.bf16.mxu0 0
        %1553 = vmatpush2.bf16.msra.mxu0 0
        %1554 = vmatprep.subr.bf16.mxu0 0
        %1555 = vmatpush2.bf16.msra.mxu0 0
        %1556 = vmatprep.subr.bf16.mxu0 0
        %1557 = vmatpush2.bf16.msra.mxu0 0
        %1558 = vmatprep.subr.bf16.mxu0 0
        %1559 = vmatpush2.bf16.msra.mxu0 0
        %1560 = vmatprep.mubr.bf16.mxu0 0
        %1561 = vmatmul.mubr.bf16.gmra.mxu0 %v1523
        %v1562 = vpop.f32.mrf.mxu0
        %v1563 = vadd.f32 0.0, %v1562
        %v1564 = vpop.f32.mrf.mxu0
        %v1565 = vpop.f32.mrf.mxu0
        %v1566 = vpop.f32.mrf.mxu0
        %1567 = vdwg.mxu0
        %v1568 = vpack.c.bf16 %v1471, %v1425
        %v1569 = vpack.c.bf16 %v1563, %v1517
        %v1570 = vld [vmem:[#allocation11] sm:$0xf]
        %v1571 = vld [vmem:[#allocation11 + $0x4] sm:$0xf]
        %1572 = vrot.lane.b32.xlu0 %v1129, 112
        %v1573 = vpop.permute.xlu0 %1572
        %1574 = vrot.lane.b32.xlu0 %v1129, 48
        %v1575 = vpop.permute.xlu0 %1574
        %v1577 = vsel %vm1140, %v1573, 0
        %v1580 = vsel %vm1140, %v1575, 0
        %1582 = vmatprep.subr.bf16.mxu0 0
        %1583 = vmatpush1.bf16.xpose.msra.mxu0 0
        %1584 = vmatprep.subr.bf16.mxu0 0
        %1585 = vmatpush1.bf16.xpose.msra.mxu0 0
        %1586 = vmatprep.subr.bf16.mxu0 0
        %1587 = vmatpush1.bf16.xpose.msra.mxu0 0
        %1588 = vmatprep.subr.bf16.mxu0 0
        %1589 = vmatpush1.bf16.xpose.msra.mxu0 0
        %1590 = vmatprep.subr.bf16.mxu0 0
        %1591 = vmatpush1.bf16.xpose.msra.mxu0 0
        %1592 = vmatprep.subr.bf16.mxu0 0
        %1593 = vmatpush1.bf16.xpose.msra.mxu0 0
        %1594 = vmatprep.subr.bf16.mxu0 0
        %1595 = vmatpush1.bf16.xpose.msra.mxu0 0
        %1596 = vmatprep.subr.bf16.mxu0 0
        %1597 = vmatpush1.bf16.xpose.msra.mxu0 %v1580
        %1598 = vmatprep.subr.bf16.mxu0 0
        %1599 = vmatpush2.bf16.xpose.msra.mxu0 0
        %1600 = vmatprep.subr.bf16.mxu0 0
        %1601 = vmatpush2.bf16.xpose.msra.mxu0 0
        %1602 = vmatprep.subr.bf16.mxu0 0
        %1603 = vmatpush2.bf16.xpose.msra.mxu0 0
        %1604 = vmatprep.subr.bf16.mxu0 0
        %1605 = vmatpush2.bf16.xpose.msra.mxu0 0
        %1606 = vmatprep.subr.bf16.mxu0 0
        %1607 = vmatpush2.bf16.xpose.msra.mxu0 0
        %1608 = vmatprep.subr.bf16.mxu0 0
        %1609 = vmatpush2.bf16.xpose.msra.mxu0 0
        %1610 = vmatprep.subr.bf16.mxu0 0
        %1611 = vmatpush2.bf16.xpose.msra.mxu0 0
        %1612 = vmatprep.subr.bf16.mxu0 0
        %1613 = vmatpush2.bf16.xpose.msra.mxu0 0
        %1614 = vmatprep.mubr.bf16.mxu0 0
        %1615 = vmatmul.mubr.bf16.gmra.mxu0 %v1577
        %v1616 = vpop.f32.mrf.mxu0
        %v1617 = vadd.f32 0.0, %v1616
        %v1618 = vpop.f32.mrf.mxu0
        %v1619 = vpop.f32.mrf.mxu0
        %v1620 = vpop.f32.mrf.mxu0
        %1621 = vdwg.mxu0
        %1622 = vrot.lane.b32.xlu0 %v1130, 112
        %v1623 = vpop.permute.xlu0 %1622
        %1624 = vrot.lane.b32.xlu0 %v1130, 48
        %v1625 = vpop.permute.xlu0 %1624
        %v1627 = vsel %vm1140, %v1623, 0
        %v1630 = vsel %vm1140, %v1625, 0
        %1632 = vmatprep.subr.bf16.mxu0 0
        %1633 = vmatpush1.bf16.xpose.msra.mxu0 0
        %1634 = vmatprep.subr.bf16.mxu0 0
        %1635 = vmatpush1.bf16.xpose.msra.mxu0 0
        %1636 = vmatprep.subr.bf16.mxu0 0
        %1637 = vmatpush1.bf16.xpose.msra.mxu0 0
        %1638 = vmatprep.subr.bf16.mxu0 0
        %1639 = vmatpush1.bf16.xpose.msra.mxu0 0
        %1640 = vmatprep.subr.bf16.mxu0 0
        %1641 = vmatpush1.bf16.xpose.msra.mxu0 0
        %1642 = vmatprep.subr.bf16.mxu0 0
        %1643 = vmatpush1.bf16.xpose.msra.mxu0 0
        %1644 = vmatprep.subr.bf16.mxu0 0
        %1645 = vmatpush1.bf16.xpose.msra.mxu0 0
        %1646 = vmatprep.subr.bf16.mxu0 0
        %1647 = vmatpush1.bf16.xpose.msra.mxu0 %v1630
        %1648 = vmatprep.subr.bf16.mxu0 0
        %1649 = vmatpush2.bf16.xpose.msra.mxu0 0
        %1650 = vmatprep.subr.bf16.mxu0 0
        %1651 = vmatpush2.bf16.xpose.msra.mxu0 0
        %1652 = vmatprep.subr.bf16.mxu0 0
        %1653 = vmatpush2.bf16.xpose.msra.mxu0 0
        %1654 = vmatprep.subr.bf16.mxu0 0
        %1655 = vmatpush2.bf16.xpose.msra.mxu0 0
        %1656 = vmatprep.subr.bf16.mxu0 0
        %1657 = vmatpush2.bf16.xpose.msra.mxu0 0
        %1658 = vmatprep.subr.bf16.mxu0 0
        %1659 = vmatpush2.bf16.xpose.msra.mxu0 0
        %1660 = vmatprep.subr.bf16.mxu0 0
        %1661 = vmatpush2.bf16.xpose.msra.mxu0 0
        %1662 = vmatprep.subr.bf16.mxu0 0
        %1663 = vmatpush2.bf16.xpose.msra.mxu0 0
        %1664 = vmatprep.mubr.bf16.mxu0 0
        %1665 = vmatmul.mubr.bf16.gmra.mxu0 %v1627
        %v1666 = vpop.f32.mrf.mxu0
        %v1667 = vadd.f32 0.0, %v1666
        %v1668 = vpop.f32.mrf.mxu0
        %v1669 = vpop.f32.mrf.mxu0
        %v1670 = vpop.f32.mrf.mxu0
        %1671 = vdwg.mxu0
        %1672 = vrot.lane.b32.xlu0 %v1131, 112
        %v1673 = vpop.permute.xlu0 %1672
        %1674 = vrot.lane.b32.xlu0 %v1131, 48
        %v1675 = vpop.permute.xlu0 %1674
        %v1677 = vsel %vm1140, %v1673, 0
        %v1680 = vsel %vm1140, %v1675, 0
        %1682 = vmatprep.subr.bf16.mxu0 0
        %1683 = vmatpush1.bf16.xpose.msra.mxu0 0
        %1684 = vmatprep.subr.bf16.mxu0 0
        %1685 = vmatpush1.bf16.xpose.msra.mxu0 0
        %1686 = vmatprep.subr.bf16.mxu0 0
        %1687 = vmatpush1.bf16.xpose.msra.mxu0 0
        %1688 = vmatprep.subr.bf16.mxu0 0
        %1689 = vmatpush1.bf16.xpose.msra.mxu0 0
        %1690 = vmatprep.subr.bf16.mxu0 0
        %1691 = vmatpush1.bf16.xpose.msra.mxu0 0
        %1692 = vmatprep.subr.bf16.mxu0 0
        %1693 = vmatpush1.bf16.xpose.msra.mxu0 0
        %1694 = vmatprep.subr.bf16.mxu0 0
        %1695 = vmatpush1.bf16.xpose.msra.mxu0 0
        %1696 = vmatprep.subr.bf16.mxu0 0
        %1697 = vmatpush1.bf16.xpose.msra.mxu0 %v1680
        %1698 = vmatprep.subr.bf16.mxu0 0
        %1699 = vmatpush2.bf16.xpose.msra.mxu0 0
        %1700 = vmatprep.subr.bf16.mxu0 0
        %1701 = vmatpush2.bf16.xpose.msra.mxu0 0
        %1702 = vmatprep.subr.bf16.mxu0 0
        %1703 = vmatpush2.bf16.xpose.msra.mxu0 0
        %1704 = vmatprep.subr.bf16.mxu0 0
        %1705 = vmatpush2.bf16.xpose.msra.mxu0 0
        %1706 = vmatprep.subr.bf16.mxu0 0
        %1707 = vmatpush2.bf16.xpose.msra.mxu0 0
        %1708 = vmatprep.subr.bf16.mxu0 0
        %1709 = vmatpush2.bf16.xpose.msra.mxu0 0
        %1710 = vmatprep.subr.bf16.mxu0 0
        %1711 = vmatpush2.bf16.xpose.msra.mxu0 0
        %1712 = vmatprep.subr.bf16.mxu0 0
        %1713 = vmatpush2.bf16.xpose.msra.mxu0 0
        %1714 = vmatprep.mubr.bf16.mxu0 0
        %1715 = vmatmul.mubr.bf16.gmra.mxu0 %v1677
        %v1716 = vpop.f32.mrf.mxu0
        %v1717 = vadd.f32 0.0, %v1716
        %v1718 = vpop.f32.mrf.mxu0
        %v1719 = vpop.f32.mrf.mxu0
        %v1720 = vpop.f32.mrf.mxu0
        %1721 = vdwg.mxu0
        %1722 = vrot.lane.b32.xlu0 %v1132, 112
        %v1723 = vpop.permute.xlu0 %1722
        %1724 = vrot.lane.b32.xlu0 %v1132, 48
        %v1725 = vpop.permute.xlu0 %1724
        %v1727 = vsel %vm1140, %v1723, 0
        %v1730 = vsel %vm1140, %v1725, 0
        %1732 = vmatprep.subr.bf16.mxu0 0
        %1733 = vmatpush1.bf16.xpose.msra.mxu0 0
        %1734 = vmatprep.subr.bf16.mxu0 0
        %1735 = vmatpush1.bf16.xpose.msra.mxu0 0
        %1736 = vmatprep.subr.bf16.mxu0 0
        %1737 = vmatpush1.bf16.xpose.msra.mxu0 0
        %1738 = vmatprep.subr.bf16.mxu0 0
        %1739 = vmatpush1.bf16.xpose.msra.mxu0 0
        %1740 = vmatprep.subr.bf16.mxu0 0
        %1741 = vmatpush1.bf16.xpose.msra.mxu0 0
        %1742 = vmatprep.subr.bf16.mxu0 0
        %1743 = vmatpush1.bf16.xpose.msra.mxu0 0
        %1744 = vmatprep.subr.bf16.mxu0 0
        %1745 = vmatpush1.bf16.xpose.msra.mxu0 0
        %1746 = vmatprep.subr.bf16.mxu0 0
        %1747 = vmatpush1.bf16.xpose.msra.mxu0 %v1730
        %1748 = vmatprep.subr.bf16.mxu0 0
        %1749 = vmatpush2.bf16.xpose.msra.mxu0 0
        %1750 = vmatprep.subr.bf16.mxu0 0
        %1751 = vmatpush2.bf16.xpose.msra.mxu0 0
        %1752 = vmatprep.subr.bf16.mxu0 0
        %1753 = vmatpush2.bf16.xpose.msra.mxu0 0
        %1754 = vmatprep.subr.bf16.mxu0 0
        %1755 = vmatpush2.bf16.xpose.msra.mxu0 0
        %1756 = vmatprep.subr.bf16.mxu0 0
        %1757 = vmatpush2.bf16.xpose.msra.mxu0 0
        %1758 = vmatprep.subr.bf16.mxu0 0
        %1759 = vmatpush2.bf16.xpose.msra.mxu0 0
        %1760 = vmatprep.subr.bf16.mxu0 0
        %1761 = vmatpush2.bf16.xpose.msra.mxu0 0
        %1762 = vmatprep.subr.bf16.mxu0 0
        %1763 = vmatpush2.bf16.xpose.msra.mxu0 0
        %1764 = vmatprep.mubr.bf16.mxu0 0
        %1765 = vmatmul.mubr.bf16.gmra.mxu0 %v1727
        %v1766 = vpop.f32.mrf.mxu0
        %v1767 = vadd.f32 0.0, %v1766
        %v1768 = vpop.f32.mrf.mxu0
        %v1769 = vpop.f32.mrf.mxu0
        %v1770 = vpop.f32.mrf.mxu0
        %1771 = vdwg.mxu0
        %v1772 = vsel %vm1334, %v1617, -inf
        %1773 = vmax.xlane.f32.xlu0 %v1772
        %v1774 = vpop.xlane.xlu0 %1773
        %v1775 = vsel %vm1334, %v1667, -inf
        %1776 = vmax.xlane.f32.xlu0 %v1775
        %v1777 = vpop.xlane.xlu0 %1776
        %v1778 = vsel %vm1334, %v1717, -inf
        %1779 = vmax.xlane.f32.xlu0 %v1778
        %v1780 = vpop.xlane.xlu0 %1779
        %v1781 = vsel %vm1334, %v1767, -inf
        %1782 = vmax.xlane.f32.xlu0 %v1781
        %v1783 = vpop.xlane.xlu0 %1782
        %v1784 = vsub.f32 %v1617, %v1774
        %v1785 = vsub.f32 %v1667, %v1777
        %v1786 = vsub.f32 %v1717, %v1780
        %v1787 = vsub.f32 %v1767, %v1783
        %v1788 = vmul.f32 %v1784, 1.442695
        %v1789 = vpow.pop %v1788
        %v1790 = vmul.f32 %v1785, 1.442695
        %v1791 = vpow.pop %v1790
        %v1792 = vmul.f32 %v1786, 1.442695
        %v1793 = vpow.pop %v1792
        %v1794 = vmul.f32 %v1787, 1.442695
        %v1795 = vpow.pop %v1794
        %v1796 = vsel %vm1334, %v1789, 0.0
        %1797 = vadd.xlane.f32.xlu0 %v1796
        %v1798 = vpop.xlane.xlu0 %1797
        %v1799 = vsel %vm1334, %v1791, 0.0
        %1800 = vadd.xlane.f32.xlu0 %v1799
        %v1801 = vpop.xlane.xlu0 %1800
        %v1802 = vsel %vm1334, %v1793, 0.0
        %1803 = vadd.xlane.f32.xlu0 %v1802
        %v1804 = vpop.xlane.xlu0 %1803
        %v1805 = vsel %vm1334, %v1795, 0.0
        %1806 = vadd.xlane.f32.xlu0 %v1805
        %v1807 = vpop.xlane.xlu0 %1806
        %v1808 = vrcp.pop %v1798
        %v1809 = vrcp.pop %v1801
        %v1810 = vrcp.pop %v1804
        %v1811 = vrcp.pop %v1807
        %v1812 = vmul.f32 %v1789, %v1808
        %v1813 = vmul.f32 %v1791, %v1809
        %v1814 = vmul.f32 %v1793, %v1810
        %v1815 = vmul.f32 %v1795, %v1811
        %v1816 = vpack.c.bf16 %v1812, %v1812
        %v1817 = vpack.c.bf16 %v1813, %v1813
        %v1818 = vpack.c.bf16 %v1814, %v1814
        %v1819 = vpack.c.bf16 %v1815, %v1815
        %1821 = vrot.lane.b32.xlu0 %v1133, 112
        %v1822 = vpop.permute.xlu0 %1821
        %v1824 = vsel %vm1334, %v1816, 0
        %v1827 = vsel %vm1386, %v1822, 0
        %1829 = vmatprep.subr.bf16.mxu0 0
        %1830 = vmatpush1.bf16.msra.mxu0 0
        %1831 = vmatprep.subr.bf16.mxu0 0
        %1832 = vmatpush1.bf16.msra.mxu0 0
        %1833 = vmatprep.subr.bf16.mxu0 0
        %1834 = vmatpush1.bf16.msra.mxu0 0
        %1835 = vmatprep.subr.bf16.mxu0 0
        %1836 = vmatpush1.bf16.msra.mxu0 0
        %1837 = vmatprep.subr.bf16.mxu0 0
        %1838 = vmatpush1.bf16.msra.mxu0 0
        %1839 = vmatprep.subr.bf16.mxu0 0
        %1840 = vmatpush1.bf16.msra.mxu0 0
        %1841 = vmatprep.subr.bf16.mxu0 0
        %1842 = vmatpush1.bf16.msra.mxu0 0
        %1843 = vmatprep.subr.bf16.mxu0 0
        %1844 = vmatpush1.bf16.msra.mxu0 %v1827
        %1845 = vmatprep.subr.bf16.mxu0 0
        %1846 = vmatpush2.bf16.msra.mxu0 0
        %1847 = vmatprep.subr.bf16.mxu0 0
        %1848 = vmatpush2.bf16.msra.mxu0 0
        %1849 = vmatprep.subr.bf16.mxu0 0
        %1850 = vmatpush2.bf16.msra.mxu0 0
        %1851 = vmatprep.subr.bf16.mxu0 0
        %1852 = vmatpush2.bf16.msra.mxu0 0
        %1853 = vmatprep.subr.bf16.mxu0 0
        %1854 = vmatpush2.bf16.msra.mxu0 0
        %1855 = vmatprep.subr.bf16.mxu0 0
        %1856 = vmatpush2.bf16.msra.mxu0 0
        %1857 = vmatprep.subr.bf16.mxu0 0
        %1858 = vmatpush2.bf16.msra.mxu0 0
        %1859 = vmatprep.subr.bf16.mxu0 0
        %1860 = vmatpush2.bf16.msra.mxu0 0
        %1861 = vmatprep.mubr.bf16.mxu0 0
        %1862 = vmatmul.mubr.bf16.gmra.mxu0 %v1824
        %v1863 = vpop.f32.mrf.mxu0
        %v1864 = vadd.f32 0.0, %v1863
        %v1865 = vpop.f32.mrf.mxu0
        %v1866 = vpop.f32.mrf.mxu0
        %v1867 = vpop.f32.mrf.mxu0
        %1868 = vdwg.mxu0
        %1870 = vrot.lane.b32.xlu0 %v1134, 112
        %v1871 = vpop.permute.xlu0 %1870
        %v1873 = vsel %vm1334, %v1817, 0
        %v1876 = vsel %vm1386, %v1871, 0
        %1878 = vmatprep.subr.bf16.mxu0 0
        %1879 = vmatpush1.bf16.msra.mxu0 0
        %1880 = vmatprep.subr.bf16.mxu0 0
        %1881 = vmatpush1.bf16.msra.mxu0 0
        %1882 = vmatprep.subr.bf16.mxu0 0
        %1883 = vmatpush1.bf16.msra.mxu0 0
        %1884 = vmatprep.subr.bf16.mxu0 0
        %1885 = vmatpush1.bf16.msra.mxu0 0
        %1886 = vmatprep.subr.bf16.mxu0 0
        %1887 = vmatpush1.bf16.msra.mxu0 0
        %1888 = vmatprep.subr.bf16.mxu0 0
        %1889 = vmatpush1.bf16.msra.mxu0 0
        %1890 = vmatprep.subr.bf16.mxu0 0
        %1891 = vmatpush1.bf16.msra.mxu0 0
        %1892 = vmatprep.subr.bf16.mxu0 0
        %1893 = vmatpush1.bf16.msra.mxu0 %v1876
        %1894 = vmatprep.subr.bf16.mxu0 0
        %1895 = vmatpush2.bf16.msra.mxu0 0
        %1896 = vmatprep.subr.bf16.mxu0 0
        %1897 = vmatpush2.bf16.msra.mxu0 0
        %1898 = vmatprep.subr.bf16.mxu0 0
        %1899 = vmatpush2.bf16.msra.mxu0 0
        %1900 = vmatprep.subr.bf16.mxu0 0
        %1901 = vmatpush2.bf16.msra.mxu0 0
        %1902 = vmatprep.subr.bf16.mxu0 0
        %1903 = vmatpush2.bf16.msra.mxu0 0
        %1904 = vmatprep.subr.bf16.mxu0 0
        %1905 = vmatpush2.bf16.msra.mxu0 0
        %1906 = vmatprep.subr.bf16.mxu0 0
        %1907 = vmatpush2.bf16.msra.mxu0 0
        %1908 = vmatprep.subr.bf16.mxu0 0
        %1909 = vmatpush2.bf16.msra.mxu0 0
        %1910 = vmatprep.mubr.bf16.mxu0 0
        %1911 = vmatmul.mubr.bf16.gmra.mxu0 %v1873
        %v1912 = vpop.f32.mrf.mxu0
        %v1913 = vadd.f32 0.0, %v1912
        %v1914 = vpop.f32.mrf.mxu0
        %v1915 = vpop.f32.mrf.mxu0
        %v1916 = vpop.f32.mrf.mxu0
        %1917 = vdwg.mxu0
        %1919 = vrot.lane.b32.xlu0 %v1135, 112
        %v1920 = vpop.permute.xlu0 %1919
        %v1922 = vsel %vm1334, %v1818, 0
        %v1925 = vsel %vm1386, %v1920, 0
        %1927 = vmatprep.subr.bf16.mxu0 0
        %1928 = vmatpush1.bf16.msra.mxu0 0
        %1929 = vmatprep.subr.bf16.mxu0 0
        %1930 = vmatpush1.bf16.msra.mxu0 0
        %1931 = vmatprep.subr.bf16.mxu0 0
        %1932 = vmatpush1.bf16.msra.mxu0 0
        %1933 = vmatprep.subr.bf16.mxu0 0
        %1934 = vmatpush1.bf16.msra.mxu0 0
        %1935 = vmatprep.subr.bf16.mxu0 0
        %1936 = vmatpush1.bf16.msra.mxu0 0
        %1937 = vmatprep.subr.bf16.mxu0 0
        %1938 = vmatpush1.bf16.msra.mxu0 0
        %1939 = vmatprep.subr.bf16.mxu0 0
        %1940 = vmatpush1.bf16.msra.mxu0 0
        %1941 = vmatprep.subr.bf16.mxu0 0
        %1942 = vmatpush1.bf16.msra.mxu0 %v1925
        %1943 = vmatprep.subr.bf16.mxu0 0
        %1944 = vmatpush2.bf16.msra.mxu0 0
        %1945 = vmatprep.subr.bf16.mxu0 0
        %1946 = vmatpush2.bf16.msra.mxu0 0
        %1947 = vmatprep.subr.bf16.mxu0 0
        %1948 = vmatpush2.bf16.msra.mxu0 0
        %1949 = vmatprep.subr.bf16.mxu0 0
        %1950 = vmatpush2.bf16.msra.mxu0 0
        %1951 = vmatprep.subr.bf16.mxu0 0
        %1952 = vmatpush2.bf16.msra.mxu0 0
        %1953 = vmatprep.subr.bf16.mxu0 0
        %1954 = vmatpush2.bf16.msra.mxu0 0
        %1955 = vmatprep.subr.bf16.mxu0 0
        %1956 = vmatpush2.bf16.msra.mxu0 0
        %1957 = vmatprep.subr.bf16.mxu0 0
        %1958 = vmatpush2.bf16.msra.mxu0 0
        %1959 = vmatprep.mubr.bf16.mxu0 0
        %1960 = vmatmul.mubr.bf16.gmra.mxu0 %v1922
        %v1961 = vpop.f32.mrf.mxu0
        %v1962 = vadd.f32 0.0, %v1961
        %v1963 = vpop.f32.mrf.mxu0
        %v1964 = vpop.f32.mrf.mxu0
        %v1965 = vpop.f32.mrf.mxu0
        %1966 = vdwg.mxu0
        %1968 = vrot.lane.b32.xlu0 %v1136, 112
        %v1969 = vpop.permute.xlu0 %1968
        %v1971 = vsel %vm1334, %v1819, 0
        %v1974 = vsel %vm1386, %v1969, 0
        %1976 = vmatprep.subr.bf16.mxu0 0
        %1977 = vmatpush1.bf16.msra.mxu0 0
        %1978 = vmatprep.subr.bf16.mxu0 0
        %1979 = vmatpush1.bf16.msra.mxu0 0
        %1980 = vmatprep.subr.bf16.mxu0 0
        %1981 = vmatpush1.bf16.msra.mxu0 0
        %1982 = vmatprep.subr.bf16.mxu0 0
        %1983 = vmatpush1.bf16.msra.mxu0 0
        %1984 = vmatprep.subr.bf16.mxu0 0
        %1985 = vmatpush1.bf16.msra.mxu0 0
        %1986 = vmatprep.subr.bf16.mxu0 0
        %1987 = vmatpush1.bf16.msra.mxu0 0
        %1988 = vmatprep.subr.bf16.mxu0 0
        %1989 = vmatpush1.bf16.msra.mxu0 0
        %1990 = vmatprep.subr.bf16.mxu0 0
        %1991 = vmatpush1.bf16.msra.mxu0 %v1974
        %1992 = vmatprep.subr.bf16.mxu0 0
        %1993 = vmatpush2.bf16.msra.mxu0 0
        %1994 = vmatprep.subr.bf16.mxu0 0
        %1995 = vmatpush2.bf16.msra.mxu0 0
        %1996 = vmatprep.subr.bf16.mxu0 0
        %1997 = vmatpush2.bf16.msra.mxu0 0
        %1998 = vmatprep.subr.bf16.mxu0 0
        %1999 = vmatpush2.bf16.msra.mxu0 0
        %2000 = vmatprep.subr.bf16.mxu0 0
        %2001 = vmatpush2.bf16.msra.mxu0 0
        %2002 = vmatprep.subr.bf16.mxu0 0
        %2003 = vmatpush2.bf16.msra.mxu0 0
        %2004 = vmatprep.subr.bf16.mxu0 0
        %2005 = vmatpush2.bf16.msra.mxu0 0
        %2006 = vmatprep.subr.bf16.mxu0 0
        %2007 = vmatpush2.bf16.msra.mxu0 0
        %2008 = vmatprep.mubr.bf16.mxu0 0
        %2009 = vmatmul.mubr.bf16.gmra.mxu0 %v1971
        %v2010 = vpop.f32.mrf.mxu0
        %v2011 = vadd.f32 0.0, %v2010
        %v2012 = vpop.f32.mrf.mxu0
        %v2013 = vpop.f32.mrf.mxu0
        %v2014 = vpop.f32.mrf.mxu0
        %2015 = vdwg.mxu0
        %v2016 = vpack.c.bf16 %v1913, %v1864
        %v2017 = vpack.c.bf16 %v2011, %v1962
        %s2018 = scalar_lea.vmem [#allocation11], 8
        %v2019 = vld [vmem:[%s2018] sm:$0xf]
        %v2020 = vld [vmem:[%s2018 + $0x4] sm:$0xf]
        %v2023 = vunpack.c.l.b16 %v2019
        %v2024 = vunpack.c.l.b16 %v2020
        %v2025 = vpack.c.b16 %v2024, %v2023
        %v2028 = vsel %vm1140, %v2016, 0
        %v2031 = vsel %vm1140, %v2017, 0
        %2033 = vmatprep.subr.bf16.mxu0 0
        %2034 = vmatpush1.bf16.msra.mxu0 0
        %2035 = vmatprep.subr.bf16.mxu0 0
        %2036 = vmatpush1.bf16.msra.mxu0 0
        %2037 = vmatprep.subr.bf16.mxu0 0
        %2038 = vmatpush1.bf16.msra.mxu0 0
        %2039 = vmatprep.subr.bf16.mxu0 0
        %2040 = vmatpush1.bf16.msra.mxu0 0
        %2041 = vmatprep.subr.bf16.mxu0 0
        %2042 = vmatpush1.bf16.msra.mxu0 0
        %2043 = vmatprep.subr.bf16.mxu0 0
        %2044 = vmatpush1.bf16.msra.mxu0 0
        %2045 = vmatprep.subr.bf16.mxu0 0
        %2046 = vmatpush1.bf16.msra.mxu0 0
        %2047 = vmatprep.subr.bf16.mxu0 0
        %2048 = vmatpush1.bf16.msra.mxu0 %v2025
        %2049 = vmatprep.subr.bf16.mxu0 0
        %2050 = vmatpush2.bf16.msra.mxu0 0
        %2051 = vmatprep.subr.bf16.mxu0 0
        %2052 = vmatpush2.bf16.msra.mxu0 0
        %2053 = vmatprep.subr.bf16.mxu0 0
        %2054 = vmatpush2.bf16.msra.mxu0 0
        %2055 = vmatprep.subr.bf16.mxu0 0
        %2056 = vmatpush2.bf16.msra.mxu0 0
        %2057 = vmatprep.subr.bf16.mxu0 0
        %2058 = vmatpush2.bf16.msra.mxu0 0
        %2059 = vmatprep.subr.bf16.mxu0 0
        %2060 = vmatpush2.bf16.msra.mxu0 0
        %2061 = vmatprep.subr.bf16.mxu0 0
        %2062 = vmatpush2.bf16.msra.mxu0 0
        %2063 = vmatprep.subr.bf16.mxu0 0
        %2064 = vmatpush2.bf16.msra.mxu0 0
        %2065 = vmatprep.mubr.bf16.mxu0 0
        %2066 = vmatmul.mubr.bf16.gmra.mxu0 %v2028
        %v2067 = vpop.f32.mrf.mxu0
        %v2068 = vadd.f32 0.0, %v2067
        %v2069 = vpop.f32.mrf.mxu0
        %v2070 = vpop.f32.mrf.mxu0
        %v2071 = vadd.f32 0.0, %v2070
        %v2072 = vpop.f32.mrf.mxu0
        %2073 = vmatprep.mubr.bf16.mxu0 0
        %2074 = vmatmul.mubr.bf16.gmra.mxu0 %v2031
        %v2075 = vpop.f32.mrf.mxu0
        %v2076 = vadd.f32 0.0, %v2075
        %v2077 = vpop.f32.mrf.mxu0
        %v2078 = vpop.f32.mrf.mxu0
        %v2079 = vadd.f32 0.0, %v2078
        %v2080 = vpop.f32.mrf.mxu0
        %2081 = vdwg.mxu0
        %v2084 = vunpack.c.l.b16 %v1570
        %v2085 = vunpack.c.l.b16 %v1571
        %v2086 = vpack.c.b16 %v2085, %v2084
        %v2089 = vsel %vm1140, %v1568, 0
        %v2092 = vsel %vm1140, %v1569, 0
        %2094 = vmatprep.subr.bf16.mxu0 0
        %2095 = vmatpush1.bf16.msra.mxu0 0
        %2096 = vmatprep.subr.bf16.mxu0 0
        %2097 = vmatpush1.bf16.msra.mxu0 0
        %2098 = vmatprep.subr.bf16.mxu0 0
        %2099 = vmatpush1.bf16.msra.mxu0 0
        %2100 = vmatprep.subr.bf16.mxu0 0
        %2101 = vmatpush1.bf16.msra.mxu0 0
        %2102 = vmatprep.subr.bf16.mxu0 0
        %2103 = vmatpush1.bf16.msra.mxu0 0
        %2104 = vmatprep.subr.bf16.mxu0 0
        %2105 = vmatpush1.bf16.msra.mxu0 0
        %2106 = vmatprep.subr.bf16.mxu0 0
        %2107 = vmatpush1.bf16.msra.mxu0 0
        %2108 = vmatprep.subr.bf16.mxu0 0
        %2109 = vmatpush1.bf16.msra.mxu0 %v2086
        %2110 = vmatprep.subr.bf16.mxu0 0
        %2111 = vmatpush2.bf16.msra.mxu0 0
        %2112 = vmatprep.subr.bf16.mxu0 0
        %2113 = vmatpush2.bf16.msra.mxu0 0
        %2114 = vmatprep.subr.bf16.mxu0 0
        %2115 = vmatpush2.bf16.msra.mxu0 0
        %2116 = vmatprep.subr.bf16.mxu0 0
        %2117 = vmatpush2.bf16.msra.mxu0 0
        %2118 = vmatprep.subr.bf16.mxu0 0
        %2119 = vmatpush2.bf16.msra.mxu0 0
        %2120 = vmatprep.subr.bf16.mxu0 0
        %2121 = vmatpush2.bf16.msra.mxu0 0
        %2122 = vmatprep.subr.bf16.mxu0 0
        %2123 = vmatpush2.bf16.msra.mxu0 0
        %2124 = vmatprep.subr.bf16.mxu0 0
        %2125 = vmatpush2.bf16.msra.mxu0 0
        %2126 = vmatprep.mubr.bf16.mxu0 0
        %2127 = vmatmul.mubr.bf16.gmra.mxu0 %v2089
        %v2128 = vpop.f32.mrf.mxu0
        %v2129 = vadd.f32 %v2068, %v2128
        %v2130 = vpop.f32.mrf.mxu0
        %v2131 = vpop.f32.mrf.mxu0
        %v2132 = vadd.f32 %v2071, %v2131
        %v2133 = vpop.f32.mrf.mxu0
        %2134 = vmatprep.mubr.bf16.mxu0 0
        %2135 = vmatmul.mubr.bf16.gmra.mxu0 %v2092
        %v2136 = vpop.f32.mrf.mxu0
        %v2137 = vadd.f32 %v2076, %v2136
        %v2138 = vpop.f32.mrf.mxu0
        %v2139 = vpop.f32.mrf.mxu0
        %v2140 = vadd.f32 %v2079, %v2139
        %v2141 = vpop.f32.mrf.mxu0
        %2142 = vdwg.mxu0
        %2143 = vrot.lane.b32.xlu0 %v1129, 96
        %v2144 = vpop.permute.xlu0 %2143
        %2145 = vrot.lane.b32.xlu0 %v1129, 32
        %v2146 = vpop.permute.xlu0 %2145
        %v2148 = vsel %vm1140, %v2144, 0
        %v2151 = vsel %vm1140, %v2146, 0
        %2153 = vmatprep.subr.bf16.mxu0 0
        %2154 = vmatpush1.bf16.xpose.msra.mxu0 0
        %2155 = vmatprep.subr.bf16.mxu0 0
        %2156 = vmatpush1.bf16.xpose.msra.mxu0 0
        %2157 = vmatprep.subr.bf16.mxu0 0
        %2158 = vmatpush1.bf16.xpose.msra.mxu0 0
        %2159 = vmatprep.subr.bf16.mxu0 0
        %2160 = vmatpush1.bf16.xpose.msra.mxu0 0
        %2161 = vmatprep.subr.bf16.mxu0 0
        %2162 = vmatpush1.bf16.xpose.msra.mxu0 0
        %2163 = vmatprep.subr.bf16.mxu0 0
        %2164 = vmatpush1.bf16.xpose.msra.mxu0 0
        %2165 = vmatprep.subr.bf16.mxu0 0
        %2166 = vmatpush1.bf16.xpose.msra.mxu0 0
        %2167 = vmatprep.subr.bf16.mxu0 0
        %2168 = vmatpush1.bf16.xpose.msra.mxu0 %v2151
        %2169 = vmatprep.subr.bf16.mxu0 0
        %2170 = vmatpush2.bf16.xpose.msra.mxu0 0
        %2171 = vmatprep.subr.bf16.mxu0 0
        %2172 = vmatpush2.bf16.xpose.msra.mxu0 0
        %2173 = vmatprep.subr.bf16.mxu0 0
        %2174 = vmatpush2.bf16.xpose.msra.mxu0 0
        %2175 = vmatprep.subr.bf16.mxu0 0
        %2176 = vmatpush2.bf16.xpose.msra.mxu0 0
        %2177 = vmatprep.subr.bf16.mxu0 0
        %2178 = vmatpush2.bf16.xpose.msra.mxu0 0
        %2179 = vmatprep.subr.bf16.mxu0 0
        %2180 = vmatpush2.bf16.xpose.msra.mxu0 0
        %2181 = vmatprep.subr.bf16.mxu0 0
        %2182 = vmatpush2.bf16.xpose.msra.mxu0 0
        %2183 = vmatprep.subr.bf16.mxu0 0
        %2184 = vmatpush2.bf16.xpose.msra.mxu0 0
        %2185 = vmatprep.mubr.bf16.mxu0 0
        %2186 = vmatmul.mubr.bf16.gmra.mxu0 %v2148
        %v2187 = vpop.f32.mrf.mxu0
        %v2188 = vadd.f32 0.0, %v2187
        %v2189 = vpop.f32.mrf.mxu0
        %v2190 = vpop.f32.mrf.mxu0
        %v2191 = vpop.f32.mrf.mxu0
        %2192 = vdwg.mxu0
        %2193 = vrot.lane.b32.xlu0 %v1130, 96
        %v2194 = vpop.permute.xlu0 %2193
        %2195 = vrot.lane.b32.xlu0 %v1130, 32
        %v2196 = vpop.permute.xlu0 %2195
        %v2198 = vsel %vm1140, %v2194, 0
        %v2201 = vsel %vm1140, %v2196, 0
        %2203 = vmatprep.subr.bf16.mxu0 0
        %2204 = vmatpush1.bf16.xpose.msra.mxu0 0
        %2205 = vmatprep.subr.bf16.mxu0 0
        %2206 = vmatpush1.bf16.xpose.msra.mxu0 0
        %2207 = vmatprep.subr.bf16.mxu0 0
        %2208 = vmatpush1.bf16.xpose.msra.mxu0 0
        %2209 = vmatprep.subr.bf16.mxu0 0
        %2210 = vmatpush1.bf16.xpose.msra.mxu0 0
        %2211 = vmatprep.subr.bf16.mxu0 0
        %2212 = vmatpush1.bf16.xpose.msra.mxu0 0
        %2213 = vmatprep.subr.bf16.mxu0 0
        %2214 = vmatpush1.bf16.xpose.msra.mxu0 0
        %2215 = vmatprep.subr.bf16.mxu0 0
        %2216 = vmatpush1.bf16.xpose.msra.mxu0 0
        %2217 = vmatprep.subr.bf16.mxu0 0
        %2218 = vmatpush1.bf16.xpose.msra.mxu0 %v2201
        %2219 = vmatprep.subr.bf16.mxu0 0
        %2220 = vmatpush2.bf16.xpose.msra.mxu0 0
        %2221 = vmatprep.subr.bf16.mxu0 0
        %2222 = vmatpush2.bf16.xpose.msra.mxu0 0
        %2223 = vmatprep.subr.bf16.mxu0 0
        %2224 = vmatpush2.bf16.xpose.msra.mxu0 0
        %2225 = vmatprep.subr.bf16.mxu0 0
        %2226 = vmatpush2.bf16.xpose.msra.mxu0 0
        %2227 = vmatprep.subr.bf16.mxu0 0
        %2228 = vmatpush2.bf16.xpose.msra.mxu0 0
        %2229 = vmatprep.subr.bf16.mxu0 0
        %2230 = vmatpush2.bf16.xpose.msra.mxu0 0
        %2231 = vmatprep.subr.bf16.mxu0 0
        %2232 = vmatpush2.bf16.xpose.msra.mxu0 0
        %2233 = vmatprep.subr.bf16.mxu0 0
        %2234 = vmatpush2.bf16.xpose.msra.mxu0 0
        %2235 = vmatprep.mubr.bf16.mxu0 0
        %2236 = vmatmul.mubr.bf16.gmra.mxu0 %v2198
        %v2237 = vpop.f32.mrf.mxu0
        %v2238 = vadd.f32 0.0, %v2237
        %v2239 = vpop.f32.mrf.mxu0
        %v2240 = vpop.f32.mrf.mxu0
        %v2241 = vpop.f32.mrf.mxu0
        %2242 = vdwg.mxu0
        %2243 = vrot.lane.b32.xlu0 %v1131, 96
        %v2244 = vpop.permute.xlu0 %2243
        %2245 = vrot.lane.b32.xlu0 %v1131, 32
        %v2246 = vpop.permute.xlu0 %2245
        %v2248 = vsel %vm1140, %v2244, 0
        %v2251 = vsel %vm1140, %v2246, 0
        %2253 = vmatprep.subr.bf16.mxu0 0
        %2254 = vmatpush1.bf16.xpose.msra.mxu0 0
        %2255 = vmatprep.subr.bf16.mxu0 0
        %2256 = vmatpush1.bf16.xpose.msra.mxu0 0
        %2257 = vmatprep.subr.bf16.mxu0 0
        %2258 = vmatpush1.bf16.xpose.msra.mxu0 0
        %2259 = vmatprep.subr.bf16.mxu0 0
        %2260 = vmatpush1.bf16.xpose.msra.mxu0 0
        %2261 = vmatprep.subr.bf16.mxu0 0
        %2262 = vmatpush1.bf16.xpose.msra.mxu0 0
        %2263 = vmatprep.subr.bf16.mxu0 0
        %2264 = vmatpush1.bf16.xpose.msra.mxu0 0
        %2265 = vmatprep.subr.bf16.mxu0 0
        %2266 = vmatpush1.bf16.xpose.msra.mxu0 0
        %2267 = vmatprep.subr.bf16.mxu0 0
        %2268 = vmatpush1.bf16.xpose.msra.mxu0 %v2251
        %2269 = vmatprep.subr.bf16.mxu0 0
        %2270 = vmatpush2.bf16.xpose.msra.mxu0 0
        %2271 = vmatprep.subr.bf16.mxu0 0
        %2272 = vmatpush2.bf16.xpose.msra.mxu0 0
        %2273 = vmatprep.subr.bf16.mxu0 0
        %2274 = vmatpush2.bf16.xpose.msra.mxu0 0
        %2275 = vmatprep.subr.bf16.mxu0 0
        %2276 = vmatpush2.bf16.xpose.msra.mxu0 0
        %2277 = vmatprep.subr.bf16.mxu0 0
        %2278 = vmatpush2.bf16.xpose.msra.mxu0 0
        %2279 = vmatprep.subr.bf16.mxu0 0
        %2280 = vmatpush2.bf16.xpose.msra.mxu0 0
        %2281 = vmatprep.subr.bf16.mxu0 0
        %2282 = vmatpush2.bf16.xpose.msra.mxu0 0
        %2283 = vmatprep.subr.bf16.mxu0 0
        %2284 = vmatpush2.bf16.xpose.msra.mxu0 0
        %2285 = vmatprep.mubr.bf16.mxu0 0
        %2286 = vmatmul.mubr.bf16.gmra.mxu0 %v2248
        %v2287 = vpop.f32.mrf.mxu0
        %v2288 = vadd.f32 0.0, %v2287
        %v2289 = vpop.f32.mrf.mxu0
        %v2290 = vpop.f32.mrf.mxu0
        %v2291 = vpop.f32.mrf.mxu0
        %2292 = vdwg.mxu0
        %2293 = vrot.lane.b32.xlu0 %v1132, 96
        %v2294 = vpop.permute.xlu0 %2293
        %2295 = vrot.lane.b32.xlu0 %v1132, 32
        %v2296 = vpop.permute.xlu0 %2295
        %v2298 = vsel %vm1140, %v2294, 0
        %v2301 = vsel %vm1140, %v2296, 0
        %2303 = vmatprep.subr.bf16.mxu0 0
        %2304 = vmatpush1.bf16.xpose.msra.mxu0 0
        %2305 = vmatprep.subr.bf16.mxu0 0
        %2306 = vmatpush1.bf16.xpose.msra.mxu0 0
        %2307 = vmatprep.subr.bf16.mxu0 0
        %2308 = vmatpush1.bf16.xpose.msra.mxu0 0
        %2309 = vmatprep.subr.bf16.mxu0 0
        %2310 = vmatpush1.bf16.xpose.msra.mxu0 0
        %2311 = vmatprep.subr.bf16.mxu0 0
        %2312 = vmatpush1.bf16.xpose.msra.mxu0 0
        %2313 = vmatprep.subr.bf16.mxu0 0
        %2314 = vmatpush1.bf16.xpose.msra.mxu0 0
        %2315 = vmatprep.subr.bf16.mxu0 0
        %2316 = vmatpush1.bf16.xpose.msra.mxu0 0
        %2317 = vmatprep.subr.bf16.mxu0 0
        %2318 = vmatpush1.bf16.xpose.msra.mxu0 %v2301
        %2319 = vmatprep.subr.bf16.mxu0 0
        %2320 = vmatpush2.bf16.xpose.msra.mxu0 0
        %2321 = vmatprep.subr.bf16.mxu0 0
        %2322 = vmatpush2.bf16.xpose.msra.mxu0 0
        %2323 = vmatprep.subr.bf16.mxu0 0
        %2324 = vmatpush2.bf16.xpose.msra.mxu0 0
        %2325 = vmatprep.subr.bf16.mxu0 0
        %2326 = vmatpush2.bf16.xpose.msra.mxu0 0
        %2327 = vmatprep.subr.bf16.mxu0 0
        %2328 = vmatpush2.bf16.xpose.msra.mxu0 0
        %2329 = vmatprep.subr.bf16.mxu0 0
        %2330 = vmatpush2.bf16.xpose.msra.mxu0 0
        %2331 = vmatprep.subr.bf16.mxu0 0
        %2332 = vmatpush2.bf16.xpose.msra.mxu0 0
        %2333 = vmatprep.subr.bf16.mxu0 0
        %2334 = vmatpush2.bf16.xpose.msra.mxu0 0
        %2335 = vmatprep.mubr.bf16.mxu0 0
        %2336 = vmatmul.mubr.bf16.gmra.mxu0 %v2298
        %v2337 = vpop.f32.mrf.mxu0
        %v2338 = vadd.f32 0.0, %v2337
        %v2339 = vpop.f32.mrf.mxu0
        %v2340 = vpop.f32.mrf.mxu0
        %v2341 = vpop.f32.mrf.mxu0
        %2342 = vdwg.mxu0
        %v2343 = vsel %vm1334, %v2188, -inf
        %2344 = vmax.xlane.f32.xlu0 %v2343
        %v2345 = vpop.xlane.xlu0 %2344
        %v2346 = vsel %vm1334, %v2238, -inf
        %2347 = vmax.xlane.f32.xlu0 %v2346
        %v2348 = vpop.xlane.xlu0 %2347
        %v2349 = vsel %vm1334, %v2288, -inf
        %2350 = vmax.xlane.f32.xlu0 %v2349
        %v2351 = vpop.xlane.xlu0 %2350
        %v2352 = vsel %vm1334, %v2338, -inf
        %2353 = vmax.xlane.f32.xlu0 %v2352
        %v2354 = vpop.xlane.xlu0 %2353
        %v2355 = vsub.f32 %v2188, %v2345
        %v2356 = vsub.f32 %v2238, %v2348
        %v2357 = vsub.f32 %v2288, %v2351
        %v2358 = vsub.f32 %v2338, %v2354
        %v2359 = vmul.f32 %v2355, 1.442695
        %v2360 = vpow.pop %v2359
        %v2361 = vmul.f32 %v2356, 1.442695
        %v2362 = vpow.pop %v2361
        %v2363 = vmul.f32 %v2357, 1.442695
        %v2364 = vpow.pop %v2363
        %v2365 = vmul.f32 %v2358, 1.442695
        %v2366 = vpow.pop %v2365
        %v2367 = vsel %vm1334, %v2360, 0.0
        %2368 = vadd.xlane.f32.xlu0 %v2367
        %v2369 = vpop.xlane.xlu0 %2368
        %v2370 = vsel %vm1334, %v2362, 0.0
        %2371 = vadd.xlane.f32.xlu0 %v2370
        %v2372 = vpop.xlane.xlu0 %2371
        %v2373 = vsel %vm1334, %v2364, 0.0
        %2374 = vadd.xlane.f32.xlu0 %v2373
        %v2375 = vpop.xlane.xlu0 %2374
        %v2376 = vsel %vm1334, %v2366, 0.0
        %2377 = vadd.xlane.f32.xlu0 %v2376
        %v2378 = vpop.xlane.xlu0 %2377
        %v2379 = vrcp.pop %v2369
        %v2380 = vrcp.pop %v2372
        %v2381 = vrcp.pop %v2375
        %v2382 = vrcp.pop %v2378
        %v2383 = vmul.f32 %v2360, %v2379
        %v2384 = vmul.f32 %v2362, %v2380
        %v2385 = vmul.f32 %v2364, %v2381
        %v2386 = vmul.f32 %v2366, %v2382
        %v2387 = vpack.c.bf16 %v2383, %v2383
        %v2388 = vpack.c.bf16 %v2384, %v2384
        %v2389 = vpack.c.bf16 %v2385, %v2385
        %v2390 = vpack.c.bf16 %v2386, %v2386
        %2391 = vrot.lane.b32.xlu0 %v1133, 96
        %v2392 = vpop.permute.xlu0 %2391
        %v2394 = vsel %vm1334, %v2387, 0
        %v2397 = vsel %vm1386, %v2392, 0
        %2399 = vmatprep.subr.bf16.mxu0 0
        %2400 = vmatpush1.bf16.msra.mxu0 0
        %2401 = vmatprep.subr.bf16.mxu0 0
        %2402 = vmatpush1.bf16.msra.mxu0 0
        %2403 = vmatprep.subr.bf16.mxu0 0
        %2404 = vmatpush1.bf16.msra.mxu0 0
        %2405 = vmatprep.subr.bf16.mxu0 0
        %2406 = vmatpush1.bf16.msra.mxu0 0
        %2407 = vmatprep.subr.bf16.mxu0 0
        %2408 = vmatpush1.bf16.msra.mxu0 0
        %2409 = vmatprep.subr.bf16.mxu0 0
        %2410 = vmatpush1.bf16.msra.mxu0 0
        %2411 = vmatprep.subr.bf16.mxu0 0
        %2412 = vmatpush1.bf16.msra.mxu0 0
        %2413 = vmatprep.subr.bf16.mxu0 0
        %2414 = vmatpush1.bf16.msra.mxu0 %v2397
        %2415 = vmatprep.subr.bf16.mxu0 0
        %2416 = vmatpush2.bf16.msra.mxu0 0
        %2417 = vmatprep.subr.bf16.mxu0 0
        %2418 = vmatpush2.bf16.msra.mxu0 0
        %2419 = vmatprep.subr.bf16.mxu0 0
        %2420 = vmatpush2.bf16.msra.mxu0 0
        %2421 = vmatprep.subr.bf16.mxu0 0
        %2422 = vmatpush2.bf16.msra.mxu0 0
        %2423 = vmatprep.subr.bf16.mxu0 0
        %2424 = vmatpush2.bf16.msra.mxu0 0
        %2425 = vmatprep.subr.bf16.mxu0 0
        %2426 = vmatpush2.bf16.msra.mxu0 0
        %2427 = vmatprep.subr.bf16.mxu0 0
        %2428 = vmatpush2.bf16.msra.mxu0 0
        %2429 = vmatprep.subr.bf16.mxu0 0
        %2430 = vmatpush2.bf16.msra.mxu0 0
        %2431 = vmatprep.mubr.bf16.mxu0 0
        %2432 = vmatmul.mubr.bf16.gmra.mxu0 %v2394
        %v2433 = vpop.f32.mrf.mxu0
        %v2434 = vadd.f32 0.0, %v2433
        %v2435 = vpop.f32.mrf.mxu0
        %v2436 = vpop.f32.mrf.mxu0
        %v2437 = vpop.f32.mrf.mxu0
        %2438 = vdwg.mxu0
        %2439 = vrot.lane.b32.xlu0 %v1134, 96
        %v2440 = vpop.permute.xlu0 %2439
        %v2442 = vsel %vm1334, %v2388, 0
        %v2445 = vsel %vm1386, %v2440, 0
        %2447 = vmatprep.subr.bf16.mxu0 0
        %2448 = vmatpush1.bf16.msra.mxu0 0
        %2449 = vmatprep.subr.bf16.mxu0 0
        %2450 = vmatpush1.bf16.msra.mxu0 0
        %2451 = vmatprep.subr.bf16.mxu0 0
        %2452 = vmatpush1.bf16.msra.mxu0 0
        %2453 = vmatprep.subr.bf16.mxu0 0
        %2454 = vmatpush1.bf16.msra.mxu0 0
        %2455 = vmatprep.subr.bf16.mxu0 0
        %2456 = vmatpush1.bf16.msra.mxu0 0
        %2457 = vmatprep.subr.bf16.mxu0 0
        %2458 = vmatpush1.bf16.msra.mxu0 0
        %2459 = vmatprep.subr.bf16.mxu0 0
        %2460 = vmatpush1.bf16.msra.mxu0 0
        %2461 = vmatprep.subr.bf16.mxu0 0
        %2462 = vmatpush1.bf16.msra.mxu0 %v2445
        %2463 = vmatprep.subr.bf16.mxu0 0
        %2464 = vmatpush2.bf16.msra.mxu0 0
        %2465 = vmatprep.subr.bf16.mxu0 0
        %2466 = vmatpush2.bf16.msra.mxu0 0
        %2467 = vmatprep.subr.bf16.mxu0 0
        %2468 = vmatpush2.bf16.msra.mxu0 0
        %2469 = vmatprep.subr.bf16.mxu0 0
        %2470 = vmatpush2.bf16.msra.mxu0 0
        %2471 = vmatprep.subr.bf16.mxu0 0
        %2472 = vmatpush2.bf16.msra.mxu0 0
        %2473 = vmatprep.subr.bf16.mxu0 0
        %2474 = vmatpush2.bf16.msra.mxu0 0
        %2475 = vmatprep.subr.bf16.mxu0 0
        %2476 = vmatpush2.bf16.msra.mxu0 0
        %2477 = vmatprep.subr.bf16.mxu0 0
        %2478 = vmatpush2.bf16.msra.mxu0 0
        %2479 = vmatprep.mubr.bf16.mxu0 0
        %2480 = vmatmul.mubr.bf16.gmra.mxu0 %v2442
        %v2481 = vpop.f32.mrf.mxu0
        %v2482 = vadd.f32 0.0, %v2481
        %v2483 = vpop.f32.mrf.mxu0
        %v2484 = vpop.f32.mrf.mxu0
        %v2485 = vpop.f32.mrf.mxu0
        %2486 = vdwg.mxu0
        %2487 = vrot.lane.b32.xlu0 %v1135, 96
        %v2488 = vpop.permute.xlu0 %2487
        %v2490 = vsel %vm1334, %v2389, 0
        %v2493 = vsel %vm1386, %v2488, 0
        %2495 = vmatprep.subr.bf16.mxu0 0
        %2496 = vmatpush1.bf16.msra.mxu0 0
        %2497 = vmatprep.subr.bf16.mxu0 0
        %2498 = vmatpush1.bf16.msra.mxu0 0
        %2499 = vmatprep.subr.bf16.mxu0 0
        %2500 = vmatpush1.bf16.msra.mxu0 0
        %2501 = vmatprep.subr.bf16.mxu0 0
        %2502 = vmatpush1.bf16.msra.mxu0 0
        %2503 = vmatprep.subr.bf16.mxu0 0
        %2504 = vmatpush1.bf16.msra.mxu0 0
        %2505 = vmatprep.subr.bf16.mxu0 0
        %2506 = vmatpush1.bf16.msra.mxu0 0
        %2507 = vmatprep.subr.bf16.mxu0 0
        %2508 = vmatpush1.bf16.msra.mxu0 0
        %2509 = vmatprep.subr.bf16.mxu0 0
        %2510 = vmatpush1.bf16.msra.mxu0 %v2493
        %2511 = vmatprep.subr.bf16.mxu0 0
        %2512 = vmatpush2.bf16.msra.mxu0 0
        %2513 = vmatprep.subr.bf16.mxu0 0
        %2514 = vmatpush2.bf16.msra.mxu0 0
        %2515 = vmatprep.subr.bf16.mxu0 0
        %2516 = vmatpush2.bf16.msra.mxu0 0
        %2517 = vmatprep.subr.bf16.mxu0 0
        %2518 = vmatpush2.bf16.msra.mxu0 0
        %2519 = vmatprep.subr.bf16.mxu0 0
        %2520 = vmatpush2.bf16.msra.mxu0 0
        %2521 = vmatprep.subr.bf16.mxu0 0
        %2522 = vmatpush2.bf16.msra.mxu0 0
        %2523 = vmatprep.subr.bf16.mxu0 0
        %2524 = vmatpush2.bf16.msra.mxu0 0
        %2525 = vmatprep.subr.bf16.mxu0 0
        %2526 = vmatpush2.bf16.msra.mxu0 0
        %2527 = vmatprep.mubr.bf16.mxu0 0
        %2528 = vmatmul.mubr.bf16.gmra.mxu0 %v2490
        %v2529 = vpop.f32.mrf.mxu0
        %v2530 = vadd.f32 0.0, %v2529
        %v2531 = vpop.f32.mrf.mxu0
        %v2532 = vpop.f32.mrf.mxu0
        %v2533 = vpop.f32.mrf.mxu0
        %2534 = vdwg.mxu0
        %2535 = vrot.lane.b32.xlu0 %v1136, 96
        %v2536 = vpop.permute.xlu0 %2535
        %v2538 = vsel %vm1334, %v2390, 0
        %v2541 = vsel %vm1386, %v2536, 0
        %2543 = vmatprep.subr.bf16.mxu0 0
        %2544 = vmatpush1.bf16.msra.mxu0 0
        %2545 = vmatprep.subr.bf16.mxu0 0
        %2546 = vmatpush1.bf16.msra.mxu0 0
        %2547 = vmatprep.subr.bf16.mxu0 0
        %2548 = vmatpush1.bf16.msra.mxu0 0
        %2549 = vmatprep.subr.bf16.mxu0 0
        %2550 = vmatpush1.bf16.msra.mxu0 0
        %2551 = vmatprep.subr.bf16.mxu0 0
        %2552 = vmatpush1.bf16.msra.mxu0 0
        %2553 = vmatprep.subr.bf16.mxu0 0
        %2554 = vmatpush1.bf16.msra.mxu0 0
        %2555 = vmatprep.subr.bf16.mxu0 0
        %2556 = vmatpush1.bf16.msra.mxu0 0
        %2557 = vmatprep.subr.bf16.mxu0 0
        %2558 = vmatpush1.bf16.msra.mxu0 %v2541
        %2559 = vmatprep.subr.bf16.mxu0 0
        %2560 = vmatpush2.bf16.msra.mxu0 0
        %2561 = vmatprep.subr.bf16.mxu0 0
        %2562 = vmatpush2.bf16.msra.mxu0 0
        %2563 = vmatprep.subr.bf16.mxu0 0
        %2564 = vmatpush2.bf16.msra.mxu0 0
        %2565 = vmatprep.subr.bf16.mxu0 0
        %2566 = vmatpush2.bf16.msra.mxu0 0
        %2567 = vmatprep.subr.bf16.mxu0 0
        %2568 = vmatpush2.bf16.msra.mxu0 0
        %2569 = vmatprep.subr.bf16.mxu0 0
        %2570 = vmatpush2.bf16.msra.mxu0 0
        %2571 = vmatprep.subr.bf16.mxu0 0
        %2572 = vmatpush2.bf16.msra.mxu0 0
        %2573 = vmatprep.subr.bf16.mxu0 0
        %2574 = vmatpush2.bf16.msra.mxu0 0
        %2575 = vmatprep.mubr.bf16.mxu0 0
        %2576 = vmatmul.mubr.bf16.gmra.mxu0 %v2538
        %v2577 = vpop.f32.mrf.mxu0
        %v2578 = vadd.f32 0.0, %v2577
        %v2579 = vpop.f32.mrf.mxu0
        %v2580 = vpop.f32.mrf.mxu0
        %v2581 = vpop.f32.mrf.mxu0
        %2582 = vdwg.mxu0
        %v2583 = vpack.c.bf16 %v2482, %v2434
        %v2584 = vpack.c.bf16 %v2578, %v2530
        %s2585 = scalar_lea.vmem [#allocation11], 16
        %v2586 = vld [vmem:[%s2585] sm:$0xf]
        %v2587 = vld [vmem:[%s2585 + $0x4] sm:$0xf]
        %v2590 = vunpack.c.l.b16 %v2586
        %v2591 = vunpack.c.l.b16 %v2587
        %v2592 = vpack.c.b16 %v2591, %v2590
        %v2595 = vsel %vm1140, %v2583, 0
        %v2598 = vsel %vm1140, %v2584, 0
        %2600 = vmatprep.subr.bf16.mxu0 0
        %2601 = vmatpush1.bf16.msra.mxu0 0
        %2602 = vmatprep.subr.bf16.mxu0 0
        %2603 = vmatpush1.bf16.msra.mxu0 0
        %2604 = vmatprep.subr.bf16.mxu0 0
        %2605 = vmatpush1.bf16.msra.mxu0 0
        %2606 = vmatprep.subr.bf16.mxu0 0
        %2607 = vmatpush1.bf16.msra.mxu0 0
        %2608 = vmatprep.subr.bf16.mxu0 0
        %2609 = vmatpush1.bf16.msra.mxu0 0
        %2610 = vmatprep.subr.bf16.mxu0 0
        %2611 = vmatpush1.bf16.msra.mxu0 0
        %2612 = vmatprep.subr.bf16.mxu0 0
        %2613 = vmatpush1.bf16.msra.mxu0 0
        %2614 = vmatprep.subr.bf16.mxu0 0
        %2615 = vmatpush1.bf16.msra.mxu0 %v2592
        %2616 = vmatprep.subr.bf16.mxu0 0
        %2617 = vmatpush2.bf16.msra.mxu0 0
        %2618 = vmatprep.subr.bf16.mxu0 0
        %2619 = vmatpush2.bf16.msra.mxu0 0
        %2620 = vmatprep.subr.bf16.mxu0 0
        %2621 = vmatpush2.bf16.msra.mxu0 0
        %2622 = vmatprep.subr.bf16.mxu0 0
        %2623 = vmatpush2.bf16.msra.mxu0 0
        %2624 = vmatprep.subr.bf16.mxu0 0
        %2625 = vmatpush2.bf16.msra.mxu0 0
        %2626 = vmatprep.subr.bf16.mxu0 0
        %2627 = vmatpush2.bf16.msra.mxu0 0
        %2628 = vmatprep.subr.bf16.mxu0 0
        %2629 = vmatpush2.bf16.msra.mxu0 0
        %2630 = vmatprep.subr.bf16.mxu0 0
        %2631 = vmatpush2.bf16.msra.mxu0 0
        %2632 = vmatprep.mubr.bf16.mxu0 0
        %2633 = vmatmul.mubr.bf16.gmra.mxu0 %v2595
        %v2634 = vpop.f32.mrf.mxu0
        %v2635 = vadd.f32 0.0, %v2634
        %v2636 = vpop.f32.mrf.mxu0
        %v2637 = vpop.f32.mrf.mxu0
        %v2638 = vadd.f32 0.0, %v2637
        %v2639 = vpop.f32.mrf.mxu0
        %2640 = vmatprep.mubr.bf16.mxu0 0
        %2641 = vmatmul.mubr.bf16.gmra.mxu0 %v2598
        %v2642 = vpop.f32.mrf.mxu0
        %v2643 = vadd.f32 0.0, %v2642
        %v2644 = vpop.f32.mrf.mxu0
        %v2645 = vpop.f32.mrf.mxu0
        %v2646 = vadd.f32 0.0, %v2645
        %v2647 = vpop.f32.mrf.mxu0
        %2648 = vdwg.mxu0
        %v2649 = vadd.f32 %v2129, %v2635
        %v2650 = vadd.f32 %v2132, %v2638
        %v2651 = vadd.f32 %v2137, %v2643
        %v2652 = vadd.f32 %v2140, %v2646
        %2653 = vrot.lane.b32.xlu0 %v1129, 80
        %v2654 = vpop.permute.xlu0 %2653
        %2655 = vrot.lane.b32.xlu0 %v1129, 16
        %v2656 = vpop.permute.xlu0 %2655
        %v2658 = vsel %vm1140, %v2654, 0
        %v2661 = vsel %vm1140, %v2656, 0
        %2663 = vmatprep.subr.bf16.mxu0 0
        %2664 = vmatpush1.bf16.xpose.msra.mxu0 0
        %2665 = vmatprep.subr.bf16.mxu0 0
        %2666 = vmatpush1.bf16.xpose.msra.mxu0 0
        %2667 = vmatprep.subr.bf16.mxu0 0
        %2668 = vmatpush1.bf16.xpose.msra.mxu0 0
        %2669 = vmatprep.subr.bf16.mxu0 0
        %2670 = vmatpush1.bf16.xpose.msra.mxu0 0
        %2671 = vmatprep.subr.bf16.mxu0 0
        %2672 = vmatpush1.bf16.xpose.msra.mxu0 0
        %2673 = vmatprep.subr.bf16.mxu0 0
        %2674 = vmatpush1.bf16.xpose.msra.mxu0 0
        %2675 = vmatprep.subr.bf16.mxu0 0
        %2676 = vmatpush1.bf16.xpose.msra.mxu0 0
        %2677 = vmatprep.subr.bf16.mxu0 0
        %2678 = vmatpush1.bf16.xpose.msra.mxu0 %v2661
        %2679 = vmatprep.subr.bf16.mxu0 0
        %2680 = vmatpush2.bf16.xpose.msra.mxu0 0
        %2681 = vmatprep.subr.bf16.mxu0 0
        %2682 = vmatpush2.bf16.xpose.msra.mxu0 0
        %2683 = vmatprep.subr.bf16.mxu0 0
        %2684 = vmatpush2.bf16.xpose.msra.mxu0 0
        %2685 = vmatprep.subr.bf16.mxu0 0
        %2686 = vmatpush2.bf16.xpose.msra.mxu0 0
        %2687 = vmatprep.subr.bf16.mxu0 0
        %2688 = vmatpush2.bf16.xpose.msra.mxu0 0
        %2689 = vmatprep.subr.bf16.mxu0 0
        %2690 = vmatpush2.bf16.xpose.msra.mxu0 0
        %2691 = vmatprep.subr.bf16.mxu0 0
        %2692 = vmatpush2.bf16.xpose.msra.mxu0 0
        %2693 = vmatprep.subr.bf16.mxu0 0
        %2694 = vmatpush2.bf16.xpose.msra.mxu0 0
        %2695 = vmatprep.mubr.bf16.mxu0 0
        %2696 = vmatmul.mubr.bf16.gmra.mxu0 %v2658
        %v2697 = vpop.f32.mrf.mxu0
        %v2698 = vadd.f32 0.0, %v2697
        %v2699 = vpop.f32.mrf.mxu0
        %v2700 = vpop.f32.mrf.mxu0
        %v2701 = vpop.f32.mrf.mxu0
        %2702 = vdwg.mxu0
        %2703 = vrot.lane.b32.xlu0 %v1130, 80
        %v2704 = vpop.permute.xlu0 %2703
        %2705 = vrot.lane.b32.xlu0 %v1130, 16
        %v2706 = vpop.permute.xlu0 %2705
        %v2708 = vsel %vm1140, %v2704, 0
        %v2711 = vsel %vm1140, %v2706, 0
        %2713 = vmatprep.subr.bf16.mxu0 0
        %2714 = vmatpush1.bf16.xpose.msra.mxu0 0
        %2715 = vmatprep.subr.bf16.mxu0 0
        %2716 = vmatpush1.bf16.xpose.msra.mxu0 0
        %2717 = vmatprep.subr.bf16.mxu0 0
        %2718 = vmatpush1.bf16.xpose.msra.mxu0 0
        %2719 = vmatprep.subr.bf16.mxu0 0
        %2720 = vmatpush1.bf16.xpose.msra.mxu0 0
        %2721 = vmatprep.subr.bf16.mxu0 0
        %2722 = vmatpush1.bf16.xpose.msra.mxu0 0
        %2723 = vmatprep.subr.bf16.mxu0 0
        %2724 = vmatpush1.bf16.xpose.msra.mxu0 0
        %2725 = vmatprep.subr.bf16.mxu0 0
        %2726 = vmatpush1.bf16.xpose.msra.mxu0 0
        %2727 = vmatprep.subr.bf16.mxu0 0
        %2728 = vmatpush1.bf16.xpose.msra.mxu0 %v2711
        %2729 = vmatprep.subr.bf16.mxu0 0
        %2730 = vmatpush2.bf16.xpose.msra.mxu0 0
        %2731 = vmatprep.subr.bf16.mxu0 0
        %2732 = vmatpush2.bf16.xpose.msra.mxu0 0
        %2733 = vmatprep.subr.bf16.mxu0 0
        %2734 = vmatpush2.bf16.xpose.msra.mxu0 0
        %2735 = vmatprep.subr.bf16.mxu0 0
        %2736 = vmatpush2.bf16.xpose.msra.mxu0 0
        %2737 = vmatprep.subr.bf16.mxu0 0
        %2738 = vmatpush2.bf16.xpose.msra.mxu0 0
        %2739 = vmatprep.subr.bf16.mxu0 0
        %2740 = vmatpush2.bf16.xpose.msra.mxu0 0
        %2741 = vmatprep.subr.bf16.mxu0 0
        %2742 = vmatpush2.bf16.xpose.msra.mxu0 0
        %2743 = vmatprep.subr.bf16.mxu0 0
        %2744 = vmatpush2.bf16.xpose.msra.mxu0 0
        %2745 = vmatprep.mubr.bf16.mxu0 0
        %2746 = vmatmul.mubr.bf16.gmra.mxu0 %v2708
        %v2747 = vpop.f32.mrf.mxu0
        %v2748 = vadd.f32 0.0, %v2747
        %v2749 = vpop.f32.mrf.mxu0
        %v2750 = vpop.f32.mrf.mxu0
        %v2751 = vpop.f32.mrf.mxu0
        %2752 = vdwg.mxu0
        %2753 = vrot.lane.b32.xlu0 %v1131, 80
        %v2754 = vpop.permute.xlu0 %2753
        %2755 = vrot.lane.b32.xlu0 %v1131, 16
        %v2756 = vpop.permute.xlu0 %2755
        %v2758 = vsel %vm1140, %v2754, 0
        %v2761 = vsel %vm1140, %v2756, 0
        %2763 = vmatprep.subr.bf16.mxu0 0
        %2764 = vmatpush1.bf16.xpose.msra.mxu0 0
        %2765 = vmatprep.subr.bf16.mxu0 0
        %2766 = vmatpush1.bf16.xpose.msra.mxu0 0
        %2767 = vmatprep.subr.bf16.mxu0 0
        %2768 = vmatpush1.bf16.xpose.msra.mxu0 0
        %2769 = vmatprep.subr.bf16.mxu0 0
        %2770 = vmatpush1.bf16.xpose.msra.mxu0 0
        %2771 = vmatprep.subr.bf16.mxu0 0
        %2772 = vmatpush1.bf16.xpose.msra.mxu0 0
        %2773 = vmatprep.subr.bf16.mxu0 0
        %2774 = vmatpush1.bf16.xpose.msra.mxu0 0
        %2775 = vmatprep.subr.bf16.mxu0 0
        %2776 = vmatpush1.bf16.xpose.msra.mxu0 0
        %2777 = vmatprep.subr.bf16.mxu0 0
        %2778 = vmatpush1.bf16.xpose.msra.mxu0 %v2761
        %2779 = vmatprep.subr.bf16.mxu0 0
        %2780 = vmatpush2.bf16.xpose.msra.mxu0 0
        %2781 = vmatprep.subr.bf16.mxu0 0
        %2782 = vmatpush2.bf16.xpose.msra.mxu0 0
        %2783 = vmatprep.subr.bf16.mxu0 0
        %2784 = vmatpush2.bf16.xpose.msra.mxu0 0
        %2785 = vmatprep.subr.bf16.mxu0 0
        %2786 = vmatpush2.bf16.xpose.msra.mxu0 0
        %2787 = vmatprep.subr.bf16.mxu0 0
        %2788 = vmatpush2.bf16.xpose.msra.mxu0 0
        %2789 = vmatprep.subr.bf16.mxu0 0
        %2790 = vmatpush2.bf16.xpose.msra.mxu0 0
        %2791 = vmatprep.subr.bf16.mxu0 0
        %2792 = vmatpush2.bf16.xpose.msra.mxu0 0
        %2793 = vmatprep.subr.bf16.mxu0 0
        %2794 = vmatpush2.bf16.xpose.msra.mxu0 0
        %2795 = vmatprep.mubr.bf16.mxu0 0
        %2796 = vmatmul.mubr.bf16.gmra.mxu0 %v2758
        %v2797 = vpop.f32.mrf.mxu0
        %v2798 = vadd.f32 0.0, %v2797
        %v2799 = vpop.f32.mrf.mxu0
        %v2800 = vpop.f32.mrf.mxu0
        %v2801 = vpop.f32.mrf.mxu0
        %2802 = vdwg.mxu0
        %2803 = vrot.lane.b32.xlu0 %v1132, 80
        %v2804 = vpop.permute.xlu0 %2803
        %2805 = vrot.lane.b32.xlu0 %v1132, 16
        %v2806 = vpop.permute.xlu0 %2805
        %v2808 = vsel %vm1140, %v2804, 0
        %v2811 = vsel %vm1140, %v2806, 0
        %2813 = vmatprep.subr.bf16.mxu0 0
        %2814 = vmatpush1.bf16.xpose.msra.mxu0 0
        %2815 = vmatprep.subr.bf16.mxu0 0
        %2816 = vmatpush1.bf16.xpose.msra.mxu0 0
        %2817 = vmatprep.subr.bf16.mxu0 0
        %2818 = vmatpush1.bf16.xpose.msra.mxu0 0
        %2819 = vmatprep.subr.bf16.mxu0 0
        %2820 = vmatpush1.bf16.xpose.msra.mxu0 0
        %2821 = vmatprep.subr.bf16.mxu0 0
        %2822 = vmatpush1.bf16.xpose.msra.mxu0 0
        %2823 = vmatprep.subr.bf16.mxu0 0
        %2824 = vmatpush1.bf16.xpose.msra.mxu0 0
        %2825 = vmatprep.subr.bf16.mxu0 0
        %2826 = vmatpush1.bf16.xpose.msra.mxu0 0
        %2827 = vmatprep.subr.bf16.mxu0 0
        %2828 = vmatpush1.bf16.xpose.msra.mxu0 %v2811
        %2829 = vmatprep.subr.bf16.mxu0 0
        %2830 = vmatpush2.bf16.xpose.msra.mxu0 0
        %2831 = vmatprep.subr.bf16.mxu0 0
        %2832 = vmatpush2.bf16.xpose.msra.mxu0 0
        %2833 = vmatprep.subr.bf16.mxu0 0
        %2834 = vmatpush2.bf16.xpose.msra.mxu0 0
        %2835 = vmatprep.subr.bf16.mxu0 0
        %2836 = vmatpush2.bf16.xpose.msra.mxu0 0
        %2837 = vmatprep.subr.bf16.mxu0 0
        %2838 = vmatpush2.bf16.xpose.msra.mxu0 0
        %2839 = vmatprep.subr.bf16.mxu0 0
        %2840 = vmatpush2.bf16.xpose.msra.mxu0 0
        %2841 = vmatprep.subr.bf16.mxu0 0
        %2842 = vmatpush2.bf16.xpose.msra.mxu0 0
        %2843 = vmatprep.subr.bf16.mxu0 0
        %2844 = vmatpush2.bf16.xpose.msra.mxu0 0
        %2845 = vmatprep.mubr.bf16.mxu0 0
        %2846 = vmatmul.mubr.bf16.gmra.mxu0 %v2808
        %v2847 = vpop.f32.mrf.mxu0
        %v2848 = vadd.f32 0.0, %v2847
        %v2849 = vpop.f32.mrf.mxu0
        %v2850 = vpop.f32.mrf.mxu0
        %v2851 = vpop.f32.mrf.mxu0
        %2852 = vdwg.mxu0
        %v2853 = vsel %vm1334, %v2698, -inf
        %2854 = vmax.xlane.f32.xlu0 %v2853
        %v2855 = vpop.xlane.xlu0 %2854
        %v2856 = vsel %vm1334, %v2748, -inf
        %2857 = vmax.xlane.f32.xlu0 %v2856
        %v2858 = vpop.xlane.xlu0 %2857
        %v2859 = vsel %vm1334, %v2798, -inf
        %2860 = vmax.xlane.f32.xlu0 %v2859
        %v2861 = vpop.xlane.xlu0 %2860
        %v2862 = vsel %vm1334, %v2848, -inf
        %2863 = vmax.xlane.f32.xlu0 %v2862
        %v2864 = vpop.xlane.xlu0 %2863
        %v2865 = vsub.f32 %v2698, %v2855
        %v2866 = vsub.f32 %v2748, %v2858
        %v2867 = vsub.f32 %v2798, %v2861
        %v2868 = vsub.f32 %v2848, %v2864
        %v2869 = vmul.f32 %v2865, 1.442695
        %v2870 = vpow.pop %v2869
        %v2871 = vmul.f32 %v2866, 1.442695
        %v2872 = vpow.pop %v2871
        %v2873 = vmul.f32 %v2867, 1.442695
        %v2874 = vpow.pop %v2873
        %v2875 = vmul.f32 %v2868, 1.442695
        %v2876 = vpow.pop %v2875
        %v2877 = vsel %vm1334, %v2870, 0.0
        %2878 = vadd.xlane.f32.xlu0 %v2877
        %v2879 = vpop.xlane.xlu0 %2878
        %v2880 = vsel %vm1334, %v2872, 0.0
        %2881 = vadd.xlane.f32.xlu0 %v2880
        %v2882 = vpop.xlane.xlu0 %2881
        %v2883 = vsel %vm1334, %v2874, 0.0
        %2884 = vadd.xlane.f32.xlu0 %v2883
        %v2885 = vpop.xlane.xlu0 %2884
        %v2886 = vsel %vm1334, %v2876, 0.0
        %2887 = vadd.xlane.f32.xlu0 %v2886
        %v2888 = vpop.xlane.xlu0 %2887
        %v2889 = vrcp.pop %v2879
        %v2890 = vrcp.pop %v2882
        %v2891 = vrcp.pop %v2885
        %v2892 = vrcp.pop %v2888
        %v2893 = vmul.f32 %v2870, %v2889
        %v2894 = vmul.f32 %v2872, %v2890
        %v2895 = vmul.f32 %v2874, %v2891
        %v2896 = vmul.f32 %v2876, %v2892
        %v2897 = vpack.c.bf16 %v2893, %v2893
        %v2898 = vpack.c.bf16 %v2894, %v2894
        %v2899 = vpack.c.bf16 %v2895, %v2895
        %v2900 = vpack.c.bf16 %v2896, %v2896
        %2901 = vrot.lane.b32.xlu0 %v1133, 80
        %v2902 = vpop.permute.xlu0 %2901
        %v2904 = vsel %vm1334, %v2897, 0
        %v2907 = vsel %vm1386, %v2902, 0
        %2909 = vmatprep.subr.bf16.mxu0 0
        %2910 = vmatpush1.bf16.msra.mxu0 0
        %2911 = vmatprep.subr.bf16.mxu0 0
        %2912 = vmatpush1.bf16.msra.mxu0 0
        %2913 = vmatprep.subr.bf16.mxu0 0
        %2914 = vmatpush1.bf16.msra.mxu0 0
        %2915 = vmatprep.subr.bf16.mxu0 0
        %2916 = vmatpush1.bf16.msra.mxu0 0
        %2917 = vmatprep.subr.bf16.mxu0 0
        %2918 = vmatpush1.bf16.msra.mxu0 0
        %2919 = vmatprep.subr.bf16.mxu0 0
        %2920 = vmatpush1.bf16.msra.mxu0 0
        %2921 = vmatprep.subr.bf16.mxu0 0
        %2922 = vmatpush1.bf16.msra.mxu0 0
        %2923 = vmatprep.subr.bf16.mxu0 0
        %2924 = vmatpush1.bf16.msra.mxu0 %v2907
        %2925 = vmatprep.subr.bf16.mxu0 0
        %2926 = vmatpush2.bf16.msra.mxu0 0
        %2927 = vmatprep.subr.bf16.mxu0 0
        %2928 = vmatpush2.bf16.msra.mxu0 0
        %2929 = vmatprep.subr.bf16.mxu0 0
        %2930 = vmatpush2.bf16.msra.mxu0 0
        %2931 = vmatprep.subr.bf16.mxu0 0
        %2932 = vmatpush2.bf16.msra.mxu0 0
        %2933 = vmatprep.subr.bf16.mxu0 0
        %2934 = vmatpush2.bf16.msra.mxu0 0
        %2935 = vmatprep.subr.bf16.mxu0 0
        %2936 = vmatpush2.bf16.msra.mxu0 0
        %2937 = vmatprep.subr.bf16.mxu0 0
        %2938 = vmatpush2.bf16.msra.mxu0 0
        %2939 = vmatprep.subr.bf16.mxu0 0
        %2940 = vmatpush2.bf16.msra.mxu0 0
        %2941 = vmatprep.mubr.bf16.mxu0 0
        %2942 = vmatmul.mubr.bf16.gmra.mxu0 %v2904
        %v2943 = vpop.f32.mrf.mxu0
        %v2944 = vadd.f32 0.0, %v2943
        %v2945 = vpop.f32.mrf.mxu0
        %v2946 = vpop.f32.mrf.mxu0
        %v2947 = vpop.f32.mrf.mxu0
        %2948 = vdwg.mxu0
        %2949 = vrot.lane.b32.xlu0 %v1134, 80
        %v2950 = vpop.permute.xlu0 %2949
        %v2952 = vsel %vm1334, %v2898, 0
        %v2955 = vsel %vm1386, %v2950, 0
        %2957 = vmatprep.subr.bf16.mxu0 0
        %2958 = vmatpush1.bf16.msra.mxu0 0
        %2959 = vmatprep.subr.bf16.mxu0 0
        %2960 = vmatpush1.bf16.msra.mxu0 0
        %2961 = vmatprep.subr.bf16.mxu0 0
        %2962 = vmatpush1.bf16.msra.mxu0 0
        %2963 = vmatprep.subr.bf16.mxu0 0
        %2964 = vmatpush1.bf16.msra.mxu0 0
        %2965 = vmatprep.subr.bf16.mxu0 0
        %2966 = vmatpush1.bf16.msra.mxu0 0
        %2967 = vmatprep.subr.bf16.mxu0 0
        %2968 = vmatpush1.bf16.msra.mxu0 0
        %2969 = vmatprep.subr.bf16.mxu0 0
        %2970 = vmatpush1.bf16.msra.mxu0 0
        %2971 = vmatprep.subr.bf16.mxu0 0
        %2972 = vmatpush1.bf16.msra.mxu0 %v2955
        %2973 = vmatprep.subr.bf16.mxu0 0
        %2974 = vmatpush2.bf16.msra.mxu0 0
        %2975 = vmatprep.subr.bf16.mxu0 0
        %2976 = vmatpush2.bf16.msra.mxu0 0
        %2977 = vmatprep.subr.bf16.mxu0 0
        %2978 = vmatpush2.bf16.msra.mxu0 0
        %2979 = vmatprep.subr.bf16.mxu0 0
        %2980 = vmatpush2.bf16.msra.mxu0 0
        %2981 = vmatprep.subr.bf16.mxu0 0
        %2982 = vmatpush2.bf16.msra.mxu0 0
        %2983 = vmatprep.subr.bf16.mxu0 0
        %2984 = vmatpush2.bf16.msra.mxu0 0
        %2985 = vmatprep.subr.bf16.mxu0 0
        %2986 = vmatpush2.bf16.msra.mxu0 0
        %2987 = vmatprep.subr.bf16.mxu0 0
        %2988 = vmatpush2.bf16.msra.mxu0 0
        %2989 = vmatprep.mubr.bf16.mxu0 0
        %2990 = vmatmul.mubr.bf16.gmra.mxu0 %v2952
        %v2991 = vpop.f32.mrf.mxu0
        %v2992 = vadd.f32 0.0, %v2991
        %v2993 = vpop.f32.mrf.mxu0
        %v2994 = vpop.f32.mrf.mxu0
        %v2995 = vpop.f32.mrf.mxu0
        %2996 = vdwg.mxu0
        %2997 = vrot.lane.b32.xlu0 %v1135, 80
        %v2998 = vpop.permute.xlu0 %2997
        %v3000 = vsel %vm1334, %v2899, 0
        %v3003 = vsel %vm1386, %v2998, 0
        %3005 = vmatprep.subr.bf16.mxu0 0
        %3006 = vmatpush1.bf16.msra.mxu0 0
        %3007 = vmatprep.subr.bf16.mxu0 0
        %3008 = vmatpush1.bf16.msra.mxu0 0
        %3009 = vmatprep.subr.bf16.mxu0 0
        %3010 = vmatpush1.bf16.msra.mxu0 0
        %3011 = vmatprep.subr.bf16.mxu0 0
        %3012 = vmatpush1.bf16.msra.mxu0 0
        %3013 = vmatprep.subr.bf16.mxu0 0
        %3014 = vmatpush1.bf16.msra.mxu0 0
        %3015 = vmatprep.subr.bf16.mxu0 0
        %3016 = vmatpush1.bf16.msra.mxu0 0
        %3017 = vmatprep.subr.bf16.mxu0 0
        %3018 = vmatpush1.bf16.msra.mxu0 0
        %3019 = vmatprep.subr.bf16.mxu0 0
        %3020 = vmatpush1.bf16.msra.mxu0 %v3003
        %3021 = vmatprep.subr.bf16.mxu0 0
        %3022 = vmatpush2.bf16.msra.mxu0 0
        %3023 = vmatprep.subr.bf16.mxu0 0
        %3024 = vmatpush2.bf16.msra.mxu0 0
        %3025 = vmatprep.subr.bf16.mxu0 0
        %3026 = vmatpush2.bf16.msra.mxu0 0
        %3027 = vmatprep.subr.bf16.mxu0 0
        %3028 = vmatpush2.bf16.msra.mxu0 0
        %3029 = vmatprep.subr.bf16.mxu0 0
        %3030 = vmatpush2.bf16.msra.mxu0 0
        %3031 = vmatprep.subr.bf16.mxu0 0
        %3032 = vmatpush2.bf16.msra.mxu0 0
        %3033 = vmatprep.subr.bf16.mxu0 0
        %3034 = vmatpush2.bf16.msra.mxu0 0
        %3035 = vmatprep.subr.bf16.mxu0 0
        %3036 = vmatpush2.bf16.msra.mxu0 0
        %3037 = vmatprep.mubr.bf16.mxu0 0
        %3038 = vmatmul.mubr.bf16.gmra.mxu0 %v3000
        %v3039 = vpop.f32.mrf.mxu0
        %v3040 = vadd.f32 0.0, %v3039
        %v3041 = vpop.f32.mrf.mxu0
        %v3042 = vpop.f32.mrf.mxu0
        %v3043 = vpop.f32.mrf.mxu0
        %3044 = vdwg.mxu0
        %3045 = vrot.lane.b32.xlu0 %v1136, 80
        %v3046 = vpop.permute.xlu0 %3045
        %v3048 = vsel %vm1334, %v2900, 0
        %v3051 = vsel %vm1386, %v3046, 0
        %3053 = vmatprep.subr.bf16.mxu0 0
        %3054 = vmatpush1.bf16.msra.mxu0 0
        %3055 = vmatprep.subr.bf16.mxu0 0
        %3056 = vmatpush1.bf16.msra.mxu0 0
        %3057 = vmatprep.subr.bf16.mxu0 0
        %3058 = vmatpush1.bf16.msra.mxu0 0
        %3059 = vmatprep.subr.bf16.mxu0 0
        %3060 = vmatpush1.bf16.msra.mxu0 0
        %3061 = vmatprep.subr.bf16.mxu0 0
        %3062 = vmatpush1.bf16.msra.mxu0 0
        %3063 = vmatprep.subr.bf16.mxu0 0
        %3064 = vmatpush1.bf16.msra.mxu0 0
        %3065 = vmatprep.subr.bf16.mxu0 0
        %3066 = vmatpush1.bf16.msra.mxu0 0
        %3067 = vmatprep.subr.bf16.mxu0 0
        %3068 = vmatpush1.bf16.msra.mxu0 %v3051
        %3069 = vmatprep.subr.bf16.mxu0 0
        %3070 = vmatpush2.bf16.msra.mxu0 0
        %3071 = vmatprep.subr.bf16.mxu0 0
        %3072 = vmatpush2.bf16.msra.mxu0 0
        %3073 = vmatprep.subr.bf16.mxu0 0
        %3074 = vmatpush2.bf16.msra.mxu0 0
        %3075 = vmatprep.subr.bf16.mxu0 0
        %3076 = vmatpush2.bf16.msra.mxu0 0
        %3077 = vmatprep.subr.bf16.mxu0 0
        %3078 = vmatpush2.bf16.msra.mxu0 0
        %3079 = vmatprep.subr.bf16.mxu0 0
        %3080 = vmatpush2.bf16.msra.mxu0 0
        %3081 = vmatprep.subr.bf16.mxu0 0
        %3082 = vmatpush2.bf16.msra.mxu0 0
        %3083 = vmatprep.subr.bf16.mxu0 0
        %3084 = vmatpush2.bf16.msra.mxu0 0
        %3085 = vmatprep.mubr.bf16.mxu0 0
        %3086 = vmatmul.mubr.bf16.gmra.mxu0 %v3048
        %v3087 = vpop.f32.mrf.mxu0
        %v3088 = vadd.f32 0.0, %v3087
        %v3089 = vpop.f32.mrf.mxu0
        %v3090 = vpop.f32.mrf.mxu0
        %v3091 = vpop.f32.mrf.mxu0
        %3092 = vdwg.mxu0
        %v3093 = vpack.c.bf16 %v2992, %v2944
        %v3094 = vpack.c.bf16 %v3088, %v3040
        %s3095 = scalar_lea.vmem [#allocation11], 24
        %v3096 = vld [vmem:[%s3095] sm:$0xf]
        %v3097 = vld [vmem:[%s3095 + $0x4] sm:$0xf]
        %v3100 = vunpack.c.l.b16 %v3096
        %v3101 = vunpack.c.l.b16 %v3097
        %v3102 = vpack.c.b16 %v3101, %v3100
        %v3105 = vsel %vm1140, %v3093, 0
        %v3108 = vsel %vm1140, %v3094, 0
        %3110 = vmatprep.subr.bf16.mxu0 0
        %3111 = vmatpush1.bf16.msra.mxu0 0
        %3112 = vmatprep.subr.bf16.mxu0 0
        %3113 = vmatpush1.bf16.msra.mxu0 0
        %3114 = vmatprep.subr.bf16.mxu0 0
        %3115 = vmatpush1.bf16.msra.mxu0 0
        %3116 = vmatprep.subr.bf16.mxu0 0
        %3117 = vmatpush1.bf16.msra.mxu0 0
        %3118 = vmatprep.subr.bf16.mxu0 0
        %3119 = vmatpush1.bf16.msra.mxu0 0
        %3120 = vmatprep.subr.bf16.mxu0 0
        %3121 = vmatpush1.bf16.msra.mxu0 0
        %3122 = vmatprep.subr.bf16.mxu0 0
        %3123 = vmatpush1.bf16.msra.mxu0 0
        %3124 = vmatprep.subr.bf16.mxu0 0
        %3125 = vmatpush1.bf16.msra.mxu0 %v3102
        %3126 = vmatprep.subr.bf16.mxu0 0
        %3127 = vmatpush2.bf16.msra.mxu0 0
        %3128 = vmatprep.subr.bf16.mxu0 0
        %3129 = vmatpush2.bf16.msra.mxu0 0
        %3130 = vmatprep.subr.bf16.mxu0 0
        %3131 = vmatpush2.bf16.msra.mxu0 0
        %3132 = vmatprep.subr.bf16.mxu0 0
        %3133 = vmatpush2.bf16.msra.mxu0 0
        %3134 = vmatprep.subr.bf16.mxu0 0
        %3135 = vmatpush2.bf16.msra.mxu0 0
        %3136 = vmatprep.subr.bf16.mxu0 0
        %3137 = vmatpush2.bf16.msra.mxu0 0
        %3138 = vmatprep.subr.bf16.mxu0 0
        %3139 = vmatpush2.bf16.msra.mxu0 0
        %3140 = vmatprep.subr.bf16.mxu0 0
        %3141 = vmatpush2.bf16.msra.mxu0 0
        %3142 = vmatprep.mubr.bf16.mxu0 0
        %3143 = vmatmul.mubr.bf16.gmra.mxu0 %v3105
        %v3144 = vpop.f32.mrf.mxu0
        %v3145 = vadd.f32 0.0, %v3144
        %v3146 = vpop.f32.mrf.mxu0
        %v3147 = vpop.f32.mrf.mxu0
        %v3148 = vadd.f32 0.0, %v3147
        %v3149 = vpop.f32.mrf.mxu0
        %3150 = vmatprep.mubr.bf16.mxu0 0
        %3151 = vmatmul.mubr.bf16.gmra.mxu0 %v3108
        %v3152 = vpop.f32.mrf.mxu0
        %v3153 = vadd.f32 0.0, %v3152
        %v3154 = vpop.f32.mrf.mxu0
        %v3155 = vpop.f32.mrf.mxu0
        %v3156 = vadd.f32 0.0, %v3155
        %v3157 = vpop.f32.mrf.mxu0
        %3158 = vdwg.mxu0
        %v3159 = vadd.f32 %v2649, %v3145
        %v3160 = vadd.f32 %v2650, %v3148
        %v3161 = vadd.f32 %v2651, %v3153
        %v3162 = vadd.f32 %v2652, %v3156
        %v3163 = vadd.f32 %v929, %v3159
        %v3164 = vadd.f32 %v930, %v3160
        %v3165 = vadd.f32 %v931, %v3161
        %v3166 = vadd.f32 %v932, %v3162
        %v3167 = vld [vmem:[#allocation13] sm:$0x1]
        %v3169 = vlaneseq
        %v3170 = vshrl.u32 %v3169, 7
        %v3171 = vsub.s32 0, %v3170
        %v3172 = vrot.slane %v3167, %v3171
        %v3174 = vadd.f32 %v3163, %v3172
        %v3175 = vadd.f32 %v3164, %v3172
        %v3176 = vadd.f32 %v3165, %v3172
        %v3177 = vadd.f32 %v3166, %v3172
        %v3178 = vld [vmem:[#allocation14] sm:$0x1]
        %v3179 = vld [vmem:[#allocation16] sm:$0x1]
        %v3180 = vsel %vm849, %v3174, 0.0
        %3181 = vadd.xlane.f32.xlu0 %v3180
        %v3182 = vpop.xlane.xlu0 %3181
        %v3183 = vsel %vm849, %v3175, 0.0
        %3184 = vadd.xlane.f32.xlu0 %v3183
        %v3185 = vpop.xlane.xlu0 %3184
        %v3186 = vsel %vm849, %v3176, 0.0
        %3187 = vadd.xlane.f32.xlu0 %v3186
        %v3188 = vpop.xlane.xlu0 %3187
        %v3189 = vsel %vm849, %v3177, 0.0
        %3190 = vadd.xlane.f32.xlu0 %v3189
        %v3191 = vpop.xlane.xlu0 %3190
        %v3192 = vmul.f32 %v3182, %v947
        %v3193 = vmul.f32 %v3185, %v947
        %v3194 = vmul.f32 %v3188, %v947
        %v3195 = vmul.f32 %v3191, %v947
        %v3196 = vsub.f32 %v3174, %v3192
        %v3197 = vsub.f32 %v3175, %v3193
        %v3198 = vsub.f32 %v3176, %v3194
        %v3199 = vsub.f32 %v3177, %v3195
        %v3200 = vmul.f32 %v3196, %v3196
        %v3201 = vmul.f32 %v3197, %v3197
        %v3202 = vmul.f32 %v3198, %v3198
        %v3203 = vmul.f32 %v3199, %v3199
        %v3204 = vsel %vm849, %v3200, 0.0
        %3205 = vadd.xlane.f32.xlu0 %v3204
        %v3206 = vpop.xlane.xlu0 %3205
        %v3207 = vsel %vm849, %v3201, 0.0
        %3208 = vadd.xlane.f32.xlu0 %v3207
        %v3209 = vpop.xlane.xlu0 %3208
        %v3210 = vsel %vm849, %v3202, 0.0
        %3211 = vadd.xlane.f32.xlu0 %v3210
        %v3212 = vpop.xlane.xlu0 %3211
        %v3213 = vsel %vm849, %v3203, 0.0
        %3214 = vadd.xlane.f32.xlu0 %v3213
        %v3215 = vpop.xlane.xlu0 %3214
        %v3216 = vmul.f32 %v3206, %v947
        %v3217 = vmul.f32 %v3209, %v947
        %v3218 = vmul.f32 %v3212, %v947
        %v3219 = vmul.f32 %v3215, %v947
        %v3220 = vadd.f32 %v3216, 1e-05
        %v3221 = vadd.f32 %v3217, 1e-05
        %v3222 = vadd.f32 %v3218, 1e-05
        %v3223 = vadd.f32 %v3219, 1e-05
        %v3224 = vrsqrt.pop %v3220
        %v3225 = vrsqrt.pop %v3221
        %v3226 = vrsqrt.pop %v3222
        %v3227 = vrsqrt.pop %v3223
        %v3228 = vmul.f32 %v3196, %v3224
        %v3229 = vmul.f32 %v3197, %v3225
        %v3230 = vmul.f32 %v3198, %v3226
        %v3231 = vmul.f32 %v3199, %v3227
        %v3233 = vlaneseq
        %v3234 = vshrl.u32 %v3233, 7
        %v3235 = vsub.s32 0, %v3234
        %v3236 = vrot.slane %v3178, %v3235
        %v3238 = vmul.f32 %v3228, %v3236
        %v3239 = vmul.f32 %v3229, %v3236
        %v3240 = vmul.f32 %v3230, %v3236
        %v3241 = vmul.f32 %v3231, %v3236
        %v3243 = vlaneseq
        %v3244 = vshrl.u32 %v3243, 7
        %v3245 = vsub.s32 0, %v3244
        %v3246 = vrot.slane %v3179, %v3245
        %v3248 = vadd.f32 %v3238, %v3246
        %v3249 = vadd.f32 %v3239, %v3246
        %v3250 = vadd.f32 %v3240, %v3246
        %v3251 = vadd.f32 %v3241, %v3246
        %v3252 = vpack.c.bf16 %v3249, %v3248
        %v3253 = vpack.c.bf16 %v3251, %v3250
        %v3254 = vld [vmem:[%s15] sm:$0x1]
        %v3256 = vlaneseq
        %v3257 = vshrl.u32 %v3256, 7
        %v3258 = vsub.s32 0, %v3257
        %v3259 = vrot.slane %v3254, %v3258
        %v3261 = vadd.f32 %v3174, %v3259
        %v3262 = vadd.f32 %v3175, %v3259
        %v3263 = vadd.f32 %v3176, %v3259
        %v3264 = vadd.f32 %v3177, %v3259
        %v3265 = vld [vmem:[%s12] sm:$0xf]
        %v3266 = vld [vmem:[%s12 + $0x8] sm:$0xf]
        %v3267 = vld [vmem:[%s12 + $0x10] sm:$0xf]
        %v3268 = vld [vmem:[%s12 + $0x18] sm:$0xf]
        %v3269 = vld [vmem:[%s12 + $0x20] sm:$0xf]
        %v3270 = vld [vmem:[%s12 + $0x28] sm:$0xf]
        %v3271 = vld [vmem:[%s12 + $0x30] sm:$0xf]
        %v3272 = vld [vmem:[%s12 + $0x38] sm:$0xf]
        %v3273 = vld [vmem:[%s13] sm:$0x1]
        %v3275 = vlaneseq
        %v3276 = vshrl.u32 %v3275, 7
        %v3277 = vsub.s32 0, %v3276
        %v3278 = vrot.slane %v3273, %v3277
        %v3288 = vunpack.c.l.b16 %v3265
        %v3289 = vunpack.c.l.b16 %v3266
        %v3290 = vunpack.c.l.b16 %v3267
        %v3291 = vunpack.c.l.b16 %v3268
        %v3292 = vunpack.c.l.b16 %v3269
        %v3293 = vunpack.c.l.b16 %v3270
        %v3294 = vunpack.c.l.b16 %v3271
        %v3295 = vunpack.c.l.b16 %v3272
        %v3296 = vpack.c.b16 %v3289, %v3288
        %v3297 = vpack.c.b16 %v3291, %v3290
        %v3298 = vpack.c.b16 %v3293, %v3292
        %v3299 = vpack.c.b16 %v3295, %v3294
        %v3305 = vsel %vm849, %v3252, 0
        %v3308 = vsel %vm849, %v3253, 0
        %3310 = vmatprep.subr.bf16.mxu0 0
        %3311 = vmatpush1.bf16.msra.mxu0 0
        %3312 = vmatprep.subr.bf16.mxu0 0
        %3313 = vmatpush1.bf16.msra.mxu0 0
        %3314 = vmatprep.subr.bf16.mxu0 0
        %3315 = vmatpush1.bf16.msra.mxu0 0
        %3316 = vmatprep.subr.bf16.mxu0 0
        %3317 = vmatpush1.bf16.msra.mxu0 0
        %3318 = vmatprep.subr.bf16.mxu0 0
        %3319 = vmatpush1.bf16.msra.mxu0 %v3299
        %3320 = vmatprep.subr.bf16.mxu0 0
        %3321 = vmatpush1.bf16.msra.mxu0 %v3298
        %3322 = vmatprep.subr.bf16.mxu0 0
        %3323 = vmatpush1.bf16.msra.mxu0 %v3297
        %3324 = vmatprep.subr.bf16.mxu0 0
        %3325 = vmatpush1.bf16.msra.mxu0 %v3296
        %3326 = vmatprep.subr.bf16.mxu0 0
        %3327 = vmatpush2.bf16.msra.mxu0 0
        %3328 = vmatprep.subr.bf16.mxu0 0
        %3329 = vmatpush2.bf16.msra.mxu0 0
        %3330 = vmatprep.subr.bf16.mxu0 0
        %3331 = vmatpush2.bf16.msra.mxu0 0
        %3332 = vmatprep.subr.bf16.mxu0 0
        %3333 = vmatpush2.bf16.msra.mxu0 0
        %3334 = vmatprep.subr.bf16.mxu0 0
        %3335 = vmatpush2.bf16.msra.mxu0 0
        %3336 = vmatprep.subr.bf16.mxu0 0
        %3337 = vmatpush2.bf16.msra.mxu0 0
        %3338 = vmatprep.subr.bf16.mxu0 0
        %3339 = vmatpush2.bf16.msra.mxu0 0
        %3340 = vmatprep.subr.bf16.mxu0 0
        %3341 = vmatpush2.bf16.msra.mxu0 0
        %3342 = vmatprep.mubr.bf16.mxu0 0
        %3343 = vmatmul.mubr.bf16.gmra.mxu0 %v3305
        %v3344 = vpop.f32.mrf.mxu0
        %v3345 = vadd.f32 %v3278, %v3344
        %v3346 = vpop.f32.mrf.mxu0
        %v3347 = vpop.f32.mrf.mxu0
        %v3348 = vadd.f32 %v3278, %v3347
        %v3349 = vpop.f32.mrf.mxu0
        %3350 = vmatprep.mubr.bf16.mxu0 0
        %3351 = vmatmul.mubr.bf16.gmra.mxu0 %v3308
        %v3352 = vpop.f32.mrf.mxu0
        %v3353 = vadd.f32 %v3278, %v3352
        %v3354 = vpop.f32.mrf.mxu0
        %v3355 = vpop.f32.mrf.mxu0
        %v3356 = vadd.f32 %v3278, %v3355
        %v3357 = vpop.f32.mrf.mxu0
        %3358 = vdwg.mxu0
        %v3359 = vmul.f32 %v3345, %v3345
        %v3360 = vmul.f32 %v3348, %v3348
        %v3361 = vmul.f32 %v3353, %v3353
        %v3362 = vmul.f32 %v3356, %v3356
        %v3363 = vmul.f32 %v3345, %v3359
        %v3364 = vmul.f32 %v3348, %v3360
        %v3365 = vmul.f32 %v3353, %v3361
        %v3366 = vmul.f32 %v3356, %v3362
        %v3367 = vmul.f32 %v3363, 0.044715
        %v3368 = vmul.f32 %v3364, 0.044715
        %v3369 = vmul.f32 %v3365, 0.044715
        %v3370 = vmul.f32 %v3366, 0.044715
        %v3371 = vadd.f32 %v3345, %v3367
        %v3372 = vadd.f32 %v3348, %v3368
        %v3373 = vadd.f32 %v3353, %v3369
        %v3374 = vadd.f32 %v3356, %v3370
        %v3375 = vmul.f32 %v3371, 0.7978846
        %v3376 = vmul.f32 %v3372, 0.7978846
        %v3377 = vmul.f32 %v3373, 0.7978846
        %v3378 = vmul.f32 %v3374, 0.7978846
        %v3379 = vtanh.pop %v3375
        %v3380 = vtanh.pop %v3376
        %v3381 = vtanh.pop %v3377
        %v3382 = vtanh.pop %v3378
        %v3383 = vadd.f32 %v3379, 1.0
        %v3384 = vadd.f32 %v3380, 1.0
        %v3385 = vadd.f32 %v3381, 1.0
        %v3386 = vadd.f32 %v3382, 1.0
        %v3387 = vmul.f32 %v3383, 0.5
        %v3388 = vmul.f32 %v3384, 0.5
        %v3389 = vmul.f32 %v3385, 0.5
        %v3390 = vmul.f32 %v3386, 0.5
        %v3391 = vmul.f32 %v3345, %v3387
        %v3392 = vmul.f32 %v3348, %v3388
        %v3393 = vmul.f32 %v3353, %v3389
        %v3394 = vmul.f32 %v3356, %v3390
        %v3395 = vpack.c.bf16 %v3392, %v3391
        %v3396 = vpack.c.bf16 %v3394, %v3393
        %v3397 = vld [vmem:[%s14] sm:$0xf]
        %v3398 = vld [vmem:[%s14 + $0x4] sm:$0xf]
        %v3399 = vld [vmem:[%s14 + $0x8] sm:$0xf]
        %v3400 = vld [vmem:[%s14 + $0xc] sm:$0xf]
        %v3401 = vld [vmem:[%s14 + $0x10] sm:$0xf]
        %v3402 = vld [vmem:[%s14 + $0x14] sm:$0xf]
        %v3403 = vld [vmem:[%s14 + $0x18] sm:$0xf]
        %v3404 = vld [vmem:[%s14 + $0x1c] sm:$0xf]
        %v3405 = vld [vmem:[%s14 + $0x20] sm:$0xf]
        %v3406 = vld [vmem:[%s14 + $0x24] sm:$0xf]
        %v3407 = vld [vmem:[%s14 + $0x28] sm:$0xf]
        %v3408 = vld [vmem:[%s14 + $0x2c] sm:$0xf]
        %v3409 = vld [vmem:[%s14 + $0x30] sm:$0xf]
        %v3410 = vld [vmem:[%s14 + $0x34] sm:$0xf]
        %v3411 = vld [vmem:[%s14 + $0x38] sm:$0xf]
        %v3412 = vld [vmem:[%s14 + $0x3c] sm:$0xf]
        %v3429 = vunpack.c.l.b16 %v3397
        %v3430 = vunpack.c.l.b16 %v3398
        %v3431 = vunpack.c.l.b16 %v3399
        %v3432 = vunpack.c.l.b16 %v3400
        %v3433 = vunpack.c.l.b16 %v3401
        %v3434 = vunpack.c.l.b16 %v3402
        %v3435 = vunpack.c.l.b16 %v3403
        %v3436 = vunpack.c.l.b16 %v3404
        %v3437 = vunpack.c.l.b16 %v3405
        %v3438 = vunpack.c.l.b16 %v3406
        %v3439 = vunpack.c.l.b16 %v3407
        %v3440 = vunpack.c.l.b16 %v3408
        %v3441 = vunpack.c.l.b16 %v3409
        %v3442 = vunpack.c.l.b16 %v3410
        %v3443 = vunpack.c.l.b16 %v3411
        %v3444 = vunpack.c.l.b16 %v3412
        %v3445 = vpack.c.b16 %v3430, %v3429
        %v3446 = vpack.c.b16 %v3432, %v3431
        %v3447 = vpack.c.b16 %v3434, %v3433
        %v3448 = vpack.c.b16 %v3436, %v3435
        %v3449 = vpack.c.b16 %v3438, %v3437
        %v3450 = vpack.c.b16 %v3440, %v3439
        %v3451 = vpack.c.b16 %v3442, %v3441
        %v3452 = vpack.c.b16 %v3444, %v3443
        %3461 = vmatprep.subr.bf16.mxu0 0
        %3462 = vmatpush1.bf16.msra.mxu0 %v3452
        %3463 = vmatprep.subr.bf16.mxu0 0
        %3464 = vmatpush1.bf16.msra.mxu0 %v3451
        %3465 = vmatprep.subr.bf16.mxu0 0
        %3466 = vmatpush1.bf16.msra.mxu0 %v3450
        %3467 = vmatprep.subr.bf16.mxu0 0
        %3468 = vmatpush1.bf16.msra.mxu0 %v3449
        %3469 = vmatprep.subr.bf16.mxu0 0
        %3470 = vmatpush1.bf16.msra.mxu0 %v3448
        %3471 = vmatprep.subr.bf16.mxu0 0
        %3472 = vmatpush1.bf16.msra.mxu0 %v3447
        %3473 = vmatprep.subr.bf16.mxu0 0
        %3474 = vmatpush1.bf16.msra.mxu0 %v3446
        %3475 = vmatprep.subr.bf16.mxu0 0
        %3476 = vmatpush1.bf16.msra.mxu0 %v3445
        %3477 = vmatprep.subr.bf16.mxu0 0
        %3478 = vmatpush2.bf16.msra.mxu0 0
        %3479 = vmatprep.subr.bf16.mxu0 0
        %3480 = vmatpush2.bf16.msra.mxu0 0
        %3481 = vmatprep.subr.bf16.mxu0 0
        %3482 = vmatpush2.bf16.msra.mxu0 0
        %3483 = vmatprep.subr.bf16.mxu0 0
        %3484 = vmatpush2.bf16.msra.mxu0 0
        %3485 = vmatprep.subr.bf16.mxu0 0
        %3486 = vmatpush2.bf16.msra.mxu0 0
        %3487 = vmatprep.subr.bf16.mxu0 0
        %3488 = vmatpush2.bf16.msra.mxu0 0
        %3489 = vmatprep.subr.bf16.mxu0 0
        %3490 = vmatpush2.bf16.msra.mxu0 0
        %3491 = vmatprep.subr.bf16.mxu0 0
        %3492 = vmatpush2.bf16.msra.mxu0 0
        %3493 = vmatprep.mubr.bf16.mxu0 0
        %3494 = vmatmul.mubr.bf16.gmra.mxu0 %v3395
        %v3495 = vpop.f32.mrf.mxu0
        %v3496 = vadd.f32 0.0, %v3495
        %v3497 = vpop.f32.mrf.mxu0
        %v3498 = vpop.f32.mrf.mxu0
        %v3499 = vadd.f32 0.0, %v3498
        %v3500 = vpop.f32.mrf.mxu0
        %3501 = vmatprep.mubr.bf16.mxu0 0
        %3502 = vmatmul.mubr.bf16.gmra.mxu0 %v3396
        %v3503 = vpop.f32.mrf.mxu0
        %v3504 = vadd.f32 0.0, %v3503
        %v3505 = vpop.f32.mrf.mxu0
        %v3506 = vpop.f32.mrf.mxu0
        %v3507 = vadd.f32 0.0, %v3506
        %v3508 = vpop.f32.mrf.mxu0
        %3509 = vdwg.mxu0
        %v3510 = vadd.f32 %v3261, %v3496
        %v3511 = vadd.f32 %v3262, %v3499
        %v3512 = vadd.f32 %v3263, %v3504
        %v3513 = vadd.f32 %v3264, %v3507
        %v3514 = vld [vmem:[%s12 + $0x4] sm:$0xf]
        %v3515 = vld [vmem:[%s12 + $0xc] sm:$0xf]
        %v3516 = vld [vmem:[%s12 + $0x14] sm:$0xf]
        %v3517 = vld [vmem:[%s12 + $0x1c] sm:$0xf]
        %v3518 = vld [vmem:[%s12 + $0x24] sm:$0xf]
        %v3519 = vld [vmem:[%s12 + $0x2c] sm:$0xf]
        %v3520 = vld [vmem:[%s12 + $0x34] sm:$0xf]
        %v3521 = vld [vmem:[%s12 + $0x3c] sm:$0xf]
        %v3522 = vld [vmem:[%s13 + $0x1] sm:$0x1]
        %v3524 = vlaneseq
        %v3525 = vshrl.u32 %v3524, 7
        %v3526 = vsub.s32 0, %v3525
        %v3527 = vrot.slane %v3522, %v3526
        %v3537 = vunpack.c.l.b16 %v3514
        %v3538 = vunpack.c.l.b16 %v3515
        %v3539 = vunpack.c.l.b16 %v3516
        %v3540 = vunpack.c.l.b16 %v3517
        %v3541 = vunpack.c.l.b16 %v3518
        %v3542 = vunpack.c.l.b16 %v3519
        %v3543 = vunpack.c.l.b16 %v3520
        %v3544 = vunpack.c.l.b16 %v3521
        %v3545 = vpack.c.b16 %v3538, %v3537
        %v3546 = vpack.c.b16 %v3540, %v3539
        %v3547 = vpack.c.b16 %v3542, %v3541
        %v3548 = vpack.c.b16 %v3544, %v3543
        %3553 = vmatprep.subr.bf16.mxu0 0
        %3554 = vmatpush1.bf16.msra.mxu0 0
        %3555 = vmatprep.subr.bf16.mxu0 0
        %3556 = vmatpush1.bf16.msra.mxu0 0
        %3557 = vmatprep.subr.bf16.mxu0 0
        %3558 = vmatpush1.bf16.msra.mxu0 0
        %3559 = vmatprep.subr.bf16.mxu0 0
        %3560 = vmatpush1.bf16.msra.mxu0 0
        %3561 = vmatprep.subr.bf16.mxu0 0
        %3562 = vmatpush1.bf16.msra.mxu0 %v3548
        %3563 = vmatprep.subr.bf16.mxu0 0
        %3564 = vmatpush1.bf16.msra.mxu0 %v3547
        %3565 = vmatprep.subr.bf16.mxu0 0
        %3566 = vmatpush1.bf16.msra.mxu0 %v3546
        %3567 = vmatprep.subr.bf16.mxu0 0
        %3568 = vmatpush1.bf16.msra.mxu0 %v3545
        %3569 = vmatprep.subr.bf16.mxu0 0
        %3570 = vmatpush2.bf16.msra.mxu0 0
        %3571 = vmatprep.subr.bf16.mxu0 0
        %3572 = vmatpush2.bf16.msra.mxu0 0
        %3573 = vmatprep.subr.bf16.mxu0 0
        %3574 = vmatpush2.bf16.msra.mxu0 0
        %3575 = vmatprep.subr.bf16.mxu0 0
        %3576 = vmatpush2.bf16.msra.mxu0 0
        %3577 = vmatprep.subr.bf16.mxu0 0
        %3578 = vmatpush2.bf16.msra.mxu0 0
        %3579 = vmatprep.subr.bf16.mxu0 0
        %3580 = vmatpush2.bf16.msra.mxu0 0
        %3581 = vmatprep.subr.bf16.mxu0 0
        %3582 = vmatpush2.bf16.msra.mxu0 0
        %3583 = vmatprep.subr.bf16.mxu0 0
        %3584 = vmatpush2.bf16.msra.mxu0 0
        %3585 = vmatprep.mubr.bf16.mxu0 0
        %3586 = vmatmul.mubr.bf16.gmra.mxu0 %v3305
        %v3587 = vpop.f32.mrf.mxu0
        %v3588 = vadd.f32 %v3527, %v3587
        %v3589 = vpop.f32.mrf.mxu0
        %v3590 = vpop.f32.mrf.mxu0
        %v3591 = vadd.f32 %v3527, %v3590
        %v3592 = vpop.f32.mrf.mxu0
        %3593 = vmatprep.mubr.bf16.mxu0 0
        %3594 = vmatmul.mubr.bf16.gmra.mxu0 %v3308
        %v3595 = vpop.f32.mrf.mxu0
        %v3596 = vadd.f32 %v3527, %v3595
        %v3597 = vpop.f32.mrf.mxu0
        %v3598 = vpop.f32.mrf.mxu0
        %v3599 = vadd.f32 %v3527, %v3598
        %v3600 = vpop.f32.mrf.mxu0
        %3601 = vdwg.mxu0
        %v3602 = vmul.f32 %v3588, %v3588
        %v3603 = vmul.f32 %v3591, %v3591
        %v3604 = vmul.f32 %v3596, %v3596
        %v3605 = vmul.f32 %v3599, %v3599
        %v3606 = vmul.f32 %v3588, %v3602
        %v3607 = vmul.f32 %v3591, %v3603
        %v3608 = vmul.f32 %v3596, %v3604
        %v3609 = vmul.f32 %v3599, %v3605
        %v3610 = vmul.f32 %v3606, 0.044715
        %v3611 = vmul.f32 %v3607, 0.044715
        %v3612 = vmul.f32 %v3608, 0.044715
        %v3613 = vmul.f32 %v3609, 0.044715
        %v3614 = vadd.f32 %v3588, %v3610
        %v3615 = vadd.f32 %v3591, %v3611
        %v3616 = vadd.f32 %v3596, %v3612
        %v3617 = vadd.f32 %v3599, %v3613
        %v3618 = vmul.f32 %v3614, 0.7978846
        %v3619 = vmul.f32 %v3615, 0.7978846
        %v3620 = vmul.f32 %v3616, 0.7978846
        %v3621 = vmul.f32 %v3617, 0.7978846
        %v3622 = vtanh.pop %v3618
        %v3623 = vtanh.pop %v3619
        %v3624 = vtanh.pop %v3620
        %v3625 = vtanh.pop %v3621
        %v3626 = vadd.f32 %v3622, 1.0
        %v3627 = vadd.f32 %v3623, 1.0
        %v3628 = vadd.f32 %v3624, 1.0
        %v3629 = vadd.f32 %v3625, 1.0
        %v3630 = vmul.f32 %v3626, 0.5
        %v3631 = vmul.f32 %v3627, 0.5
        %v3632 = vmul.f32 %v3628, 0.5
        %v3633 = vmul.f32 %v3629, 0.5
        %v3634 = vmul.f32 %v3588, %v3630
        %v3635 = vmul.f32 %v3591, %v3631
        %v3636 = vmul.f32 %v3596, %v3632
        %v3637 = vmul.f32 %v3599, %v3633
        %v3638 = vpack.c.bf16 %v3635, %v3634
        %v3639 = vpack.c.bf16 %v3637, %v3636
        %v3640 = vld [vmem:[%s14 + $0x40] sm:$0xf]
        %v3641 = vld [vmem:[%s14 + $0x44] sm:$0xf]
        %v3642 = vld [vmem:[%s14 + $0x48] sm:$0xf]
        %v3643 = vld [vmem:[%s14 + $0x4c] sm:$0xf]
        %v3644 = vld [vmem:[%s14 + $0x50] sm:$0xf]
        %v3645 = vld [vmem:[%s14 + $0x54] sm:$0xf]
        %v3646 = vld [vmem:[%s14 + $0x58] sm:$0xf]
        %v3647 = vld [vmem:[%s14 + $0x5c] sm:$0xf]
        %v3648 = vld [vmem:[%s14 + $0x60] sm:$0xf]
        %v3649 = vld [vmem:[%s14 + $0x64] sm:$0xf]
        %v3650 = vld [vmem:[%s14 + $0x68] sm:$0xf]
        %v3651 = vld [vmem:[%s14 + $0x6c] sm:$0xf]
        %v3652 = vld [vmem:[%s14 + $0x70] sm:$0xf]
        %v3653 = vld [vmem:[%s14 + $0x74] sm:$0xf]
        %v3654 = vld [vmem:[%s14 + $0x78] sm:$0xf]
        %v3655 = vld [vmem:[%s14 + $0x7c] sm:$0xf]
        %v3672 = vunpack.c.l.b16 %v3640
        %v3673 = vunpack.c.l.b16 %v3641
        %v3674 = vunpack.c.l.b16 %v3642
        %v3675 = vunpack.c.l.b16 %v3643
        %v3676 = vunpack.c.l.b16 %v3644
        %v3677 = vunpack.c.l.b16 %v3645
        %v3678 = vunpack.c.l.b16 %v3646
        %v3679 = vunpack.c.l.b16 %v3647
        %v3680 = vunpack.c.l.b16 %v3648
        %v3681 = vunpack.c.l.b16 %v3649
        %v3682 = vunpack.c.l.b16 %v3650
        %v3683 = vunpack.c.l.b16 %v3651
        %v3684 = vunpack.c.l.b16 %v3652
        %v3685 = vunpack.c.l.b16 %v3653
        %v3686 = vunpack.c.l.b16 %v3654
        %v3687 = vunpack.c.l.b16 %v3655
        %v3688 = vpack.c.b16 %v3673, %v3672
        %v3689 = vpack.c.b16 %v3675, %v3674
        %v3690 = vpack.c.b16 %v3677, %v3676
        %v3691 = vpack.c.b16 %v3679, %v3678
        %v3692 = vpack.c.b16 %v3681, %v3680
        %v3693 = vpack.c.b16 %v3683, %v3682
        %v3694 = vpack.c.b16 %v3685, %v3684
        %v3695 = vpack.c.b16 %v3687, %v3686
        %3704 = vmatprep.subr.bf16.mxu0 0
        %3705 = vmatpush1.bf16.msra.mxu0 %v3695
        %3706 = vmatprep.subr.bf16.mxu0 0
        %3707 = vmatpush1.bf16.msra.mxu0 %v3694
        %3708 = vmatprep.subr.bf16.mxu0 0
        %3709 = vmatpush1.bf16.msra.mxu0 %v3693
        %3710 = vmatprep.subr.bf16.mxu0 0
        %3711 = vmatpush1.bf16.msra.mxu0 %v3692
        %3712 = vmatprep.subr.bf16.mxu0 0
        %3713 = vmatpush1.bf16.msra.mxu0 %v3691
        %3714 = vmatprep.subr.bf16.mxu0 0
        %3715 = vmatpush1.bf16.msra.mxu0 %v3690
        %3716 = vmatprep.subr.bf16.mxu0 0
        %3717 = vmatpush1.bf16.msra.mxu0 %v3689
        %3718 = vmatprep.subr.bf16.mxu0 0
        %3719 = vmatpush1.bf16.msra.mxu0 %v3688
        %3720 = vmatprep.subr.bf16.mxu0 0
        %3721 = vmatpush2.bf16.msra.mxu0 0
        %3722 = vmatprep.subr.bf16.mxu0 0
        %3723 = vmatpush2.bf16.msra.mxu0 0
        %3724 = vmatprep.subr.bf16.mxu0 0
        %3725 = vmatpush2.bf16.msra.mxu0 0
        %3726 = vmatprep.subr.bf16.mxu0 0
        %3727 = vmatpush2.bf16.msra.mxu0 0
        %3728 = vmatprep.subr.bf16.mxu0 0
        %3729 = vmatpush2.bf16.msra.mxu0 0
        %3730 = vmatprep.subr.bf16.mxu0 0
        %3731 = vmatpush2.bf16.msra.mxu0 0
        %3732 = vmatprep.subr.bf16.mxu0 0
        %3733 = vmatpush2.bf16.msra.mxu0 0
        %3734 = vmatprep.subr.bf16.mxu0 0
        %3735 = vmatpush2.bf16.msra.mxu0 0
        %3736 = vmatprep.mubr.bf16.mxu0 0
        %3737 = vmatmul.mubr.bf16.gmra.mxu0 %v3638
        %v3738 = vpop.f32.mrf.mxu0
        %v3739 = vadd.f32 0.0, %v3738
        %v3740 = vpop.f32.mrf.mxu0
        %v3741 = vpop.f32.mrf.mxu0
        %v3742 = vadd.f32 0.0, %v3741
        %v3743 = vpop.f32.mrf.mxu0
        %3744 = vmatprep.mubr.bf16.mxu0 0
        %3745 = vmatmul.mubr.bf16.gmra.mxu0 %v3639
        %v3746 = vpop.f32.mrf.mxu0
        %v3747 = vadd.f32 0.0, %v3746
        %v3748 = vpop.f32.mrf.mxu0
        %v3749 = vpop.f32.mrf.mxu0
        %v3750 = vadd.f32 0.0, %v3749
        %v3751 = vpop.f32.mrf.mxu0
        %3752 = vdwg.mxu0
        %v3753 = vadd.f32 %v3510, %v3739
        %v3754 = vadd.f32 %v3511, %v3742
        %v3755 = vadd.f32 %v3512, %v3747
        %v3756 = vadd.f32 %v3513, %v3750
        %v3757 = vld [vmem:[%s790] sm:$0x1]
        %v3758 = vld [vmem:[%s790 + $0x1] sm:$0x1]
        %v3759 = vld [vmem:[%s790 + $0x2] sm:$0x1]
        %v3760 = vld [vmem:[%s790 + $0x3] sm:$0x1]
        %v3761 = vld [vmem:[%s795] sm:$0x1]
        %v3762 = vld [vmem:[%s795 + $0x1] sm:$0x1]
        %v3763 = vld [vmem:[%s795 + $0x2] sm:$0x1]
        %v3764 = vld [vmem:[%s795 + $0x3] sm:$0x1]
        %3769 = vrot.lane.b32.xlu0 %v3753, 64
        %v3770 = vpop.permute.xlu0 %3769
        %3771 = vrot.lane.b32.xlu0 %v3754, 64
        %v3772 = vpop.permute.xlu0 %3771
        %3773 = vrot.lane.b32.xlu0 %v3755, 64
        %v3774 = vpop.permute.xlu0 %3773
        %3775 = vrot.lane.b32.xlu0 %v3756, 64
        %v3776 = vpop.permute.xlu0 %3775
        %v3781 = vsel %vm849, %v3753, %v3770
        %v3782 = vsel %vm849, %v3754, %v3772
        %v3783 = vsel %vm849, %v3755, %v3774
        %v3784 = vsel %vm849, %v3756, %v3776
        %v3789 = vlaneseq
        %v3790 = vshrl.u32 %v3789, 7
        %v3791 = vsub.s32 0, %v3790
        %v3792 = vrot.slane %v3757, %v3791
        %v3793 = vlaneseq
        %v3794 = vshrl.u32 %v3793, 7
        %v3795 = vsub.s32 0, %v3794
        %v3796 = vrot.slane %v3758, %v3795
        %v3797 = vlaneseq
        %v3798 = vshrl.u32 %v3797, 7
        %v3799 = vsub.s32 0, %v3798
        %v3800 = vrot.slane %v3759, %v3799
        %v3801 = vlaneseq
        %v3802 = vshrl.u32 %v3801, 7
        %v3803 = vsub.s32 0, %v3802
        %v3804 = vrot.slane %v3760, %v3803
        %v3809 = vmul.f32 %v3781, %v3792
        %v3810 = vmul.f32 %v3782, %v3796
        %v3811 = vmul.f32 %v3783, %v3800
        %v3812 = vmul.f32 %v3784, %v3804
        %v3817 = vlaneseq
        %v3818 = vshrl.u32 %v3817, 7
        %v3819 = vsub.s32 0, %v3818
        %v3820 = vrot.slane %v3761, %v3819
        %v3821 = vlaneseq
        %v3822 = vshrl.u32 %v3821, 7
        %v3823 = vsub.s32 0, %v3822
        %v3824 = vrot.slane %v3762, %v3823
        %v3825 = vlaneseq
        %v3826 = vshrl.u32 %v3825, 7
        %v3827 = vsub.s32 0, %v3826
        %v3828 = vrot.slane %v3763, %v3827
        %v3829 = vlaneseq
        %v3830 = vshrl.u32 %v3829, 7
        %v3831 = vsub.s32 0, %v3830
        %v3832 = vrot.slane %v3764, %v3831
        %v3837 = vadd.f32 %v3809, %v3820
        %v3838 = vadd.f32 %v3810, %v3824
        %v3839 = vadd.f32 %v3811, %v3828
        %v3840 = vadd.f32 %v3812, %v3832
        %3841 = vst [vmem:[%s779] sm:$0xff] %v3837
        %3842 = vst [vmem:[%s779 + $0x8] sm:$0xff] %v3838
        %3843 = vst [vmem:[%s779 + $0x10] sm:$0xff] %v3839
        %3844 = vst [vmem:[%s779 + $0x18] sm:$0xff] %v3840
        %3845 = vrot.lane.b32.xlu0 %v3757, 64
        %v3846 = vpop.permute.xlu0 %3845
        %3847 = vrot.lane.b32.xlu0 %v3758, 64
        %v3848 = vpop.permute.xlu0 %3847
        %3849 = vrot.lane.b32.xlu0 %v3759, 64
        %v3850 = vpop.permute.xlu0 %3849
        %3851 = vrot.lane.b32.xlu0 %v3760, 64
        %v3852 = vpop.permute.xlu0 %3851
        %v3857 = vsub.f32 %v3757, %v3846
        %v3858 = vsub.f32 %v3758, %v3848
        %v3859 = vsub.f32 %v3759, %v3850
        %v3860 = vsub.f32 %v3760, %v3852
        %3861 = vrot.lane.b32.xlu0 %v3761, 64
        %v3862 = vpop.permute.xlu0 %3861
        %3863 = vrot.lane.b32.xlu0 %v3762, 64
        %v3864 = vpop.permute.xlu0 %3863
        %3865 = vrot.lane.b32.xlu0 %v3763, 64
        %v3866 = vpop.permute.xlu0 %3865
        %3867 = vrot.lane.b32.xlu0 %v3764, 64
        %v3868 = vpop.permute.xlu0 %3867
        %v3873 = vsub.f32 %v3761, %v3862
        %v3874 = vsub.f32 %v3762, %v3864
        %v3875 = vsub.f32 %v3763, %v3866
        %v3876 = vsub.f32 %v3764, %v3868
        %v3881 = vlaneseq
        %v3882 = vshrl.u32 %v3881, 7
        %v3883 = vsub.s32 0, %v3882
        %v3884 = vrot.slane %v3857, %v3883
        %v3885 = vlaneseq
        %v3886 = vshrl.u32 %v3885, 7
        %v3887 = vsub.s32 0, %v3886
        %v3888 = vrot.slane %v3858, %v3887
        %v3889 = vlaneseq
        %v3890 = vshrl.u32 %v3889, 7
        %v3891 = vsub.s32 0, %v3890
        %v3892 = vrot.slane %v3859, %v3891
        %v3893 = vlaneseq
        %v3894 = vshrl.u32 %v3893, 7
        %v3895 = vsub.s32 0, %v3894
        %v3896 = vrot.slane %v3860, %v3895
        %3897 = vrot.lane.b32.xlu0 %v3884, 64
        %v3898 = vpop.permute.xlu0 %3897
        %3899 = vrot.lane.b32.xlu0 %v3888, 64
        %v3900 = vpop.permute.xlu0 %3899
        %3901 = vrot.lane.b32.xlu0 %v3892, 64
        %v3902 = vpop.permute.xlu0 %3901
        %3903 = vrot.lane.b32.xlu0 %v3896, 64
        %v3904 = vpop.permute.xlu0 %3903
        %v3909 = vmul.f32 %v3753, %v3898
        %v3910 = vmul.f32 %v3754, %v3900
        %v3911 = vmul.f32 %v3755, %v3902
        %v3912 = vmul.f32 %v3756, %v3904
        %v3917 = vlaneseq
        %v3918 = vshrl.u32 %v3917, 7
        %v3919 = vsub.s32 0, %v3918
        %v3920 = vrot.slane %v3873, %v3919
        %v3921 = vlaneseq
        %v3922 = vshrl.u32 %v3921, 7
        %v3923 = vsub.s32 0, %v3922
        %v3924 = vrot.slane %v3874, %v3923
        %v3925 = vlaneseq
        %v3926 = vshrl.u32 %v3925, 7
        %v3927 = vsub.s32 0, %v3926
        %v3928 = vrot.slane %v3875, %v3927
        %v3929 = vlaneseq
        %v3930 = vshrl.u32 %v3929, 7
        %v3931 = vsub.s32 0, %v3930
        %v3932 = vrot.slane %v3876, %v3931
        %3933 = vrot.lane.b32.xlu0 %v3920, 64
        %v3934 = vpop.permute.xlu0 %3933
        %3935 = vrot.lane.b32.xlu0 %v3924, 64
        %v3936 = vpop.permute.xlu0 %3935
        %3937 = vrot.lane.b32.xlu0 %v3928, 64
        %v3938 = vpop.permute.xlu0 %3937
        %3939 = vrot.lane.b32.xlu0 %v3932, 64
        %v3940 = vpop.permute.xlu0 %3939
        %v3945 = vadd.f32 %v3909, %v3934
        %v3946 = vadd.f32 %v3910, %v3936
        %v3947 = vadd.f32 %v3911, %v3938
        %v3948 = vadd.f32 %v3912, %v3940
        %v3949 = vxor.u32 %v3945, 2147483648
        %v3950 = vxor.u32 %v3946, 2147483648
        %v3951 = vxor.u32 %v3947, 2147483648
        %v3952 = vxor.u32 %v3948, 2147483648
        %v3953 = vmul.f32 %v3949, 1.442695
        %v3954 = vpow.pop %v3953
        %v3955 = vmul.f32 %v3950, 1.442695
        %v3956 = vpow.pop %v3955
        %v3957 = vmul.f32 %v3951, 1.442695
        %v3958 = vpow.pop %v3957
        %v3959 = vmul.f32 %v3952, 1.442695
        %v3960 = vpow.pop %v3959
        %v3961 = vadd.f32 %v3954, 1.0
        %v3962 = vadd.f32 %v3956, 1.0
        %v3963 = vadd.f32 %v3958, 1.0
        %v3964 = vadd.f32 %v3960, 1.0
        %v3965 = vrcp.pop %v3961
        %v3966 = vmul.f32 1.0, %v3965
        %v3967 = vrcp.pop %v3962
        %v3968 = vmul.f32 1.0, %v3967
        %v3969 = vrcp.pop %v3963
        %v3970 = vmul.f32 1.0, %v3969
        %v3971 = vrcp.pop %v3964
        %v3972 = vmul.f32 1.0, %v3971
        %3973 = vst.msk [vmem:[%s772] sm:$0xff] %vm849, %v3966
        %3974 = vst.msk [vmem:[%s772 + $0x8] sm:$0xff] %vm849, %v3968
        %3975 = vst.msk [vmem:[%s772 + $0x10] sm:$0xff] %vm849, %v3970
        %3976 = vst.msk [vmem:[%s772 + $0x18] sm:$0xff] %vm849, %v3972
        %s3977 = sand.u32 %s450, 1
        %s3978 = scalar_lea.sflag [#allocation4], %s3977
        %s3979 = sand.u32 %s450, 1
        %s3980 = smul.addr %s3979, 32
        %s3981 = scalar_lea.vmem [#allocation17], %s3980
        %s3982 = sand.u32 %s476, 1
        %s3983 = scalar_lea.sflag [#allocation19], %s3982
        %s3984 = sand.u32 %s476, 1
        %s3985 = smul.addr %s3984, 32
        %s3986 = scalar_lea.vmem [#allocation18], %s3985
        // Predicated region
        $region129: #{tpu_custom_call.1} parent=91 // pred_check
          %p3987 = pneg %p460
        $region130: #{tpu_custom_call.1} parent=91 // pred_check_branch
          %3989 = sbr.rel (%p3987) target = $region132
        $region131: #{tpu_custom_call.1} parent=91 // pred_region
          %s3990 = smul.u32 4, %s44
          %s3992 = ssub.s32 512, 512
          %3993 = vsyncadd %s3978, %s3992
          %s3994 = smul.addr %s3990, 128
          %s3995 = scalar_lea.hbm %s18, %s3994
          %s3996 = sshll.u32 %s3981, 4
          %s3997 = int_to_ptr.vmem [resolvable:$true] %s3996
          %4002 = dma.vmem_to_hbm [thread:$0]  %s3997, 512, %s3995, %s3978, 128, 128, 8
        $region132: #{tpu_custom_call.1} parent=91 // pred_fallthru
          _
        // Predicated region
        $region133: #{tpu_custom_call.1} parent=91 // pred_check
          %p4003 = pneg %p486
        $region134: #{tpu_custom_call.1} parent=91 // pred_check_branch
          %4005 = sbr.rel (%p4003) target = $region136
        $region135: #{tpu_custom_call.1} parent=91 // pred_region
          %s4006 = smul.u32 4, %s44
          %s4008 = ssub.s32 512, 512
          %4009 = vsyncadd %s3983, %s4008
          %s4010 = smul.addr %s4006, 128
          %s4011 = scalar_lea.hbm %s19, %s4010
          %s4012 = sshll.u32 %s3986, 4
          %s4013 = int_to_ptr.vmem [resolvable:$true] %s4012
          %4018 = dma.vmem_to_hbm [thread:$0]  %s4013, 512, %s4011, %s3983, 128, 128, 8
        $region136: #{tpu_custom_call.1} parent=91 // pred_fallthru
          _
      $region92: #{tpu_custom_call.1} parent=5 // pred_fallthru
        _
      %p4019 = scmp.le.s32.totalorder 2, %s39
      // Predicated region
      $region137: #{tpu_custom_call.1} parent=5 // pred_check
        %p4020 = pneg %p4019
      $region138: #{tpu_custom_call.1} parent=5 // pred_check_branch
        %4022 = sbr.rel (%p4020) target = $region140
      $region139: #{tpu_custom_call.1} parent=5 // pred_region
        %s4023 = ssub.s32 %s39, 2
        // Predicated region
        $region141: #{tpu_custom_call.1} parent=139 // pred_check
          %p4024 = pneg %p466
        $region142: #{tpu_custom_call.1} parent=139 // pred_check_branch
          %4026 = sbr.rel (%p4024) target = $region144
        $region143: #{tpu_custom_call.1} parent=139 // pred_region
          %s4027 = sand.u32 %s451, 1
          %s4028 = scalar_lea.sflag [#allocation4], %s4027
          %s4029 = sand.u32 %s451, 1
          %s4030 = smul.addr %s4029, 32
          %s4031 = scalar_lea.vmem [#allocation17], %s4030
          %4032 = dma.done %s4028, 512
        $region144: #{tpu_custom_call.1} parent=139 // pred_fallthru
          _
        // Predicated region
        $region145: #{tpu_custom_call.1} parent=139 // pred_check
          %p4033 = pneg %p492
        $region146: #{tpu_custom_call.1} parent=139 // pred_check_branch
          %4035 = sbr.rel (%p4033) target = $region148
        $region147: #{tpu_custom_call.1} parent=139 // pred_region
          %s4036 = sand.u32 %s477, 1
          %s4037 = scalar_lea.sflag [#allocation19], %s4036
          %s4038 = sand.u32 %s477, 1
          %s4039 = smul.addr %s4038, 32
          %s4040 = scalar_lea.vmem [#allocation18], %s4039
          %4041 = dma.done %s4037, 512
        $region148: #{tpu_custom_call.1} parent=139 // pred_fallthru
          _
      $region140: #{tpu_custom_call.1} parent=5 // pred_fallthru
        _
    $region6: #{tpu_custom_call.1} parent=1 // loop_footer
      %s43 = sadd.s32 1, %s39
    $region7: #{tpu_custom_call.1} parent=1 // loop_footer_branch
      %38 = sbr.rel target = $region3
    $region8: #{tpu_custom_call.1} parent=1 // loop_exit
      _
    %4042 = vsyncpa [#allocation3], 1
    %s4043 = scalar_lea.sflag [#allocation3], 1
    %4044 = vsyncpa %s4043, 1
    %4045 = vsyncpa [#allocation6], 1
    %4046 = vsyncpa [#allocation9], 1
    %4047 = vsyncpa [#allocation12], 1
    %4048 = vsyncpa [#allocation15], 1
    %4049 = vsyncpa [#allocation4], 1
    %s4050 = scalar_lea.sflag [#allocation4], 1
    %4051 = vsyncpa %s4050, 1
    %4052 = vsyncpa [#allocation19], 1
    %s4053 = scalar_lea.sflag [#allocation19], 1
    %4054 = vsyncpa %s4053, 1

</llo_original>
